<compile_context>
chip_gen: v5e
topology: v5e:2x2
jax: 0.10.0
libtpu: 0.0.40
codegen_flags: <defaults>
</compile_context>

<pallas_src>
import functools

import jax
import jax.numpy as jnp
from jax import lax
from jax.experimental import pallas as pl
from jax.experimental.pallas import tpu as pltpu


# --------------------------------------------------------------------------
# Pallas kernel 1: tiled matmul with fused bias (+ optional ReLU)
#   - bf16 operands, f32 accumulation directly in the output block
# --------------------------------------------------------------------------
def _matmul_bias_kernel(a_ref, b_ref, bias_ref, o_ref, *, relu):
    k = pl.program_id(2)

    @pl.when(k == 0)
    def _():
        o_ref[...] = jnp.zeros_like(o_ref)

    o_ref[...] += jnp.dot(a_ref[...], b_ref[...],
                          preferred_element_type=jnp.float32)

    @pl.when(k == pl.num_programs(2) - 1)
    def _():
        out = o_ref[...] + bias_ref[...]
        if relu:
            out = jnp.maximum(out, 0.0)
        o_ref[...] = out


def _round_up(x, m):
    return (x + m - 1) // m * m


def _pick_tk(K, tk_max):
    """Largest tk (multiple of 128, <= tk_max) whose K padding slack is <= 128."""
    Kp128 = _round_up(K, 128)
    if Kp128 <= tk_max:
        return Kp128
    for cand in range(tk_max, 127, -128):
        if _round_up(Kp128, cand) - Kp128 <= 128:
            return cand
    return 128


def linear_pallas(x, w, b, *, relu=False, tm=256, tn=256, tk=512):
    """y = x @ w + b (optionally ReLU), tiled Pallas matmul. x:[M,K] w:[K,N] b:[N]."""
    M, K = x.shape
    K2, N = w.shape
    assert K == K2

    # Adaptive tiles: small M (e.g. 8 ROIs) -> tiny tm; tk sized to K.
    tm = min(tm, _round_up(M, 8))
    tn = min(tn, _round_up(N, 128))
    tk = _pick_tk(K, tk)

    Mp, Kp, Np = _round_up(M, tm), _round_up(K, tk), _round_up(N, tn)

    # bf16 operands for the MXU; accumulation stays f32 in the kernel.
    xp = jnp.pad(x.astype(jnp.bfloat16), ((0, Mp - M), (0, Kp - K)))
    wp = jnp.pad(w.astype(jnp.bfloat16), ((0, Kp - K), (0, Np - N)))
    bp = jnp.pad(b.astype(jnp.float32), (0, Np - N)).reshape(1, Np)

    grid = (Mp // tm, Np // tn, Kp // tk)
    out = pl.pallas_call(
        functools.partial(_matmul_bias_kernel, relu=relu),
        out_shape=jax.ShapeDtypeStruct((Mp, Np), jnp.float32),
        grid_spec=pltpu.PrefetchScalarGridSpec(
            num_scalar_prefetch=0,
            grid=grid,
            in_specs=[
                pl.BlockSpec((tm, tk), lambda i, j, k: (i, k)),
                pl.BlockSpec((tk, tn), lambda i, j, k: (k, j)),
                pl.BlockSpec((1, tn), lambda i, j, k: (0, j)),
            ],
            out_specs=pl.BlockSpec((tm, tn), lambda i, j, k: (i, j)),
        ),
        compiler_params=pltpu.CompilerParams(
            dimension_semantics=("parallel", "parallel", "arbitrary")),
    )(xp, wp, bp)
    return out[:M, :N]


# --------------------------------------------------------------------------
# Pallas kernel 2: fused WSDDN head
#   class_scores  = softmax(feats @ Wc + bc, axis=1)   (over classes)
#   det_scores    = softmax(feats @ Wb + bb, axis=0)   (over rois)
#   cls_prob      = class_scores * det_scores
# R is never tiled/padded here (grid=(1,), full blocks) so the axis=0 softmax
# denominator only sees real ROI rows.
# --------------------------------------------------------------------------
def _wsddn_head_kernel(f_ref, wc_ref, bc_ref, wb_ref, bb_ref, o_ref):
    f = f_ref[...]

    sc = jnp.dot(f, wc_ref[...], preferred_element_type=jnp.float32) + bc_ref[...]
    sc = sc - jnp.max(sc, axis=1, keepdims=True)
    ec = jnp.exp(sc)
    pc = ec / jnp.sum(ec, axis=1, keepdims=True)          # softmax over classes

    sd = jnp.dot(f, wb_ref[...], preferred_element_type=jnp.float32) + bb_ref[...]
    sd = sd - jnp.max(sd, axis=0, keepdims=True)
    ed = jnp.exp(sd)
    pd = ed / jnp.sum(ed, axis=0, keepdims=True)          # softmax over rois

    o_ref[...] = (pc * pd).astype(o_ref.dtype)


def wsddn_head_pallas(feats, wc, bc, wb, bb):
    R, H = feats.shape
    C = wc.shape[1]

    def full(shape):
        nd = len(shape)
        return pl.BlockSpec(shape, lambda i, _nd=nd: (0,) * _nd)

    return pl.pallas_call(
        _wsddn_head_kernel,
        out_shape=jax.ShapeDtypeStruct((R, C), jnp.float32),
        grid_spec=pltpu.PrefetchScalarGridSpec(
            num_scalar_prefetch=0,
            grid=(1,),
            in_specs=[full((R, H)), full((H, C)), full((1, C)),
                      full((H, C)), full((1, C))],
            out_specs=full((R, C)),
        ),
        compiler_params=pltpu.CompilerParams(
            dimension_semantics=("arbitrary",)),
    )(feats, wc, bc.reshape(1, C), wb, bb.reshape(1, C))


# --------------------------------------------------------------------------
# Conv / pool / ROI-pool plumbing (JAX glue; GEMM hot path goes through Pallas)
# Whole trunk runs in NHWC so the im2col col matrix is lane-dense by
# construction and conv outputs come straight back in NHWC (no transposes).
# --------------------------------------------------------------------------
def conv2d_nhwc_pallas(x, w, b, *, stride, pad, relu=True):
    """x: [N,H,W,C]; w: [O,C,KH,KW] (OIHW); b: [O] -> out [N,OH,OW,O]."""
    N, H, W, C = x.shape
    O, _, KH, KW = w.shape
    xp = jnp.pad(x, ((0, 0), (pad, pad), (pad, pad), (0, 0)))
    OH = (H + 2 * pad - KH) // stride + 1
    OW = (W + 2 * pad - KW) // stride + 1
    cols = []
    for i in range(KH):
        for j in range(KW):
            patch = lax.slice(
                xp, (0, i, j, 0),
                (N, i + (OH - 1) * stride + 1, j + (OW - 1) * stride + 1, C),
                (1, stride, stride, 1))                 # [N, OH, OW, C]
            cols.append(patch)
    col = jnp.concatenate(cols, axis=-1)                # [N, OH, OW, KH*KW*C]
    col = col.reshape(N * OH * OW, KH * KW * C)         # lane-dense, (i, j, c) minor->c
    w2d = w.transpose(2, 3, 1, 0).reshape(KH * KW * C, O)   # matches (i, j, c) ordering
    y = linear_pallas(col, w2d, b, relu=relu)           # [N*OH*OW, O]
    return y.reshape(N, OH, OW, O)


def max_pool2d_nhwc(x, k=3, s=2):
    # nn.MaxPool2d(kernel=3, stride=2, ceil_mode=False): tiny reduction, kept as glue.
    return lax.reduce_window(x, -jnp.inf, lax.max,
                             (1, k, k, 1), (1, s, s, 1), "VALID")


def roi_pool_nhwc(feat, boxes, output_size, spatial_scale):
    """torchvision.ops.roi_pool semantics on an NHWC feature map.
    feat: [N, H, W, C]; boxes: [R, 5] = (batch_idx, x1, y1, x2, y2) in image coords.
    Separable two-pass max: reduce over W into [H,PW,C], then over H into [PH,PW,C].
    """
    # TODO(synk): a fully-Pallas roi_pool would need scalar-prefetch-driven DMA of
    # per-ROI windows (data-dependent gather); kept as separable JAX max here.
    N, H, W, C = feat.shape
    PH, PW = output_size

    def rnd(v):  # roundf (half away from zero) for non-negative coords
        return jnp.floor(v + 0.5).astype(jnp.int32)

    def one_roi(box):
        bidx = box[0].astype(jnp.int32)
        fmap = feat[bidx]                                # [H, W, C]
        x1 = rnd(box[1] * spatial_scale)
        y1 = rnd(box[2] * spatial_scale)
        x2 = rnd(box[3] * spatial_scale)
        y2 = rnd(box[4] * spatial_scale)
        roi_w = jnp.maximum(x2 - x1 + 1, 1).astype(jnp.float32)
        roi_h = jnp.maximum(y2 - y1 + 1, 1).astype(jnp.float32)
        bin_h = roi_h / PH
        bin_w = roi_w / PW
        ph = jnp.arange(PH, dtype=jnp.float32)
        pw = jnp.arange(PW, dtype=jnp.float32)
        hstart = jnp.clip(jnp.floor(ph * bin_h).astype(jnp.int32) + y1, 0, H)
        hend = jnp.clip(jnp.ceil((ph + 1) * bin_h).astype(jnp.int32) + y1, 0, H)
        wstart = jnp.clip(jnp.floor(pw * bin_w).astype(jnp.int32) + x1, 0, W)
        wend = jnp.clip(jnp.ceil((pw + 1) * bin_w).astype(jnp.int32) + x1, 0, W)
        hh = jnp.arange(H)
        ww = jnp.arange(W)
        wmask = (ww[None, :] >= wstart[:, None]) & (ww[None, :] < wend[:, None])  # [PW, W]
        hmask = (hh[None, :] >= hstart[:, None]) & (hh[None, :] < hend[:, None])  # [PH, H]

        neg = jnp.array(-jnp.inf, feat.dtype)
        # Pass 1: reduce over W -> [H, PW, C]
        vals_w = jnp.where(wmask[None, :, :, None], fmap[:, None, :, :], neg)      # [H,PW,W,C]
        tmp = jnp.max(vals_w, axis=2)                                              # [H,PW,C]
        # Pass 2: reduce over H -> [PH, PW, C]
        vals_h = jnp.where(hmask[:, :, None, None], tmp[None, :, :, :], neg)       # [PH,H,PW,C]
        pooled = jnp.max(vals_h, axis=1)                                           # [PH,PW,C]

        # Re-apply torchvision empty-bin handling after the second pass.
        empty = (hend <= hstart)[:, None] | (wend <= wstart)[None, :]              # [PH,PW]
        return jnp.where(empty[:, :, None], 0.0, pooled)

    return jax.vmap(one_roi)(boxes)                      # [R, PH, PW, C]


# --------------------------------------------------------------------------
# WSDDN model: deterministic parameter init + forward
# --------------------------------------------------------------------------
N_CLASSES = 20
N_CHANNEL = 256          # module: self.n_channel
ROI_DIM = 15             # module: self.roi_dim
CONV_CFG = [             # (cin, cout, kernel, stride, pad) — exactly the PyTorch stack
    (3, 64, 11, 4, 2),
    (64, 192, 5, 1, 2),
    (192, 384, 3, 1, 1),
    (384, N_CHANNEL, 3, 1, 1),
    (N_CHANNEL, N_CHANNEL, 3, 1, 1),
]


def init_params(key, hidden):
    keys = jax.random.split(key, len(CONV_CFG) + 8)
    params = {"convs": []}
    ki = 0
    for (cin, cout, k, _s, _p) in CONV_CFG:
        fan_in = cin * k * k
        w = jax.random.normal(keys[ki], (cout, cin, k, k), jnp.float32) / jnp.sqrt(float(fan_in))
        b = jnp.zeros((cout,), jnp.float32)
        # NOTE: stride/pad are static (in CONV_CFG), NOT stored in the jitted pytree.
        params["convs"].append({"w": w, "b": b})
        ki += 1

    feat_dim = N_CHANNEL * ROI_DIM * ROI_DIM

    def lin(kw, kb, din, dout):
        w = jax.random.normal(kw, (din, dout), jnp.float32) / jnp.sqrt(float(din))
        b = 0.01 * jax.random.normal(kb, (dout,), jnp.float32)
        return {"w": w, "b": b}

    params["fc1"] = lin(keys[ki], keys[ki + 1], feat_dim, hidden); ki += 2
    params["fc2"] = lin(keys[ki], keys[ki + 1], hidden, hidden); ki += 2
    params["cls"] = lin(keys[ki], keys[ki + 1], hidden, N_CLASSES); ki += 2
    params["det"] = lin(keys[ki], keys[ki + 1], hidden, N_CLASSES); ki += 2
    return params


def wsddn_forward(params, image, rois):
    """image: [N, 3, H, W] (NCHW, float32); rois: [R, 4] normalized (x1,y1,x2,y2)."""
    # self.features(image): AlexNet-style conv trunk (run in NHWC internally).
    x = jnp.transpose(image, (0, 2, 3, 1))               # NCHW -> NHWC, once
    convs = params["convs"]
    for li, (_cin, _cout, _k, stride, pad) in enumerate(CONV_CFG):
        x = conv2d_nhwc_pallas(x, convs[li]["w"], convs[li]["b"],
                               stride=stride, pad=pad, relu=True)
        if li < 2:                                        # MaxPool after conv1 and conv2
            x = max_pool2d_nhwc(x)

    # roi_pool(..., boxes=cat([zeros, rois*512], -1), output_size=(15,15), spatial_scale=31/512)
    R = rois.shape[0]
    boxes = jnp.concatenate(
        [jnp.zeros((R, 1), jnp.float32), rois.astype(jnp.float32) * 512.0], axis=-1)
    roi_feat = roi_pool_nhwc(x, boxes, (ROI_DIM, ROI_DIM), 31.0 / 512.0)   # [R, 15, 15, C]
    # match PyTorch roi_feat.view(R, -1) layout: (C, PH, PW) channel-major flatten
    flat = jnp.transpose(roi_feat, (0, 3, 1, 2)).reshape(R, -1)

    # classifier: (Dropout=id) Linear -> (Dropout=id) -> ReLU -> Linear -> (Dropout=id) -> ReLU
    h = linear_pallas(flat, params["fc1"]["w"], params["fc1"]["b"], relu=True)
    h = linear_pallas(h, params["fc2"]["w"], params["fc2"]["b"], relu=True)

    # cls_prob = softmax(class_score, dim=1) * softmax(bbox_score, dim=0)
    cls_prob = wsddn_head_pallas(h, params["cls"]["w"], params["cls"]["b"],
                                 params["det"]["w"], params["det"]["b"])
    return cls_prob


if __name__ == "__main__":
    key = jax.random.PRNGKey(0)
    k_img, k_r1, k_r2, k_par = jax.random.split(key, 4)

    IMG = 128      # small test image (module was written for ~512x512 inputs)
    N_ROIS = 8
    HIDDEN = 512   # module default is 4096; reduced for a fast self-test (kernels are size-agnostic)

    image = jax.random.normal(k_img, (1, 3, IMG, IMG), jnp.float32)
    xy1 = jax.random.uniform(k_r1, (N_ROIS, 2), minval=0.0, maxval=0.05)
    wh = jax.random.uniform(k_r2, (N_ROIS, 2), minval=0.05, maxval=0.15)
    rois = jnp.concatenate([xy1, xy1 + wh], axis=-1)     # normalized (x1, y1, x2, y2)

    params = init_params(k_par, hidden=HIDDEN)

    fwd = jax.jit(wsddn_forward)
    cls_prob = fwd(params, image, rois)
    cls_prob = jax.block_until_ready(cls_prob)

    assert cls_prob.shape == (N_ROIS, N_CLASSES)
    assert bool(jnp.all(jnp.isfinite(cls_prob)))
    print("KERNEL_OK")
</pallas_src>

<mosaic_0001>
module attributes {stable_mosaic.version = 11 : i64} {
  func.func @_matmul_bias_kernel(%arg0: i32, %arg1: i32, %arg2: i32, %arg3: memref<256x384xbf16, #tpu.memory_space<vmem>>, %arg4: memref<384x128xbf16, #tpu.memory_space<vmem>>, %arg5: memref<1x128xf32, #tpu.memory_space<vmem>>, %arg6: memref<256x128xf32, #tpu.memory_space<vmem>>) attributes {dimension_semantics = [#tpu.dimension_semantics<parallel>, #tpu.dimension_semantics<parallel>, #tpu.dimension_semantics<arbitrary>], iteration_bounds = array<i64: 4, 1, 1>, scalar_prefetch = 0 : i64, scratch_operands = 0 : i64, tpu.core_type = #tpu.core_type<tc>, window_params = [{transform_indices = @transform_0, window_bounds = array<i64: 256, 384>}, {transform_indices = @transform_1, window_bounds = array<i64: 384, 128>}, {transform_indices = @transform_2, window_bounds = array<i64: 1, 128>}, {transform_indices = @transform_3, window_bounds = array<i64: 256, 128>}]} {
    %c0_i32 = arith.constant 0 : i32
    %0 = arith.cmpi eq, %arg2, %c0_i32 : i32
    %1 = arith.extui %0 : i1 to i32
    %c0_i32_0 = arith.constant 0 : i32
    %2 = arith.cmpi ne, %1, %c0_i32_0 : i32
    scf.if %2 {
      %cst_10 = arith.constant 0.000000e+00 : f32
      %12 = vector.broadcast %cst_10 : f32 to vector<256x128xf32>
      %c0_11 = arith.constant 0 : index
      %c0_12 = arith.constant 0 : index
      %13 = vector.load %arg6[%c0_11, %c0_12] : memref<256x128xf32, #tpu.memory_space<vmem>>, vector<256x128xf32>
      tpu.vector_store %arg6[%c0_11, %c0_12], %12 {strides = array<i32>} : memref<256x128xf32, #tpu.memory_space<vmem>>, vector<256x128xf32>,
    } else {
    }
    %c0 = arith.constant 0 : index
    %c0_1 = arith.constant 0 : index
    %3 = vector.load %arg6[%c0, %c0_1] : memref<256x128xf32, #tpu.memory_space<vmem>>, vector<256x128xf32>
    %c0_2 = arith.constant 0 : index
    %c0_3 = arith.constant 0 : index
    %4 = vector.load %arg3[%c0_2, %c0_3] : memref<256x384xbf16, #tpu.memory_space<vmem>>, vector<256x384xbf16>
    %c0_4 = arith.constant 0 : index
    %c0_5 = arith.constant 0 : index
    %5 = vector.load %arg4[%c0_4, %c0_5] : memref<384x128xbf16, #tpu.memory_space<vmem>>, vector<384x128xbf16>
    %cst = arith.constant dense<0.000000e+00> : vector<256x128xf32>
    %6 = tpu.matmul %4, %5, %cst {dimension_numbers = #tpu.dot_dimension_numbers<[1], [0], [0], [1], [0, 0, 1, 1], [], []>} : vector<256x384xbf16>, vector<384x128xbf16>, vector<256x128xf32> -> vector<256x128xf32>
    %7 = arith.addf %3, %6 : vector<256x128xf32>
    %c0_6 = arith.constant 0 : index
    %c0_7 = arith.constant 0 : index
    %8 = vector.load %arg6[%c0_6, %c0_7] : memref<256x128xf32, #tpu.memory_space<vmem>>, vector<256x128xf32>
    tpu.vector_store %arg6[%c0_6, %c0_7], %7 {strides = array<i32>} : memref<256x128xf32, #tpu.memory_space<vmem>>, vector<256x128xf32>,
    %c0_i32_8 = arith.constant 0 : i32
    %9 = arith.cmpi eq, %arg2, %c0_i32_8 : i32
    %10 = arith.extui %9 : i1 to i32
    %c0_i32_9 = arith.constant 0 : i32
    %11 = arith.cmpi ne, %10, %c0_i32_9 : i32
    scf.if %11 {
      %c0_10 = arith.constant 0 : index
      %c0_11 = arith.constant 0 : index
      %12 = vector.load %arg6[%c0_10, %c0_11] : memref<256x128xf32, #tpu.memory_space<vmem>>, vector<256x128xf32>
      %c0_12 = arith.constant 0 : index
      %c0_13 = arith.constant 0 : index
      %13 = vector.load %arg5[%c0_12, %c0_13] : memref<1x128xf32, #tpu.memory_space<vmem>>, vector<1x128xf32>
      %14 = vector.broadcast %13 : vector<1x128xf32> to vector<256x128xf32>
      %15 = arith.addf %12, %14 : vector<256x128xf32>
      %cst_14 = arith.constant 0.000000e+00 : f32
      %16 = vector.broadcast %cst_14 : f32 to vector<256x128xf32>
      %17 = arith.maximumf %15, %16 : vector<256x128xf32>
      %c0_15 = arith.constant 0 : index
      %c0_16 = arith.constant 0 : index
      %18 = vector.load %arg6[%c0_15, %c0_16] : memref<256x128xf32, #tpu.memory_space<vmem>>, vector<256x128xf32>
      tpu.vector_store %arg6[%c0_15, %c0_16], %17 {strides = array<i32>} : memref<256x128xf32, #tpu.memory_space<vmem>>, vector<256x128xf32>,
    } else {
    }
    return
  }
  func.func @transform_0(%arg0: i32, %arg1: i32, %arg2: i32) -> (i32, i32) {
    %c0_i32 = arith.constant 0 : i32
    return %arg0, %arg2 : i32, i32
  }
  func.func @transform_1(%arg0: i32, %arg1: i32, %arg2: i32) -> (i32, i32) {
    %c0_i32 = arith.constant 0 : i32
    return %arg2, %arg1 : i32, i32
  }
  func.func @transform_2(%arg0: i32, %arg1: i32, %arg2: i32) -> (i32, i32) {
    %c0_i32 = arith.constant 0 : i32
    %c0_i32_0 = arith.constant 0 : i32
    return %c0_i32, %arg1 : i32, i32
  }
  func.func @transform_3(%arg0: i32, %arg1: i32, %arg2: i32) -> (i32, i32) {
    %c0_i32 = arith.constant 0 : i32
    return %arg0, %arg1 : i32, i32
  }
}

module attributes {stable_mosaic.version = 11 : i64} {
  func.func @_matmul_bias_kernel(%arg0: i32, %arg1: i32, %arg2: i32, %arg3: memref<232x256xbf16, #tpu.memory_space<vmem>>, %arg4: memref<256x256xbf16, #tpu.memory_space<vmem>>, %arg5: memref<1x256xf32, #tpu.memory_space<vmem>>, %arg6: memref<232x256xf32, #tpu.memory_space<vmem>>) attributes {dimension_semantics = [#tpu.dimension_semantics<parallel>, #tpu.dimension_semantics<parallel>, #tpu.dimension_semantics<arbitrary>], iteration_bounds = array<i64: 1, 1, 7>, scalar_prefetch = 0 : i64, scratch_operands = 0 : i64, tpu.core_type = #tpu.core_type<tc>, window_params = [{transform_indices = @transform_0, window_bounds = array<i64: 232, 256>}, {transform_indices = @transform_1, window_bounds = array<i64: 256, 256>}, {transform_indices = @transform_2, window_bounds = array<i64: 1, 256>}, {transform_indices = @transform_3, window_bounds = array<i64: 232, 256>}]} {
    %c0_i32 = arith.constant 0 : i32
    %0 = arith.cmpi eq, %arg2, %c0_i32 : i32
    %1 = arith.extui %0 : i1 to i32
    %c0_i32_0 = arith.constant 0 : i32
    %2 = arith.cmpi ne, %1, %c0_i32_0 : i32
    scf.if %2 {
      %cst_9 = arith.constant 0.000000e+00 : f32
      %12 = vector.broadcast %cst_9 : f32 to vector<232x256xf32>
      %c0_10 = arith.constant 0 : index
      %c0_11 = arith.constant 0 : index
      %13 = vector.load %arg6[%c0_10, %c0_11] : memref<232x256xf32, #tpu.memory_space<vmem>>, vector<232x256xf32>
      tpu.vector_store %arg6[%c0_10, %c0_11], %12 {strides = array<i32>} : memref<232x256xf32, #tpu.memory_space<vmem>>, vector<232x256xf32>,
    } else {
    }
    %c0 = arith.constant 0 : index
    %c0_1 = arith.constant 0 : index
    %3 = vector.load %arg6[%c0, %c0_1] : memref<232x256xf32, #tpu.memory_space<vmem>>, vector<232x256xf32>
    %c0_2 = arith.constant 0 : index
    %c0_3 = arith.constant 0 : index
    %4 = vector.load %arg3[%c0_2, %c0_3] : memref<232x256xbf16, #tpu.memory_space<vmem>>, vector<232x256xbf16>
    %c0_4 = arith.constant 0 : index
    %c0_5 = arith.constant 0 : index
    %5 = vector.load %arg4[%c0_4, %c0_5] : memref<256x256xbf16, #tpu.memory_space<vmem>>, vector<256x256xbf16>
    %cst = arith.constant dense<0.000000e+00> : vector<232x256xf32>
    %6 = tpu.matmul %4, %5, %cst {dimension_numbers = #tpu.dot_dimension_numbers<[1], [0], [0], [1], [0, 0, 1, 1], [], []>} : vector<232x256xbf16>, vector<256x256xbf16>, vector<232x256xf32> -> vector<232x256xf32>
    %7 = arith.addf %3, %6 : vector<232x256xf32>
    %c0_6 = arith.constant 0 : index
    %c0_7 = arith.constant 0 : index
    %8 = vector.load %arg6[%c0_6, %c0_7] : memref<232x256xf32, #tpu.memory_space<vmem>>, vector<232x256xf32>
    tpu.vector_store %arg6[%c0_6, %c0_7], %7 {strides = array<i32>} : memref<232x256xf32, #tpu.memory_space<vmem>>, vector<232x256xf32>,
    %c6_i32 = arith.constant 6 : i32
    %9 = arith.cmpi eq, %arg2, %c6_i32 : i32
    %10 = arith.extui %9 : i1 to i32
    %c0_i32_8 = arith.constant 0 : i32
    %11 = arith.cmpi ne, %10, %c0_i32_8 : i32
    scf.if %11 {
      %c0_9 = arith.constant 0 : index
      %c0_10 = arith.constant 0 : index
      %12 = vector.load %arg6[%c0_9, %c0_10] : memref<232x256xf32, #tpu.memory_space<vmem>>, vector<232x256xf32>
      %c0_11 = arith.constant 0 : index
      %c0_12 = arith.constant 0 : index
      %13 = vector.load %arg5[%c0_11, %c0_12] : memref<1x256xf32, #tpu.memory_space<vmem>>, vector<1x256xf32>
      %14 = vector.broadcast %13 : vector<1x256xf32> to vector<232x256xf32>
      %15 = arith.addf %12, %14 : vector<232x256xf32>
      %cst_13 = arith.constant 0.000000e+00 : f32
      %16 = vector.broadcast %cst_13 : f32 to vector<232x256xf32>
      %17 = arith.maximumf %15, %16 : vector<232x256xf32>
      %c0_14 = arith.constant 0 : index
      %c0_15 = arith.constant 0 : index
      %18 = vector.load %arg6[%c0_14, %c0_15] : memref<232x256xf32, #tpu.memory_space<vmem>>, vector<232x256xf32>
      tpu.vector_store %arg6[%c0_14, %c0_15], %17 {strides = array<i32>} : memref<232x256xf32, #tpu.memory_space<vmem>>, vector<232x256xf32>,
    } else {
    }
    return
  }
  func.func @transform_0(%arg0: i32, %arg1: i32, %arg2: i32) -> (i32, i32) {
    %c0_i32 = arith.constant 0 : i32
    return %arg0, %arg2 : i32, i32
  }
  func.func @transform_1(%arg0: i32, %arg1: i32, %arg2: i32) -> (i32, i32) {
    %c0_i32 = arith.constant 0 : i32
    return %arg2, %arg1 : i32, i32
  }
  func.func @transform_2(%arg0: i32, %arg1: i32, %arg2: i32) -> (i32, i32) {
    %c0_i32 = arith.constant 0 : i32
    %c0_i32_0 = arith.constant 0 : i32
    return %c0_i32, %arg1 : i32, i32
  }
  func.func @transform_3(%arg0: i32, %arg1: i32, %arg2: i32) -> (i32, i32) {
    %c0_i32 = arith.constant 0 : i32
    return %arg0, %arg1 : i32, i32
  }
}

module attributes {stable_mosaic.version = 11 : i64} {
  func.func @_matmul_bias_kernel(%arg0: i32, %arg1: i32, %arg2: i32, %arg3: memref<56x384xbf16, #tpu.memory_space<vmem>>, %arg4: memref<384x256xbf16, #tpu.memory_space<vmem>>, %arg5: memref<1x256xf32, #tpu.memory_space<vmem>>, %arg6: memref<56x256xf32, #tpu.memory_space<vmem>>) attributes {dimension_semantics = [#tpu.dimension_semantics<parallel>, #tpu.dimension_semantics<parallel>, #tpu.dimension_semantics<arbitrary>], iteration_bounds = array<i64: 1, 2, 5>, scalar_prefetch = 0 : i64, scratch_operands = 0 : i64, tpu.core_type = #tpu.core_type<tc>, window_params = [{transform_indices = @transform_0, window_bounds = array<i64: 56, 384>}, {transform_indices = @transform_1, window_bounds = array<i64: 384, 256>}, {transform_indices = @transform_2, window_bounds = array<i64: 1, 256>}, {transform_indices = @transform_3, window_bounds = array<i64: 56, 256>}]} {
    %c0_i32 = arith.constant 0 : i32
    %0 = arith.cmpi eq, %arg2, %c0_i32 : i32
    %1 = arith.extui %0 : i1 to i32
    %c0_i32_0 = arith.constant 0 : i32
    %2 = arith.cmpi ne, %1, %c0_i32_0 : i32
    scf.if %2 {
      %cst_9 = arith.constant 0.000000e+00 : f32
      %12 = vector.broadcast %cst_9 : f32 to vector<56x256xf32>
      %c0_10 = arith.constant 0 : index
      %c0_11 = arith.constant 0 : index
      %13 = vector.load %arg6[%c0_10, %c0_11] : memref<56x256xf32, #tpu.memory_space<vmem>>, vector<56x256xf32>
      tpu.vector_store %arg6[%c0_10, %c0_11], %12 {strides = array<i32>} : memref<56x256xf32, #tpu.memory_space<vmem>>, vector<56x256xf32>,
    } else {
    }
    %c0 = arith.constant 0 : index
    %c0_1 = arith.constant 0 : index
    %3 = vector.load %arg6[%c0, %c0_1] : memref<56x256xf32, #tpu.memory_space<vmem>>, vector<56x256xf32>
    %c0_2 = arith.constant 0 : index
    %c0_3 = arith.constant 0 : index
    %4 = vector.load %arg3[%c0_2, %c0_3] : memref<56x384xbf16, #tpu.memory_space<vmem>>, vector<56x384xbf16>
    %c0_4 = arith.constant 0 : index
    %c0_5 = arith.constant 0 : index
    %5 = vector.load %arg4[%c0_4, %c0_5] : memref<384x256xbf16, #tpu.memory_space<vmem>>, vector<384x256xbf16>
    %cst = arith.constant dense<0.000000e+00> : vector<56x256xf32>
    %6 = tpu.matmul %4, %5, %cst {dimension_numbers = #tpu.dot_dimension_numbers<[1], [0], [0], [1], [0, 0, 1, 1], [], []>} : vector<56x384xbf16>, vector<384x256xbf16>, vector<56x256xf32> -> vector<56x256xf32>
    %7 = arith.addf %3, %6 : vector<56x256xf32>
    %c0_6 = arith.constant 0 : index
    %c0_7 = arith.constant 0 : index
    %8 = vector.load %arg6[%c0_6, %c0_7] : memref<56x256xf32, #tpu.memory_space<vmem>>, vector<56x256xf32>
    tpu.vector_store %arg6[%c0_6, %c0_7], %7 {strides = array<i32>} : memref<56x256xf32, #tpu.memory_space<vmem>>, vector<56x256xf32>,
    %c4_i32 = arith.constant 4 : i32
    %9 = arith.cmpi eq, %arg2, %c4_i32 : i32
    %10 = arith.extui %9 : i1 to i32
    %c0_i32_8 = arith.constant 0 : i32
    %11 = arith.cmpi ne, %10, %c0_i32_8 : i32
    scf.if %11 {
      %c0_9 = arith.constant 0 : index
      %c0_10 = arith.constant 0 : index
      %12 = vector.load %arg6[%c0_9, %c0_10] : memref<56x256xf32, #tpu.memory_space<vmem>>, vector<56x256xf32>
      %c0_11 = arith.constant 0 : index
      %c0_12 = arith.constant 0 : index
      %13 = vector.load %arg5[%c0_11, %c0_12] : memref<1x256xf32, #tpu.memory_space<vmem>>, vector<1x256xf32>
      %14 = vector.broadcast %13 : vector<1x256xf32> to vector<56x256xf32>
      %15 = arith.addf %12, %14 : vector<56x256xf32>
      %cst_13 = arith.constant 0.000000e+00 : f32
      %16 = vector.broadcast %cst_13 : f32 to vector<56x256xf32>
      %17 = arith.maximumf %15, %16 : vector<56x256xf32>
      %c0_14 = arith.constant 0 : index
      %c0_15 = arith.constant 0 : index
      %18 = vector.load %arg6[%c0_14, %c0_15] : memref<56x256xf32, #tpu.memory_space<vmem>>, vector<56x256xf32>
      tpu.vector_store %arg6[%c0_14, %c0_15], %17 {strides = array<i32>} : memref<56x256xf32, #tpu.memory_space<vmem>>, vector<56x256xf32>,
    } else {
    }
    return
  }
  func.func @transform_0(%arg0: i32, %arg1: i32, %arg2: i32) -> (i32, i32) {
    %c0_i32 = arith.constant 0 : i32
    return %arg0, %arg2 : i32, i32
  }
  func.func @transform_1(%arg0: i32, %arg1: i32, %arg2: i32) -> (i32, i32) {
    %c0_i32 = arith.constant 0 : i32
    return %arg2, %arg1 : i32, i32
  }
  func.func @transform_2(%arg0: i32, %arg1: i32, %arg2: i32) -> (i32, i32) {
    %c0_i32 = arith.constant 0 : i32
    %c0_i32_0 = arith.constant 0 : i32
    return %c0_i32, %arg1 : i32, i32
  }
  func.func @transform_3(%arg0: i32, %arg1: i32, %arg2: i32) -> (i32, i32) {
    %c0_i32 = arith.constant 0 : i32
    return %arg0, %arg1 : i32, i32
  }
}

module attributes {stable_mosaic.version = 11 : i64} {
  func.func @_matmul_bias_kernel(%arg0: i32, %arg1: i32, %arg2: i32, %arg3: memref<56x512xbf16, #tpu.memory_space<vmem>>, %arg4: memref<512x256xbf16, #tpu.memory_space<vmem>>, %arg5: memref<1x256xf32, #tpu.memory_space<vmem>>, %arg6: memref<56x256xf32, #tpu.memory_space<vmem>>) attributes {dimension_semantics = [#tpu.dimension_semantics<parallel>, #tpu.dimension_semantics<parallel>, #tpu.dimension_semantics<arbitrary>], iteration_bounds = array<i64: 1, 1, 7>, scalar_prefetch = 0 : i64, scratch_operands = 0 : i64, tpu.core_type = #tpu.core_type<tc>, window_params = [{transform_indices = @transform_0, window_bounds = array<i64: 56, 512>}, {transform_indices = @transform_1, window_bounds = array<i64: 512, 256>}, {transform_indices = @transform_2, window_bounds = array<i64: 1, 256>}, {transform_indices = @transform_3, window_bounds = array<i64: 56, 256>}]} {
    %c0_i32 = arith.constant 0 : i32
    %0 = arith.cmpi eq, %arg2, %c0_i32 : i32
    %1 = arith.extui %0 : i1 to i32
    %c0_i32_0 = arith.constant 0 : i32
    %2 = arith.cmpi ne, %1, %c0_i32_0 : i32
    scf.if %2 {
      %cst_9 = arith.constant 0.000000e+00 : f32
      %12 = vector.broadcast %cst_9 : f32 to vector<56x256xf32>
      %c0_10 = arith.constant 0 : index
      %c0_11 = arith.constant 0 : index
      %13 = vector.load %arg6[%c0_10, %c0_11] : memref<56x256xf32, #tpu.memory_space<vmem>>, vector<56x256xf32>
      tpu.vector_store %arg6[%c0_10, %c0_11], %12 {strides = array<i32>} : memref<56x256xf32, #tpu.memory_space<vmem>>, vector<56x256xf32>,
    } else {
    }
    %c0 = arith.constant 0 : index
    %c0_1 = arith.constant 0 : index
    %3 = vector.load %arg6[%c0, %c0_1] : memref<56x256xf32, #tpu.memory_space<vmem>>, vector<56x256xf32>
    %c0_2 = arith.constant 0 : index
    %c0_3 = arith.constant 0 : index
    %4 = vector.load %arg3[%c0_2, %c0_3] : memref<56x512xbf16, #tpu.memory_space<vmem>>, vector<56x512xbf16>
    %c0_4 = arith.constant 0 : index
    %c0_5 = arith.constant 0 : index
    %5 = vector.load %arg4[%c0_4, %c0_5] : memref<512x256xbf16, #tpu.memory_space<vmem>>, vector<512x256xbf16>
    %cst = arith.constant dense<0.000000e+00> : vector<56x256xf32>
    %6 = tpu.matmul %4, %5, %cst {dimension_numbers = #tpu.dot_dimension_numbers<[1], [0], [0], [1], [0, 0, 1, 1], [], []>} : vector<56x512xbf16>, vector<512x256xbf16>, vector<56x256xf32> -> vector<56x256xf32>
    %7 = arith.addf %3, %6 : vector<56x256xf32>
    %c0_6 = arith.constant 0 : index
    %c0_7 = arith.constant 0 : index
    %8 = vector.load %arg6[%c0_6, %c0_7] : memref<56x256xf32, #tpu.memory_space<vmem>>, vector<56x256xf32>
    tpu.vector_store %arg6[%c0_6, %c0_7], %7 {strides = array<i32>} : memref<56x256xf32, #tpu.memory_space<vmem>>, vector<56x256xf32>,
    %c6_i32 = arith.constant 6 : i32
    %9 = arith.cmpi eq, %arg2, %c6_i32 : i32
    %10 = arith.extui %9 : i1 to i32
    %c0_i32_8 = arith.constant 0 : i32
    %11 = arith.cmpi ne, %10, %c0_i32_8 : i32
    scf.if %11 {
      %c0_9 = arith.constant 0 : index
      %c0_10 = arith.constant 0 : index
      %12 = vector.load %arg6[%c0_9, %c0_10] : memref<56x256xf32, #tpu.memory_space<vmem>>, vector<56x256xf32>
      %c0_11 = arith.constant 0 : index
      %c0_12 = arith.constant 0 : index
      %13 = vector.load %arg5[%c0_11, %c0_12] : memref<1x256xf32, #tpu.memory_space<vmem>>, vector<1x256xf32>
      %14 = vector.broadcast %13 : vector<1x256xf32> to vector<56x256xf32>
      %15 = arith.addf %12, %14 : vector<56x256xf32>
      %cst_13 = arith.constant 0.000000e+00 : f32
      %16 = vector.broadcast %cst_13 : f32 to vector<56x256xf32>
      %17 = arith.maximumf %15, %16 : vector<56x256xf32>
      %c0_14 = arith.constant 0 : index
      %c0_15 = arith.constant 0 : index
      %18 = vector.load %arg6[%c0_14, %c0_15] : memref<56x256xf32, #tpu.memory_space<vmem>>, vector<56x256xf32>
      tpu.vector_store %arg6[%c0_14, %c0_15], %17 {strides = array<i32>} : memref<56x256xf32, #tpu.memory_space<vmem>>, vector<56x256xf32>,
    } else {
    }
    return
  }
  func.func @transform_0(%arg0: i32, %arg1: i32, %arg2: i32) -> (i32, i32) {
    %c0_i32 = arith.constant 0 : i32
    return %arg0, %arg2 : i32, i32
  }
  func.func @transform_1(%arg0: i32, %arg1: i32, %arg2: i32) -> (i32, i32) {
    %c0_i32 = arith.constant 0 : i32
    return %arg2, %arg1 : i32, i32
  }
  func.func @transform_2(%arg0: i32, %arg1: i32, %arg2: i32) -> (i32, i32) {
    %c0_i32 = arith.constant 0 : i32
    %c0_i32_0 = arith.constant 0 : i32
    return %c0_i32, %arg1 : i32, i32
  }
  func.func @transform_3(%arg0: i32, %arg1: i32, %arg2: i32) -> (i32, i32) {
    %c0_i32 = arith.constant 0 : i32
    return %arg0, %arg1 : i32, i32
  }
}

module attributes {stable_mosaic.version = 11 : i64} {
  func.func @_matmul_bias_kernel(%arg0: i32, %arg1: i32, %arg2: i32, %arg3: memref<56x384xbf16, #tpu.memory_space<vmem>>, %arg4: memref<384x256xbf16, #tpu.memory_space<vmem>>, %arg5: memref<1x256xf32, #tpu.memory_space<vmem>>, %arg6: memref<56x256xf32, #tpu.memory_space<vmem>>) attributes {dimension_semantics = [#tpu.dimension_semantics<parallel>, #tpu.dimension_semantics<parallel>, #tpu.dimension_semantics<arbitrary>], iteration_bounds = array<i64: 1, 1, 6>, scalar_prefetch = 0 : i64, scratch_operands = 0 : i64, tpu.core_type = #tpu.core_type<tc>, window_params = [{transform_indices = @transform_0, window_bounds = array<i64: 56, 384>}, {transform_indices = @transform_1, window_bounds = array<i64: 384, 256>}, {transform_indices = @transform_2, window_bounds = array<i64: 1, 256>}, {transform_indices = @transform_3, window_bounds = array<i64: 56, 256>}]} {
    %c0_i32 = arith.constant 0 : i32
    %0 = arith.cmpi eq, %arg2, %c0_i32 : i32
    %1 = arith.extui %0 : i1 to i32
    %c0_i32_0 = arith.constant 0 : i32
    %2 = arith.cmpi ne, %1, %c0_i32_0 : i32
    scf.if %2 {
      %cst_9 = arith.constant 0.000000e+00 : f32
      %12 = vector.broadcast %cst_9 : f32 to vector<56x256xf32>
      %c0_10 = arith.constant 0 : index
      %c0_11 = arith.constant 0 : index
      %13 = vector.load %arg6[%c0_10, %c0_11] : memref<56x256xf32, #tpu.memory_space<vmem>>, vector<56x256xf32>
      tpu.vector_store %arg6[%c0_10, %c0_11], %12 {strides = array<i32>} : memref<56x256xf32, #tpu.memory_space<vmem>>, vector<56x256xf32>,
    } else {
    }
    %c0 = arith.constant 0 : index
    %c0_1 = arith.constant 0 : index
    %3 = vector.load %arg6[%c0, %c0_1] : memref<56x256xf32, #tpu.memory_space<vmem>>, vector<56x256xf32>
    %c0_2 = arith.constant 0 : index
    %c0_3 = arith.constant 0 : index
    %4 = vector.load %arg3[%c0_2, %c0_3] : memref<56x384xbf16, #tpu.memory_space<vmem>>, vector<56x384xbf16>
    %c0_4 = arith.constant 0 : index
    %c0_5 = arith.constant 0 : index
    %5 = vector.load %arg4[%c0_4, %c0_5] : memref<384x256xbf16, #tpu.memory_space<vmem>>, vector<384x256xbf16>
    %cst = arith.constant dense<0.000000e+00> : vector<56x256xf32>
    %6 = tpu.matmul %4, %5, %cst {dimension_numbers = #tpu.dot_dimension_numbers<[1], [0], [0], [1], [0, 0, 1, 1], [], []>} : vector<56x384xbf16>, vector<384x256xbf16>, vector<56x256xf32> -> vector<56x256xf32>
    %7 = arith.addf %3, %6 : vector<56x256xf32>
    %c0_6 = arith.constant 0 : index
    %c0_7 = arith.constant 0 : index
    %8 = vector.load %arg6[%c0_6, %c0_7] : memref<56x256xf32, #tpu.memory_space<vmem>>, vector<56x256xf32>
    tpu.vector_store %arg6[%c0_6, %c0_7], %7 {strides = array<i32>} : memref<56x256xf32, #tpu.memory_space<vmem>>, vector<56x256xf32>,
    %c5_i32 = arith.constant 5 : i32
    %9 = arith.cmpi eq, %arg2, %c5_i32 : i32
    %10 = arith.extui %9 : i1 to i32
    %c0_i32_8 = arith.constant 0 : i32
    %11 = arith.cmpi ne, %10, %c0_i32_8 : i32
    scf.if %11 {
      %c0_9 = arith.constant 0 : index
      %c0_10 = arith.constant 0 : index
      %12 = vector.load %arg6[%c0_9, %c0_10] : memref<56x256xf32, #tpu.memory_space<vmem>>, vector<56x256xf32>
      %c0_11 = arith.constant 0 : index
      %c0_12 = arith.constant 0 : index
      %13 = vector.load %arg5[%c0_11, %c0_12] : memref<1x256xf32, #tpu.memory_space<vmem>>, vector<1x256xf32>
      %14 = vector.broadcast %13 : vector<1x256xf32> to vector<56x256xf32>
      %15 = arith.addf %12, %14 : vector<56x256xf32>
      %cst_13 = arith.constant 0.000000e+00 : f32
      %16 = vector.broadcast %cst_13 : f32 to vector<56x256xf32>
      %17 = arith.maximumf %15, %16 : vector<56x256xf32>
      %c0_14 = arith.constant 0 : index
      %c0_15 = arith.constant 0 : index
      %18 = vector.load %arg6[%c0_14, %c0_15] : memref<56x256xf32, #tpu.memory_space<vmem>>, vector<56x256xf32>
      tpu.vector_store %arg6[%c0_14, %c0_15], %17 {strides = array<i32>} : memref<56x256xf32, #tpu.memory_space<vmem>>, vector<56x256xf32>,
    } else {
    }
    return
  }
  func.func @transform_0(%arg0: i32, %arg1: i32, %arg2: i32) -> (i32, i32) {
    %c0_i32 = arith.constant 0 : i32
    return %arg0, %arg2 : i32, i32
  }
  func.func @transform_1(%arg0: i32, %arg1: i32, %arg2: i32) -> (i32, i32) {
    %c0_i32 = arith.constant 0 : i32
    return %arg2, %arg1 : i32, i32
  }
  func.func @transform_2(%arg0: i32, %arg1: i32, %arg2: i32) -> (i32, i32) {
    %c0_i32 = arith.constant 0 : i32
    %c0_i32_0 = arith.constant 0 : i32
    return %c0_i32, %arg1 : i32, i32
  }
  func.func @transform_3(%arg0: i32, %arg1: i32, %arg2: i32) -> (i32, i32) {
    %c0_i32 = arith.constant 0 : i32
    return %arg0, %arg1 : i32, i32
  }
}

module attributes {stable_mosaic.version = 11 : i64} {
  func.func @_matmul_bias_kernel(%arg0: i32, %arg1: i32, %arg2: i32, %arg3: memref<8x384xbf16, #tpu.memory_space<vmem>>, %arg4: memref<384x256xbf16, #tpu.memory_space<vmem>>, %arg5: memref<1x256xf32, #tpu.memory_space<vmem>>, %arg6: memref<8x256xf32, #tpu.memory_space<vmem>>) attributes {dimension_semantics = [#tpu.dimension_semantics<parallel>, #tpu.dimension_semantics<parallel>, #tpu.dimension_semantics<arbitrary>], iteration_bounds = array<i64: 1, 2, 150>, scalar_prefetch = 0 : i64, scratch_operands = 0 : i64, tpu.core_type = #tpu.core_type<tc>, window_params = [{transform_indices = @transform_0, window_bounds = array<i64: 8, 384>}, {transform_indices = @transform_1, window_bounds = array<i64: 384, 256>}, {transform_indices = @transform_2, window_bounds = array<i64: 1, 256>}, {transform_indices = @transform_3, window_bounds = array<i64: 8, 256>}]} {
    %c0_i32 = arith.constant 0 : i32
    %0 = arith.cmpi eq, %arg2, %c0_i32 : i32
    %1 = arith.extui %0 : i1 to i32
    %c0_i32_0 = arith.constant 0 : i32
    %2 = arith.cmpi ne, %1, %c0_i32_0 : i32
    scf.if %2 {
      %cst_9 = arith.constant 0.000000e+00 : f32
      %12 = vector.broadcast %cst_9 : f32 to vector<8x256xf32>
      %c0_10 = arith.constant 0 : index
      %c0_11 = arith.constant 0 : index
      %13 = vector.load %arg6[%c0_10, %c0_11] : memref<8x256xf32, #tpu.memory_space<vmem>>, vector<8x256xf32>
      tpu.vector_store %arg6[%c0_10, %c0_11], %12 {strides = array<i32>} : memref<8x256xf32, #tpu.memory_space<vmem>>, vector<8x256xf32>,
    } else {
    }
    %c0 = arith.constant 0 : index
    %c0_1 = arith.constant 0 : index
    %3 = vector.load %arg6[%c0, %c0_1] : memref<8x256xf32, #tpu.memory_space<vmem>>, vector<8x256xf32>
    %c0_2 = arith.constant 0 : index
    %c0_3 = arith.constant 0 : index
    %4 = vector.load %arg3[%c0_2, %c0_3] : memref<8x384xbf16, #tpu.memory_space<vmem>>, vector<8x384xbf16>
    %c0_4 = arith.constant 0 : index
    %c0_5 = arith.constant 0 : index
    %5 = vector.load %arg4[%c0_4, %c0_5] : memref<384x256xbf16, #tpu.memory_space<vmem>>, vector<384x256xbf16>
    %cst = arith.constant dense<0.000000e+00> : vector<8x256xf32>
    %6 = tpu.matmul %4, %5, %cst {dimension_numbers = #tpu.dot_dimension_numbers<[1], [0], [0], [1], [0, 0, 1, 1], [], []>} : vector<8x384xbf16>, vector<384x256xbf16>, vector<8x256xf32> -> vector<8x256xf32>
    %7 = arith.addf %3, %6 : vector<8x256xf32>
    %c0_6 = arith.constant 0 : index
    %c0_7 = arith.constant 0 : index
    %8 = vector.load %arg6[%c0_6, %c0_7] : memref<8x256xf32, #tpu.memory_space<vmem>>, vector<8x256xf32>
    tpu.vector_store %arg6[%c0_6, %c0_7], %7 {strides = array<i32>} : memref<8x256xf32, #tpu.memory_space<vmem>>, vector<8x256xf32>,
    %c149_i32 = arith.constant 149 : i32
    %9 = arith.cmpi eq, %arg2, %c149_i32 : i32
    %10 = arith.extui %9 : i1 to i32
    %c0_i32_8 = arith.constant 0 : i32
    %11 = arith.cmpi ne, %10, %c0_i32_8 : i32
    scf.if %11 {
      %c0_9 = arith.constant 0 : index
      %c0_10 = arith.constant 0 : index
      %12 = vector.load %arg6[%c0_9, %c0_10] : memref<8x256xf32, #tpu.memory_space<vmem>>, vector<8x256xf32>
      %c0_11 = arith.constant 0 : index
      %c0_12 = arith.constant 0 : index
      %13 = vector.load %arg5[%c0_11, %c0_12] : memref<1x256xf32, #tpu.memory_space<vmem>>, vector<1x256xf32>
      %14 = vector.broadcast %13 : vector<1x256xf32> to vector<8x256xf32>
      %15 = arith.addf %12, %14 : vector<8x256xf32>
      %cst_13 = arith.constant 0.000000e+00 : f32
      %16 = vector.broadcast %cst_13 : f32 to vector<8x256xf32>
      %17 = arith.maximumf %15, %16 : vector<8x256xf32>
      %c0_14 = arith.constant 0 : index
      %c0_15 = arith.constant 0 : index
      %18 = vector.load %arg6[%c0_14, %c0_15] : memref<8x256xf32, #tpu.memory_space<vmem>>, vector<8x256xf32>
      tpu.vector_store %arg6[%c0_14, %c0_15], %17 {strides = array<i32>} : memref<8x256xf32, #tpu.memory_space<vmem>>, vector<8x256xf32>,
    } else {
    }
    return
  }
  func.func @transform_0(%arg0: i32, %arg1: i32, %arg2: i32) -> (i32, i32) {
    %c0_i32 = arith.constant 0 : i32
    return %arg0, %arg2 : i32, i32
  }
  func.func @transform_1(%arg0: i32, %arg1: i32, %arg2: i32) -> (i32, i32) {
    %c0_i32 = arith.constant 0 : i32
    return %arg2, %arg1 : i32, i32
  }
  func.func @transform_2(%arg0: i32, %arg1: i32, %arg2: i32) -> (i32, i32) {
    %c0_i32 = arith.constant 0 : i32
    %c0_i32_0 = arith.constant 0 : i32
    return %c0_i32, %arg1 : i32, i32
  }
  func.func @transform_3(%arg0: i32, %arg1: i32, %arg2: i32) -> (i32, i32) {
    %c0_i32 = arith.constant 0 : i32
    return %arg0, %arg1 : i32, i32
  }
}

module attributes {stable_mosaic.version = 11 : i64} {
  func.func @_matmul_bias_kernel(%arg0: i32, %arg1: i32, %arg2: i32, %arg3: memref<8x512xbf16, #tpu.memory_space<vmem>>, %arg4: memref<512x256xbf16, #tpu.memory_space<vmem>>, %arg5: memref<1x256xf32, #tpu.memory_space<vmem>>, %arg6: memref<8x256xf32, #tpu.memory_space<vmem>>) attributes {dimension_semantics = [#tpu.dimension_semantics<parallel>, #tpu.dimension_semantics<parallel>, #tpu.dimension_semantics<arbitrary>], iteration_bounds = array<i64: 1, 2, 1>, scalar_prefetch = 0 : i64, scratch_operands = 0 : i64, tpu.core_type = #tpu.core_type<tc>, window_params = [{transform_indices = @transform_0, window_bounds = array<i64: 8, 512>}, {transform_indices = @transform_1, window_bounds = array<i64: 512, 256>}, {transform_indices = @transform_2, window_bounds = array<i64: 1, 256>}, {transform_indices = @transform_3, window_bounds = array<i64: 8, 256>}]} {
    %c0_i32 = arith.constant 0 : i32
    %0 = arith.cmpi eq, %arg2, %c0_i32 : i32
    %1 = arith.extui %0 : i1 to i32
    %c0_i32_0 = arith.constant 0 : i32
    %2 = arith.cmpi ne, %1, %c0_i32_0 : i32
    scf.if %2 {
      %cst_10 = arith.constant 0.000000e+00 : f32
      %12 = vector.broadcast %cst_10 : f32 to vector<8x256xf32>
      %c0_11 = arith.constant 0 : index
      %c0_12 = arith.constant 0 : index
      %13 = vector.load %arg6[%c0_11, %c0_12] : memref<8x256xf32, #tpu.memory_space<vmem>>, vector<8x256xf32>
      tpu.vector_store %arg6[%c0_11, %c0_12], %12 {strides = array<i32>} : memref<8x256xf32, #tpu.memory_space<vmem>>, vector<8x256xf32>,
    } else {
    }
    %c0 = arith.constant 0 : index
    %c0_1 = arith.constant 0 : index
    %3 = vector.load %arg6[%c0, %c0_1] : memref<8x256xf32, #tpu.memory_space<vmem>>, vector<8x256xf32>
    %c0_2 = arith.constant 0 : index
    %c0_3 = arith.constant 0 : index
    %4 = vector.load %arg3[%c0_2, %c0_3] : memref<8x512xbf16, #tpu.memory_space<vmem>>, vector<8x512xbf16>
    %c0_4 = arith.constant 0 : index
    %c0_5 = arith.constant 0 : index
    %5 = vector.load %arg4[%c0_4, %c0_5] : memref<512x256xbf16, #tpu.memory_space<vmem>>, vector<512x256xbf16>
    %cst = arith.constant dense<0.000000e+00> : vector<8x256xf32>
    %6 = tpu.matmul %4, %5, %cst {dimension_numbers = #tpu.dot_dimension_numbers<[1], [0], [0], [1], [0, 0, 1, 1], [], []>} : vector<8x512xbf16>, vector<512x256xbf16>, vector<8x256xf32> -> vector<8x256xf32>
    %7 = arith.addf %3, %6 : vector<8x256xf32>
    %c0_6 = arith.constant 0 : index
    %c0_7 = arith.constant 0 : index
    %8 = vector.load %arg6[%c0_6, %c0_7] : memref<8x256xf32, #tpu.memory_space<vmem>>, vector<8x256xf32>
    tpu.vector_store %arg6[%c0_6, %c0_7], %7 {strides = array<i32>} : memref<8x256xf32, #tpu.memory_space<vmem>>, vector<8x256xf32>,
    %c0_i32_8 = arith.constant 0 : i32
    %9 = arith.cmpi eq, %arg2, %c0_i32_8 : i32
    %10 = arith.extui %9 : i1 to i32
    %c0_i32_9 = arith.constant 0 : i32
    %11 = arith.cmpi ne, %10, %c0_i32_9 : i32
    scf.if %11 {
      %c0_10 = arith.constant 0 : index
      %c0_11 = arith.constant 0 : index
      %12 = vector.load %arg6[%c0_10, %c0_11] : memref<8x256xf32, #tpu.memory_space<vmem>>, vector<8x256xf32>
      %c0_12 = arith.constant 0 : index
      %c0_13 = arith.constant 0 : index
      %13 = vector.load %arg5[%c0_12, %c0_13] : memref<1x256xf32, #tpu.memory_space<vmem>>, vector<1x256xf32>
      %14 = vector.broadcast %13 : vector<1x256xf32> to vector<8x256xf32>
      %15 = arith.addf %12, %14 : vector<8x256xf32>
      %cst_14 = arith.constant 0.000000e+00 : f32
      %16 = vector.broadcast %cst_14 : f32 to vector<8x256xf32>
      %17 = arith.maximumf %15, %16 : vector<8x256xf32>
      %c0_15 = arith.constant 0 : index
      %c0_16 = arith.constant 0 : index
      %18 = vector.load %arg6[%c0_15, %c0_16] : memref<8x256xf32, #tpu.memory_space<vmem>>, vector<8x256xf32>
      tpu.vector_store %arg6[%c0_15, %c0_16], %17 {strides = array<i32>} : memref<8x256xf32, #tpu.memory_space<vmem>>, vector<8x256xf32>,
    } else {
    }
    return
  }
  func.func @transform_0(%arg0: i32, %arg1: i32, %arg2: i32) -> (i32, i32) {
    %c0_i32 = arith.constant 0 : i32
    return %arg0, %arg2 : i32, i32
  }
  func.func @transform_1(%arg0: i32, %arg1: i32, %arg2: i32) -> (i32, i32) {
    %c0_i32 = arith.constant 0 : i32
    return %arg2, %arg1 : i32, i32
  }
  func.func @transform_2(%arg0: i32, %arg1: i32, %arg2: i32) -> (i32, i32) {
    %c0_i32 = arith.constant 0 : i32
    %c0_i32_0 = arith.constant 0 : i32
    return %c0_i32, %arg1 : i32, i32
  }
  func.func @transform_3(%arg0: i32, %arg1: i32, %arg2: i32) -> (i32, i32) {
    %c0_i32 = arith.constant 0 : i32
    return %arg0, %arg1 : i32, i32
  }
}

module attributes {stable_mosaic.version = 11 : i64} {
  func.func @_wsddn_head_kernel(%arg0: i32, %arg1: memref<8x512xf32, #tpu.memory_space<vmem>>, %arg2: memref<512x20xf32, #tpu.memory_space<vmem>>, %arg3: memref<1x20xf32, #tpu.memory_space<vmem>>, %arg4: memref<512x20xf32, #tpu.memory_space<vmem>>, %arg5: memref<1x20xf32, #tpu.memory_space<vmem>>, %arg6: memref<8x20xf32, #tpu.memory_space<vmem>>) attributes {dimension_semantics = [#tpu.dimension_semantics<arbitrary>], iteration_bounds = array<i64: 1>, scalar_prefetch = 0 : i64, scratch_operands = 0 : i64, tpu.core_type = #tpu.core_type<tc>, window_params = [{pipeline_mode = #tpu.pipeline_mode<synchronous>, transform_indices = @transform_0, window_bounds = array<i64: 8, 512>}, {pipeline_mode = #tpu.pipeline_mode<synchronous>, transform_indices = @transform_1, window_bounds = array<i64: 512, 20>}, {pipeline_mode = #tpu.pipeline_mode<synchronous>, transform_indices = @transform_2, window_bounds = array<i64: 1, 20>}, {pipeline_mode = #tpu.pipeline_mode<synchronous>, transform_indices = @transform_3, window_bounds = array<i64: 512, 20>}, {pipeline_mode = #tpu.pipeline_mode<synchronous>, transform_indices = @transform_4, window_bounds = array<i64: 1, 20>}, {pipeline_mode = #tpu.pipeline_mode<synchronous>, transform_indices = @transform_5, window_bounds = array<i64: 8, 20>}]} {
    %c0 = arith.constant 0 : index
    %c0_0 = arith.constant 0 : index
    %0 = vector.load %arg1[%c0, %c0_0] : memref<8x512xf32, #tpu.memory_space<vmem>>, vector<8x512xf32>
    %c0_1 = arith.constant 0 : index
    %c0_2 = arith.constant 0 : index
    %1 = vector.load %arg2[%c0_1, %c0_2] : memref<512x20xf32, #tpu.memory_space<vmem>>, vector<512x20xf32>
    %cst = arith.constant dense<0.000000e+00> : vector<8x20xf32>
    %2 = tpu.matmul %0, %1, %cst {dimension_numbers = #tpu.dot_dimension_numbers<[1], [0], [0], [1], [0, 0, 1, 1], [], []>} : vector<8x512xf32>, vector<512x20xf32>, vector<8x20xf32> -> vector<8x20xf32>
    %c0_3 = arith.constant 0 : index
    %c0_4 = arith.constant 0 : index
    %3 = vector.load %arg3[%c0_3, %c0_4] : memref<1x20xf32, #tpu.memory_space<vmem>>, vector<1x20xf32>
    %4 = vector.broadcast %3 : vector<1x20xf32> to vector<8x20xf32>
    %5 = arith.addf %2, %4 : vector<8x20xf32>
    %cst_5 = arith.constant dense<0xFF800000> : vector<8xf32>
    %6 = vector.multi_reduction <maximumf>, %5, %cst_5 [1] : vector<8x20xf32> to vector<8xf32>
    %7 = vector.shape_cast %6 : vector<8xf32> to vector<8x1xf32>
    %8 = vector.broadcast %7 : vector<8x1xf32> to vector<8x20xf32>
    %9 = arith.subf %5, %8 : vector<8x20xf32>
    %10 = math.exp %9 : vector<8x20xf32>
    %cst_6 = arith.constant dense<0.000000e+00> : vector<8xf32>
    %11 = vector.multi_reduction <add>, %10, %cst_6 [1] : vector<8x20xf32> to vector<8xf32>
    %12 = vector.shape_cast %11 : vector<8xf32> to vector<8x1xf32>
    %13 = vector.broadcast %12 : vector<8x1xf32> to vector<8x20xf32>
    %14 = arith.divf %10, %13 : vector<8x20xf32>
    %c0_7 = arith.constant 0 : index
    %c0_8 = arith.constant 0 : index
    %15 = vector.load %arg4[%c0_7, %c0_8] : memref<512x20xf32, #tpu.memory_space<vmem>>, vector<512x20xf32>
    %cst_9 = arith.constant dense<0.000000e+00> : vector<8x20xf32>
    %16 = tpu.matmul %0, %15, %cst_9 {dimension_numbers = #tpu.dot_dimension_numbers<[1], [0], [0], [1], [0, 0, 1, 1], [], []>} : vector<8x512xf32>, vector<512x20xf32>, vector<8x20xf32> -> vector<8x20xf32>
    %c0_10 = arith.constant 0 : index
    %c0_11 = arith.constant 0 : index
    %17 = vector.load %arg5[%c0_10, %c0_11] : memref<1x20xf32, #tpu.memory_space<vmem>>, vector<1x20xf32>
    %18 = vector.broadcast %17 : vector<1x20xf32> to vector<8x20xf32>
    %19 = arith.addf %16, %18 : vector<8x20xf32>
    %cst_12 = arith.constant dense<0xFF800000> : vector<20xf32>
    %20 = vector.multi_reduction <maximumf>, %19, %cst_12 [0] : vector<8x20xf32> to vector<20xf32>
    %21 = vector.shape_cast %20 : vector<20xf32> to vector<1x20xf32>
    %22 = vector.broadcast %21 : vector<1x20xf32> to vector<8x20xf32>
    %23 = arith.subf %19, %22 : vector<8x20xf32>
    %24 = math.exp %23 : vector<8x20xf32>
    %cst_13 = arith.constant dense<0.000000e+00> : vector<20xf32>
    %25 = vector.multi_reduction <add>, %24, %cst_13 [0] : vector<8x20xf32> to vector<20xf32>
    %26 = vector.shape_cast %25 : vector<20xf32> to vector<1x20xf32>
    %27 = vector.broadcast %26 : vector<1x20xf32> to vector<8x20xf32>
    %28 = arith.divf %24, %27 : vector<8x20xf32>
    %29 = arith.mulf %14, %28 : vector<8x20xf32>
    %c0_14 = arith.constant 0 : index
    %c0_15 = arith.constant 0 : index
    %30 = vector.load %arg6[%c0_14, %c0_15] : memref<8x20xf32, #tpu.memory_space<vmem>>, vector<8x20xf32>
    tpu.vector_store %arg6[%c0_14, %c0_15], %29 {strides = array<i32>} : memref<8x20xf32, #tpu.memory_space<vmem>>, vector<8x20xf32>,
    return
  }
  func.func @transform_0(%arg0: i32) -> (i32, i32) {
    %c0_i32 = arith.constant 0 : i32
    %c0_i32_0 = arith.constant 0 : i32
    %c0_i32_1 = arith.constant 0 : i32
    return %c0_i32, %c0_i32_0 : i32, i32
  }
  func.func @transform_1(%arg0: i32) -> (i32, i32) {
    %c0_i32 = arith.constant 0 : i32
    %c0_i32_0 = arith.constant 0 : i32
    %c0_i32_1 = arith.constant 0 : i32
    return %c0_i32, %c0_i32_0 : i32, i32
  }
  func.func @transform_2(%arg0: i32) -> (i32, i32) {
    %c0_i32 = arith.constant 0 : i32
    %c0_i32_0 = arith.constant 0 : i32
    %c0_i32_1 = arith.constant 0 : i32
    return %c0_i32, %c0_i32_0 : i32, i32
  }
  func.func @transform_3(%arg0: i32) -> (i32, i32) {
    %c0_i32 = arith.constant 0 : i32
    %c0_i32_0 = arith.constant 0 : i32
    %c0_i32_1 = arith.constant 0 : i32
    return %c0_i32, %c0_i32_0 : i32, i32
  }
  func.func @transform_4(%arg0: i32) -> (i32, i32) {
    %c0_i32 = arith.constant 0 : i32
    %c0_i32_0 = arith.constant 0 : i32
    %c0_i32_1 = arith.constant 0 : i32
    return %c0_i32, %c0_i32_0 : i32, i32
  }
  func.func @transform_5(%arg0: i32) -> (i32, i32) {
    %c0_i32 = arith.constant 0 : i32
    %c0_i32_0 = arith.constant 0 : i32
    %c0_i32_1 = arith.constant 0 : i32
    return %c0_i32, %c0_i32_0 : i32, i32
  }
}

</mosaic_0001>

<llo_original>
// kernel: wsddn_forward.8
$region0: #{wsddn_forward.8}
  #allocation0 [shape = 'u32[]', space=smem, size = 0x4, offset = 0x4, fixed_abs, tag = 'smem constant byte address 0x4 - core index']
  #allocation1 [shape = 'u32[72,128]{1,0:T(1,128)}', space=vmem, size = 0x9000, scoped, tag = 'internal scratch']
  %s0 = inlined_call_operand.vmem [shape: bf16[1024,384], index: 0, kind: input, shape index: {}]
  %s1 = inlined_call_operand.vmem [shape: bf16[384,128], index: 1, kind: input, shape index: {}]
  %s2 = inlined_call_operand.vmem [shape: f32[1,128], index: 2, kind: input, shape index: {}]
  %s3 = inlined_call_operand.vmem [shape: f32[1024,128], index: 3, kind: output, shape index: {}]
  %s4 = sld [smem:[#allocation0]]
  $region53: #{wsddn_forward.8} parent=0
    _
  %s6 = ssub.s32 1, %s4
  %s7 = scalar_select 0, %s6, %s4
  loop: start=0, step=1, limit=6
  $region2: #{wsddn_forward.8} parent=0 // loop_pre_header
    _
  $region3: #{wsddn_forward.8} parent=0 // loop_header
    %s9 = sphi 0, %s13
    %p10 = scmp.ge.s32.totalorder %s9, 6
    %s16 = sphi 0, %s35
    %s17 = sphi 0, %s31
    %s18 = sphi 0, %s27
    %s19 = sphi 0, %s16
    %s20 = sphi 0, %s17
    %s21 = sphi 0, %s18
    %s22 = sphi 0, %s19
    %s23 = sphi 0, %s20
    %s24 = sphi 0, %s21
    %s40 = sphi 0, %s42
    %s43 = sphi 0, %s40
    %s44 = sphi 0, %s43
    %s60 = sphi 0, %s44
    %s68 = sphi 0, %s70
    %s71 = sphi 0, %s68
    %s72 = sphi 0, %s71
    %s88 = sphi 0, %s72
    %s94 = sphi 0, %s96
    %s97 = sphi 0, %s94
    %s98 = sphi 0, %s97
    %s114 = sphi 0, %s98
    %s122 = sphi 0, %s124
    %s125 = sphi 0, %s122
    %s126 = sphi 0, %s125
    %s142 = sphi 0, %s126
  $region4: #{wsddn_forward.8} parent=0 // loop_header_branch
    %12 = sbr.rel (%p10) target = $region8
  $region5: #{wsddn_forward.8} parent=0 // loop_body
    %s14 = ssub.s32 %s9, 1
    %s15 = ssub.s32 %s9, 2
    %s25 = sadd.s32 1, %s18
    %p26 = scmp.ge.s32.totalorder %s25, 1
    %s27 = scalar_select %p26, 0, %s25
    %s28 = sadd.s32 1, %s17
    %s29 = scalar_select %p26, %s28, %s17
    %p30 = scmp.ge.s32.totalorder %s29, 1
    %s31 = scalar_select %p30, 0, %s29
    %s32 = sadd.s32 1, %s16
    %s33 = scalar_select %p30, %s32, %s16
    %p34 = scmp.ge.s32.totalorder %s33, 4
    %s35 = scalar_select %p34, 0, %s33
    %s36 = ssub.s32 %s16, %s35
    %s37 = ssub.s32 %s18, %s27
    %s38 = sor.u32 %s36, %s37
    %p39 = scmp.eq.s32.totalorder %s38, 0
    %s41 = sadd.s32 %s40, 1
    %s42 = scalar_select %p39, %s40, %s41
    %p45 = pneg %p39
    %p46 = scmp.eq.s32.totalorder %s9, 3
    %p47 = por %p45, %p46
    %p48 = scmp.ne.s32.totalorder %s40, %s43
    %p49 = scmp.eq.s32.totalorder %s9, 0
    %p50 = por %p48, %p49
    %p51 = scmp.ne.s32.totalorder %s40, %s43
    %p52 = scmp.eq.s32.totalorder %s14, 3
    %p53 = por %p51, %p52
    %p54 = scmp.ne.s32.totalorder %s43, %s44
    %p55 = scmp.eq.s32.totalorder %s14, 0
    %p56 = por %p54, %p55
    %p57 = scmp.ne.s32.totalorder %s43, %s44
    %p58 = scmp.eq.s32.totalorder %s15, 3
    %p59 = por %p57, %p58
    %p61 = scmp.ne.s32.totalorder %s44, %s60
    %p62 = scmp.eq.s32.totalorder %s15, 0
    %p63 = por %p61, %p62
    %s64 = ssub.s32 %s18, %s27
    %s65 = ssub.s32 %s17, %s31
    %s66 = sor.u32 %s64, %s65
    %p67 = scmp.eq.s32.totalorder %s66, 0
    %s69 = sadd.s32 %s68, 1
    %s70 = scalar_select %p67, %s68, %s69
    %p73 = pneg %p67
    %p74 = scmp.eq.s32.totalorder %s9, 3
    %p75 = por %p73, %p74
    %p76 = scmp.ne.s32.totalorder %s68, %s71
    %p77 = scmp.eq.s32.totalorder %s9, 0
    %p78 = por %p76, %p77
    %p79 = scmp.ne.s32.totalorder %s68, %s71
    %p80 = scmp.eq.s32.totalorder %s14, 3
    %p81 = por %p79, %p80
    %p82 = scmp.ne.s32.totalorder %s71, %s72
    %p83 = scmp.eq.s32.totalorder %s14, 0
    %p84 = por %p82, %p83
    %p85 = scmp.ne.s32.totalorder %s71, %s72
    %p86 = scmp.eq.s32.totalorder %s15, 3
    %p87 = por %p85, %p86
    %p89 = scmp.ne.s32.totalorder %s72, %s88
    %p90 = scmp.eq.s32.totalorder %s15, 0
    %p91 = por %p89, %p90
    %s92 = ssub.s32 %s17, %s31
    %p93 = scmp.eq.s32.totalorder %s92, 0
    %s95 = sadd.s32 %s94, 1
    %s96 = scalar_select %p93, %s94, %s95
    %p99 = pneg %p93
    %p100 = scmp.eq.s32.totalorder %s9, 3
    %p101 = por %p99, %p100
    %p102 = scmp.ne.s32.totalorder %s94, %s97
    %p103 = scmp.eq.s32.totalorder %s9, 0
    %p104 = por %p102, %p103
    %p105 = scmp.ne.s32.totalorder %s94, %s97
    %p106 = scmp.eq.s32.totalorder %s14, 3
    %p107 = por %p105, %p106
    %p108 = scmp.ne.s32.totalorder %s97, %s98
    %p109 = scmp.eq.s32.totalorder %s14, 0
    %p110 = por %p108, %p109
    %p111 = scmp.ne.s32.totalorder %s97, %s98
    %p112 = scmp.eq.s32.totalorder %s15, 3
    %p113 = por %p111, %p112
    %p115 = scmp.ne.s32.totalorder %s98, %s114
    %p116 = scmp.eq.s32.totalorder %s15, 0
    %p117 = por %p115, %p116
    %s118 = ssub.s32 %s16, %s35
    %s119 = ssub.s32 %s17, %s31
    %s120 = sor.u32 %s118, %s119
    %p121 = scmp.eq.s32.totalorder %s120, 0
    %s123 = sadd.s32 %s122, 1
    %s124 = scalar_select %p121, %s122, %s123
    %p127 = pneg %p121
    %p128 = scmp.eq.s32.totalorder %s9, 3
    %p129 = por %p127, %p128
    %p130 = scmp.ne.s32.totalorder %s122, %s125
    %p131 = scmp.eq.s32.totalorder %s9, 0
    %p132 = por %p130, %p131
    %p133 = scmp.ne.s32.totalorder %s122, %s125
    %p134 = scmp.eq.s32.totalorder %s14, 3
    %p135 = por %p133, %p134
    %p136 = scmp.ne.s32.totalorder %s125, %s126
    %p137 = scmp.eq.s32.totalorder %s14, 0
    %p138 = por %p136, %p137
    %p139 = scmp.ne.s32.totalorder %s125, %s126
    %p140 = scmp.eq.s32.totalorder %s15, 3
    %p141 = por %p139, %p140
    %p143 = scmp.ne.s32.totalorder %s126, %s142
    %p144 = scmp.eq.s32.totalorder %s15, 0
    %p145 = por %p143, %p144
    %p146 = scmp.le.s32.totalorder 1, %s9
    %p147 = scmp.lt.s32.totalorder %s9, 5
    %p148 = pnand %p146, %p147
    %p149 = pneg %p148
    // Predicated region
    $region9: #{wsddn_forward.8} parent=5 // pred_check
      _
    $region10: #{wsddn_forward.8} parent=5 // pred_check_branch
      %151 = sbr.rel (%p148) target = $region12
    $region11: #{wsddn_forward.8} parent=5 // pred_region
      %s152 = ssub.s32 %s9, 1
      // Predicated region
      $region13: #{wsddn_forward.8} parent=11 // pred_check
        %p153 = pneg %p84
      $region14: #{wsddn_forward.8} parent=11 // pred_check_branch
        %155 = sbr.rel (%p153) target = $region16
      $region15: #{wsddn_forward.8} parent=11 // pred_region
        %s156 = smul.u32 48, %s21
        %p157 = scmp.lt.s32.totalorder %s156, 47
        %s158 = scalar_select %p157, %s156, 47
        %p159 = scmp.lt.s32.totalorder %s20, 0
        %s160 = scalar_select %p159, %s20, 0
        %s161 = sadd.s32 %s160, %s158
        %s162 = smul.addr %s161, 4
        %s163 = scalar_lea.vmem %s1, %s162
        %s164 = smul.u32 48, %s21
      $region16: #{wsddn_forward.8} parent=11 // pred_fallthru
        _
      // Predicated region
      $region17: #{wsddn_forward.8} parent=11 // pred_check
        %p165 = pneg %p110
      $region18: #{wsddn_forward.8} parent=11 // pred_check_branch
        %167 = sbr.rel (%p165) target = $region20
      $region19: #{wsddn_forward.8} parent=11 // pred_region
        %p168 = scmp.lt.s32.totalorder %s20, 0
        %s169 = scalar_select %p168, %s20, 0
        %s170 = scalar_lea.vmem %s2, %s169
      $region20: #{wsddn_forward.8} parent=11 // pred_fallthru
        _
    $region12: #{wsddn_forward.8} parent=5 // pred_fallthru
      _
    %p171 = scmp.lt.s32.totalorder %s9, 4
    // Predicated region
    $region21: #{wsddn_forward.8} parent=5 // pred_check
      %p172 = pneg %p171
    $region22: #{wsddn_forward.8} parent=5 // pred_check_branch
      %174 = sbr.rel (%p172) target = $region24
    $region23: #{wsddn_forward.8} parent=5 // pred_region
      // Predicated region
      $region25: #{wsddn_forward.8} parent=23 // pred_check
        %p175 = pneg %p50
      $region26: #{wsddn_forward.8} parent=23 // pred_check_branch
        %177 = sbr.rel (%p175) target = $region28
      $region27: #{wsddn_forward.8} parent=23 // pred_region
        %s178 = smul.u32 32, %s16
        %s179 = smul.u32 3, %s18
        %p180 = scmp.lt.s32.totalorder %s178, 127
        %s181 = scalar_select %p180, %s178, 127
        %p182 = scmp.lt.s32.totalorder %s179, 2
        %s183 = scalar_select %p182, %s179, 2
        %s184 = smul.addr %s181, 3
        %s185 = sadd.s32 %s183, %s184
        %s186 = smul.addr %s185, 4
        %s187 = scalar_lea.vmem %s0, %s186
        %s188 = smul.u32 32, %s16
        %s189 = smul.u32 3, %s18
      $region28: #{wsddn_forward.8} parent=23 // pred_fallthru
        _
    $region24: #{wsddn_forward.8} parent=5 // pred_fallthru
      _
    %p190 = scmp.le.s32.totalorder 1, %s9
    %p191 = scmp.lt.s32.totalorder %s9, 5
    %p192 = pnand %p190, %p191
    %p193 = pneg %p192
    // Predicated region
    $region29: #{wsddn_forward.8} parent=5 // pred_check
      _
    $region30: #{wsddn_forward.8} parent=5 // pred_check_branch
      %195 = sbr.rel (%p192) target = $region32
    $region31: #{wsddn_forward.8} parent=5 // pred_region
      %s196 = ssub.s32 %s9, 1
      %s197 = smul.u32 32, %s19
      %s198 = smul.u32 3, %s21
      %p199 = scmp.lt.s32.totalorder %s197, 127
      %s200 = scalar_select %p199, %s197, 127
      %p201 = scmp.lt.s32.totalorder %s198, 2
      %s202 = scalar_select %p201, %s198, 2
      %s203 = smul.addr %s200, 3
      %s204 = sadd.s32 %s202, %s203
      %s205 = smul.addr %s204, 4
      %s206 = scalar_lea.vmem %s0, %s205
      %p207 = pneg %p56
      %p208 = pneg %p53
      %s209 = smul.u32 48, %s21
      %p210 = scmp.lt.s32.totalorder %s209, 47
      %s211 = scalar_select %p210, %s209, 47
      %p212 = scmp.lt.s32.totalorder %s20, 0
      %s213 = scalar_select %p212, %s20, 0
      %s214 = sadd.s32 %s213, %s211
      %s215 = smul.addr %s214, 4
      %s216 = scalar_lea.vmem %s1, %s215
      %p217 = pneg %p84
      %p218 = pneg %p81
      %p219 = scmp.lt.s32.totalorder %s20, 0
      %s220 = scalar_select %p219, %s20, 0
      %s221 = scalar_lea.vmem %s2, %s220
      %p222 = pneg %p110
      %p223 = pneg %p107
      %p224 = pneg %p138
      %p225 = pneg %p135
      %s226 = smul.u32 32, %s19
      %p227 = scmp.lt.s32.totalorder %s226, 127
      %s228 = scalar_select %p227, %s226, 127
      %p229 = scmp.lt.s32.totalorder %s20, 0
      %s230 = scalar_select %p229, %s20, 0
      %s231 = sadd.s32 %s230, %s228
      %s232 = smul.addr %s231, 8
      %s233 = scalar_lea.vmem %s3, %s232
      %s234 = smul.u32 32, %s19
      %s235 = smul.u32 3, %s21
      %p236 = scmp.lt.s32.totalorder %s234, 127
      %s237 = scalar_select %p236, %s234, 127
      %p238 = scmp.lt.s32.totalorder %s235, 2
      %s239 = scalar_select %p238, %s235, 2
      %s240 = smul.addr %s237, 3
      %s241 = sadd.s32 %s239, %s240
      %s242 = smul.addr %s241, 4
      %s243 = scalar_lea.vmem %s0, %s242
      %s244 = smul.u32 32, %s19
      %s245 = smul.u32 3, %s21
      %s246 = smul.u32 48, %s21
      %p247 = scmp.lt.s32.totalorder %s246, 47
      %s248 = scalar_select %p247, %s246, 47
      %p249 = scmp.lt.s32.totalorder %s20, 0
      %s250 = scalar_select %p249, %s20, 0
      %s251 = sadd.s32 %s250, %s248
      %s252 = smul.addr %s251, 4
      %s253 = scalar_lea.vmem %s1, %s252
      %s254 = smul.u32 48, %s21
      %p255 = scmp.lt.s32.totalorder %s20, 0
      %s256 = scalar_select %p255, %s20, 0
      %s257 = scalar_lea.vmem %s2, %s256
      %s258 = smul.u32 32, %s19
      %p259 = scmp.lt.s32.totalorder %s258, 127
      %s260 = scalar_select %p259, %s258, 127
      %p261 = scmp.lt.s32.totalorder %s20, 0
      %s262 = scalar_select %p261, %s20, 0
      %s263 = sadd.s32 %s262, %s260
      %s264 = smul.addr %s263, 8
      %s265 = scalar_lea.vmem %s3, %s264
      %s266 = smul.u32 32, %s19
      %p267 = scmp.eq.s32.totalorder %s21, 0
      // Predicated region
      $region33: #{wsddn_forward.8} parent=31 // pred_check
        %p268 = pneg %p267
      $region34: #{wsddn_forward.8} parent=31 // pred_check_branch
        %270 = sbr.rel (%p268) target = $region36
      $region35: #{wsddn_forward.8} parent=31 // pred_region
        %271 = vst [vmem:[%s265] sm:$0xff] 0.0
        %272 = vst [vmem:[%s265 + $0x8] sm:$0xff] 0.0
        %273 = vst [vmem:[%s265 + $0x10] sm:$0xff] 0.0
        %274 = vst [vmem:[%s265 + $0x18] sm:$0xff] 0.0
        %275 = vst [vmem:[%s265 + $0x20] sm:$0xff] 0.0
        %276 = vst [vmem:[%s265 + $0x28] sm:$0xff] 0.0
        %277 = vst [vmem:[%s265 + $0x30] sm:$0xff] 0.0
        %278 = vst [vmem:[%s265 + $0x38] sm:$0xff] 0.0
        %279 = vst [vmem:[%s265 + $0x40] sm:$0xff] 0.0
        %280 = vst [vmem:[%s265 + $0x48] sm:$0xff] 0.0
        %281 = vst [vmem:[%s265 + $0x50] sm:$0xff] 0.0
        %282 = vst [vmem:[%s265 + $0x58] sm:$0xff] 0.0
        %283 = vst [vmem:[%s265 + $0x60] sm:$0xff] 0.0
        %284 = vst [vmem:[%s265 + $0x68] sm:$0xff] 0.0
        %285 = vst [vmem:[%s265 + $0x70] sm:$0xff] 0.0
        %286 = vst [vmem:[%s265 + $0x78] sm:$0xff] 0.0
        %287 = vst [vmem:[%s265 + $0x80] sm:$0xff] 0.0
        %288 = vst [vmem:[%s265 + $0x88] sm:$0xff] 0.0
        %289 = vst [vmem:[%s265 + $0x90] sm:$0xff] 0.0
        %290 = vst [vmem:[%s265 + $0x98] sm:$0xff] 0.0
        %291 = vst [vmem:[%s265 + $0xa0] sm:$0xff] 0.0
        %292 = vst [vmem:[%s265 + $0xa8] sm:$0xff] 0.0
        %293 = vst [vmem:[%s265 + $0xb0] sm:$0xff] 0.0
        %294 = vst [vmem:[%s265 + $0xb8] sm:$0xff] 0.0
        %295 = vst [vmem:[%s265 + $0xc0] sm:$0xff] 0.0
        %296 = vst [vmem:[%s265 + $0xc8] sm:$0xff] 0.0
        %297 = vst [vmem:[%s265 + $0xd0] sm:$0xff] 0.0
        %298 = vst [vmem:[%s265 + $0xd8] sm:$0xff] 0.0
        %299 = vst [vmem:[%s265 + $0xe0] sm:$0xff] 0.0
        %300 = vst [vmem:[%s265 + $0xe8] sm:$0xff] 0.0
        %301 = vst [vmem:[%s265 + $0xf0] sm:$0xff] 0.0
        %302 = vst [vmem:[%s265 + $0xf8] sm:$0xff] 0.0
      $region36: #{wsddn_forward.8} parent=31 // pred_fallthru
        _
      %v303 = vld [vmem:[%s265] sm:$0xff]
      %v304 = vld [vmem:[%s265 + $0x8] sm:$0xff]
      %v305 = vld [vmem:[%s265 + $0x10] sm:$0xff]
      %v306 = vld [vmem:[%s265 + $0x18] sm:$0xff]
      %v307 = vld [vmem:[%s265 + $0x20] sm:$0xff]
      %v308 = vld [vmem:[%s265 + $0x28] sm:$0xff]
      %v309 = vld [vmem:[%s265 + $0x30] sm:$0xff]
      %v310 = vld [vmem:[%s265 + $0x38] sm:$0xff]
      %v311 = vld [vmem:[%s265 + $0x40] sm:$0xff]
      %v312 = vld [vmem:[%s265 + $0x48] sm:$0xff]
      %v313 = vld [vmem:[%s265 + $0x50] sm:$0xff]
      %v314 = vld [vmem:[%s265 + $0x58] sm:$0xff]
      %v315 = vld [vmem:[%s265 + $0x60] sm:$0xff]
      %v316 = vld [vmem:[%s265 + $0x68] sm:$0xff]
      %v317 = vld [vmem:[%s265 + $0x70] sm:$0xff]
      %v318 = vld [vmem:[%s265 + $0x78] sm:$0xff]
      %v319 = vld [vmem:[%s265 + $0x80] sm:$0xff]
      %v320 = vld [vmem:[%s265 + $0x88] sm:$0xff]
      %v321 = vld [vmem:[%s265 + $0x90] sm:$0xff]
      %v322 = vld [vmem:[%s265 + $0x98] sm:$0xff]
      %v323 = vld [vmem:[%s265 + $0xa0] sm:$0xff]
      %v324 = vld [vmem:[%s265 + $0xa8] sm:$0xff]
      %v325 = vld [vmem:[%s265 + $0xb0] sm:$0xff]
      %v326 = vld [vmem:[%s265 + $0xb8] sm:$0xff]
      %v327 = vld [vmem:[%s265 + $0xc0] sm:$0xff]
      %v328 = vld [vmem:[%s265 + $0xc8] sm:$0xff]
      %v329 = vld [vmem:[%s265 + $0xd0] sm:$0xff]
      %v330 = vld [vmem:[%s265 + $0xd8] sm:$0xff]
      %v331 = vld [vmem:[%s265 + $0xe0] sm:$0xff]
      %v332 = vld [vmem:[%s265 + $0xe8] sm:$0xff]
      %v333 = vld [vmem:[%s265 + $0xf0] sm:$0xff]
      %v334 = vld [vmem:[%s265 + $0xf8] sm:$0xff]
      %v335 = vld [vmem:[%s243] sm:$0xff]
      %v336 = vld [vmem:[%s243 + $0x8] sm:$0xf]
      %v337 = vld [vmem:[%s243 + $0xc] sm:$0xff]
      %v338 = vld [vmem:[%s243 + $0x14] sm:$0xf]
      %v339 = vld [vmem:[%s243 + $0x18] sm:$0xff]
      %v340 = vld [vmem:[%s243 + $0x20] sm:$0xf]
      %v341 = vld [vmem:[%s243 + $0x24] sm:$0xff]
      %v342 = vld [vmem:[%s243 + $0x2c] sm:$0xf]
      %v343 = vld [vmem:[%s243 + $0x30] sm:$0xff]
      %v344 = vld [vmem:[%s243 + $0x38] sm:$0xf]
      %v345 = vld [vmem:[%s243 + $0x3c] sm:$0xff]
      %v346 = vld [vmem:[%s243 + $0x44] sm:$0xf]
      %v347 = vld [vmem:[%s243 + $0x48] sm:$0xff]
      %v348 = vld [vmem:[%s243 + $0x50] sm:$0xf]
      %v349 = vld [vmem:[%s243 + $0x54] sm:$0xff]
      %v350 = vld [vmem:[%s243 + $0x5c] sm:$0xf]
      %v351 = vld [vmem:[%s243 + $0x60] sm:$0xff]
      %v352 = vld [vmem:[%s243 + $0x68] sm:$0xf]
      %v353 = vld [vmem:[%s243 + $0x6c] sm:$0xff]
      %v354 = vld [vmem:[%s243 + $0x74] sm:$0xf]
      %v355 = vld [vmem:[%s243 + $0x78] sm:$0xff]
      %v356 = vld [vmem:[%s243 + $0x80] sm:$0xf]
      %v357 = vld [vmem:[%s243 + $0x84] sm:$0xff]
      %v358 = vld [vmem:[%s243 + $0x8c] sm:$0xf]
      %v359 = vld [vmem:[%s243 + $0x90] sm:$0xff]
      %v360 = vld [vmem:[%s243 + $0x98] sm:$0xf]
      %v361 = vld [vmem:[%s243 + $0x9c] sm:$0xff]
      %v362 = vld [vmem:[%s243 + $0xa4] sm:$0xf]
      %v363 = vld [vmem:[%s243 + $0xa8] sm:$0xff]
      %v364 = vld [vmem:[%s243 + $0xb0] sm:$0xf]
      %v365 = vld [vmem:[%s243 + $0xb4] sm:$0xff]
      %v366 = vld [vmem:[%s243 + $0xbc] sm:$0xf]
      %v367 = vld [vmem:[%s243 + $0xc0] sm:$0xff]
      %v368 = vld [vmem:[%s243 + $0xc8] sm:$0xf]
      %v369 = vld [vmem:[%s243 + $0xcc] sm:$0xff]
      %v370 = vld [vmem:[%s243 + $0xd4] sm:$0xf]
      %v371 = vld [vmem:[%s243 + $0xd8] sm:$0xff]
      %v372 = vld [vmem:[%s243 + $0xe0] sm:$0xf]
      %v373 = vld [vmem:[%s243 + $0xe4] sm:$0xff]
      %v374 = vld [vmem:[%s243 + $0xec] sm:$0xf]
      %v375 = vld [vmem:[%s243 + $0xf0] sm:$0xff]
      %v376 = vld [vmem:[%s243 + $0xf8] sm:$0xf]
      %v377 = vld [vmem:[%s243 + $0xfc] sm:$0xff]
      %v378 = vld [vmem:[%s243 + $0x104] sm:$0xf]
      %v379 = vld [vmem:[%s243 + $0x108] sm:$0xff]
      %v380 = vld [vmem:[%s243 + $0x110] sm:$0xf]
      %v381 = vld [vmem:[%s243 + $0x114] sm:$0xff]
      %v382 = vld [vmem:[%s243 + $0x11c] sm:$0xf]
      %v383 = vld [vmem:[%s243 + $0x120] sm:$0xff]
      %v384 = vld [vmem:[%s243 + $0x128] sm:$0xf]
      %v385 = vld [vmem:[%s243 + $0x12c] sm:$0xff]
      %v386 = vld [vmem:[%s243 + $0x134] sm:$0xf]
      %v387 = vld [vmem:[%s243 + $0x138] sm:$0xff]
      %v388 = vld [vmem:[%s243 + $0x140] sm:$0xf]
      %v389 = vld [vmem:[%s243 + $0x144] sm:$0xff]
      %v390 = vld [vmem:[%s243 + $0x14c] sm:$0xf]
      %v391 = vld [vmem:[%s243 + $0x150] sm:$0xff]
      %v392 = vld [vmem:[%s243 + $0x158] sm:$0xf]
      %v393 = vld [vmem:[%s243 + $0x15c] sm:$0xff]
      %v394 = vld [vmem:[%s243 + $0x164] sm:$0xf]
      %v395 = vld [vmem:[%s243 + $0x168] sm:$0xff]
      %v396 = vld [vmem:[%s243 + $0x170] sm:$0xf]
      %v397 = vld [vmem:[%s243 + $0x174] sm:$0xff]
      %v398 = vld [vmem:[%s243 + $0x17c] sm:$0xf]
      %v399 = vld [vmem:[%s253] sm:$0xf]
      %v400 = vld [vmem:[%s253 + $0x4] sm:$0xf]
      %v401 = vld [vmem:[%s253 + $0x8] sm:$0xf]
      %v402 = vld [vmem:[%s253 + $0xc] sm:$0xf]
      %v403 = vld [vmem:[%s253 + $0x10] sm:$0xf]
      %v404 = vld [vmem:[%s253 + $0x14] sm:$0xf]
      %v405 = vld [vmem:[%s253 + $0x18] sm:$0xf]
      %v406 = vld [vmem:[%s253 + $0x1c] sm:$0xf]
      %v407 = vld [vmem:[%s253 + $0x20] sm:$0xf]
      %v408 = vld [vmem:[%s253 + $0x24] sm:$0xf]
      %v409 = vld [vmem:[%s253 + $0x28] sm:$0xf]
      %v410 = vld [vmem:[%s253 + $0x2c] sm:$0xf]
      %v411 = vld [vmem:[%s253 + $0x30] sm:$0xf]
      %v412 = vld [vmem:[%s253 + $0x34] sm:$0xf]
      %v413 = vld [vmem:[%s253 + $0x38] sm:$0xf]
      %v414 = vld [vmem:[%s253 + $0x3c] sm:$0xf]
      %v415 = vld [vmem:[%s253 + $0x40] sm:$0xf]
      %v416 = vld [vmem:[%s253 + $0x44] sm:$0xf]
      %v417 = vld [vmem:[%s253 + $0x48] sm:$0xf]
      %v418 = vld [vmem:[%s253 + $0x4c] sm:$0xf]
      %v419 = vld [vmem:[%s253 + $0x50] sm:$0xf]
      %v420 = vld [vmem:[%s253 + $0x54] sm:$0xf]
      %v421 = vld [vmem:[%s253 + $0x58] sm:$0xf]
      %v422 = vld [vmem:[%s253 + $0x5c] sm:$0xf]
      %v423 = vld [vmem:[%s253 + $0x60] sm:$0xf]
      %v424 = vld [vmem:[%s253 + $0x64] sm:$0xf]
      %v425 = vld [vmem:[%s253 + $0x68] sm:$0xf]
      %v426 = vld [vmem:[%s253 + $0x6c] sm:$0xf]
      %v427 = vld [vmem:[%s253 + $0x70] sm:$0xf]
      %v428 = vld [vmem:[%s253 + $0x74] sm:$0xf]
      %v429 = vld [vmem:[%s253 + $0x78] sm:$0xf]
      %v430 = vld [vmem:[%s253 + $0x7c] sm:$0xf]
      %v431 = vld [vmem:[%s253 + $0x80] sm:$0xf]
      %v432 = vld [vmem:[%s253 + $0x84] sm:$0xf]
      %v433 = vld [vmem:[%s253 + $0x88] sm:$0xf]
      %v434 = vld [vmem:[%s253 + $0x8c] sm:$0xf]
      %v435 = vld [vmem:[%s253 + $0x90] sm:$0xf]
      %v436 = vld [vmem:[%s253 + $0x94] sm:$0xf]
      %v437 = vld [vmem:[%s253 + $0x98] sm:$0xf]
      %v438 = vld [vmem:[%s253 + $0x9c] sm:$0xf]
      %v439 = vld [vmem:[%s253 + $0xa0] sm:$0xf]
      %v440 = vld [vmem:[%s253 + $0xa4] sm:$0xf]
      %v441 = vld [vmem:[%s253 + $0xa8] sm:$0xf]
      %v442 = vld [vmem:[%s253 + $0xac] sm:$0xf]
      %v443 = vld [vmem:[%s253 + $0xb0] sm:$0xf]
      %v444 = vld [vmem:[%s253 + $0xb4] sm:$0xf]
      %v445 = vld [vmem:[%s253 + $0xb8] sm:$0xf]
      %v446 = vld [vmem:[%s253 + $0xbc] sm:$0xf]
      %v511 = vunpack.c.l.b16 %v335
      %v512 = vunpack.c.h.b16 %v335
      %v513 = vunpack.c.l.b16 %v336
      %v514 = vunpack.c.l.b16 %v337
      %v515 = vunpack.c.h.b16 %v337
      %v516 = vunpack.c.l.b16 %v338
      %v517 = vunpack.c.l.b16 %v339
      %v518 = vunpack.c.h.b16 %v339
      %v519 = vunpack.c.l.b16 %v340
      %v520 = vunpack.c.l.b16 %v341
      %v521 = vunpack.c.h.b16 %v341
      %v522 = vunpack.c.l.b16 %v342
      %v523 = vunpack.c.l.b16 %v343
      %v524 = vunpack.c.h.b16 %v343
      %v525 = vunpack.c.l.b16 %v344
      %v526 = vunpack.c.l.b16 %v345
      %v527 = vunpack.c.h.b16 %v345
      %v528 = vunpack.c.l.b16 %v346
      %v529 = vunpack.c.l.b16 %v347
      %v530 = vunpack.c.h.b16 %v347
      %v531 = vunpack.c.l.b16 %v348
      %v532 = vunpack.c.l.b16 %v349
      %v533 = vunpack.c.h.b16 %v349
      %v534 = vunpack.c.l.b16 %v350
      %v535 = vunpack.c.l.b16 %v351
      %v536 = vunpack.c.h.b16 %v351
      %v537 = vunpack.c.l.b16 %v352
      %v538 = vunpack.c.l.b16 %v353
      %v539 = vunpack.c.h.b16 %v353
      %v540 = vunpack.c.l.b16 %v354
      %v541 = vunpack.c.l.b16 %v355
      %v542 = vunpack.c.h.b16 %v355
      %v543 = vunpack.c.l.b16 %v356
      %v544 = vunpack.c.l.b16 %v357
      %v545 = vunpack.c.h.b16 %v357
      %v546 = vunpack.c.l.b16 %v358
      %v547 = vunpack.c.l.b16 %v359
      %v548 = vunpack.c.h.b16 %v359
      %v549 = vunpack.c.l.b16 %v360
      %v550 = vunpack.c.l.b16 %v361
      %v551 = vunpack.c.h.b16 %v361
      %v552 = vunpack.c.l.b16 %v362
      %v553 = vunpack.c.l.b16 %v363
      %v554 = vunpack.c.h.b16 %v363
      %v555 = vunpack.c.l.b16 %v364
      %v556 = vunpack.c.l.b16 %v365
      %v557 = vunpack.c.h.b16 %v365
      %v558 = vunpack.c.l.b16 %v366
      %v559 = vunpack.c.l.b16 %v367
      %v560 = vunpack.c.h.b16 %v367
      %v561 = vunpack.c.l.b16 %v368
      %v562 = vunpack.c.l.b16 %v369
      %v563 = vunpack.c.h.b16 %v369
      %v564 = vunpack.c.l.b16 %v370
      %v565 = vunpack.c.l.b16 %v371
      %v566 = vunpack.c.h.b16 %v371
      %v567 = vunpack.c.l.b16 %v372
      %v568 = vunpack.c.l.b16 %v373
      %v569 = vunpack.c.h.b16 %v373
      %v570 = vunpack.c.l.b16 %v374
      %v571 = vunpack.c.l.b16 %v375
      %v572 = vunpack.c.h.b16 %v375
      %v573 = vunpack.c.l.b16 %v376
      %v574 = vunpack.c.l.b16 %v377
      %v575 = vunpack.c.h.b16 %v377
      %v576 = vunpack.c.l.b16 %v378
      %v577 = vunpack.c.l.b16 %v379
      %v578 = vunpack.c.h.b16 %v379
      %v579 = vunpack.c.l.b16 %v380
      %v580 = vunpack.c.l.b16 %v381
      %v581 = vunpack.c.h.b16 %v381
      %v582 = vunpack.c.l.b16 %v382
      %v583 = vunpack.c.l.b16 %v383
      %v584 = vunpack.c.h.b16 %v383
      %v585 = vunpack.c.l.b16 %v384
      %v586 = vunpack.c.l.b16 %v385
      %v587 = vunpack.c.h.b16 %v385
      %v588 = vunpack.c.l.b16 %v386
      %v589 = vunpack.c.l.b16 %v387
      %v590 = vunpack.c.h.b16 %v387
      %v591 = vunpack.c.l.b16 %v388
      %v592 = vunpack.c.l.b16 %v389
      %v593 = vunpack.c.h.b16 %v389
      %v594 = vunpack.c.l.b16 %v390
      %v595 = vunpack.c.l.b16 %v391
      %v596 = vunpack.c.h.b16 %v391
      %v597 = vunpack.c.l.b16 %v392
      %v598 = vunpack.c.l.b16 %v393
      %v599 = vunpack.c.h.b16 %v393
      %v600 = vunpack.c.l.b16 %v394
      %v601 = vunpack.c.l.b16 %v395
      %v602 = vunpack.c.h.b16 %v395
      %v603 = vunpack.c.l.b16 %v396
      %v604 = vunpack.c.l.b16 %v397
      %v605 = vunpack.c.h.b16 %v397
      %v606 = vunpack.c.l.b16 %v398
      %v607 = vpack.c.b16 %v514, %v511
      %v608 = vpack.c.b16 %v515, %v512
      %v609 = vpack.c.b16 %v516, %v513
      %v610 = vpack.c.b16 %v520, %v517
      %v611 = vpack.c.b16 %v521, %v518
      %v612 = vpack.c.b16 %v522, %v519
      %v613 = vpack.c.b16 %v526, %v523
      %v614 = vpack.c.b16 %v527, %v524
      %v615 = vpack.c.b16 %v528, %v525
      %v616 = vpack.c.b16 %v532, %v529
      %v617 = vpack.c.b16 %v533, %v530
      %v618 = vpack.c.b16 %v534, %v531
      %v619 = vpack.c.b16 %v538, %v535
      %v620 = vpack.c.b16 %v539, %v536
      %v621 = vpack.c.b16 %v540, %v537
      %v622 = vpack.c.b16 %v544, %v541
      %v623 = vpack.c.b16 %v545, %v542
      %v624 = vpack.c.b16 %v546, %v543
      %v625 = vpack.c.b16 %v550, %v547
      %v626 = vpack.c.b16 %v551, %v548
      %v627 = vpack.c.b16 %v552, %v549
      %v628 = vpack.c.b16 %v556, %v553
      %v629 = vpack.c.b16 %v557, %v554
      %v630 = vpack.c.b16 %v558, %v555
      %v631 = vpack.c.b16 %v562, %v559
      %v632 = vpack.c.b16 %v563, %v560
      %v633 = vpack.c.b16 %v564, %v561
      %v634 = vpack.c.b16 %v568, %v565
      %v635 = vpack.c.b16 %v569, %v566
      %v636 = vpack.c.b16 %v570, %v567
      %v637 = vpack.c.b16 %v574, %v571
      %v638 = vpack.c.b16 %v575, %v572
      %v639 = vpack.c.b16 %v576, %v573
      %v640 = vpack.c.b16 %v580, %v577
      %v641 = vpack.c.b16 %v581, %v578
      %v642 = vpack.c.b16 %v582, %v579
      %v643 = vpack.c.b16 %v586, %v583
      %v644 = vpack.c.b16 %v587, %v584
      %v645 = vpack.c.b16 %v588, %v585
      %v646 = vpack.c.b16 %v592, %v589
      %v647 = vpack.c.b16 %v593, %v590
      %v648 = vpack.c.b16 %v594, %v591
      %v649 = vpack.c.b16 %v598, %v595
      %v650 = vpack.c.b16 %v599, %v596
      %v651 = vpack.c.b16 %v600, %v597
      %v652 = vpack.c.b16 %v604, %v601
      %v653 = vpack.c.b16 %v605, %v602
      %v654 = vpack.c.b16 %v606, %v603
      %v751 = vunpack.c.l.b16 %v399
      %v752 = vunpack.c.l.b16 %v400
      %v753 = vunpack.c.l.b16 %v401
      %v754 = vunpack.c.l.b16 %v402
      %v755 = vunpack.c.l.b16 %v403
      %v756 = vunpack.c.l.b16 %v404
      %v757 = vunpack.c.l.b16 %v405
      %v758 = vunpack.c.l.b16 %v406
      %v759 = vunpack.c.l.b16 %v407
      %v760 = vunpack.c.l.b16 %v408
      %v761 = vunpack.c.l.b16 %v409
      %v762 = vunpack.c.l.b16 %v410
      %v763 = vunpack.c.l.b16 %v411
      %v764 = vunpack.c.l.b16 %v412
      %v765 = vunpack.c.l.b16 %v413
      %v766 = vunpack.c.l.b16 %v414
      %v767 = vunpack.c.l.b16 %v415
      %v768 = vunpack.c.l.b16 %v416
      %v769 = vunpack.c.l.b16 %v417
      %v770 = vunpack.c.l.b16 %v418
      %v771 = vunpack.c.l.b16 %v419
      %v772 = vunpack.c.l.b16 %v420
      %v773 = vunpack.c.l.b16 %v421
      %v774 = vunpack.c.l.b16 %v422
      %v775 = vunpack.c.l.b16 %v423
      %v776 = vunpack.c.l.b16 %v424
      %v777 = vunpack.c.l.b16 %v425
      %v778 = vunpack.c.l.b16 %v426
      %v779 = vunpack.c.l.b16 %v427
      %v780 = vunpack.c.l.b16 %v428
      %v781 = vunpack.c.l.b16 %v429
      %v782 = vunpack.c.l.b16 %v430
      %v783 = vunpack.c.l.b16 %v431
      %v784 = vunpack.c.l.b16 %v432
      %v785 = vunpack.c.l.b16 %v433
      %v786 = vunpack.c.l.b16 %v434
      %v787 = vunpack.c.l.b16 %v435
      %v788 = vunpack.c.l.b16 %v436
      %v789 = vunpack.c.l.b16 %v437
      %v790 = vunpack.c.l.b16 %v438
      %v791 = vunpack.c.l.b16 %v439
      %v792 = vunpack.c.l.b16 %v440
      %v793 = vunpack.c.l.b16 %v441
      %v794 = vunpack.c.l.b16 %v442
      %v795 = vunpack.c.l.b16 %v443
      %v796 = vunpack.c.l.b16 %v444
      %v797 = vunpack.c.l.b16 %v445
      %v798 = vunpack.c.l.b16 %v446
      %v799 = vpack.c.b16 %v752, %v751
      %v800 = vpack.c.b16 %v754, %v753
      %v801 = vpack.c.b16 %v756, %v755
      %v802 = vpack.c.b16 %v758, %v757
      %v803 = vpack.c.b16 %v760, %v759
      %v804 = vpack.c.b16 %v762, %v761
      %v805 = vpack.c.b16 %v764, %v763
      %v806 = vpack.c.b16 %v766, %v765
      %v807 = vpack.c.b16 %v768, %v767
      %v808 = vpack.c.b16 %v770, %v769
      %v809 = vpack.c.b16 %v772, %v771
      %v810 = vpack.c.b16 %v774, %v773
      %v811 = vpack.c.b16 %v776, %v775
      %v812 = vpack.c.b16 %v778, %v777
      %v813 = vpack.c.b16 %v780, %v779
      %v814 = vpack.c.b16 %v782, %v781
      %v815 = vpack.c.b16 %v784, %v783
      %v816 = vpack.c.b16 %v786, %v785
      %v817 = vpack.c.b16 %v788, %v787
      %v818 = vpack.c.b16 %v790, %v789
      %v819 = vpack.c.b16 %v792, %v791
      %v820 = vpack.c.b16 %v794, %v793
      %v821 = vpack.c.b16 %v796, %v795
      %v822 = vpack.c.b16 %v798, %v797
      %847 = vmatpush.bf16.msra.mxu0 %v806
      %848 = vmatpush.bf16.msra.mxu0 %v805
      %849 = vmatpush.bf16.msra.mxu0 %v804
      %850 = vmatpush.bf16.msra.mxu0 %v803
      %851 = vmatpush.bf16.msra.mxu0 %v802
      %852 = vmatpush.bf16.msra.mxu0 %v801
      %853 = vmatpush.bf16.msra.mxu0 %v800
      %854 = vmatpush.bf16.msra.mxu0 %v799
      %855 = vmatmul.bf16.gmra.mxu0 %v607
      %v856 = vpop.f32.mrf.mxu0
      %v857 = vadd.f32 0.0, %v856
      %v858 = vpop.f32.mrf.mxu0
      %v859 = vadd.f32 0.0, %v858
      %860 = vmatmul.bf16.gmra.mxu0 %v610
      %v861 = vpop.f32.mrf.mxu0
      %v862 = vadd.f32 0.0, %v861
      %v863 = vpop.f32.mrf.mxu0
      %v864 = vadd.f32 0.0, %v863
      %865 = vmatmul.bf16.gmra.mxu0 %v613
      %v866 = vpop.f32.mrf.mxu0
      %v867 = vadd.f32 0.0, %v866
      %v868 = vpop.f32.mrf.mxu0
      %v869 = vadd.f32 0.0, %v868
      %870 = vmatmul.bf16.gmra.mxu0 %v616
      %v871 = vpop.f32.mrf.mxu0
      %v872 = vadd.f32 0.0, %v871
      %v873 = vpop.f32.mrf.mxu0
      %v874 = vadd.f32 0.0, %v873
      %875 = vmatmul.bf16.gmra.mxu0 %v619
      %v876 = vpop.f32.mrf.mxu0
      %v877 = vadd.f32 0.0, %v876
      %v878 = vpop.f32.mrf.mxu0
      %v879 = vadd.f32 0.0, %v878
      %880 = vmatmul.bf16.gmra.mxu0 %v622
      %v881 = vpop.f32.mrf.mxu0
      %v882 = vadd.f32 0.0, %v881
      %v883 = vpop.f32.mrf.mxu0
      %v884 = vadd.f32 0.0, %v883
      %885 = vmatmul.bf16.gmra.mxu0 %v625
      %v886 = vpop.f32.mrf.mxu0
      %v887 = vadd.f32 0.0, %v886
      %v888 = vpop.f32.mrf.mxu0
      %v889 = vadd.f32 0.0, %v888
      %890 = vmatmul.bf16.gmra.mxu0 %v628
      %v891 = vpop.f32.mrf.mxu0
      %v892 = vadd.f32 0.0, %v891
      %v893 = vpop.f32.mrf.mxu0
      %v894 = vadd.f32 0.0, %v893
      %895 = vmatmul.bf16.gmra.mxu0 %v631
      %v896 = vpop.f32.mrf.mxu0
      %v897 = vadd.f32 0.0, %v896
      %v898 = vpop.f32.mrf.mxu0
      %v899 = vadd.f32 0.0, %v898
      %900 = vmatmul.bf16.gmra.mxu0 %v634
      %v901 = vpop.f32.mrf.mxu0
      %v902 = vadd.f32 0.0, %v901
      %v903 = vpop.f32.mrf.mxu0
      %v904 = vadd.f32 0.0, %v903
      %905 = vmatmul.bf16.gmra.mxu0 %v637
      %v906 = vpop.f32.mrf.mxu0
      %v907 = vadd.f32 0.0, %v906
      %v908 = vpop.f32.mrf.mxu0
      %v909 = vadd.f32 0.0, %v908
      %910 = vmatmul.bf16.gmra.mxu0 %v640
      %v911 = vpop.f32.mrf.mxu0
      %v912 = vadd.f32 0.0, %v911
      %v913 = vpop.f32.mrf.mxu0
      %v914 = vadd.f32 0.0, %v913
      %915 = vmatmul.bf16.gmra.mxu0 %v643
      %v916 = vpop.f32.mrf.mxu0
      %v917 = vadd.f32 0.0, %v916
      %v918 = vpop.f32.mrf.mxu0
      %v919 = vadd.f32 0.0, %v918
      %920 = vmatmul.bf16.gmra.mxu0 %v646
      %v921 = vpop.f32.mrf.mxu0
      %v922 = vadd.f32 0.0, %v921
      %v923 = vpop.f32.mrf.mxu0
      %v924 = vadd.f32 0.0, %v923
      %925 = vmatmul.bf16.gmra.mxu0 %v649
      %v926 = vpop.f32.mrf.mxu0
      %v927 = vadd.f32 0.0, %v926
      %v928 = vpop.f32.mrf.mxu0
      %v929 = vadd.f32 0.0, %v928
      %930 = vmatmul.bf16.gmra.mxu0 %v652
      %v931 = vpop.f32.mrf.mxu0
      %v932 = vadd.f32 0.0, %v931
      %v933 = vpop.f32.mrf.mxu0
      %v934 = vadd.f32 0.0, %v933
      %935 = vdwg.mxu0
      %936 = vmatpush.bf16.msra.mxu0 %v814
      %937 = vmatpush.bf16.msra.mxu0 %v813
      %938 = vmatpush.bf16.msra.mxu0 %v812
      %939 = vmatpush.bf16.msra.mxu0 %v811
      %940 = vmatpush.bf16.msra.mxu0 %v810
      %941 = vmatpush.bf16.msra.mxu0 %v809
      %942 = vmatpush.bf16.msra.mxu0 %v808
      %943 = vmatpush.bf16.msra.mxu0 %v807
      %944 = vmatmul.bf16.gmra.mxu0 %v608
      %v945 = vpop.f32.mrf.mxu0
      %v946 = vadd.f32 %v857, %v945
      %v947 = vpop.f32.mrf.mxu0
      %v948 = vadd.f32 %v859, %v947
      %949 = vmatmul.bf16.gmra.mxu0 %v611
      %v950 = vpop.f32.mrf.mxu0
      %v951 = vadd.f32 %v862, %v950
      %v952 = vpop.f32.mrf.mxu0
      %v953 = vadd.f32 %v864, %v952
      %954 = vmatmul.bf16.gmra.mxu0 %v614
      %v955 = vpop.f32.mrf.mxu0
      %v956 = vadd.f32 %v867, %v955
      %v957 = vpop.f32.mrf.mxu0
      %v958 = vadd.f32 %v869, %v957
      %959 = vmatmul.bf16.gmra.mxu0 %v617
      %v960 = vpop.f32.mrf.mxu0
      %v961 = vadd.f32 %v872, %v960
      %v962 = vpop.f32.mrf.mxu0
      %v963 = vadd.f32 %v874, %v962
      %964 = vmatmul.bf16.gmra.mxu0 %v620
      %v965 = vpop.f32.mrf.mxu0
      %v966 = vadd.f32 %v877, %v965
      %v967 = vpop.f32.mrf.mxu0
      %v968 = vadd.f32 %v879, %v967
      %969 = vmatmul.bf16.gmra.mxu0 %v623
      %v970 = vpop.f32.mrf.mxu0
      %v971 = vadd.f32 %v882, %v970
      %v972 = vpop.f32.mrf.mxu0
      %v973 = vadd.f32 %v884, %v972
      %974 = vmatmul.bf16.gmra.mxu0 %v626
      %v975 = vpop.f32.mrf.mxu0
      %v976 = vadd.f32 %v887, %v975
      %v977 = vpop.f32.mrf.mxu0
      %v978 = vadd.f32 %v889, %v977
      %979 = vmatmul.bf16.gmra.mxu0 %v629
      %v980 = vpop.f32.mrf.mxu0
      %v981 = vadd.f32 %v892, %v980
      %v982 = vpop.f32.mrf.mxu0
      %v983 = vadd.f32 %v894, %v982
      %984 = vmatmul.bf16.gmra.mxu0 %v632
      %v985 = vpop.f32.mrf.mxu0
      %v986 = vadd.f32 %v897, %v985
      %v987 = vpop.f32.mrf.mxu0
      %v988 = vadd.f32 %v899, %v987
      %989 = vmatmul.bf16.gmra.mxu0 %v635
      %v990 = vpop.f32.mrf.mxu0
      %v991 = vadd.f32 %v902, %v990
      %v992 = vpop.f32.mrf.mxu0
      %v993 = vadd.f32 %v904, %v992
      %994 = vmatmul.bf16.gmra.mxu0 %v638
      %v995 = vpop.f32.mrf.mxu0
      %v996 = vadd.f32 %v907, %v995
      %v997 = vpop.f32.mrf.mxu0
      %v998 = vadd.f32 %v909, %v997
      %999 = vmatmul.bf16.gmra.mxu0 %v641
      %v1000 = vpop.f32.mrf.mxu0
      %v1001 = vadd.f32 %v912, %v1000
      %v1002 = vpop.f32.mrf.mxu0
      %v1003 = vadd.f32 %v914, %v1002
      %1004 = vmatmul.bf16.gmra.mxu0 %v644
      %v1005 = vpop.f32.mrf.mxu0
      %v1006 = vadd.f32 %v917, %v1005
      %v1007 = vpop.f32.mrf.mxu0
      %v1008 = vadd.f32 %v919, %v1007
      %1009 = vmatmul.bf16.gmra.mxu0 %v647
      %v1010 = vpop.f32.mrf.mxu0
      %v1011 = vadd.f32 %v922, %v1010
      %v1012 = vpop.f32.mrf.mxu0
      %v1013 = vadd.f32 %v924, %v1012
      %1014 = vmatmul.bf16.gmra.mxu0 %v650
      %v1015 = vpop.f32.mrf.mxu0
      %v1016 = vadd.f32 %v927, %v1015
      %v1017 = vpop.f32.mrf.mxu0
      %v1018 = vadd.f32 %v929, %v1017
      %1019 = vmatmul.bf16.gmra.mxu0 %v653
      %v1020 = vpop.f32.mrf.mxu0
      %v1021 = vadd.f32 %v932, %v1020
      %v1022 = vpop.f32.mrf.mxu0
      %v1023 = vadd.f32 %v934, %v1022
      %1024 = vdwg.mxu0
      %1025 = vmatpush.bf16.msra.mxu0 %v822
      %1026 = vmatpush.bf16.msra.mxu0 %v821
      %1027 = vmatpush.bf16.msra.mxu0 %v820
      %1028 = vmatpush.bf16.msra.mxu0 %v819
      %1029 = vmatpush.bf16.msra.mxu0 %v818
      %1030 = vmatpush.bf16.msra.mxu0 %v817
      %1031 = vmatpush.bf16.msra.mxu0 %v816
      %1032 = vmatpush.bf16.msra.mxu0 %v815
      %1033 = vmatmul.bf16.gmra.mxu0 %v609
      %v1034 = vpop.f32.mrf.mxu0
      %v1035 = vadd.f32 %v946, %v1034
      %v1036 = vpop.f32.mrf.mxu0
      %v1037 = vadd.f32 %v948, %v1036
      %1038 = vmatmul.bf16.gmra.mxu0 %v612
      %v1039 = vpop.f32.mrf.mxu0
      %v1040 = vadd.f32 %v951, %v1039
      %v1041 = vpop.f32.mrf.mxu0
      %v1042 = vadd.f32 %v953, %v1041
      %1043 = vmatmul.bf16.gmra.mxu0 %v615
      %v1044 = vpop.f32.mrf.mxu0
      %v1045 = vadd.f32 %v956, %v1044
      %v1046 = vpop.f32.mrf.mxu0
      %v1047 = vadd.f32 %v958, %v1046
      %1048 = vmatmul.bf16.gmra.mxu0 %v618
      %v1049 = vpop.f32.mrf.mxu0
      %v1050 = vadd.f32 %v961, %v1049
      %v1051 = vpop.f32.mrf.mxu0
      %v1052 = vadd.f32 %v963, %v1051
      %1053 = vmatmul.bf16.gmra.mxu0 %v621
      %v1054 = vpop.f32.mrf.mxu0
      %v1055 = vadd.f32 %v966, %v1054
      %v1056 = vpop.f32.mrf.mxu0
      %v1057 = vadd.f32 %v968, %v1056
      %1058 = vmatmul.bf16.gmra.mxu0 %v624
      %v1059 = vpop.f32.mrf.mxu0
      %v1060 = vadd.f32 %v971, %v1059
      %v1061 = vpop.f32.mrf.mxu0
      %v1062 = vadd.f32 %v973, %v1061
      %1063 = vmatmul.bf16.gmra.mxu0 %v627
      %v1064 = vpop.f32.mrf.mxu0
      %v1065 = vadd.f32 %v976, %v1064
      %v1066 = vpop.f32.mrf.mxu0
      %v1067 = vadd.f32 %v978, %v1066
      %1068 = vmatmul.bf16.gmra.mxu0 %v630
      %v1069 = vpop.f32.mrf.mxu0
      %v1070 = vadd.f32 %v981, %v1069
      %v1071 = vpop.f32.mrf.mxu0
      %v1072 = vadd.f32 %v983, %v1071
      %1073 = vmatmul.bf16.gmra.mxu0 %v633
      %v1074 = vpop.f32.mrf.mxu0
      %v1075 = vadd.f32 %v986, %v1074
      %v1076 = vpop.f32.mrf.mxu0
      %v1077 = vadd.f32 %v988, %v1076
      %1078 = vmatmul.bf16.gmra.mxu0 %v636
      %v1079 = vpop.f32.mrf.mxu0
      %v1080 = vadd.f32 %v991, %v1079
      %v1081 = vpop.f32.mrf.mxu0
      %v1082 = vadd.f32 %v993, %v1081
      %1083 = vmatmul.bf16.gmra.mxu0 %v639
      %v1084 = vpop.f32.mrf.mxu0
      %v1085 = vadd.f32 %v996, %v1084
      %v1086 = vpop.f32.mrf.mxu0
      %v1087 = vadd.f32 %v998, %v1086
      %1088 = vmatmul.bf16.gmra.mxu0 %v642
      %v1089 = vpop.f32.mrf.mxu0
      %v1090 = vadd.f32 %v1001, %v1089
      %v1091 = vpop.f32.mrf.mxu0
      %v1092 = vadd.f32 %v1003, %v1091
      %1093 = vmatmul.bf16.gmra.mxu0 %v645
      %v1094 = vpop.f32.mrf.mxu0
      %v1095 = vadd.f32 %v1006, %v1094
      %v1096 = vpop.f32.mrf.mxu0
      %v1097 = vadd.f32 %v1008, %v1096
      %1098 = vmatmul.bf16.gmra.mxu0 %v648
      %v1099 = vpop.f32.mrf.mxu0
      %v1100 = vadd.f32 %v1011, %v1099
      %v1101 = vpop.f32.mrf.mxu0
      %v1102 = vadd.f32 %v1013, %v1101
      %1103 = vmatmul.bf16.gmra.mxu0 %v651
      %v1104 = vpop.f32.mrf.mxu0
      %v1105 = vadd.f32 %v1016, %v1104
      %v1106 = vpop.f32.mrf.mxu0
      %v1107 = vadd.f32 %v1018, %v1106
      %1108 = vmatmul.bf16.gmra.mxu0 %v654
      %v1109 = vpop.f32.mrf.mxu0
      %v1110 = vadd.f32 %v1021, %v1109
      %v1111 = vpop.f32.mrf.mxu0
      %v1112 = vadd.f32 %v1023, %v1111
      %1113 = vdwg.mxu0
      %v1114 = vadd.f32 %v303, %v1035
      %v1115 = vadd.f32 %v304, %v1037
      %v1116 = vadd.f32 %v305, %v1040
      %v1117 = vadd.f32 %v306, %v1042
      %v1118 = vadd.f32 %v307, %v1045
      %v1119 = vadd.f32 %v308, %v1047
      %v1120 = vadd.f32 %v309, %v1050
      %v1121 = vadd.f32 %v310, %v1052
      %v1122 = vadd.f32 %v311, %v1055
      %v1123 = vadd.f32 %v312, %v1057
      %v1124 = vadd.f32 %v313, %v1060
      %v1125 = vadd.f32 %v314, %v1062
      %v1126 = vadd.f32 %v315, %v1065
      %v1127 = vadd.f32 %v316, %v1067
      %v1128 = vadd.f32 %v317, %v1070
      %v1129 = vadd.f32 %v318, %v1072
      %v1130 = vadd.f32 %v319, %v1075
      %v1131 = vadd.f32 %v320, %v1077
      %v1132 = vadd.f32 %v321, %v1080
      %v1133 = vadd.f32 %v322, %v1082
      %v1134 = vadd.f32 %v323, %v1085
      %v1135 = vadd.f32 %v324, %v1087
      %v1136 = vadd.f32 %v325, %v1090
      %v1137 = vadd.f32 %v326, %v1092
      %v1138 = vadd.f32 %v327, %v1095
      %v1139 = vadd.f32 %v328, %v1097
      %v1140 = vadd.f32 %v329, %v1100
      %v1141 = vadd.f32 %v330, %v1102
      %v1142 = vadd.f32 %v331, %v1105
      %v1143 = vadd.f32 %v332, %v1107
      %v1144 = vadd.f32 %v333, %v1110
      %v1145 = vadd.f32 %v334, %v1112
      %1146 = vst [vmem:[%s265] sm:$0xff] %v1114
      %1147 = vst [vmem:[%s265 + $0x8] sm:$0xff] %v1115
      %1148 = vst [vmem:[%s265 + $0x10] sm:$0xff] %v1116
      %1149 = vst [vmem:[%s265 + $0x18] sm:$0xff] %v1117
      %1150 = vst [vmem:[%s265 + $0x20] sm:$0xff] %v1118
      %1151 = vst [vmem:[%s265 + $0x28] sm:$0xff] %v1119
      %1152 = vst [vmem:[%s265 + $0x30] sm:$0xff] %v1120
      %1153 = vst [vmem:[%s265 + $0x38] sm:$0xff] %v1121
      %1154 = vst [vmem:[%s265 + $0x40] sm:$0xff] %v1122
      %1155 = vst [vmem:[%s265 + $0x48] sm:$0xff] %v1123
      %1156 = vst [vmem:[%s265 + $0x50] sm:$0xff] %v1124
      %1157 = vst [vmem:[%s265 + $0x58] sm:$0xff] %v1125
      %1158 = vst [vmem:[%s265 + $0x60] sm:$0xff] %v1126
      %1159 = vst [vmem:[%s265 + $0x68] sm:$0xff] %v1127
      %1160 = vst [vmem:[%s265 + $0x70] sm:$0xff] %v1128
      %1161 = vst [vmem:[%s265 + $0x78] sm:$0xff] %v1129
      %1162 = vst [vmem:[%s265 + $0x80] sm:$0xff] %v1130
      %1163 = vst [vmem:[%s265 + $0x88] sm:$0xff] %v1131
      %1164 = vst [vmem:[%s265 + $0x90] sm:$0xff] %v1132
      %1165 = vst [vmem:[%s265 + $0x98] sm:$0xff] %v1133
      %1166 = vst [vmem:[%s265 + $0xa0] sm:$0xff] %v1134
      %1167 = vst [vmem:[%s265 + $0xa8] sm:$0xff] %v1135
      %1168 = vst [vmem:[%s265 + $0xb0] sm:$0xff] %v1136
      %1169 = vst [vmem:[%s265 + $0xb8] sm:$0xff] %v1137
      %1170 = vst [vmem:[%s265 + $0xc0] sm:$0xff] %v1138
      %1171 = vst [vmem:[%s265 + $0xc8] sm:$0xff] %v1139
      %1172 = vst [vmem:[%s265 + $0xd0] sm:$0xff] %v1140
      %1173 = vst [vmem:[%s265 + $0xd8] sm:$0xff] %v1141
      %1174 = vst [vmem:[%s265 + $0xe0] sm:$0xff] %v1142
      %1175 = vst [vmem:[%s265 + $0xe8] sm:$0xff] %v1143
      %1176 = vst [vmem:[%s265 + $0xf0] sm:$0xff] %v1144
      %1177 = vst [vmem:[%s265 + $0xf8] sm:$0xff] %v1145
      // Predicated region
      $region37: #{wsddn_forward.8} parent=31 // pred_check
        %p1178 = pneg %p267
      $region38: #{wsddn_forward.8} parent=31 // pred_check_branch
        %1180 = sbr.rel (%p1178) target = $region40
      $region39: #{wsddn_forward.8} parent=31 // pred_region
        %v1181 = vld [vmem:[%s265] sm:$0xff]
        %v1182 = vld [vmem:[%s265 + $0x8] sm:$0xff]
        %v1183 = vld [vmem:[%s265 + $0x10] sm:$0xff]
        %v1184 = vld [vmem:[%s265 + $0x18] sm:$0xff]
        %v1185 = vld [vmem:[%s265 + $0x20] sm:$0xff]
        %v1186 = vld [vmem:[%s265 + $0x28] sm:$0xff]
        %v1187 = vld [vmem:[%s265 + $0x30] sm:$0xff]
        %v1188 = vld [vmem:[%s265 + $0x38] sm:$0xff]
        %v1189 = vld [vmem:[%s265 + $0x40] sm:$0xff]
        %v1190 = vld [vmem:[%s265 + $0x48] sm:$0xff]
        %v1191 = vld [vmem:[%s265 + $0x50] sm:$0xff]
        %v1192 = vld [vmem:[%s265 + $0x58] sm:$0xff]
        %v1193 = vld [vmem:[%s265 + $0x60] sm:$0xff]
        %v1194 = vld [vmem:[%s265 + $0x68] sm:$0xff]
        %v1195 = vld [vmem:[%s265 + $0x70] sm:$0xff]
        %v1196 = vld [vmem:[%s265 + $0x78] sm:$0xff]
        %v1197 = vld [vmem:[%s265 + $0x80] sm:$0xff]
        %v1198 = vld [vmem:[%s265 + $0x88] sm:$0xff]
        %v1199 = vld [vmem:[%s265 + $0x90] sm:$0xff]
        %v1200 = vld [vmem:[%s265 + $0x98] sm:$0xff]
        %v1201 = vld [vmem:[%s265 + $0xa0] sm:$0xff]
        %v1202 = vld [vmem:[%s265 + $0xa8] sm:$0xff]
        %v1203 = vld [vmem:[%s265 + $0xb0] sm:$0xff]
        %v1204 = vld [vmem:[%s265 + $0xb8] sm:$0xff]
        %v1205 = vld [vmem:[%s265 + $0xc0] sm:$0xff]
        %v1206 = vld [vmem:[%s265 + $0xc8] sm:$0xff]
        %v1207 = vld [vmem:[%s265 + $0xd0] sm:$0xff]
        %v1208 = vld [vmem:[%s265 + $0xd8] sm:$0xff]
        %v1209 = vld [vmem:[%s265 + $0xe0] sm:$0xff]
        %v1210 = vld [vmem:[%s265 + $0xe8] sm:$0xff]
        %v1211 = vld [vmem:[%s265 + $0xf0] sm:$0xff]
        %v1212 = vld [vmem:[%s265 + $0xf8] sm:$0xff]
        %v1213 = vld [vmem:[%s257] sm:$0x1]
        %v1215 = vperm.slane %v1213, 0
        %v1217 = vadd.f32 %v1181, %v1215
        %v1218 = vadd.f32 %v1182, %v1215
        %v1219 = vadd.f32 %v1183, %v1215
        %v1220 = vadd.f32 %v1184, %v1215
        %v1221 = vadd.f32 %v1185, %v1215
        %v1222 = vadd.f32 %v1186, %v1215
        %v1223 = vadd.f32 %v1187, %v1215
        %v1224 = vadd.f32 %v1188, %v1215
        %v1225 = vadd.f32 %v1189, %v1215
        %v1226 = vadd.f32 %v1190, %v1215
        %v1227 = vadd.f32 %v1191, %v1215
        %v1228 = vadd.f32 %v1192, %v1215
        %v1229 = vadd.f32 %v1193, %v1215
        %v1230 = vadd.f32 %v1194, %v1215
        %v1231 = vadd.f32 %v1195, %v1215
        %v1232 = vadd.f32 %v1196, %v1215
        %v1233 = vadd.f32 %v1197, %v1215
        %v1234 = vadd.f32 %v1198, %v1215
        %v1235 = vadd.f32 %v1199, %v1215
        %v1236 = vadd.f32 %v1200, %v1215
        %v1237 = vadd.f32 %v1201, %v1215
        %v1238 = vadd.f32 %v1202, %v1215
        %v1239 = vadd.f32 %v1203, %v1215
        %v1240 = vadd.f32 %v1204, %v1215
        %v1241 = vadd.f32 %v1205, %v1215
        %v1242 = vadd.f32 %v1206, %v1215
        %v1243 = vadd.f32 %v1207, %v1215
        %v1244 = vadd.f32 %v1208, %v1215
        %v1245 = vadd.f32 %v1209, %v1215
        %v1246 = vadd.f32 %v1210, %v1215
        %v1247 = vadd.f32 %v1211, %v1215
        %v1248 = vadd.f32 %v1212, %v1215
        %v1249 = vmax.f32 %v1217, 0.0
        %v1250 = vmax.f32 %v1218, 0.0
        %v1251 = vmax.f32 %v1219, 0.0
        %v1252 = vmax.f32 %v1220, 0.0
        %v1253 = vmax.f32 %v1221, 0.0
        %v1254 = vmax.f32 %v1222, 0.0
        %v1255 = vmax.f32 %v1223, 0.0
        %v1256 = vmax.f32 %v1224, 0.0
        %v1257 = vmax.f32 %v1225, 0.0
        %v1258 = vmax.f32 %v1226, 0.0
        %v1259 = vmax.f32 %v1227, 0.0
        %v1260 = vmax.f32 %v1228, 0.0
        %v1261 = vmax.f32 %v1229, 0.0
        %v1262 = vmax.f32 %v1230, 0.0
        %v1263 = vmax.f32 %v1231, 0.0
        %v1264 = vmax.f32 %v1232, 0.0
        %v1265 = vmax.f32 %v1233, 0.0
        %v1266 = vmax.f32 %v1234, 0.0
        %v1267 = vmax.f32 %v1235, 0.0
        %v1268 = vmax.f32 %v1236, 0.0
        %v1269 = vmax.f32 %v1237, 0.0
        %v1270 = vmax.f32 %v1238, 0.0
        %v1271 = vmax.f32 %v1239, 0.0
        %v1272 = vmax.f32 %v1240, 0.0
        %v1273 = vmax.f32 %v1241, 0.0
        %v1274 = vmax.f32 %v1242, 0.0
        %v1275 = vmax.f32 %v1243, 0.0
        %v1276 = vmax.f32 %v1244, 0.0
        %v1277 = vmax.f32 %v1245, 0.0
        %v1278 = vmax.f32 %v1246, 0.0
        %v1279 = vmax.f32 %v1247, 0.0
        %v1280 = vmax.f32 %v1248, 0.0
        %1281 = vst [vmem:[%s265] sm:$0xff] %v1249
        %1282 = vst [vmem:[%s265 + $0x8] sm:$0xff] %v1250
        %1283 = vst [vmem:[%s265 + $0x10] sm:$0xff] %v1251
        %1284 = vst [vmem:[%s265 + $0x18] sm:$0xff] %v1252
        %1285 = vst [vmem:[%s265 + $0x20] sm:$0xff] %v1253
        %1286 = vst [vmem:[%s265 + $0x28] sm:$0xff] %v1254
        %1287 = vst [vmem:[%s265 + $0x30] sm:$0xff] %v1255
        %1288 = vst [vmem:[%s265 + $0x38] sm:$0xff] %v1256
        %1289 = vst [vmem:[%s265 + $0x40] sm:$0xff] %v1257
        %1290 = vst [vmem:[%s265 + $0x48] sm:$0xff] %v1258
        %1291 = vst [vmem:[%s265 + $0x50] sm:$0xff] %v1259
        %1292 = vst [vmem:[%s265 + $0x58] sm:$0xff] %v1260
        %1293 = vst [vmem:[%s265 + $0x60] sm:$0xff] %v1261
        %1294 = vst [vmem:[%s265 + $0x68] sm:$0xff] %v1262
        %1295 = vst [vmem:[%s265 + $0x70] sm:$0xff] %v1263
        %1296 = vst [vmem:[%s265 + $0x78] sm:$0xff] %v1264
        %1297 = vst [vmem:[%s265 + $0x80] sm:$0xff] %v1265
        %1298 = vst [vmem:[%s265 + $0x88] sm:$0xff] %v1266
        %1299 = vst [vmem:[%s265 + $0x90] sm:$0xff] %v1267
        %1300 = vst [vmem:[%s265 + $0x98] sm:$0xff] %v1268
        %1301 = vst [vmem:[%s265 + $0xa0] sm:$0xff] %v1269
        %1302 = vst [vmem:[%s265 + $0xa8] sm:$0xff] %v1270
        %1303 = vst [vmem:[%s265 + $0xb0] sm:$0xff] %v1271
        %1304 = vst [vmem:[%s265 + $0xb8] sm:$0xff] %v1272
        %1305 = vst [vmem:[%s265 + $0xc0] sm:$0xff] %v1273
        %1306 = vst [vmem:[%s265 + $0xc8] sm:$0xff] %v1274
        %1307 = vst [vmem:[%s265 + $0xd0] sm:$0xff] %v1275
        %1308 = vst [vmem:[%s265 + $0xd8] sm:$0xff] %v1276
        %1309 = vst [vmem:[%s265 + $0xe0] sm:$0xff] %v1277
        %1310 = vst [vmem:[%s265 + $0xe8] sm:$0xff] %v1278
        %1311 = vst [vmem:[%s265 + $0xf0] sm:$0xff] %v1279
        %1312 = vst [vmem:[%s265 + $0xf8] sm:$0xff] %v1280
      $region40: #{wsddn_forward.8} parent=31 // pred_fallthru
        _
      %s1313 = smul.u32 32, %s19
      %p1314 = scmp.lt.s32.totalorder %s1313, 127
      %s1315 = scalar_select %p1314, %s1313, 127
      %p1316 = scmp.lt.s32.totalorder %s20, 0
      %s1317 = scalar_select %p1316, %s20, 0
      %s1318 = sadd.s32 %s1317, %s1315
      %s1319 = smul.addr %s1318, 8
      %s1320 = scalar_lea.vmem %s3, %s1319
      // Predicated region
      $region41: #{wsddn_forward.8} parent=31 // pred_check
        %p1321 = pneg %p135
      $region42: #{wsddn_forward.8} parent=31 // pred_check_branch
        %1323 = sbr.rel (%p1321) target = $region44
      $region43: #{wsddn_forward.8} parent=31 // pred_region
        %s1324 = smul.u32 32, %s19
      $region44: #{wsddn_forward.8} parent=31 // pred_fallthru
        _
    $region32: #{wsddn_forward.8} parent=5 // pred_fallthru
      _
    %p1325 = scmp.le.s32.totalorder 2, %s9
    // Predicated region
    $region45: #{wsddn_forward.8} parent=5 // pred_check
      %p1326 = pneg %p1325
    $region46: #{wsddn_forward.8} parent=5 // pred_check_branch
      %1328 = sbr.rel (%p1326) target = $region48
    $region47: #{wsddn_forward.8} parent=5 // pred_region
      %s1329 = ssub.s32 %s9, 2
      // Predicated region
      $region49: #{wsddn_forward.8} parent=47 // pred_check
        %p1330 = pneg %p141
      $region50: #{wsddn_forward.8} parent=47 // pred_check_branch
        %1332 = sbr.rel (%p1330) target = $region52
      $region51: #{wsddn_forward.8} parent=47 // pred_region
        %s1333 = smul.u32 32, %s22
        %p1334 = scmp.lt.s32.totalorder %s1333, 127
        %s1335 = scalar_select %p1334, %s1333, 127
        %p1336 = scmp.lt.s32.totalorder %s23, 0
        %s1337 = scalar_select %p1336, %s23, 0
        %s1338 = sadd.s32 %s1337, %s1335
        %s1339 = smul.addr %s1338, 8
        %s1340 = scalar_lea.vmem %s3, %s1339
      $region52: #{wsddn_forward.8} parent=47 // pred_fallthru
        _
    $region48: #{wsddn_forward.8} parent=5 // pred_fallthru
      _
  $region6: #{wsddn_forward.8} parent=0 // loop_footer
    %s13 = sadd.s32 1, %s9
  $region7: #{wsddn_forward.8} parent=0 // loop_footer_branch
    %8 = sbr.rel target = $region3
  $region8: #{wsddn_forward.8} parent=0 // loop_exit
    _

// kernel: wsddn_forward.9
$region0: #{wsddn_forward.9}
  #allocation0 [shape = 'u32[]', space=smem, size = 0x4, offset = 0x4, fixed_abs, tag = 'smem constant byte address 0x4 - core index']
  #allocation1 [shape = 'u32[72,128]{1,0:T(1,128)}', space=vmem, size = 0x9000, scoped, tag = 'internal scratch']
  %s0 = inlined_call_operand.vmem [shape: bf16[232,1792], index: 0, kind: input, shape index: {}]
  %s1 = inlined_call_operand.vmem [shape: bf16[1792,256], index: 1, kind: input, shape index: {}]
  %s2 = inlined_call_operand.vmem [shape: f32[1,256], index: 2, kind: input, shape index: {}]
  %s3 = inlined_call_operand.vmem [shape: f32[232,256], index: 3, kind: output, shape index: {}]
  %s4 = sld [smem:[#allocation0]]
  $region91: #{wsddn_forward.9} parent=0
    _
  %s6 = ssub.s32 1, %s4
  %s7 = scalar_select 0, %s6, %s4
  $region1: #{wsddn_forward.9} parent=0
    #allocation2 [shape = 'u8[237568]{0}', space=vmem, size = 0x3a000, scoped, tag = 'input window, operand 0']
    loop: start=0, step=1, limit=9
    $region2: #{wsddn_forward.9} parent=1 // loop_pre_header
      _
    $region3: #{wsddn_forward.9} parent=1 // loop_header
      %s9 = sphi 0, %s13
      %p10 = scmp.ge.s32.totalorder %s9, 9
      %s16 = sphi 0, %s35
      %s17 = sphi 0, %s31
      %s18 = sphi 0, %s27
      %s19 = sphi 0, %s16
      %s20 = sphi 0, %s17
      %s21 = sphi 0, %s18
      %s22 = sphi 0, %s19
      %s23 = sphi 0, %s20
      %s24 = sphi 0, %s21
      %s40 = sphi 0, %s42
      %s43 = sphi 0, %s40
      %s44 = sphi 0, %s43
      %s60 = sphi 0, %s44
      %s68 = sphi 0, %s70
      %s71 = sphi 0, %s68
      %s72 = sphi 0, %s71
      %s88 = sphi 0, %s72
      %s94 = sphi 0, %s96
      %s97 = sphi 0, %s94
      %s98 = sphi 0, %s97
      %s114 = sphi 0, %s98
      %s122 = sphi 0, %s124
      %s125 = sphi 0, %s122
      %s126 = sphi 0, %s125
      %s142 = sphi 0, %s126
    $region4: #{wsddn_forward.9} parent=1 // loop_header_branch
      %12 = sbr.rel (%p10) target = $region8
    $region5: #{wsddn_forward.9} parent=1 // loop_body
      %s14 = ssub.s32 %s9, 1
      %s15 = ssub.s32 %s9, 2
      %s25 = sadd.s32 1, %s18
      %p26 = scmp.ge.s32.totalorder %s25, 7
      %s27 = scalar_select %p26, 0, %s25
      %s28 = sadd.s32 1, %s17
      %s29 = scalar_select %p26, %s28, %s17
      %p30 = scmp.ge.s32.totalorder %s29, 1
      %s31 = scalar_select %p30, 0, %s29
      %s32 = sadd.s32 1, %s16
      %s33 = scalar_select %p30, %s32, %s16
      %p34 = scmp.ge.s32.totalorder %s33, 1
      %s35 = scalar_select %p34, 0, %s33
      %s36 = ssub.s32 %s16, %s35
      %s37 = ssub.s32 %s18, %s27
      %s38 = sor.u32 %s36, %s37
      %p39 = scmp.eq.s32.totalorder %s38, 0
      %s41 = sadd.s32 %s40, 1
      %s42 = scalar_select %p39, %s40, %s41
      %p45 = pneg %p39
      %p46 = scmp.eq.s32.totalorder %s9, 6
      %p47 = por %p45, %p46
      %p48 = scmp.ne.s32.totalorder %s40, %s43
      %p49 = scmp.eq.s32.totalorder %s9, 0
      %p50 = por %p48, %p49
      %p51 = scmp.ne.s32.totalorder %s40, %s43
      %p52 = scmp.eq.s32.totalorder %s14, 6
      %p53 = por %p51, %p52
      %p54 = scmp.ne.s32.totalorder %s43, %s44
      %p55 = scmp.eq.s32.totalorder %s14, 0
      %p56 = por %p54, %p55
      %p57 = scmp.ne.s32.totalorder %s43, %s44
      %p58 = scmp.eq.s32.totalorder %s15, 6
      %p59 = por %p57, %p58
      %p61 = scmp.ne.s32.totalorder %s44, %s60
      %p62 = scmp.eq.s32.totalorder %s15, 0
      %p63 = por %p61, %p62
      %s64 = ssub.s32 %s18, %s27
      %s65 = ssub.s32 %s17, %s31
      %s66 = sor.u32 %s64, %s65
      %p67 = scmp.eq.s32.totalorder %s66, 0
      %s69 = sadd.s32 %s68, 1
      %s70 = scalar_select %p67, %s68, %s69
      %p73 = pneg %p67
      %p74 = scmp.eq.s32.totalorder %s9, 6
      %p75 = por %p73, %p74
      %p76 = scmp.ne.s32.totalorder %s68, %s71
      %p77 = scmp.eq.s32.totalorder %s9, 0
      %p78 = por %p76, %p77
      %p79 = scmp.ne.s32.totalorder %s68, %s71
      %p80 = scmp.eq.s32.totalorder %s14, 6
      %p81 = por %p79, %p80
      %p82 = scmp.ne.s32.totalorder %s71, %s72
      %p83 = scmp.eq.s32.totalorder %s14, 0
      %p84 = por %p82, %p83
      %p85 = scmp.ne.s32.totalorder %s71, %s72
      %p86 = scmp.eq.s32.totalorder %s15, 6
      %p87 = por %p85, %p86
      %p89 = scmp.ne.s32.totalorder %s72, %s88
      %p90 = scmp.eq.s32.totalorder %s15, 0
      %p91 = por %p89, %p90
      %s92 = ssub.s32 %s17, %s31
      %p93 = scmp.eq.s32.totalorder %s92, 0
      %s95 = sadd.s32 %s94, 1
      %s96 = scalar_select %p93, %s94, %s95
      %p99 = pneg %p93
      %p100 = scmp.eq.s32.totalorder %s9, 6
      %p101 = por %p99, %p100
      %p102 = scmp.ne.s32.totalorder %s94, %s97
      %p103 = scmp.eq.s32.totalorder %s9, 0
      %p104 = por %p102, %p103
      %p105 = scmp.ne.s32.totalorder %s94, %s97
      %p106 = scmp.eq.s32.totalorder %s14, 6
      %p107 = por %p105, %p106
      %p108 = scmp.ne.s32.totalorder %s97, %s98
      %p109 = scmp.eq.s32.totalorder %s14, 0
      %p110 = por %p108, %p109
      %p111 = scmp.ne.s32.totalorder %s97, %s98
      %p112 = scmp.eq.s32.totalorder %s15, 6
      %p113 = por %p111, %p112
      %p115 = scmp.ne.s32.totalorder %s98, %s114
      %p116 = scmp.eq.s32.totalorder %s15, 0
      %p117 = por %p115, %p116
      %s118 = ssub.s32 %s16, %s35
      %s119 = ssub.s32 %s17, %s31
      %s120 = sor.u32 %s118, %s119
      %p121 = scmp.eq.s32.totalorder %s120, 0
      %s123 = sadd.s32 %s122, 1
      %s124 = scalar_select %p121, %s122, %s123
      %p127 = pneg %p121
      %p128 = scmp.eq.s32.totalorder %s9, 6
      %p129 = por %p127, %p128
      %p130 = scmp.ne.s32.totalorder %s122, %s125
      %p131 = scmp.eq.s32.totalorder %s9, 0
      %p132 = por %p130, %p131
      %p133 = scmp.ne.s32.totalorder %s122, %s125
      %p134 = scmp.eq.s32.totalorder %s14, 6
      %p135 = por %p133, %p134
      %p136 = scmp.ne.s32.totalorder %s125, %s126
      %p137 = scmp.eq.s32.totalorder %s14, 0
      %p138 = por %p136, %p137
      %p139 = scmp.ne.s32.totalorder %s125, %s126
      %p140 = scmp.eq.s32.totalorder %s15, 6
      %p141 = por %p139, %p140
      %p143 = scmp.ne.s32.totalorder %s126, %s142
      %p144 = scmp.eq.s32.totalorder %s15, 0
      %p145 = por %p143, %p144
      %p146 = scmp.le.s32.totalorder 1, %s9
      %p147 = scmp.lt.s32.totalorder %s9, 8
      %p148 = pnand %p146, %p147
      %p149 = pneg %p148
      // Predicated region
      $region9: #{wsddn_forward.9} parent=5 // pred_check
        _
      $region10: #{wsddn_forward.9} parent=5 // pred_check_branch
        %151 = sbr.rel (%p148) target = $region12
      $region11: #{wsddn_forward.9} parent=5 // pred_region
        %s152 = ssub.s32 %s9, 1
        // Predicated region
        $region13: #{wsddn_forward.9} parent=11 // pred_check
          %p153 = pneg %p110
        $region14: #{wsddn_forward.9} parent=11 // pred_check_branch
          %155 = sbr.rel (%p153) target = $region16
        $region15: #{wsddn_forward.9} parent=11 // pred_region
          %s156 = smul.u32 2, %s20
          %p157 = scmp.lt.s32.totalorder %s156, 1
          %s158 = scalar_select %p157, %s156, 1
          %s159 = scalar_lea.vmem %s2, %s158
          %s160 = smul.u32 2, %s20
        $region16: #{wsddn_forward.9} parent=11 // pred_fallthru
          _
      $region12: #{wsddn_forward.9} parent=5 // pred_fallthru
        _
      %p161 = scmp.lt.s32.totalorder %s9, 7
      // Predicated region
      $region17: #{wsddn_forward.9} parent=5 // pred_check
        %p162 = pneg %p161
      $region18: #{wsddn_forward.9} parent=5 // pred_check_branch
        %164 = sbr.rel (%p162) target = $region20
      $region19: #{wsddn_forward.9} parent=5 // pred_region
        // Predicated region
        $region21: #{wsddn_forward.9} parent=19 // pred_check
          %p165 = pneg %p50
        $region22: #{wsddn_forward.9} parent=19 // pred_check_branch
          %167 = sbr.rel (%p165) target = $region24
        $region23: #{wsddn_forward.9} parent=19 // pred_region
          %s168 = sand.u32 %s40, 1
          %s169 = sand.u32 %s40, 1
          %s170 = smul.addr %s169, 232
          %s171 = scalar_lea.vmem [#allocation2], %s170
          %s172 = smul.u32 29, %s16
          %s173 = smul.u32 2, %s18
          %s174 = smul.addr %s172, 14
          %s175 = sadd.s32 %s173, %s174
          %s176 = smul.addr %s175, 4
          %s177 = scalar_lea.vmem %s0, %s176
          // Predicated region
          $region25: #{wsddn_forward.9} parent=23 // pred_check
            _
          $region26: #{wsddn_forward.9} parent=23 // pred_check_branch
            %179 = sbr.rel (0) target = $region28
          $region27: #{wsddn_forward.9} parent=23 // pred_region
            // Predicated region
            $region29: #{wsddn_forward.9} parent=27 // pred_check
              _
            $region30: #{wsddn_forward.9} parent=27 // pred_check_branch
              %181 = sbr.rel (0) target = $region32
            $region31: #{wsddn_forward.9} parent=27 // pred_region
              // Predicated region
              $region44: #{wsddn_forward.9} parent=31 // pred_check
                _
              $region45: #{wsddn_forward.9} parent=31 // pred_check_branch
                %253 = sbr.rel (0) target = $region47
              $region46: #{wsddn_forward.9} parent=31 // pred_region
                loop: start=0, step=1, limit=1
                $region48: #{wsddn_forward.9} parent=46 // loop_pre_header
                  _
                $region49: #{wsddn_forward.9} parent=46 // loop_header
                  %s255 = sphi 0, %s259
                  %p256 = scmp.ge.s32.totalorder %s255, 1
                  %s260 = sphi %s177, %s177
                  %s261 = sphi %s171, %s171
                $region50: #{wsddn_forward.9} parent=46 // loop_header_branch
                  %258 = sbr.rel (%p256) target = $region54
                $region51: #{wsddn_forward.9} parent=46 // loop_body
                  %v262 = vld [vmem:[%s260] sm:$0xff]
                  %263 = vst [vmem:[%s261] sm:$0xff] %v262
                  %v264 = vld [vmem:[%s260 + $0x38] sm:$0xff]
                  %265 = vst [vmem:[%s261 + $0x8] sm:$0xff] %v264
                  %v266 = vld [vmem:[%s260 + $0x70] sm:$0xff]
                  %267 = vst [vmem:[%s261 + $0x10] sm:$0xff] %v266
                  %v268 = vld [vmem:[%s260 + $0xa8] sm:$0xff]
                  %269 = vst [vmem:[%s261 + $0x18] sm:$0xff] %v268
                  %v270 = vld [vmem:[%s260 + $0xe0] sm:$0xff]
                  %271 = vst [vmem:[%s261 + $0x20] sm:$0xff] %v270
                  %v272 = vld [vmem:[%s260 + $0x118] sm:$0xff]
                  %273 = vst [vmem:[%s261 + $0x28] sm:$0xff] %v272
                  %v274 = vld [vmem:[%s260 + $0x150] sm:$0xff]
                  %275 = vst [vmem:[%s261 + $0x30] sm:$0xff] %v274
                  %v276 = vld [vmem:[%s260 + $0x188] sm:$0xff]
                  %277 = vst [vmem:[%s261 + $0x38] sm:$0xff] %v276
                  %v278 = vld [vmem:[%s260 + $0x1c0] sm:$0xff]
                  %279 = vst [vmem:[%s261 + $0x40] sm:$0xff] %v278
                  %v280 = vld [vmem:[%s260 + $0x1f8] sm:$0xff]
                  %281 = vst [vmem:[%s261 + $0x48] sm:$0xff] %v280
                  %v282 = vld [vmem:[%s260 + $0x230] sm:$0xff]
                  %283 = vst [vmem:[%s261 + $0x50] sm:$0xff] %v282
                  %v284 = vld [vmem:[%s260 + $0x268] sm:$0xff]
                  %285 = vst [vmem:[%s261 + $0x58] sm:$0xff] %v284
                  %v286 = vld [vmem:[%s260 + $0x2a0] sm:$0xff]
                  %287 = vst [vmem:[%s261 + $0x60] sm:$0xff] %v286
                  %v288 = vld [vmem:[%s260 + $0x2d8] sm:$0xff]
                  %289 = vst [vmem:[%s261 + $0x68] sm:$0xff] %v288
                  %v290 = vld [vmem:[%s260 + $0x310] sm:$0xff]
                  %291 = vst [vmem:[%s261 + $0x70] sm:$0xff] %v290
                  %v292 = vld [vmem:[%s260 + $0x348] sm:$0xff]
                  %293 = vst [vmem:[%s261 + $0x78] sm:$0xff] %v292
                  %v294 = vld [vmem:[%s260 + $0x380] sm:$0xff]
                  %295 = vst [vmem:[%s261 + $0x80] sm:$0xff] %v294
                  %v296 = vld [vmem:[%s260 + $0x3b8] sm:$0xff]
                  %297 = vst [vmem:[%s261 + $0x88] sm:$0xff] %v296
                  %v298 = vld [vmem:[%s260 + $0x3f0] sm:$0xff]
                  %299 = vst [vmem:[%s261 + $0x90] sm:$0xff] %v298
                  %v300 = vld [vmem:[%s260 + $0x428] sm:$0xff]
                  %301 = vst [vmem:[%s261 + $0x98] sm:$0xff] %v300
                  %v302 = vld [vmem:[%s260 + $0x460] sm:$0xff]
                  %303 = vst [vmem:[%s261 + $0xa0] sm:$0xff] %v302
                  %v304 = vld [vmem:[%s260 + $0x498] sm:$0xff]
                  %305 = vst [vmem:[%s261 + $0xa8] sm:$0xff] %v304
                  %v306 = vld [vmem:[%s260 + $0x4d0] sm:$0xff]
                  %307 = vst [vmem:[%s261 + $0xb0] sm:$0xff] %v306
                  %v308 = vld [vmem:[%s260 + $0x508] sm:$0xff]
                  %309 = vst [vmem:[%s261 + $0xb8] sm:$0xff] %v308
                  %v310 = vld [vmem:[%s260 + $0x540] sm:$0xff]
                  %311 = vst [vmem:[%s261 + $0xc0] sm:$0xff] %v310
                  %v312 = vld [vmem:[%s260 + $0x578] sm:$0xff]
                  %313 = vst [vmem:[%s261 + $0xc8] sm:$0xff] %v312
                  %v314 = vld [vmem:[%s260 + $0x5b0] sm:$0xff]
                  %315 = vst [vmem:[%s261 + $0xd0] sm:$0xff] %v314
                  %v316 = vld [vmem:[%s260 + $0x5e8] sm:$0xff]
                  %317 = vst [vmem:[%s261 + $0xd8] sm:$0xff] %v316
                  %v318 = vld [vmem:[%s260 + $0x620] sm:$0xff]
                  %319 = vst [vmem:[%s261 + $0xe0] sm:$0xff] %v318
                $region52: #{wsddn_forward.9} parent=46 // loop_footer
                  %s259 = sadd.s32 1, %s255
                $region53: #{wsddn_forward.9} parent=46 // loop_footer_branch
                  %254 = sbr.rel target = $region49
                $region54: #{wsddn_forward.9} parent=46 // loop_exit
                  _
              $region47: #{wsddn_forward.9} parent=31 // pred_fallthru
                _
              // Predicated region
              $region55: #{wsddn_forward.9} parent=31 // pred_check
                _
              $region56: #{wsddn_forward.9} parent=31 // pred_check_branch
                %321 = sbr.rel target = $region58
              $region57: #{wsddn_forward.9} parent=31 // pred_region
                _
              $region58: #{wsddn_forward.9} parent=31 // pred_fallthru
                _
            $region32: #{wsddn_forward.9} parent=27 // pred_fallthru
              _
            // Predicated region
            $region33: #{wsddn_forward.9} parent=27 // pred_check
              _
            $region34: #{wsddn_forward.9} parent=27 // pred_check_branch
              %183 = sbr.rel target = $region36
            $region35: #{wsddn_forward.9} parent=27 // pred_region
              %s185 = ssub.s32 256, 1
              loop: start=0, step=1, limit=1
              $region37: #{wsddn_forward.9} parent=35 // loop_pre_header
                _
              $region38: #{wsddn_forward.9} parent=35 // loop_header
                %s187 = sphi 0, %s191
                %p188 = scmp.ge.s32.totalorder %s187, 1
                %s192 = sphi %s177, %s177
                %s193 = sphi %s171, %s171
              $region39: #{wsddn_forward.9} parent=35 // loop_header_branch
                %190 = sbr.rel (%p188) target = $region43
              $region40: #{wsddn_forward.9} parent=35 // loop_body
                %v194 = vld [vmem:[%s192] sm:%s185]
                %195 = vst [vmem:[%s193] sm:%s185] %v194
                %v196 = vld [vmem:[%s192 + $0x38] sm:%s185]
                %197 = vst [vmem:[%s193 + $0x8] sm:%s185] %v196
                %v198 = vld [vmem:[%s192 + $0x70] sm:%s185]
                %199 = vst [vmem:[%s193 + $0x10] sm:%s185] %v198
                %v200 = vld [vmem:[%s192 + $0xa8] sm:%s185]
                %201 = vst [vmem:[%s193 + $0x18] sm:%s185] %v200
                %v202 = vld [vmem:[%s192 + $0xe0] sm:%s185]
                %203 = vst [vmem:[%s193 + $0x20] sm:%s185] %v202
                %v204 = vld [vmem:[%s192 + $0x118] sm:%s185]
                %205 = vst [vmem:[%s193 + $0x28] sm:%s185] %v204
                %v206 = vld [vmem:[%s192 + $0x150] sm:%s185]
                %207 = vst [vmem:[%s193 + $0x30] sm:%s185] %v206
                %v208 = vld [vmem:[%s192 + $0x188] sm:%s185]
                %209 = vst [vmem:[%s193 + $0x38] sm:%s185] %v208
                %v210 = vld [vmem:[%s192 + $0x1c0] sm:%s185]
                %211 = vst [vmem:[%s193 + $0x40] sm:%s185] %v210
                %v212 = vld [vmem:[%s192 + $0x1f8] sm:%s185]
                %213 = vst [vmem:[%s193 + $0x48] sm:%s185] %v212
                %v214 = vld [vmem:[%s192 + $0x230] sm:%s185]
                %215 = vst [vmem:[%s193 + $0x50] sm:%s185] %v214
                %v216 = vld [vmem:[%s192 + $0x268] sm:%s185]
                %217 = vst [vmem:[%s193 + $0x58] sm:%s185] %v216
                %v218 = vld [vmem:[%s192 + $0x2a0] sm:%s185]
                %219 = vst [vmem:[%s193 + $0x60] sm:%s185] %v218
                %v220 = vld [vmem:[%s192 + $0x2d8] sm:%s185]
                %221 = vst [vmem:[%s193 + $0x68] sm:%s185] %v220
                %v222 = vld [vmem:[%s192 + $0x310] sm:%s185]
                %223 = vst [vmem:[%s193 + $0x70] sm:%s185] %v222
                %v224 = vld [vmem:[%s192 + $0x348] sm:%s185]
                %225 = vst [vmem:[%s193 + $0x78] sm:%s185] %v224
                %v226 = vld [vmem:[%s192 + $0x380] sm:%s185]
                %227 = vst [vmem:[%s193 + $0x80] sm:%s185] %v226
                %v228 = vld [vmem:[%s192 + $0x3b8] sm:%s185]
                %229 = vst [vmem:[%s193 + $0x88] sm:%s185] %v228
                %v230 = vld [vmem:[%s192 + $0x3f0] sm:%s185]
                %231 = vst [vmem:[%s193 + $0x90] sm:%s185] %v230
                %v232 = vld [vmem:[%s192 + $0x428] sm:%s185]
                %233 = vst [vmem:[%s193 + $0x98] sm:%s185] %v232
                %v234 = vld [vmem:[%s192 + $0x460] sm:%s185]
                %235 = vst [vmem:[%s193 + $0xa0] sm:%s185] %v234
                %v236 = vld [vmem:[%s192 + $0x498] sm:%s185]
                %237 = vst [vmem:[%s193 + $0xa8] sm:%s185] %v236
                %v238 = vld [vmem:[%s192 + $0x4d0] sm:%s185]
                %239 = vst [vmem:[%s193 + $0xb0] sm:%s185] %v238
                %v240 = vld [vmem:[%s192 + $0x508] sm:%s185]
                %241 = vst [vmem:[%s193 + $0xb8] sm:%s185] %v240
                %v242 = vld [vmem:[%s192 + $0x540] sm:%s185]
                %243 = vst [vmem:[%s193 + $0xc0] sm:%s185] %v242
                %v244 = vld [vmem:[%s192 + $0x578] sm:%s185]
                %245 = vst [vmem:[%s193 + $0xc8] sm:%s185] %v244
                %v246 = vld [vmem:[%s192 + $0x5b0] sm:%s185]
                %247 = vst [vmem:[%s193 + $0xd0] sm:%s185] %v246
                %v248 = vld [vmem:[%s192 + $0x5e8] sm:%s185]
                %249 = vst [vmem:[%s193 + $0xd8] sm:%s185] %v248
                %v250 = vld [vmem:[%s192 + $0x620] sm:%s185]
                %251 = vst [vmem:[%s193 + $0xe0] sm:%s185] %v250
              $region41: #{wsddn_forward.9} parent=35 // loop_footer
                %s191 = sadd.s32 1, %s187
              $region42: #{wsddn_forward.9} parent=35 // loop_footer_branch
                %186 = sbr.rel target = $region38
              $region43: #{wsddn_forward.9} parent=35 // loop_exit
                _
            $region36: #{wsddn_forward.9} parent=27 // pred_fallthru
              _
          $region28: #{wsddn_forward.9} parent=23 // pred_fallthru
            _
          %322 = vnop
        $region24: #{wsddn_forward.9} parent=19 // pred_fallthru
          _
        // Predicated region
        $region59: #{wsddn_forward.9} parent=19 // pred_check
          %p323 = pneg %p78
        $region60: #{wsddn_forward.9} parent=19 // pred_check_branch
          %325 = sbr.rel (%p323) target = $region62
        $region61: #{wsddn_forward.9} parent=19 // pred_region
          %s326 = smul.u32 32, %s18
          %s327 = smul.u32 2, %s17
          %p328 = scmp.lt.s32.totalorder %s326, 223
          %s329 = scalar_select %p328, %s326, 223
          %p330 = scmp.lt.s32.totalorder %s327, 1
          %s331 = scalar_select %p330, %s327, 1
          %s332 = smul.addr %s329, 2
          %s333 = sadd.s32 %s331, %s332
          %s334 = smul.addr %s333, 4
          %s335 = scalar_lea.vmem %s1, %s334
          %s336 = smul.u32 32, %s18
          %s337 = smul.u32 2, %s17
        $region62: #{wsddn_forward.9} parent=19 // pred_fallthru
          _
      $region20: #{wsddn_forward.9} parent=5 // pred_fallthru
        _
      %p338 = scmp.le.s32.totalorder 1, %s9
      %p339 = scmp.lt.s32.totalorder %s9, 8
      %p340 = pnand %p338, %p339
      %p341 = pneg %p340
      // Predicated region
      $region63: #{wsddn_forward.9} parent=5 // pred_check
        _
      $region64: #{wsddn_forward.9} parent=5 // pred_check_branch
        %343 = sbr.rel (%p340) target = $region66
      $region65: #{wsddn_forward.9} parent=5 // pred_region
        %s344 = ssub.s32 %s9, 1
        %s345 = sand.u32 %s43, 1
        %s346 = sand.u32 %s43, 1
        %s347 = smul.addr %s346, 232
        %s348 = scalar_lea.vmem [#allocation2], %s347
        // Predicated region
        $region67: #{wsddn_forward.9} parent=65 // pred_check
          %p349 = pneg %p56
        $region68: #{wsddn_forward.9} parent=65 // pred_check_branch
          %351 = sbr.rel (%p349) target = $region70
        $region69: #{wsddn_forward.9} parent=65 // pred_region
          _
        $region70: #{wsddn_forward.9} parent=65 // pred_fallthru
          _
        %s352 = sand.u32 %s43, 1
        %s353 = sand.u32 %s43, 1
        %s354 = smul.addr %s353, 232
        %s355 = scalar_lea.vmem [#allocation2], %s354
        %p356 = pneg %p56
        %p357 = pneg %p53
        %s358 = smul.u32 32, %s21
        %s359 = smul.u32 2, %s20
        %p360 = scmp.lt.s32.totalorder %s358, 223
        %s361 = scalar_select %p360, %s358, 223
        %p362 = scmp.lt.s32.totalorder %s359, 1
        %s363 = scalar_select %p362, %s359, 1
        %s364 = smul.addr %s361, 2
        %s365 = sadd.s32 %s363, %s364
        %s366 = smul.addr %s365, 4
        %s367 = scalar_lea.vmem %s1, %s366
        %p368 = pneg %p84
        %p369 = pneg %p81
        %s370 = smul.u32 2, %s20
        %p371 = scmp.lt.s32.totalorder %s370, 1
        %s372 = scalar_select %p371, %s370, 1
        %s373 = scalar_lea.vmem %s2, %s372
        %p374 = pneg %p110
        %p375 = pneg %p107
        %p376 = pneg %p138
        %p377 = pneg %p135
        %s378 = smul.u32 29, %s19
        %s379 = smul.u32 2, %s20
        %p380 = scmp.lt.s32.totalorder %s378, 28
        %s381 = scalar_select %p380, %s378, 28
        %p382 = scmp.lt.s32.totalorder %s379, 1
        %s383 = scalar_select %p382, %s379, 1
        %s384 = smul.addr %s381, 2
        %s385 = sadd.s32 %s383, %s384
        %s386 = smul.addr %s385, 8
        %s387 = scalar_lea.vmem %s3, %s386
        %s388 = smul.u32 29, %s19
        %s389 = smul.u32 2, %s21
        %s390 = smul.u32 32, %s21
        %s391 = smul.u32 2, %s20
        %p392 = scmp.lt.s32.totalorder %s390, 223
        %s393 = scalar_select %p392, %s390, 223
        %p394 = scmp.lt.s32.totalorder %s391, 1
        %s395 = scalar_select %p394, %s391, 1
        %s396 = smul.addr %s393, 2
        %s397 = sadd.s32 %s395, %s396
        %s398 = smul.addr %s397, 4
        %s399 = scalar_lea.vmem %s1, %s398
        %s400 = smul.u32 32, %s21
        %s401 = smul.u32 2, %s20
        %s402 = smul.u32 2, %s20
        %p403 = scmp.lt.s32.totalorder %s402, 1
        %s404 = scalar_select %p403, %s402, 1
        %s405 = scalar_lea.vmem %s2, %s404
        %s406 = smul.u32 2, %s20
        %s407 = smul.u32 29, %s19
        %s408 = smul.u32 2, %s20
        %p409 = scmp.lt.s32.totalorder %s407, 28
        %s410 = scalar_select %p409, %s407, 28
        %p411 = scmp.lt.s32.totalorder %s408, 1
        %s412 = scalar_select %p411, %s408, 1
        %s413 = smul.addr %s410, 2
        %s414 = sadd.s32 %s412, %s413
        %s415 = smul.addr %s414, 8
        %s416 = scalar_lea.vmem %s3, %s415
        %s417 = smul.u32 29, %s19
        %s418 = smul.u32 2, %s20
        %p419 = scmp.eq.s32.totalorder %s21, 0
        // Predicated region
        $region71: #{wsddn_forward.9} parent=65 // pred_check
          %p420 = pneg %p419
        $region72: #{wsddn_forward.9} parent=65 // pred_check_branch
          %422 = sbr.rel (%p420) target = $region74
        $region73: #{wsddn_forward.9} parent=65 // pred_region
          %423 = vst [vmem:[%s416] sm:$0xff] 0.0
          %424 = vst [vmem:[%s416 + $0x8] sm:$0xff] 0.0
          %425 = vst [vmem:[%s416 + $0x10] sm:$0xff] 0.0
          %426 = vst [vmem:[%s416 + $0x18] sm:$0xff] 0.0
          %427 = vst [vmem:[%s416 + $0x20] sm:$0xff] 0.0
          %428 = vst [vmem:[%s416 + $0x28] sm:$0xff] 0.0
          %429 = vst [vmem:[%s416 + $0x30] sm:$0xff] 0.0
          %430 = vst [vmem:[%s416 + $0x38] sm:$0xff] 0.0
          %431 = vst [vmem:[%s416 + $0x40] sm:$0xff] 0.0
          %432 = vst [vmem:[%s416 + $0x48] sm:$0xff] 0.0
          %433 = vst [vmem:[%s416 + $0x50] sm:$0xff] 0.0
          %434 = vst [vmem:[%s416 + $0x58] sm:$0xff] 0.0
          %435 = vst [vmem:[%s416 + $0x60] sm:$0xff] 0.0
          %436 = vst [vmem:[%s416 + $0x68] sm:$0xff] 0.0
          %437 = vst [vmem:[%s416 + $0x70] sm:$0xff] 0.0
          %438 = vst [vmem:[%s416 + $0x78] sm:$0xff] 0.0
          %439 = vst [vmem:[%s416 + $0x80] sm:$0xff] 0.0
          %440 = vst [vmem:[%s416 + $0x88] sm:$0xff] 0.0
          %441 = vst [vmem:[%s416 + $0x90] sm:$0xff] 0.0
          %442 = vst [vmem:[%s416 + $0x98] sm:$0xff] 0.0
          %443 = vst [vmem:[%s416 + $0xa0] sm:$0xff] 0.0
          %444 = vst [vmem:[%s416 + $0xa8] sm:$0xff] 0.0
          %445 = vst [vmem:[%s416 + $0xb0] sm:$0xff] 0.0
          %446 = vst [vmem:[%s416 + $0xb8] sm:$0xff] 0.0
          %447 = vst [vmem:[%s416 + $0xc0] sm:$0xff] 0.0
          %448 = vst [vmem:[%s416 + $0xc8] sm:$0xff] 0.0
          %449 = vst [vmem:[%s416 + $0xd0] sm:$0xff] 0.0
          %450 = vst [vmem:[%s416 + $0xd8] sm:$0xff] 0.0
          %451 = vst [vmem:[%s416 + $0xe0] sm:$0xff] 0.0
          %452 = vst [vmem:[%s416 + $0xe8] sm:$0xff] 0.0
          %453 = vst [vmem:[%s416 + $0xf0] sm:$0xff] 0.0
          %454 = vst [vmem:[%s416 + $0xf8] sm:$0xff] 0.0
          %455 = vst [vmem:[%s416 + $0x100] sm:$0xff] 0.0
          %456 = vst [vmem:[%s416 + $0x108] sm:$0xff] 0.0
          %457 = vst [vmem:[%s416 + $0x110] sm:$0xff] 0.0
          %458 = vst [vmem:[%s416 + $0x118] sm:$0xff] 0.0
          %459 = vst [vmem:[%s416 + $0x120] sm:$0xff] 0.0
          %460 = vst [vmem:[%s416 + $0x128] sm:$0xff] 0.0
          %461 = vst [vmem:[%s416 + $0x130] sm:$0xff] 0.0
          %462 = vst [vmem:[%s416 + $0x138] sm:$0xff] 0.0
          %463 = vst [vmem:[%s416 + $0x140] sm:$0xff] 0.0
          %464 = vst [vmem:[%s416 + $0x148] sm:$0xff] 0.0
          %465 = vst [vmem:[%s416 + $0x150] sm:$0xff] 0.0
          %466 = vst [vmem:[%s416 + $0x158] sm:$0xff] 0.0
          %467 = vst [vmem:[%s416 + $0x160] sm:$0xff] 0.0
          %468 = vst [vmem:[%s416 + $0x168] sm:$0xff] 0.0
          %469 = vst [vmem:[%s416 + $0x170] sm:$0xff] 0.0
          %470 = vst [vmem:[%s416 + $0x178] sm:$0xff] 0.0
          %471 = vst [vmem:[%s416 + $0x180] sm:$0xff] 0.0
          %472 = vst [vmem:[%s416 + $0x188] sm:$0xff] 0.0
          %473 = vst [vmem:[%s416 + $0x190] sm:$0xff] 0.0
          %474 = vst [vmem:[%s416 + $0x198] sm:$0xff] 0.0
          %475 = vst [vmem:[%s416 + $0x1a0] sm:$0xff] 0.0
          %476 = vst [vmem:[%s416 + $0x1a8] sm:$0xff] 0.0
          %477 = vst [vmem:[%s416 + $0x1b0] sm:$0xff] 0.0
          %478 = vst [vmem:[%s416 + $0x1b8] sm:$0xff] 0.0
          %479 = vst [vmem:[%s416 + $0x1c0] sm:$0xff] 0.0
          %480 = vst [vmem:[%s416 + $0x1c8] sm:$0xff] 0.0
        $region74: #{wsddn_forward.9} parent=65 // pred_fallthru
          _
        %v481 = vld [vmem:[%s416] sm:$0xff]
        %v482 = vld [vmem:[%s416 + $0x8] sm:$0xff]
        %v483 = vld [vmem:[%s416 + $0x10] sm:$0xff]
        %v484 = vld [vmem:[%s416 + $0x18] sm:$0xff]
        %v485 = vld [vmem:[%s416 + $0x20] sm:$0xff]
        %v486 = vld [vmem:[%s416 + $0x28] sm:$0xff]
        %v487 = vld [vmem:[%s416 + $0x30] sm:$0xff]
        %v488 = vld [vmem:[%s416 + $0x38] sm:$0xff]
        %v489 = vld [vmem:[%s416 + $0x40] sm:$0xff]
        %v490 = vld [vmem:[%s416 + $0x48] sm:$0xff]
        %v491 = vld [vmem:[%s416 + $0x50] sm:$0xff]
        %v492 = vld [vmem:[%s416 + $0x58] sm:$0xff]
        %v493 = vld [vmem:[%s416 + $0x60] sm:$0xff]
        %v494 = vld [vmem:[%s416 + $0x68] sm:$0xff]
        %v495 = vld [vmem:[%s416 + $0x70] sm:$0xff]
        %v496 = vld [vmem:[%s416 + $0x78] sm:$0xff]
        %v497 = vld [vmem:[%s416 + $0x80] sm:$0xff]
        %v498 = vld [vmem:[%s416 + $0x88] sm:$0xff]
        %v499 = vld [vmem:[%s416 + $0x90] sm:$0xff]
        %v500 = vld [vmem:[%s416 + $0x98] sm:$0xff]
        %v501 = vld [vmem:[%s416 + $0xa0] sm:$0xff]
        %v502 = vld [vmem:[%s416 + $0xa8] sm:$0xff]
        %v503 = vld [vmem:[%s416 + $0xb0] sm:$0xff]
        %v504 = vld [vmem:[%s416 + $0xb8] sm:$0xff]
        %v505 = vld [vmem:[%s416 + $0xc0] sm:$0xff]
        %v506 = vld [vmem:[%s416 + $0xc8] sm:$0xff]
        %v507 = vld [vmem:[%s416 + $0xd0] sm:$0xff]
        %v508 = vld [vmem:[%s416 + $0xd8] sm:$0xff]
        %v509 = vld [vmem:[%s416 + $0xe0] sm:$0xff]
        %v510 = vld [vmem:[%s416 + $0xe8] sm:$0xff]
        %v511 = vld [vmem:[%s416 + $0xf0] sm:$0xff]
        %v512 = vld [vmem:[%s416 + $0xf8] sm:$0xff]
        %v513 = vld [vmem:[%s416 + $0x100] sm:$0xff]
        %v514 = vld [vmem:[%s416 + $0x108] sm:$0xff]
        %v515 = vld [vmem:[%s416 + $0x110] sm:$0xff]
        %v516 = vld [vmem:[%s416 + $0x118] sm:$0xff]
        %v517 = vld [vmem:[%s416 + $0x120] sm:$0xff]
        %v518 = vld [vmem:[%s416 + $0x128] sm:$0xff]
        %v519 = vld [vmem:[%s416 + $0x130] sm:$0xff]
        %v520 = vld [vmem:[%s416 + $0x138] sm:$0xff]
        %v521 = vld [vmem:[%s416 + $0x140] sm:$0xff]
        %v522 = vld [vmem:[%s416 + $0x148] sm:$0xff]
        %v523 = vld [vmem:[%s416 + $0x150] sm:$0xff]
        %v524 = vld [vmem:[%s416 + $0x158] sm:$0xff]
        %v525 = vld [vmem:[%s416 + $0x160] sm:$0xff]
        %v526 = vld [vmem:[%s416 + $0x168] sm:$0xff]
        %v527 = vld [vmem:[%s416 + $0x170] sm:$0xff]
        %v528 = vld [vmem:[%s416 + $0x178] sm:$0xff]
        %v529 = vld [vmem:[%s416 + $0x180] sm:$0xff]
        %v530 = vld [vmem:[%s416 + $0x188] sm:$0xff]
        %v531 = vld [vmem:[%s416 + $0x190] sm:$0xff]
        %v532 = vld [vmem:[%s416 + $0x198] sm:$0xff]
        %v533 = vld [vmem:[%s416 + $0x1a0] sm:$0xff]
        %v534 = vld [vmem:[%s416 + $0x1a8] sm:$0xff]
        %v535 = vld [vmem:[%s416 + $0x1b0] sm:$0xff]
        %v536 = vld [vmem:[%s416 + $0x1b8] sm:$0xff]
        %v537 = vld [vmem:[%s416 + $0x1c0] sm:$0xff]
        %v538 = vld [vmem:[%s416 + $0x1c8] sm:$0xff]
        %v539 = vld [vmem:[%s348] sm:$0xff]
        %v540 = vld [vmem:[%s348 + $0x8] sm:$0xff]
        %v541 = vld [vmem:[%s348 + $0x10] sm:$0xff]
        %v542 = vld [vmem:[%s348 + $0x18] sm:$0xff]
        %v543 = vld [vmem:[%s348 + $0x20] sm:$0xff]
        %v544 = vld [vmem:[%s348 + $0x28] sm:$0xff]
        %v545 = vld [vmem:[%s348 + $0x30] sm:$0xff]
        %v546 = vld [vmem:[%s348 + $0x38] sm:$0xff]
        %v547 = vld [vmem:[%s348 + $0x40] sm:$0xff]
        %v548 = vld [vmem:[%s348 + $0x48] sm:$0xff]
        %v549 = vld [vmem:[%s348 + $0x50] sm:$0xff]
        %v550 = vld [vmem:[%s348 + $0x58] sm:$0xff]
        %v551 = vld [vmem:[%s348 + $0x60] sm:$0xff]
        %v552 = vld [vmem:[%s348 + $0x68] sm:$0xff]
        %v553 = vld [vmem:[%s348 + $0x70] sm:$0xff]
        %v554 = vld [vmem:[%s348 + $0x78] sm:$0xff]
        %v555 = vld [vmem:[%s348 + $0x80] sm:$0xff]
        %v556 = vld [vmem:[%s348 + $0x88] sm:$0xff]
        %v557 = vld [vmem:[%s348 + $0x90] sm:$0xff]
        %v558 = vld [vmem:[%s348 + $0x98] sm:$0xff]
        %v559 = vld [vmem:[%s348 + $0xa0] sm:$0xff]
        %v560 = vld [vmem:[%s348 + $0xa8] sm:$0xff]
        %v561 = vld [vmem:[%s348 + $0xb0] sm:$0xff]
        %v562 = vld [vmem:[%s348 + $0xb8] sm:$0xff]
        %v563 = vld [vmem:[%s348 + $0xc0] sm:$0xff]
        %v564 = vld [vmem:[%s348 + $0xc8] sm:$0xff]
        %v565 = vld [vmem:[%s348 + $0xd0] sm:$0xff]
        %v566 = vld [vmem:[%s348 + $0xd8] sm:$0xff]
        %v567 = vld [vmem:[%s348 + $0xe0] sm:$0xff]
        %v568 = vld [vmem:[%s399] sm:$0xff]
        %v569 = vld [vmem:[%s399 + $0x8] sm:$0xff]
        %v570 = vld [vmem:[%s399 + $0x10] sm:$0xff]
        %v571 = vld [vmem:[%s399 + $0x18] sm:$0xff]
        %v572 = vld [vmem:[%s399 + $0x20] sm:$0xff]
        %v573 = vld [vmem:[%s399 + $0x28] sm:$0xff]
        %v574 = vld [vmem:[%s399 + $0x30] sm:$0xff]
        %v575 = vld [vmem:[%s399 + $0x38] sm:$0xff]
        %v576 = vld [vmem:[%s399 + $0x40] sm:$0xff]
        %v577 = vld [vmem:[%s399 + $0x48] sm:$0xff]
        %v578 = vld [vmem:[%s399 + $0x50] sm:$0xff]
        %v579 = vld [vmem:[%s399 + $0x58] sm:$0xff]
        %v580 = vld [vmem:[%s399 + $0x60] sm:$0xff]
        %v581 = vld [vmem:[%s399 + $0x68] sm:$0xff]
        %v582 = vld [vmem:[%s399 + $0x70] sm:$0xff]
        %v583 = vld [vmem:[%s399 + $0x78] sm:$0xff]
        %v584 = vld [vmem:[%s399 + $0x80] sm:$0xff]
        %v585 = vld [vmem:[%s399 + $0x88] sm:$0xff]
        %v586 = vld [vmem:[%s399 + $0x90] sm:$0xff]
        %v587 = vld [vmem:[%s399 + $0x98] sm:$0xff]
        %v588 = vld [vmem:[%s399 + $0xa0] sm:$0xff]
        %v589 = vld [vmem:[%s399 + $0xa8] sm:$0xff]
        %v590 = vld [vmem:[%s399 + $0xb0] sm:$0xff]
        %v591 = vld [vmem:[%s399 + $0xb8] sm:$0xff]
        %v592 = vld [vmem:[%s399 + $0xc0] sm:$0xff]
        %v593 = vld [vmem:[%s399 + $0xc8] sm:$0xff]
        %v594 = vld [vmem:[%s399 + $0xd0] sm:$0xff]
        %v595 = vld [vmem:[%s399 + $0xd8] sm:$0xff]
        %v596 = vld [vmem:[%s399 + $0xe0] sm:$0xff]
        %v597 = vld [vmem:[%s399 + $0xe8] sm:$0xff]
        %v598 = vld [vmem:[%s399 + $0xf0] sm:$0xff]
        %v599 = vld [vmem:[%s399 + $0xf8] sm:$0xff]
        %v629 = vunpack.c.l.b16 %v539
        %v630 = vunpack.c.h.b16 %v539
        %v631 = vunpack.c.l.b16 %v540
        %v632 = vunpack.c.h.b16 %v540
        %v633 = vunpack.c.l.b16 %v541
        %v634 = vunpack.c.h.b16 %v541
        %v635 = vunpack.c.l.b16 %v542
        %v636 = vunpack.c.h.b16 %v542
        %v637 = vunpack.c.l.b16 %v543
        %v638 = vunpack.c.h.b16 %v543
        %v639 = vunpack.c.l.b16 %v544
        %v640 = vunpack.c.h.b16 %v544
        %v641 = vunpack.c.l.b16 %v545
        %v642 = vunpack.c.h.b16 %v545
        %v643 = vunpack.c.l.b16 %v546
        %v644 = vunpack.c.h.b16 %v546
        %v645 = vunpack.c.l.b16 %v547
        %v646 = vunpack.c.h.b16 %v547
        %v647 = vunpack.c.l.b16 %v548
        %v648 = vunpack.c.h.b16 %v548
        %v649 = vunpack.c.l.b16 %v549
        %v650 = vunpack.c.h.b16 %v549
        %v651 = vunpack.c.l.b16 %v550
        %v652 = vunpack.c.h.b16 %v550
        %v653 = vunpack.c.l.b16 %v551
        %v654 = vunpack.c.h.b16 %v551
        %v655 = vunpack.c.l.b16 %v552
        %v656 = vunpack.c.h.b16 %v552
        %v657 = vunpack.c.l.b16 %v553
        %v658 = vunpack.c.h.b16 %v553
        %v659 = vunpack.c.l.b16 %v554
        %v660 = vunpack.c.h.b16 %v554
        %v661 = vunpack.c.l.b16 %v555
        %v662 = vunpack.c.h.b16 %v555
        %v663 = vunpack.c.l.b16 %v556
        %v664 = vunpack.c.h.b16 %v556
        %v665 = vunpack.c.l.b16 %v557
        %v666 = vunpack.c.h.b16 %v557
        %v667 = vunpack.c.l.b16 %v558
        %v668 = vunpack.c.h.b16 %v558
        %v669 = vunpack.c.l.b16 %v559
        %v670 = vunpack.c.h.b16 %v559
        %v671 = vunpack.c.l.b16 %v560
        %v672 = vunpack.c.h.b16 %v560
        %v673 = vunpack.c.l.b16 %v561
        %v674 = vunpack.c.h.b16 %v561
        %v675 = vunpack.c.l.b16 %v562
        %v676 = vunpack.c.h.b16 %v562
        %v677 = vunpack.c.l.b16 %v563
        %v678 = vunpack.c.h.b16 %v563
        %v679 = vunpack.c.l.b16 %v564
        %v680 = vunpack.c.h.b16 %v564
        %v681 = vunpack.c.l.b16 %v565
        %v682 = vunpack.c.h.b16 %v565
        %v683 = vunpack.c.l.b16 %v566
        %v684 = vunpack.c.h.b16 %v566
        %v685 = vunpack.c.l.b16 %v567
        %v686 = vunpack.c.h.b16 %v567
        %v687 = vpack.c.b16 %v631, %v629
        %v688 = vpack.c.b16 %v632, %v630
        %v689 = vpack.c.b16 %v635, %v633
        %v690 = vpack.c.b16 %v636, %v634
        %v691 = vpack.c.b16 %v639, %v637
        %v692 = vpack.c.b16 %v640, %v638
        %v693 = vpack.c.b16 %v643, %v641
        %v694 = vpack.c.b16 %v644, %v642
        %v695 = vpack.c.b16 %v647, %v645
        %v696 = vpack.c.b16 %v648, %v646
        %v697 = vpack.c.b16 %v651, %v649
        %v698 = vpack.c.b16 %v652, %v650
        %v699 = vpack.c.b16 %v655, %v653
        %v700 = vpack.c.b16 %v656, %v654
        %v701 = vpack.c.b16 %v659, %v657
        %v702 = vpack.c.b16 %v660, %v658
        %v703 = vpack.c.b16 %v663, %v661
        %v704 = vpack.c.b16 %v664, %v662
        %v705 = vpack.c.b16 %v667, %v665
        %v706 = vpack.c.b16 %v668, %v666
        %v707 = vpack.c.b16 %v671, %v669
        %v708 = vpack.c.b16 %v672, %v670
        %v709 = vpack.c.b16 %v675, %v673
        %v710 = vpack.c.b16 %v676, %v674
        %v711 = vpack.c.b16 %v679, %v677
        %v712 = vpack.c.b16 %v680, %v678
        %v713 = vpack.c.b16 %v683, %v681
        %v714 = vpack.c.b16 %v684, %v682
        %v715 = vpack.c.b16 %v685, %v685
        %v716 = vpack.c.b16 %v686, %v686
        %v779 = vunpack.c.l.b16 %v568
        %v780 = vunpack.c.h.b16 %v568
        %v781 = vunpack.c.l.b16 %v569
        %v782 = vunpack.c.h.b16 %v569
        %v783 = vunpack.c.l.b16 %v570
        %v784 = vunpack.c.h.b16 %v570
        %v785 = vunpack.c.l.b16 %v571
        %v786 = vunpack.c.h.b16 %v571
        %v787 = vunpack.c.l.b16 %v572
        %v788 = vunpack.c.h.b16 %v572
        %v789 = vunpack.c.l.b16 %v573
        %v790 = vunpack.c.h.b16 %v573
        %v791 = vunpack.c.l.b16 %v574
        %v792 = vunpack.c.h.b16 %v574
        %v793 = vunpack.c.l.b16 %v575
        %v794 = vunpack.c.h.b16 %v575
        %v795 = vunpack.c.l.b16 %v576
        %v796 = vunpack.c.h.b16 %v576
        %v797 = vunpack.c.l.b16 %v577
        %v798 = vunpack.c.h.b16 %v577
        %v799 = vunpack.c.l.b16 %v578
        %v800 = vunpack.c.h.b16 %v578
        %v801 = vunpack.c.l.b16 %v579
        %v802 = vunpack.c.h.b16 %v579
        %v803 = vunpack.c.l.b16 %v580
        %v804 = vunpack.c.h.b16 %v580
        %v805 = vunpack.c.l.b16 %v581
        %v806 = vunpack.c.h.b16 %v581
        %v807 = vunpack.c.l.b16 %v582
        %v808 = vunpack.c.h.b16 %v582
        %v809 = vunpack.c.l.b16 %v583
        %v810 = vunpack.c.h.b16 %v583
        %v811 = vunpack.c.l.b16 %v584
        %v812 = vunpack.c.h.b16 %v584
        %v813 = vunpack.c.l.b16 %v585
        %v814 = vunpack.c.h.b16 %v585
        %v815 = vunpack.c.l.b16 %v586
        %v816 = vunpack.c.h.b16 %v586
        %v817 = vunpack.c.l.b16 %v587
        %v818 = vunpack.c.h.b16 %v587
        %v819 = vunpack.c.l.b16 %v588
        %v820 = vunpack.c.h.b16 %v588
        %v821 = vunpack.c.l.b16 %v589
        %v822 = vunpack.c.h.b16 %v589
        %v823 = vunpack.c.l.b16 %v590
        %v824 = vunpack.c.h.b16 %v590
        %v825 = vunpack.c.l.b16 %v591
        %v826 = vunpack.c.h.b16 %v591
        %v827 = vunpack.c.l.b16 %v592
        %v828 = vunpack.c.h.b16 %v592
        %v829 = vunpack.c.l.b16 %v593
        %v830 = vunpack.c.h.b16 %v593
        %v831 = vunpack.c.l.b16 %v594
        %v832 = vunpack.c.h.b16 %v594
        %v833 = vunpack.c.l.b16 %v595
        %v834 = vunpack.c.h.b16 %v595
        %v835 = vunpack.c.l.b16 %v596
        %v836 = vunpack.c.h.b16 %v596
        %v837 = vunpack.c.l.b16 %v597
        %v838 = vunpack.c.h.b16 %v597
        %v839 = vunpack.c.l.b16 %v598
        %v840 = vunpack.c.h.b16 %v598
        %v841 = vunpack.c.l.b16 %v599
        %v842 = vunpack.c.h.b16 %v599
        %v843 = vpack.c.b16 %v781, %v779
        %v844 = vpack.c.b16 %v782, %v780
        %v845 = vpack.c.b16 %v785, %v783
        %v846 = vpack.c.b16 %v786, %v784
        %v847 = vpack.c.b16 %v789, %v787
        %v848 = vpack.c.b16 %v790, %v788
        %v849 = vpack.c.b16 %v793, %v791
        %v850 = vpack.c.b16 %v794, %v792
        %v851 = vpack.c.b16 %v797, %v795
        %v852 = vpack.c.b16 %v798, %v796
        %v853 = vpack.c.b16 %v801, %v799
        %v854 = vpack.c.b16 %v802, %v800
        %v855 = vpack.c.b16 %v805, %v803
        %v856 = vpack.c.b16 %v806, %v804
        %v857 = vpack.c.b16 %v809, %v807
        %v858 = vpack.c.b16 %v810, %v808
        %v859 = vpack.c.b16 %v813, %v811
        %v860 = vpack.c.b16 %v814, %v812
        %v861 = vpack.c.b16 %v817, %v815
        %v862 = vpack.c.b16 %v818, %v816
        %v863 = vpack.c.b16 %v821, %v819
        %v864 = vpack.c.b16 %v822, %v820
        %v865 = vpack.c.b16 %v825, %v823
        %v866 = vpack.c.b16 %v826, %v824
        %v867 = vpack.c.b16 %v829, %v827
        %v868 = vpack.c.b16 %v830, %v828
        %v869 = vpack.c.b16 %v833, %v831
        %v870 = vpack.c.b16 %v834, %v832
        %v871 = vpack.c.b16 %v837, %v835
        %v872 = vpack.c.b16 %v838, %v836
        %v873 = vpack.c.b16 %v841, %v839
        %v874 = vpack.c.b16 %v842, %v840
        %907 = vmatpush.bf16.msra.mxu0 %v857
        %908 = vmatpush.bf16.msra.mxu0 %v855
        %909 = vmatpush.bf16.msra.mxu0 %v853
        %910 = vmatpush.bf16.msra.mxu0 %v851
        %911 = vmatpush.bf16.msra.mxu0 %v849
        %912 = vmatpush.bf16.msra.mxu0 %v847
        %913 = vmatpush.bf16.msra.mxu0 %v845
        %914 = vmatpush.bf16.msra.mxu0 %v843
        %915 = vmatmul.bf16.gmra.mxu0 %v687
        %v916 = vpop.f32.mrf.mxu0
        %v917 = vadd.f32 0.0, %v916
        %v918 = vpop.f32.mrf.mxu0
        %v919 = vadd.f32 0.0, %v918
        %920 = vmatmul.bf16.gmra.mxu0 %v689
        %v921 = vpop.f32.mrf.mxu0
        %v922 = vadd.f32 0.0, %v921
        %v923 = vpop.f32.mrf.mxu0
        %v924 = vadd.f32 0.0, %v923
        %925 = vmatmul.bf16.gmra.mxu0 %v691
        %v926 = vpop.f32.mrf.mxu0
        %v927 = vadd.f32 0.0, %v926
        %v928 = vpop.f32.mrf.mxu0
        %v929 = vadd.f32 0.0, %v928
        %930 = vmatmul.bf16.gmra.mxu0 %v693
        %v931 = vpop.f32.mrf.mxu0
        %v932 = vadd.f32 0.0, %v931
        %v933 = vpop.f32.mrf.mxu0
        %v934 = vadd.f32 0.0, %v933
        %935 = vmatmul.bf16.gmra.mxu0 %v695
        %v936 = vpop.f32.mrf.mxu0
        %v937 = vadd.f32 0.0, %v936
        %v938 = vpop.f32.mrf.mxu0
        %v939 = vadd.f32 0.0, %v938
        %940 = vmatmul.bf16.gmra.mxu0 %v697
        %v941 = vpop.f32.mrf.mxu0
        %v942 = vadd.f32 0.0, %v941
        %v943 = vpop.f32.mrf.mxu0
        %v944 = vadd.f32 0.0, %v943
        %945 = vmatmul.bf16.gmra.mxu0 %v699
        %v946 = vpop.f32.mrf.mxu0
        %v947 = vadd.f32 0.0, %v946
        %v948 = vpop.f32.mrf.mxu0
        %v949 = vadd.f32 0.0, %v948
        %950 = vmatmul.bf16.gmra.mxu0 %v701
        %v951 = vpop.f32.mrf.mxu0
        %v952 = vadd.f32 0.0, %v951
        %v953 = vpop.f32.mrf.mxu0
        %v954 = vadd.f32 0.0, %v953
        %955 = vmatmul.bf16.gmra.mxu0 %v703
        %v956 = vpop.f32.mrf.mxu0
        %v957 = vadd.f32 0.0, %v956
        %v958 = vpop.f32.mrf.mxu0
        %v959 = vadd.f32 0.0, %v958
        %960 = vmatmul.bf16.gmra.mxu0 %v705
        %v961 = vpop.f32.mrf.mxu0
        %v962 = vadd.f32 0.0, %v961
        %v963 = vpop.f32.mrf.mxu0
        %v964 = vadd.f32 0.0, %v963
        %965 = vmatmul.bf16.gmra.mxu0 %v707
        %v966 = vpop.f32.mrf.mxu0
        %v967 = vadd.f32 0.0, %v966
        %v968 = vpop.f32.mrf.mxu0
        %v969 = vadd.f32 0.0, %v968
        %970 = vmatmul.bf16.gmra.mxu0 %v709
        %v971 = vpop.f32.mrf.mxu0
        %v972 = vadd.f32 0.0, %v971
        %v973 = vpop.f32.mrf.mxu0
        %v974 = vadd.f32 0.0, %v973
        %975 = vmatmul.bf16.gmra.mxu0 %v711
        %v976 = vpop.f32.mrf.mxu0
        %v977 = vadd.f32 0.0, %v976
        %v978 = vpop.f32.mrf.mxu0
        %v979 = vadd.f32 0.0, %v978
        %980 = vmatmul.bf16.gmra.mxu0 %v713
        %v981 = vpop.f32.mrf.mxu0
        %v982 = vadd.f32 0.0, %v981
        %v983 = vpop.f32.mrf.mxu0
        %v984 = vadd.f32 0.0, %v983
        %985 = vmatmul.bf16.gmra.mxu0 %v715
        %v986 = vpop.f32.mrf.mxu0
        %v987 = vadd.f32 0.0, %v986
        %v988 = vpop.f32.mrf.mxu0
        %989 = vdwg.mxu0
        %990 = vmatpush.bf16.msra.mxu0 %v873
        %991 = vmatpush.bf16.msra.mxu0 %v871
        %992 = vmatpush.bf16.msra.mxu0 %v869
        %993 = vmatpush.bf16.msra.mxu0 %v867
        %994 = vmatpush.bf16.msra.mxu0 %v865
        %995 = vmatpush.bf16.msra.mxu0 %v863
        %996 = vmatpush.bf16.msra.mxu0 %v861
        %997 = vmatpush.bf16.msra.mxu0 %v859
        %998 = vmatmul.bf16.gmra.mxu0 %v688
        %v999 = vpop.f32.mrf.mxu0
        %v1000 = vadd.f32 %v917, %v999
        %v1001 = vpop.f32.mrf.mxu0
        %v1002 = vadd.f32 %v919, %v1001
        %1003 = vmatmul.bf16.gmra.mxu0 %v690
        %v1004 = vpop.f32.mrf.mxu0
        %v1005 = vadd.f32 %v922, %v1004
        %v1006 = vpop.f32.mrf.mxu0
        %v1007 = vadd.f32 %v924, %v1006
        %1008 = vmatmul.bf16.gmra.mxu0 %v692
        %v1009 = vpop.f32.mrf.mxu0
        %v1010 = vadd.f32 %v927, %v1009
        %v1011 = vpop.f32.mrf.mxu0
        %v1012 = vadd.f32 %v929, %v1011
        %1013 = vmatmul.bf16.gmra.mxu0 %v694
        %v1014 = vpop.f32.mrf.mxu0
        %v1015 = vadd.f32 %v932, %v1014
        %v1016 = vpop.f32.mrf.mxu0
        %v1017 = vadd.f32 %v934, %v1016
        %1018 = vmatmul.bf16.gmra.mxu0 %v696
        %v1019 = vpop.f32.mrf.mxu0
        %v1020 = vadd.f32 %v937, %v1019
        %v1021 = vpop.f32.mrf.mxu0
        %v1022 = vadd.f32 %v939, %v1021
        %1023 = vmatmul.bf16.gmra.mxu0 %v698
        %v1024 = vpop.f32.mrf.mxu0
        %v1025 = vadd.f32 %v942, %v1024
        %v1026 = vpop.f32.mrf.mxu0
        %v1027 = vadd.f32 %v944, %v1026
        %1028 = vmatmul.bf16.gmra.mxu0 %v700
        %v1029 = vpop.f32.mrf.mxu0
        %v1030 = vadd.f32 %v947, %v1029
        %v1031 = vpop.f32.mrf.mxu0
        %v1032 = vadd.f32 %v949, %v1031
        %1033 = vmatmul.bf16.gmra.mxu0 %v702
        %v1034 = vpop.f32.mrf.mxu0
        %v1035 = vadd.f32 %v952, %v1034
        %v1036 = vpop.f32.mrf.mxu0
        %v1037 = vadd.f32 %v954, %v1036
        %1038 = vmatmul.bf16.gmra.mxu0 %v704
        %v1039 = vpop.f32.mrf.mxu0
        %v1040 = vadd.f32 %v957, %v1039
        %v1041 = vpop.f32.mrf.mxu0
        %v1042 = vadd.f32 %v959, %v1041
        %1043 = vmatmul.bf16.gmra.mxu0 %v706
        %v1044 = vpop.f32.mrf.mxu0
        %v1045 = vadd.f32 %v962, %v1044
        %v1046 = vpop.f32.mrf.mxu0
        %v1047 = vadd.f32 %v964, %v1046
        %1048 = vmatmul.bf16.gmra.mxu0 %v708
        %v1049 = vpop.f32.mrf.mxu0
        %v1050 = vadd.f32 %v967, %v1049
        %v1051 = vpop.f32.mrf.mxu0
        %v1052 = vadd.f32 %v969, %v1051
        %1053 = vmatmul.bf16.gmra.mxu0 %v710
        %v1054 = vpop.f32.mrf.mxu0
        %v1055 = vadd.f32 %v972, %v1054
        %v1056 = vpop.f32.mrf.mxu0
        %v1057 = vadd.f32 %v974, %v1056
        %1058 = vmatmul.bf16.gmra.mxu0 %v712
        %v1059 = vpop.f32.mrf.mxu0
        %v1060 = vadd.f32 %v977, %v1059
        %v1061 = vpop.f32.mrf.mxu0
        %v1062 = vadd.f32 %v979, %v1061
        %1063 = vmatmul.bf16.gmra.mxu0 %v714
        %v1064 = vpop.f32.mrf.mxu0
        %v1065 = vadd.f32 %v982, %v1064
        %v1066 = vpop.f32.mrf.mxu0
        %v1067 = vadd.f32 %v984, %v1066
        %1068 = vmatmul.bf16.gmra.mxu0 %v716
        %v1069 = vpop.f32.mrf.mxu0
        %v1070 = vadd.f32 %v987, %v1069
        %v1071 = vpop.f32.mrf.mxu0
        %1072 = vdwg.mxu0
        %1073 = vmatpush.bf16.msra.mxu0 %v858
        %1074 = vmatpush.bf16.msra.mxu0 %v856
        %1075 = vmatpush.bf16.msra.mxu0 %v854
        %1076 = vmatpush.bf16.msra.mxu0 %v852
        %1077 = vmatpush.bf16.msra.mxu0 %v850
        %1078 = vmatpush.bf16.msra.mxu0 %v848
        %1079 = vmatpush.bf16.msra.mxu0 %v846
        %1080 = vmatpush.bf16.msra.mxu0 %v844
        %1081 = vmatmul.bf16.gmra.mxu0 %v687
        %v1082 = vpop.f32.mrf.mxu0
        %v1083 = vadd.f32 0.0, %v1082
        %v1084 = vpop.f32.mrf.mxu0
        %v1085 = vadd.f32 0.0, %v1084
        %1086 = vmatmul.bf16.gmra.mxu0 %v689
        %v1087 = vpop.f32.mrf.mxu0
        %v1088 = vadd.f32 0.0, %v1087
        %v1089 = vpop.f32.mrf.mxu0
        %v1090 = vadd.f32 0.0, %v1089
        %1091 = vmatmul.bf16.gmra.mxu0 %v691
        %v1092 = vpop.f32.mrf.mxu0
        %v1093 = vadd.f32 0.0, %v1092
        %v1094 = vpop.f32.mrf.mxu0
        %v1095 = vadd.f32 0.0, %v1094
        %1096 = vmatmul.bf16.gmra.mxu0 %v693
        %v1097 = vpop.f32.mrf.mxu0
        %v1098 = vadd.f32 0.0, %v1097
        %v1099 = vpop.f32.mrf.mxu0
        %v1100 = vadd.f32 0.0, %v1099
        %1101 = vmatmul.bf16.gmra.mxu0 %v695
        %v1102 = vpop.f32.mrf.mxu0
        %v1103 = vadd.f32 0.0, %v1102
        %v1104 = vpop.f32.mrf.mxu0
        %v1105 = vadd.f32 0.0, %v1104
        %1106 = vmatmul.bf16.gmra.mxu0 %v697
        %v1107 = vpop.f32.mrf.mxu0
        %v1108 = vadd.f32 0.0, %v1107
        %v1109 = vpop.f32.mrf.mxu0
        %v1110 = vadd.f32 0.0, %v1109
        %1111 = vmatmul.bf16.gmra.mxu0 %v699
        %v1112 = vpop.f32.mrf.mxu0
        %v1113 = vadd.f32 0.0, %v1112
        %v1114 = vpop.f32.mrf.mxu0
        %v1115 = vadd.f32 0.0, %v1114
        %1116 = vmatmul.bf16.gmra.mxu0 %v701
        %v1117 = vpop.f32.mrf.mxu0
        %v1118 = vadd.f32 0.0, %v1117
        %v1119 = vpop.f32.mrf.mxu0
        %v1120 = vadd.f32 0.0, %v1119
        %1121 = vmatmul.bf16.gmra.mxu0 %v703
        %v1122 = vpop.f32.mrf.mxu0
        %v1123 = vadd.f32 0.0, %v1122
        %v1124 = vpop.f32.mrf.mxu0
        %v1125 = vadd.f32 0.0, %v1124
        %1126 = vmatmul.bf16.gmra.mxu0 %v705
        %v1127 = vpop.f32.mrf.mxu0
        %v1128 = vadd.f32 0.0, %v1127
        %v1129 = vpop.f32.mrf.mxu0
        %v1130 = vadd.f32 0.0, %v1129
        %1131 = vmatmul.bf16.gmra.mxu0 %v707
        %v1132 = vpop.f32.mrf.mxu0
        %v1133 = vadd.f32 0.0, %v1132
        %v1134 = vpop.f32.mrf.mxu0
        %v1135 = vadd.f32 0.0, %v1134
        %1136 = vmatmul.bf16.gmra.mxu0 %v709
        %v1137 = vpop.f32.mrf.mxu0
        %v1138 = vadd.f32 0.0, %v1137
        %v1139 = vpop.f32.mrf.mxu0
        %v1140 = vadd.f32 0.0, %v1139
        %1141 = vmatmul.bf16.gmra.mxu0 %v711
        %v1142 = vpop.f32.mrf.mxu0
        %v1143 = vadd.f32 0.0, %v1142
        %v1144 = vpop.f32.mrf.mxu0
        %v1145 = vadd.f32 0.0, %v1144
        %1146 = vmatmul.bf16.gmra.mxu0 %v713
        %v1147 = vpop.f32.mrf.mxu0
        %v1148 = vadd.f32 0.0, %v1147
        %v1149 = vpop.f32.mrf.mxu0
        %v1150 = vadd.f32 0.0, %v1149
        %1151 = vmatmul.bf16.gmra.mxu0 %v715
        %v1152 = vpop.f32.mrf.mxu0
        %v1153 = vadd.f32 0.0, %v1152
        %v1154 = vpop.f32.mrf.mxu0
        %1155 = vdwg.mxu0
        %1156 = vmatpush.bf16.msra.mxu0 %v874
        %1157 = vmatpush.bf16.msra.mxu0 %v872
        %1158 = vmatpush.bf16.msra.mxu0 %v870
        %1159 = vmatpush.bf16.msra.mxu0 %v868
        %1160 = vmatpush.bf16.msra.mxu0 %v866
        %1161 = vmatpush.bf16.msra.mxu0 %v864
        %1162 = vmatpush.bf16.msra.mxu0 %v862
        %1163 = vmatpush.bf16.msra.mxu0 %v860
        %1164 = vmatmul.bf16.gmra.mxu0 %v688
        %v1165 = vpop.f32.mrf.mxu0
        %v1166 = vadd.f32 %v1083, %v1165
        %v1167 = vpop.f32.mrf.mxu0
        %v1168 = vadd.f32 %v1085, %v1167
        %1169 = vmatmul.bf16.gmra.mxu0 %v690
        %v1170 = vpop.f32.mrf.mxu0
        %v1171 = vadd.f32 %v1088, %v1170
        %v1172 = vpop.f32.mrf.mxu0
        %v1173 = vadd.f32 %v1090, %v1172
        %1174 = vmatmul.bf16.gmra.mxu0 %v692
        %v1175 = vpop.f32.mrf.mxu0
        %v1176 = vadd.f32 %v1093, %v1175
        %v1177 = vpop.f32.mrf.mxu0
        %v1178 = vadd.f32 %v1095, %v1177
        %1179 = vmatmul.bf16.gmra.mxu0 %v694
        %v1180 = vpop.f32.mrf.mxu0
        %v1181 = vadd.f32 %v1098, %v1180
        %v1182 = vpop.f32.mrf.mxu0
        %v1183 = vadd.f32 %v1100, %v1182
        %1184 = vmatmul.bf16.gmra.mxu0 %v696
        %v1185 = vpop.f32.mrf.mxu0
        %v1186 = vadd.f32 %v1103, %v1185
        %v1187 = vpop.f32.mrf.mxu0
        %v1188 = vadd.f32 %v1105, %v1187
        %1189 = vmatmul.bf16.gmra.mxu0 %v698
        %v1190 = vpop.f32.mrf.mxu0
        %v1191 = vadd.f32 %v1108, %v1190
        %v1192 = vpop.f32.mrf.mxu0
        %v1193 = vadd.f32 %v1110, %v1192
        %1194 = vmatmul.bf16.gmra.mxu0 %v700
        %v1195 = vpop.f32.mrf.mxu0
        %v1196 = vadd.f32 %v1113, %v1195
        %v1197 = vpop.f32.mrf.mxu0
        %v1198 = vadd.f32 %v1115, %v1197
        %1199 = vmatmul.bf16.gmra.mxu0 %v702
        %v1200 = vpop.f32.mrf.mxu0
        %v1201 = vadd.f32 %v1118, %v1200
        %v1202 = vpop.f32.mrf.mxu0
        %v1203 = vadd.f32 %v1120, %v1202
        %1204 = vmatmul.bf16.gmra.mxu0 %v704
        %v1205 = vpop.f32.mrf.mxu0
        %v1206 = vadd.f32 %v1123, %v1205
        %v1207 = vpop.f32.mrf.mxu0
        %v1208 = vadd.f32 %v1125, %v1207
        %1209 = vmatmul.bf16.gmra.mxu0 %v706
        %v1210 = vpop.f32.mrf.mxu0
        %v1211 = vadd.f32 %v1128, %v1210
        %v1212 = vpop.f32.mrf.mxu0
        %v1213 = vadd.f32 %v1130, %v1212
        %1214 = vmatmul.bf16.gmra.mxu0 %v708
        %v1215 = vpop.f32.mrf.mxu0
        %v1216 = vadd.f32 %v1133, %v1215
        %v1217 = vpop.f32.mrf.mxu0
        %v1218 = vadd.f32 %v1135, %v1217
        %1219 = vmatmul.bf16.gmra.mxu0 %v710
        %v1220 = vpop.f32.mrf.mxu0
        %v1221 = vadd.f32 %v1138, %v1220
        %v1222 = vpop.f32.mrf.mxu0
        %v1223 = vadd.f32 %v1140, %v1222
        %1224 = vmatmul.bf16.gmra.mxu0 %v712
        %v1225 = vpop.f32.mrf.mxu0
        %v1226 = vadd.f32 %v1143, %v1225
        %v1227 = vpop.f32.mrf.mxu0
        %v1228 = vadd.f32 %v1145, %v1227
        %1229 = vmatmul.bf16.gmra.mxu0 %v714
        %v1230 = vpop.f32.mrf.mxu0
        %v1231 = vadd.f32 %v1148, %v1230
        %v1232 = vpop.f32.mrf.mxu0
        %v1233 = vadd.f32 %v1150, %v1232
        %1234 = vmatmul.bf16.gmra.mxu0 %v716
        %v1235 = vpop.f32.mrf.mxu0
        %v1236 = vadd.f32 %v1153, %v1235
        %v1237 = vpop.f32.mrf.mxu0
        %1238 = vdwg.mxu0
        %v1239 = vadd.f32 %v481, %v1000
        %v1240 = vadd.f32 %v482, %v1166
        %v1241 = vadd.f32 %v483, %v1002
        %v1242 = vadd.f32 %v484, %v1168
        %v1243 = vadd.f32 %v485, %v1005
        %v1244 = vadd.f32 %v486, %v1171
        %v1245 = vadd.f32 %v487, %v1007
        %v1246 = vadd.f32 %v488, %v1173
        %v1247 = vadd.f32 %v489, %v1010
        %v1248 = vadd.f32 %v490, %v1176
        %v1249 = vadd.f32 %v491, %v1012
        %v1250 = vadd.f32 %v492, %v1178
        %v1251 = vadd.f32 %v493, %v1015
        %v1252 = vadd.f32 %v494, %v1181
        %v1253 = vadd.f32 %v495, %v1017
        %v1254 = vadd.f32 %v496, %v1183
        %v1255 = vadd.f32 %v497, %v1020
        %v1256 = vadd.f32 %v498, %v1186
        %v1257 = vadd.f32 %v499, %v1022
        %v1258 = vadd.f32 %v500, %v1188
        %v1259 = vadd.f32 %v501, %v1025
        %v1260 = vadd.f32 %v502, %v1191
        %v1261 = vadd.f32 %v503, %v1027
        %v1262 = vadd.f32 %v504, %v1193
        %v1263 = vadd.f32 %v505, %v1030
        %v1264 = vadd.f32 %v506, %v1196
        %v1265 = vadd.f32 %v507, %v1032
        %v1266 = vadd.f32 %v508, %v1198
        %v1267 = vadd.f32 %v509, %v1035
        %v1268 = vadd.f32 %v510, %v1201
        %v1269 = vadd.f32 %v511, %v1037
        %v1270 = vadd.f32 %v512, %v1203
        %v1271 = vadd.f32 %v513, %v1040
        %v1272 = vadd.f32 %v514, %v1206
        %v1273 = vadd.f32 %v515, %v1042
        %v1274 = vadd.f32 %v516, %v1208
        %v1275 = vadd.f32 %v517, %v1045
        %v1276 = vadd.f32 %v518, %v1211
        %v1277 = vadd.f32 %v519, %v1047
        %v1278 = vadd.f32 %v520, %v1213
        %v1279 = vadd.f32 %v521, %v1050
        %v1280 = vadd.f32 %v522, %v1216
        %v1281 = vadd.f32 %v523, %v1052
        %v1282 = vadd.f32 %v524, %v1218
        %v1283 = vadd.f32 %v525, %v1055
        %v1284 = vadd.f32 %v526, %v1221
        %v1285 = vadd.f32 %v527, %v1057
        %v1286 = vadd.f32 %v528, %v1223
        %v1287 = vadd.f32 %v529, %v1060
        %v1288 = vadd.f32 %v530, %v1226
        %v1289 = vadd.f32 %v531, %v1062
        %v1290 = vadd.f32 %v532, %v1228
        %v1291 = vadd.f32 %v533, %v1065
        %v1292 = vadd.f32 %v534, %v1231
        %v1293 = vadd.f32 %v535, %v1067
        %v1294 = vadd.f32 %v536, %v1233
        %v1295 = vadd.f32 %v537, %v1070
        %v1296 = vadd.f32 %v538, %v1236
        %1297 = vst [vmem:[%s416] sm:$0xff] %v1239
        %1298 = vst [vmem:[%s416 + $0x8] sm:$0xff] %v1240
        %1299 = vst [vmem:[%s416 + $0x10] sm:$0xff] %v1241
        %1300 = vst [vmem:[%s416 + $0x18] sm:$0xff] %v1242
        %1301 = vst [vmem:[%s416 + $0x20] sm:$0xff] %v1243
        %1302 = vst [vmem:[%s416 + $0x28] sm:$0xff] %v1244
        %1303 = vst [vmem:[%s416 + $0x30] sm:$0xff] %v1245
        %1304 = vst [vmem:[%s416 + $0x38] sm:$0xff] %v1246
        %1305 = vst [vmem:[%s416 + $0x40] sm:$0xff] %v1247
        %1306 = vst [vmem:[%s416 + $0x48] sm:$0xff] %v1248
        %1307 = vst [vmem:[%s416 + $0x50] sm:$0xff] %v1249
        %1308 = vst [vmem:[%s416 + $0x58] sm:$0xff] %v1250
        %1309 = vst [vmem:[%s416 + $0x60] sm:$0xff] %v1251
        %1310 = vst [vmem:[%s416 + $0x68] sm:$0xff] %v1252
        %1311 = vst [vmem:[%s416 + $0x70] sm:$0xff] %v1253
        %1312 = vst [vmem:[%s416 + $0x78] sm:$0xff] %v1254
        %1313 = vst [vmem:[%s416 + $0x80] sm:$0xff] %v1255
        %1314 = vst [vmem:[%s416 + $0x88] sm:$0xff] %v1256
        %1315 = vst [vmem:[%s416 + $0x90] sm:$0xff] %v1257
        %1316 = vst [vmem:[%s416 + $0x98] sm:$0xff] %v1258
        %1317 = vst [vmem:[%s416 + $0xa0] sm:$0xff] %v1259
        %1318 = vst [vmem:[%s416 + $0xa8] sm:$0xff] %v1260
        %1319 = vst [vmem:[%s416 + $0xb0] sm:$0xff] %v1261
        %1320 = vst [vmem:[%s416 + $0xb8] sm:$0xff] %v1262
        %1321 = vst [vmem:[%s416 + $0xc0] sm:$0xff] %v1263
        %1322 = vst [vmem:[%s416 + $0xc8] sm:$0xff] %v1264
        %1323 = vst [vmem:[%s416 + $0xd0] sm:$0xff] %v1265
        %1324 = vst [vmem:[%s416 + $0xd8] sm:$0xff] %v1266
        %1325 = vst [vmem:[%s416 + $0xe0] sm:$0xff] %v1267
        %1326 = vst [vmem:[%s416 + $0xe8] sm:$0xff] %v1268
        %1327 = vst [vmem:[%s416 + $0xf0] sm:$0xff] %v1269
        %1328 = vst [vmem:[%s416 + $0xf8] sm:$0xff] %v1270
        %1329 = vst [vmem:[%s416 + $0x100] sm:$0xff] %v1271
        %1330 = vst [vmem:[%s416 + $0x108] sm:$0xff] %v1272
        %1331 = vst [vmem:[%s416 + $0x110] sm:$0xff] %v1273
        %1332 = vst [vmem:[%s416 + $0x118] sm:$0xff] %v1274
        %1333 = vst [vmem:[%s416 + $0x120] sm:$0xff] %v1275
        %1334 = vst [vmem:[%s416 + $0x128] sm:$0xff] %v1276
        %1335 = vst [vmem:[%s416 + $0x130] sm:$0xff] %v1277
        %1336 = vst [vmem:[%s416 + $0x138] sm:$0xff] %v1278
        %1337 = vst [vmem:[%s416 + $0x140] sm:$0xff] %v1279
        %1338 = vst [vmem:[%s416 + $0x148] sm:$0xff] %v1280
        %1339 = vst [vmem:[%s416 + $0x150] sm:$0xff] %v1281
        %1340 = vst [vmem:[%s416 + $0x158] sm:$0xff] %v1282
        %1341 = vst [vmem:[%s416 + $0x160] sm:$0xff] %v1283
        %1342 = vst [vmem:[%s416 + $0x168] sm:$0xff] %v1284
        %1343 = vst [vmem:[%s416 + $0x170] sm:$0xff] %v1285
        %1344 = vst [vmem:[%s416 + $0x178] sm:$0xff] %v1286
        %1345 = vst [vmem:[%s416 + $0x180] sm:$0xff] %v1287
        %1346 = vst [vmem:[%s416 + $0x188] sm:$0xff] %v1288
        %1347 = vst [vmem:[%s416 + $0x190] sm:$0xff] %v1289
        %1348 = vst [vmem:[%s416 + $0x198] sm:$0xff] %v1290
        %1349 = vst [vmem:[%s416 + $0x1a0] sm:$0xff] %v1291
        %1350 = vst [vmem:[%s416 + $0x1a8] sm:$0xff] %v1292
        %1351 = vst [vmem:[%s416 + $0x1b0] sm:$0xff] %v1293
        %1352 = vst [vmem:[%s416 + $0x1b8] sm:$0xff] %v1294
        %1353 = vst [vmem:[%s416 + $0x1c0] sm:$0xff] %v1295
        %1354 = vst [vmem:[%s416 + $0x1c8] sm:$0xff] %v1296
        %p1355 = scmp.eq.s32.totalorder %s21, 6
        // Predicated region
        $region75: #{wsddn_forward.9} parent=65 // pred_check
          %p1356 = pneg %p1355
        $region76: #{wsddn_forward.9} parent=65 // pred_check_branch
          %1358 = sbr.rel (%p1356) target = $region78
        $region77: #{wsddn_forward.9} parent=65 // pred_region
          %v1359 = vld [vmem:[%s416] sm:$0xff]
          %v1360 = vld [vmem:[%s416 + $0x8] sm:$0xff]
          %v1361 = vld [vmem:[%s416 + $0x10] sm:$0xff]
          %v1362 = vld [vmem:[%s416 + $0x18] sm:$0xff]
          %v1363 = vld [vmem:[%s416 + $0x20] sm:$0xff]
          %v1364 = vld [vmem:[%s416 + $0x28] sm:$0xff]
          %v1365 = vld [vmem:[%s416 + $0x30] sm:$0xff]
          %v1366 = vld [vmem:[%s416 + $0x38] sm:$0xff]
          %v1367 = vld [vmem:[%s416 + $0x40] sm:$0xff]
          %v1368 = vld [vmem:[%s416 + $0x48] sm:$0xff]
          %v1369 = vld [vmem:[%s416 + $0x50] sm:$0xff]
          %v1370 = vld [vmem:[%s416 + $0x58] sm:$0xff]
          %v1371 = vld [vmem:[%s416 + $0x60] sm:$0xff]
          %v1372 = vld [vmem:[%s416 + $0x68] sm:$0xff]
          %v1373 = vld [vmem:[%s416 + $0x70] sm:$0xff]
          %v1374 = vld [vmem:[%s416 + $0x78] sm:$0xff]
          %v1375 = vld [vmem:[%s416 + $0x80] sm:$0xff]
          %v1376 = vld [vmem:[%s416 + $0x88] sm:$0xff]
          %v1377 = vld [vmem:[%s416 + $0x90] sm:$0xff]
          %v1378 = vld [vmem:[%s416 + $0x98] sm:$0xff]
          %v1379 = vld [vmem:[%s416 + $0xa0] sm:$0xff]
          %v1380 = vld [vmem:[%s416 + $0xa8] sm:$0xff]
          %v1381 = vld [vmem:[%s416 + $0xb0] sm:$0xff]
          %v1382 = vld [vmem:[%s416 + $0xb8] sm:$0xff]
          %v1383 = vld [vmem:[%s416 + $0xc0] sm:$0xff]
          %v1384 = vld [vmem:[%s416 + $0xc8] sm:$0xff]
          %v1385 = vld [vmem:[%s416 + $0xd0] sm:$0xff]
          %v1386 = vld [vmem:[%s416 + $0xd8] sm:$0xff]
          %v1387 = vld [vmem:[%s416 + $0xe0] sm:$0xff]
          %v1388 = vld [vmem:[%s416 + $0xe8] sm:$0xff]
          %v1389 = vld [vmem:[%s416 + $0xf0] sm:$0xff]
          %v1390 = vld [vmem:[%s416 + $0xf8] sm:$0xff]
          %v1391 = vld [vmem:[%s416 + $0x100] sm:$0xff]
          %v1392 = vld [vmem:[%s416 + $0x108] sm:$0xff]
          %v1393 = vld [vmem:[%s416 + $0x110] sm:$0xff]
          %v1394 = vld [vmem:[%s416 + $0x118] sm:$0xff]
          %v1395 = vld [vmem:[%s416 + $0x120] sm:$0xff]
          %v1396 = vld [vmem:[%s416 + $0x128] sm:$0xff]
          %v1397 = vld [vmem:[%s416 + $0x130] sm:$0xff]
          %v1398 = vld [vmem:[%s416 + $0x138] sm:$0xff]
          %v1399 = vld [vmem:[%s416 + $0x140] sm:$0xff]
          %v1400 = vld [vmem:[%s416 + $0x148] sm:$0xff]
          %v1401 = vld [vmem:[%s416 + $0x150] sm:$0xff]
          %v1402 = vld [vmem:[%s416 + $0x158] sm:$0xff]
          %v1403 = vld [vmem:[%s416 + $0x160] sm:$0xff]
          %v1404 = vld [vmem:[%s416 + $0x168] sm:$0xff]
          %v1405 = vld [vmem:[%s416 + $0x170] sm:$0xff]
          %v1406 = vld [vmem:[%s416 + $0x178] sm:$0xff]
          %v1407 = vld [vmem:[%s416 + $0x180] sm:$0xff]
          %v1408 = vld [vmem:[%s416 + $0x188] sm:$0xff]
          %v1409 = vld [vmem:[%s416 + $0x190] sm:$0xff]
          %v1410 = vld [vmem:[%s416 + $0x198] sm:$0xff]
          %v1411 = vld [vmem:[%s416 + $0x1a0] sm:$0xff]
          %v1412 = vld [vmem:[%s416 + $0x1a8] sm:$0xff]
          %v1413 = vld [vmem:[%s416 + $0x1b0] sm:$0xff]
          %v1414 = vld [vmem:[%s416 + $0x1b8] sm:$0xff]
          %v1415 = vld [vmem:[%s416 + $0x1c0] sm:$0xff]
          %v1416 = vld [vmem:[%s416 + $0x1c8] sm:$0xff]
          %v1417 = vld [vmem:[%s405] sm:$0x3]
          %v1419 = vperm.slane %v1417, 0
          %v1420 = vperm.slane %v1417, 1
          %v1423 = vadd.f32 %v1359, %v1419
          %v1424 = vadd.f32 %v1360, %v1420
          %v1425 = vadd.f32 %v1361, %v1419
          %v1426 = vadd.f32 %v1362, %v1420
          %v1427 = vadd.f32 %v1363, %v1419
          %v1428 = vadd.f32 %v1364, %v1420
          %v1429 = vadd.f32 %v1365, %v1419
          %v1430 = vadd.f32 %v1366, %v1420
          %v1431 = vadd.f32 %v1367, %v1419
          %v1432 = vadd.f32 %v1368, %v1420
          %v1433 = vadd.f32 %v1369, %v1419
          %v1434 = vadd.f32 %v1370, %v1420
          %v1435 = vadd.f32 %v1371, %v1419
          %v1436 = vadd.f32 %v1372, %v1420
          %v1437 = vadd.f32 %v1373, %v1419
          %v1438 = vadd.f32 %v1374, %v1420
          %v1439 = vadd.f32 %v1375, %v1419
          %v1440 = vadd.f32 %v1376, %v1420
          %v1441 = vadd.f32 %v1377, %v1419
          %v1442 = vadd.f32 %v1378, %v1420
          %v1443 = vadd.f32 %v1379, %v1419
          %v1444 = vadd.f32 %v1380, %v1420
          %v1445 = vadd.f32 %v1381, %v1419
          %v1446 = vadd.f32 %v1382, %v1420
          %v1447 = vadd.f32 %v1383, %v1419
          %v1448 = vadd.f32 %v1384, %v1420
          %v1449 = vadd.f32 %v1385, %v1419
          %v1450 = vadd.f32 %v1386, %v1420
          %v1451 = vadd.f32 %v1387, %v1419
          %v1452 = vadd.f32 %v1388, %v1420
          %v1453 = vadd.f32 %v1389, %v1419
          %v1454 = vadd.f32 %v1390, %v1420
          %v1455 = vadd.f32 %v1391, %v1419
          %v1456 = vadd.f32 %v1392, %v1420
          %v1457 = vadd.f32 %v1393, %v1419
          %v1458 = vadd.f32 %v1394, %v1420
          %v1459 = vadd.f32 %v1395, %v1419
          %v1460 = vadd.f32 %v1396, %v1420
          %v1461 = vadd.f32 %v1397, %v1419
          %v1462 = vadd.f32 %v1398, %v1420
          %v1463 = vadd.f32 %v1399, %v1419
          %v1464 = vadd.f32 %v1400, %v1420
          %v1465 = vadd.f32 %v1401, %v1419
          %v1466 = vadd.f32 %v1402, %v1420
          %v1467 = vadd.f32 %v1403, %v1419
          %v1468 = vadd.f32 %v1404, %v1420
          %v1469 = vadd.f32 %v1405, %v1419
          %v1470 = vadd.f32 %v1406, %v1420
          %v1471 = vadd.f32 %v1407, %v1419
          %v1472 = vadd.f32 %v1408, %v1420
          %v1473 = vadd.f32 %v1409, %v1419
          %v1474 = vadd.f32 %v1410, %v1420
          %v1475 = vadd.f32 %v1411, %v1419
          %v1476 = vadd.f32 %v1412, %v1420
          %v1477 = vadd.f32 %v1413, %v1419
          %v1478 = vadd.f32 %v1414, %v1420
          %v1479 = vadd.f32 %v1415, %v1419
          %v1480 = vadd.f32 %v1416, %v1420
          %v1481 = vmax.f32 %v1423, 0.0
          %v1482 = vmax.f32 %v1424, 0.0
          %v1483 = vmax.f32 %v1425, 0.0
          %v1484 = vmax.f32 %v1426, 0.0
          %v1485 = vmax.f32 %v1427, 0.0
          %v1486 = vmax.f32 %v1428, 0.0
          %v1487 = vmax.f32 %v1429, 0.0
          %v1488 = vmax.f32 %v1430, 0.0
          %v1489 = vmax.f32 %v1431, 0.0
          %v1490 = vmax.f32 %v1432, 0.0
          %v1491 = vmax.f32 %v1433, 0.0
          %v1492 = vmax.f32 %v1434, 0.0
          %v1493 = vmax.f32 %v1435, 0.0
          %v1494 = vmax.f32 %v1436, 0.0
          %v1495 = vmax.f32 %v1437, 0.0
          %v1496 = vmax.f32 %v1438, 0.0
          %v1497 = vmax.f32 %v1439, 0.0
          %v1498 = vmax.f32 %v1440, 0.0
          %v1499 = vmax.f32 %v1441, 0.0
          %v1500 = vmax.f32 %v1442, 0.0
          %v1501 = vmax.f32 %v1443, 0.0
          %v1502 = vmax.f32 %v1444, 0.0
          %v1503 = vmax.f32 %v1445, 0.0
          %v1504 = vmax.f32 %v1446, 0.0
          %v1505 = vmax.f32 %v1447, 0.0
          %v1506 = vmax.f32 %v1448, 0.0
          %v1507 = vmax.f32 %v1449, 0.0
          %v1508 = vmax.f32 %v1450, 0.0
          %v1509 = vmax.f32 %v1451, 0.0
          %v1510 = vmax.f32 %v1452, 0.0
          %v1511 = vmax.f32 %v1453, 0.0
          %v1512 = vmax.f32 %v1454, 0.0
          %v1513 = vmax.f32 %v1455, 0.0
          %v1514 = vmax.f32 %v1456, 0.0
          %v1515 = vmax.f32 %v1457, 0.0
          %v1516 = vmax.f32 %v1458, 0.0
          %v1517 = vmax.f32 %v1459, 0.0
          %v1518 = vmax.f32 %v1460, 0.0
          %v1519 = vmax.f32 %v1461, 0.0
          %v1520 = vmax.f32 %v1462, 0.0
          %v1521 = vmax.f32 %v1463, 0.0
          %v1522 = vmax.f32 %v1464, 0.0
          %v1523 = vmax.f32 %v1465, 0.0
          %v1524 = vmax.f32 %v1466, 0.0
          %v1525 = vmax.f32 %v1467, 0.0
          %v1526 = vmax.f32 %v1468, 0.0
          %v1527 = vmax.f32 %v1469, 0.0
          %v1528 = vmax.f32 %v1470, 0.0
          %v1529 = vmax.f32 %v1471, 0.0
          %v1530 = vmax.f32 %v1472, 0.0
          %v1531 = vmax.f32 %v1473, 0.0
          %v1532 = vmax.f32 %v1474, 0.0
          %v1533 = vmax.f32 %v1475, 0.0
          %v1534 = vmax.f32 %v1476, 0.0
          %v1535 = vmax.f32 %v1477, 0.0
          %v1536 = vmax.f32 %v1478, 0.0
          %v1537 = vmax.f32 %v1479, 0.0
          %v1538 = vmax.f32 %v1480, 0.0
          %1539 = vst [vmem:[%s416] sm:$0xff] %v1481
          %1540 = vst [vmem:[%s416 + $0x8] sm:$0xff] %v1482
          %1541 = vst [vmem:[%s416 + $0x10] sm:$0xff] %v1483
          %1542 = vst [vmem:[%s416 + $0x18] sm:$0xff] %v1484
          %1543 = vst [vmem:[%s416 + $0x20] sm:$0xff] %v1485
          %1544 = vst [vmem:[%s416 + $0x28] sm:$0xff] %v1486
          %1545 = vst [vmem:[%s416 + $0x30] sm:$0xff] %v1487
          %1546 = vst [vmem:[%s416 + $0x38] sm:$0xff] %v1488
          %1547 = vst [vmem:[%s416 + $0x40] sm:$0xff] %v1489
          %1548 = vst [vmem:[%s416 + $0x48] sm:$0xff] %v1490
          %1549 = vst [vmem:[%s416 + $0x50] sm:$0xff] %v1491
          %1550 = vst [vmem:[%s416 + $0x58] sm:$0xff] %v1492
          %1551 = vst [vmem:[%s416 + $0x60] sm:$0xff] %v1493
          %1552 = vst [vmem:[%s416 + $0x68] sm:$0xff] %v1494
          %1553 = vst [vmem:[%s416 + $0x70] sm:$0xff] %v1495
          %1554 = vst [vmem:[%s416 + $0x78] sm:$0xff] %v1496
          %1555 = vst [vmem:[%s416 + $0x80] sm:$0xff] %v1497
          %1556 = vst [vmem:[%s416 + $0x88] sm:$0xff] %v1498
          %1557 = vst [vmem:[%s416 + $0x90] sm:$0xff] %v1499
          %1558 = vst [vmem:[%s416 + $0x98] sm:$0xff] %v1500
          %1559 = vst [vmem:[%s416 + $0xa0] sm:$0xff] %v1501
          %1560 = vst [vmem:[%s416 + $0xa8] sm:$0xff] %v1502
          %1561 = vst [vmem:[%s416 + $0xb0] sm:$0xff] %v1503
          %1562 = vst [vmem:[%s416 + $0xb8] sm:$0xff] %v1504
          %1563 = vst [vmem:[%s416 + $0xc0] sm:$0xff] %v1505
          %1564 = vst [vmem:[%s416 + $0xc8] sm:$0xff] %v1506
          %1565 = vst [vmem:[%s416 + $0xd0] sm:$0xff] %v1507
          %1566 = vst [vmem:[%s416 + $0xd8] sm:$0xff] %v1508
          %1567 = vst [vmem:[%s416 + $0xe0] sm:$0xff] %v1509
          %1568 = vst [vmem:[%s416 + $0xe8] sm:$0xff] %v1510
          %1569 = vst [vmem:[%s416 + $0xf0] sm:$0xff] %v1511
          %1570 = vst [vmem:[%s416 + $0xf8] sm:$0xff] %v1512
          %1571 = vst [vmem:[%s416 + $0x100] sm:$0xff] %v1513
          %1572 = vst [vmem:[%s416 + $0x108] sm:$0xff] %v1514
          %1573 = vst [vmem:[%s416 + $0x110] sm:$0xff] %v1515
          %1574 = vst [vmem:[%s416 + $0x118] sm:$0xff] %v1516
          %1575 = vst [vmem:[%s416 + $0x120] sm:$0xff] %v1517
          %1576 = vst [vmem:[%s416 + $0x128] sm:$0xff] %v1518
          %1577 = vst [vmem:[%s416 + $0x130] sm:$0xff] %v1519
          %1578 = vst [vmem:[%s416 + $0x138] sm:$0xff] %v1520
          %1579 = vst [vmem:[%s416 + $0x140] sm:$0xff] %v1521
          %1580 = vst [vmem:[%s416 + $0x148] sm:$0xff] %v1522
          %1581 = vst [vmem:[%s416 + $0x150] sm:$0xff] %v1523
          %1582 = vst [vmem:[%s416 + $0x158] sm:$0xff] %v1524
          %1583 = vst [vmem:[%s416 + $0x160] sm:$0xff] %v1525
          %1584 = vst [vmem:[%s416 + $0x168] sm:$0xff] %v1526
          %1585 = vst [vmem:[%s416 + $0x170] sm:$0xff] %v1527
          %1586 = vst [vmem:[%s416 + $0x178] sm:$0xff] %v1528
          %1587 = vst [vmem:[%s416 + $0x180] sm:$0xff] %v1529
          %1588 = vst [vmem:[%s416 + $0x188] sm:$0xff] %v1530
          %1589 = vst [vmem:[%s416 + $0x190] sm:$0xff] %v1531
          %1590 = vst [vmem:[%s416 + $0x198] sm:$0xff] %v1532
          %1591 = vst [vmem:[%s416 + $0x1a0] sm:$0xff] %v1533
          %1592 = vst [vmem:[%s416 + $0x1a8] sm:$0xff] %v1534
          %1593 = vst [vmem:[%s416 + $0x1b0] sm:$0xff] %v1535
          %1594 = vst [vmem:[%s416 + $0x1b8] sm:$0xff] %v1536
          %1595 = vst [vmem:[%s416 + $0x1c0] sm:$0xff] %v1537
          %1596 = vst [vmem:[%s416 + $0x1c8] sm:$0xff] %v1538
        $region78: #{wsddn_forward.9} parent=65 // pred_fallthru
          _
        %s1597 = smul.u32 29, %s19
        %s1598 = smul.u32 2, %s20
        %p1599 = scmp.lt.s32.totalorder %s1597, 28
        %s1600 = scalar_select %p1599, %s1597, 28
        %p1601 = scmp.lt.s32.totalorder %s1598, 1
        %s1602 = scalar_select %p1601, %s1598, 1
        %s1603 = smul.addr %s1600, 2
        %s1604 = sadd.s32 %s1602, %s1603
        %s1605 = smul.addr %s1604, 8
        %s1606 = scalar_lea.vmem %s3, %s1605
        // Predicated region
        $region79: #{wsddn_forward.9} parent=65 // pred_check
          %p1607 = pneg %p135
        $region80: #{wsddn_forward.9} parent=65 // pred_check_branch
          %1609 = sbr.rel (%p1607) target = $region82
        $region81: #{wsddn_forward.9} parent=65 // pred_region
          %s1610 = smul.u32 29, %s19
          %s1611 = smul.u32 2, %s20
        $region82: #{wsddn_forward.9} parent=65 // pred_fallthru
          _
        // Predicated region
        $region83: #{wsddn_forward.9} parent=65 // pred_check
          %p1612 = pneg %p135
        $region84: #{wsddn_forward.9} parent=65 // pred_check_branch
          %1614 = sbr.rel (%p1612) target = $region86
        $region85: #{wsddn_forward.9} parent=65 // pred_region
          %s1615 = smul.u32 29, %s19
          %s1616 = smul.u32 2, %s20
          %p1617 = scmp.lt.s32.totalorder %s1615, 28
          %s1618 = scalar_select %p1617, %s1615, 28
          %p1619 = scmp.lt.s32.totalorder %s1616, 1
          %s1620 = scalar_select %p1619, %s1616, 1
          %s1621 = smul.addr %s1618, 2
          %s1622 = sadd.s32 %s1620, %s1621
          %s1623 = smul.addr %s1622, 8
          %s1624 = scalar_lea.vmem %s3, %s1623
        $region86: #{wsddn_forward.9} parent=65 // pred_fallthru
          _
      $region66: #{wsddn_forward.9} parent=5 // pred_fallthru
        _
      %p1625 = scmp.le.s32.totalorder 2, %s9
      // Predicated region
      $region87: #{wsddn_forward.9} parent=5 // pred_check
        %p1626 = pneg %p1625
      $region88: #{wsddn_forward.9} parent=5 // pred_check_branch
        %1628 = sbr.rel (%p1626) target = $region90
      $region89: #{wsddn_forward.9} parent=5 // pred_region
        %s1629 = ssub.s32 %s9, 2
      $region90: #{wsddn_forward.9} parent=5 // pred_fallthru
        _
    $region6: #{wsddn_forward.9} parent=1 // loop_footer
      %s13 = sadd.s32 1, %s9
    $region7: #{wsddn_forward.9} parent=1 // loop_footer_branch
      %8 = sbr.rel target = $region3
    $region8: #{wsddn_forward.9} parent=1 // loop_exit
      _

// kernel: wsddn_forward.10
$region0: #{wsddn_forward.10}
  #allocation0 [shape = 'u32[]', space=smem, size = 0x4, offset = 0x4, fixed_abs, tag = 'smem constant byte address 0x4 - core index']
  #allocation1 [shape = 'u32[72,128]{1,0:T(1,128)}', space=vmem, size = 0x9000, scoped, tag = 'internal scratch']
  %s0 = inlined_call_operand.vmem [shape: bf16[56,1920], index: 0, kind: input, shape index: {}]
  %s1 = inlined_call_operand.vmem [shape: bf16[1920,512], index: 1, kind: input, shape index: {}]
  %s2 = inlined_call_operand.vmem [shape: f32[1,512], index: 2, kind: input, shape index: {}]
  %s3 = inlined_call_operand.vmem [shape: f32[56,512], index: 3, kind: output, shape index: {}]
  %s4 = sld [smem:[#allocation0]]
  $region136: #{wsddn_forward.10} parent=0
    _
  %s6 = ssub.s32 1, %s4
  %s7 = scalar_select 0, %s6, %s4
  $region1: #{wsddn_forward.10} parent=0
    #allocation2 [shape = 'u8[86016]{0}', space=vmem, size = 0x15000, scoped, tag = 'input window, operand 0']
    #allocation3 [shape = 'u8[393216]{0}', space=vmem, size = 0x60000, scoped, tag = 'input window, operand 1']
    #allocation4 [shape = 'u8[114688]{0}', space=vmem, size = 0x1c000, scoped, tag = 'output window, operand 0']
    loop: start=0, step=1, limit=12
    $region2: #{wsddn_forward.10} parent=1 // loop_pre_header
      _
    $region3: #{wsddn_forward.10} parent=1 // loop_header
      %s9 = sphi 0, %s13
      %p10 = scmp.ge.s32.totalorder %s9, 12
      %s16 = sphi 0, %s35
      %s17 = sphi 0, %s31
      %s18 = sphi 0, %s27
      %s19 = sphi 0, %s16
      %s20 = sphi 0, %s17
      %s21 = sphi 0, %s18
      %s22 = sphi 0, %s19
      %s23 = sphi 0, %s20
      %s24 = sphi 0, %s21
      %s40 = sphi 0, %s42
      %s43 = sphi 0, %s40
      %s44 = sphi 0, %s43
      %s60 = sphi 0, %s44
      %s68 = sphi 0, %s70
      %s71 = sphi 0, %s68
      %s72 = sphi 0, %s71
      %s88 = sphi 0, %s72
      %s94 = sphi 0, %s96
      %s97 = sphi 0, %s94
      %s98 = sphi 0, %s97
      %s114 = sphi 0, %s98
      %s122 = sphi 0, %s124
      %s125 = sphi 0, %s122
      %s126 = sphi 0, %s125
      %s142 = sphi 0, %s126
    $region4: #{wsddn_forward.10} parent=1 // loop_header_branch
      %12 = sbr.rel (%p10) target = $region8
    $region5: #{wsddn_forward.10} parent=1 // loop_body
      %s14 = ssub.s32 %s9, 1
      %s15 = ssub.s32 %s9, 2
      %s25 = sadd.s32 1, %s18
      %p26 = scmp.ge.s32.totalorder %s25, 5
      %s27 = scalar_select %p26, 0, %s25
      %s28 = sadd.s32 1, %s17
      %s29 = scalar_select %p26, %s28, %s17
      %p30 = scmp.ge.s32.totalorder %s29, 2
      %s31 = scalar_select %p30, 0, %s29
      %s32 = sadd.s32 1, %s16
      %s33 = scalar_select %p30, %s32, %s16
      %p34 = scmp.ge.s32.totalorder %s33, 1
      %s35 = scalar_select %p34, 0, %s33
      %s36 = ssub.s32 %s16, %s35
      %s37 = ssub.s32 %s18, %s27
      %s38 = sor.u32 %s36, %s37
      %p39 = scmp.eq.s32.totalorder %s38, 0
      %s41 = sadd.s32 %s40, 1
      %s42 = scalar_select %p39, %s40, %s41
      %p45 = pneg %p39
      %p46 = scmp.eq.s32.totalorder %s9, 9
      %p47 = por %p45, %p46
      %p48 = scmp.ne.s32.totalorder %s40, %s43
      %p49 = scmp.eq.s32.totalorder %s9, 0
      %p50 = por %p48, %p49
      %p51 = scmp.ne.s32.totalorder %s40, %s43
      %p52 = scmp.eq.s32.totalorder %s14, 9
      %p53 = por %p51, %p52
      %p54 = scmp.ne.s32.totalorder %s43, %s44
      %p55 = scmp.eq.s32.totalorder %s14, 0
      %p56 = por %p54, %p55
      %p57 = scmp.ne.s32.totalorder %s43, %s44
      %p58 = scmp.eq.s32.totalorder %s15, 9
      %p59 = por %p57, %p58
      %p61 = scmp.ne.s32.totalorder %s44, %s60
      %p62 = scmp.eq.s32.totalorder %s15, 0
      %p63 = por %p61, %p62
      %s64 = ssub.s32 %s18, %s27
      %s65 = ssub.s32 %s17, %s31
      %s66 = sor.u32 %s64, %s65
      %p67 = scmp.eq.s32.totalorder %s66, 0
      %s69 = sadd.s32 %s68, 1
      %s70 = scalar_select %p67, %s68, %s69
      %p73 = pneg %p67
      %p74 = scmp.eq.s32.totalorder %s9, 9
      %p75 = por %p73, %p74
      %p76 = scmp.ne.s32.totalorder %s68, %s71
      %p77 = scmp.eq.s32.totalorder %s9, 0
      %p78 = por %p76, %p77
      %p79 = scmp.ne.s32.totalorder %s68, %s71
      %p80 = scmp.eq.s32.totalorder %s14, 9
      %p81 = por %p79, %p80
      %p82 = scmp.ne.s32.totalorder %s71, %s72
      %p83 = scmp.eq.s32.totalorder %s14, 0
      %p84 = por %p82, %p83
      %p85 = scmp.ne.s32.totalorder %s71, %s72
      %p86 = scmp.eq.s32.totalorder %s15, 9
      %p87 = por %p85, %p86
      %p89 = scmp.ne.s32.totalorder %s72, %s88
      %p90 = scmp.eq.s32.totalorder %s15, 0
      %p91 = por %p89, %p90
      %s92 = ssub.s32 %s17, %s31
      %p93 = scmp.eq.s32.totalorder %s92, 0
      %s95 = sadd.s32 %s94, 1
      %s96 = scalar_select %p93, %s94, %s95
      %p99 = pneg %p93
      %p100 = scmp.eq.s32.totalorder %s9, 9
      %p101 = por %p99, %p100
      %p102 = scmp.ne.s32.totalorder %s94, %s97
      %p103 = scmp.eq.s32.totalorder %s9, 0
      %p104 = por %p102, %p103
      %p105 = scmp.ne.s32.totalorder %s94, %s97
      %p106 = scmp.eq.s32.totalorder %s14, 9
      %p107 = por %p105, %p106
      %p108 = scmp.ne.s32.totalorder %s97, %s98
      %p109 = scmp.eq.s32.totalorder %s14, 0
      %p110 = por %p108, %p109
      %p111 = scmp.ne.s32.totalorder %s97, %s98
      %p112 = scmp.eq.s32.totalorder %s15, 9
      %p113 = por %p111, %p112
      %p115 = scmp.ne.s32.totalorder %s98, %s114
      %p116 = scmp.eq.s32.totalorder %s15, 0
      %p117 = por %p115, %p116
      %s118 = ssub.s32 %s16, %s35
      %s119 = ssub.s32 %s17, %s31
      %s120 = sor.u32 %s118, %s119
      %p121 = scmp.eq.s32.totalorder %s120, 0
      %s123 = sadd.s32 %s122, 1
      %s124 = scalar_select %p121, %s122, %s123
      %p127 = pneg %p121
      %p128 = scmp.eq.s32.totalorder %s9, 9
      %p129 = por %p127, %p128
      %p130 = scmp.ne.s32.totalorder %s122, %s125
      %p131 = scmp.eq.s32.totalorder %s9, 0
      %p132 = por %p130, %p131
      %p133 = scmp.ne.s32.totalorder %s122, %s125
      %p134 = scmp.eq.s32.totalorder %s14, 9
      %p135 = por %p133, %p134
      %p136 = scmp.ne.s32.totalorder %s125, %s126
      %p137 = scmp.eq.s32.totalorder %s14, 0
      %p138 = por %p136, %p137
      %p139 = scmp.ne.s32.totalorder %s125, %s126
      %p140 = scmp.eq.s32.totalorder %s15, 9
      %p141 = por %p139, %p140
      %p143 = scmp.ne.s32.totalorder %s126, %s142
      %p144 = scmp.eq.s32.totalorder %s15, 0
      %p145 = por %p143, %p144
      %p146 = scmp.le.s32.totalorder 1, %s9
      %p147 = scmp.lt.s32.totalorder %s9, 11
      %p148 = pnand %p146, %p147
      %p149 = pneg %p148
      // Predicated region
      $region9: #{wsddn_forward.10} parent=5 // pred_check
        _
      $region10: #{wsddn_forward.10} parent=5 // pred_check_branch
        %151 = sbr.rel (%p148) target = $region12
      $region11: #{wsddn_forward.10} parent=5 // pred_region
        %s152 = ssub.s32 %s9, 1
      $region12: #{wsddn_forward.10} parent=5 // pred_fallthru
        _
      %p153 = scmp.lt.s32.totalorder %s9, 10
      // Predicated region
      $region13: #{wsddn_forward.10} parent=5 // pred_check
        %p154 = pneg %p153
      $region14: #{wsddn_forward.10} parent=5 // pred_check_branch
        %156 = sbr.rel (%p154) target = $region16
      $region15: #{wsddn_forward.10} parent=5 // pred_region
        // Predicated region
        $region17: #{wsddn_forward.10} parent=15 // pred_check
          %p157 = pneg %p50
        $region18: #{wsddn_forward.10} parent=15 // pred_check_branch
          %159 = sbr.rel (%p157) target = $region20
        $region19: #{wsddn_forward.10} parent=15 // pred_region
          %s160 = sand.u32 %s40, 1
          %s161 = sand.u32 %s40, 1
          %s162 = smul.addr %s161, 84
          %s163 = scalar_lea.vmem [#allocation2], %s162
          %s164 = smul.u32 7, %s16
          %s165 = smul.u32 3, %s18
          %s166 = smul.addr %s164, 15
          %s167 = sadd.s32 %s165, %s166
          %s168 = smul.addr %s167, 4
          %s169 = scalar_lea.vmem %s0, %s168
          // Predicated region
          $region21: #{wsddn_forward.10} parent=19 // pred_check
            _
          $region22: #{wsddn_forward.10} parent=19 // pred_check_branch
            %171 = sbr.rel (0) target = $region24
          $region23: #{wsddn_forward.10} parent=19 // pred_region
            // Predicated region
            $region25: #{wsddn_forward.10} parent=23 // pred_check
              _
            $region26: #{wsddn_forward.10} parent=23 // pred_check_branch
              %173 = sbr.rel (0) target = $region28
            $region27: #{wsddn_forward.10} parent=23 // pred_region
              %s174 = scalar_lea.vmem %s169, 8
              %s175 = scalar_lea.vmem %s163, 8 [#allocation2]
              loop: start=0, step=1, limit=1
              $region29: #{wsddn_forward.10} parent=27 // loop_pre_header
                _
              $region30: #{wsddn_forward.10} parent=27 // loop_header
                %s177 = sphi 0, %s181
                %p178 = scmp.ge.s32.totalorder %s177, 1
                %s182 = sphi %s169, %s169
                %s183 = sphi %s163, %s163
              $region31: #{wsddn_forward.10} parent=27 // loop_header_branch
                %180 = sbr.rel (%p178) target = $region35
              $region32: #{wsddn_forward.10} parent=27 // loop_body
                %v184 = vld [vmem:[%s182] sm:$0xff]
                %185 = vst [vmem:[%s183] sm:$0xff] %v184
                %v186 = vld [vmem:[%s182 + $0x3c] sm:$0xff]
                %187 = vst [vmem:[%s183 + $0xc] sm:$0xff] %v186
                %v188 = vld [vmem:[%s182 + $0x78] sm:$0xff]
                %189 = vst [vmem:[%s183 + $0x18] sm:$0xff] %v188
                %v190 = vld [vmem:[%s182 + $0xb4] sm:$0xff]
                %191 = vst [vmem:[%s183 + $0x24] sm:$0xff] %v190
                %v192 = vld [vmem:[%s182 + $0xf0] sm:$0xff]
                %193 = vst [vmem:[%s183 + $0x30] sm:$0xff] %v192
                %v194 = vld [vmem:[%s182 + $0x12c] sm:$0xff]
                %195 = vst [vmem:[%s183 + $0x3c] sm:$0xff] %v194
                %v196 = vld [vmem:[%s182 + $0x168] sm:$0xff]
                %197 = vst [vmem:[%s183 + $0x48] sm:$0xff] %v196
              $region33: #{wsddn_forward.10} parent=27 // loop_footer
                %s181 = sadd.s32 1, %s177
              $region34: #{wsddn_forward.10} parent=27 // loop_footer_branch
                %176 = sbr.rel target = $region30
              $region35: #{wsddn_forward.10} parent=27 // loop_exit
                _
              %s199 = ssub.s32 16, 1
              loop: start=0, step=1, limit=1
              $region36: #{wsddn_forward.10} parent=27 // loop_pre_header
                _
              $region37: #{wsddn_forward.10} parent=27 // loop_header
                %s201 = sphi 0, %s205
                %p202 = scmp.ge.s32.totalorder %s201, 1
                %s206 = sphi %s174, %s174
                %s207 = sphi %s175, %s175
              $region38: #{wsddn_forward.10} parent=27 // loop_header_branch
                %204 = sbr.rel (%p202) target = $region42
              $region39: #{wsddn_forward.10} parent=27 // loop_body
                %v208 = vld [vmem:[%s206] sm:%s199]
                %209 = vst [vmem:[%s207] sm:%s199] %v208
                %v210 = vld [vmem:[%s206 + $0x3c] sm:%s199]
                %211 = vst [vmem:[%s207 + $0xc] sm:%s199] %v210
                %v212 = vld [vmem:[%s206 + $0x78] sm:%s199]
                %213 = vst [vmem:[%s207 + $0x18] sm:%s199] %v212
                %v214 = vld [vmem:[%s206 + $0xb4] sm:%s199]
                %215 = vst [vmem:[%s207 + $0x24] sm:%s199] %v214
                %v216 = vld [vmem:[%s206 + $0xf0] sm:%s199]
                %217 = vst [vmem:[%s207 + $0x30] sm:%s199] %v216
                %v218 = vld [vmem:[%s206 + $0x12c] sm:%s199]
                %219 = vst [vmem:[%s207 + $0x3c] sm:%s199] %v218
                %v220 = vld [vmem:[%s206 + $0x168] sm:%s199]
                %221 = vst [vmem:[%s207 + $0x48] sm:%s199] %v220
              $region40: #{wsddn_forward.10} parent=27 // loop_footer
                %s205 = sadd.s32 1, %s201
              $region41: #{wsddn_forward.10} parent=27 // loop_footer_branch
                %200 = sbr.rel target = $region37
              $region42: #{wsddn_forward.10} parent=27 // loop_exit
                _
            $region28: #{wsddn_forward.10} parent=23 // pred_fallthru
              _
          $region24: #{wsddn_forward.10} parent=19 // pred_fallthru
            _
          %222 = vnop
        $region20: #{wsddn_forward.10} parent=15 // pred_fallthru
          _
        // Predicated region
        $region43: #{wsddn_forward.10} parent=15 // pred_check
          %p223 = pneg %p78
        $region44: #{wsddn_forward.10} parent=15 // pred_check_branch
          %225 = sbr.rel (%p223) target = $region46
        $region45: #{wsddn_forward.10} parent=15 // pred_region
          %s226 = sand.u32 %s68, 1
          %s227 = sand.u32 %s68, 1
          %s228 = smul.addr %s227, 384
          %s229 = scalar_lea.vmem [#allocation3], %s228
          %s230 = smul.u32 48, %s18
          %s231 = smul.u32 2, %s17
          %s232 = smul.addr %s230, 4
          %s233 = sadd.s32 %s231, %s232
          %s234 = smul.addr %s233, 4
          %s235 = scalar_lea.vmem %s1, %s234
          // Predicated region
          $region47: #{wsddn_forward.10} parent=45 // pred_check
            _
          $region48: #{wsddn_forward.10} parent=45 // pred_check_branch
            %237 = sbr.rel (0) target = $region50
          $region49: #{wsddn_forward.10} parent=45 // pred_region
            // Predicated region
            $region51: #{wsddn_forward.10} parent=49 // pred_check
              _
            $region52: #{wsddn_forward.10} parent=49 // pred_check_branch
              %239 = sbr.rel (0) target = $region54
            $region53: #{wsddn_forward.10} parent=49 // pred_region
              // Predicated region
              $region66: #{wsddn_forward.10} parent=53 // pred_check
                _
              $region67: #{wsddn_forward.10} parent=53 // pred_check_branch
                %349 = sbr.rel (0) target = $region69
              $region68: #{wsddn_forward.10} parent=53 // pred_region
                loop: start=0, step=1, limit=1
                $region70: #{wsddn_forward.10} parent=68 // loop_pre_header
                  _
                $region71: #{wsddn_forward.10} parent=68 // loop_header
                  %s351 = sphi 0, %s355
                  %p352 = scmp.ge.s32.totalorder %s351, 1
                  %s356 = sphi %s235, %s235
                  %s357 = sphi %s229, %s229
                $region72: #{wsddn_forward.10} parent=68 // loop_header_branch
                  %354 = sbr.rel (%p352) target = $region76
                $region73: #{wsddn_forward.10} parent=68 // loop_body
                  %v358 = vld [vmem:[%s356] sm:$0xff]
                  %359 = vst [vmem:[%s357] sm:$0xff] %v358
                  %v360 = vld [vmem:[%s356 + $0x10] sm:$0xff]
                  %361 = vst [vmem:[%s357 + $0x8] sm:$0xff] %v360
                  %v362 = vld [vmem:[%s356 + $0x20] sm:$0xff]
                  %363 = vst [vmem:[%s357 + $0x10] sm:$0xff] %v362
                  %v364 = vld [vmem:[%s356 + $0x30] sm:$0xff]
                  %365 = vst [vmem:[%s357 + $0x18] sm:$0xff] %v364
                  %v366 = vld [vmem:[%s356 + $0x40] sm:$0xff]
                  %367 = vst [vmem:[%s357 + $0x20] sm:$0xff] %v366
                  %v368 = vld [vmem:[%s356 + $0x50] sm:$0xff]
                  %369 = vst [vmem:[%s357 + $0x28] sm:$0xff] %v368
                  %v370 = vld [vmem:[%s356 + $0x60] sm:$0xff]
                  %371 = vst [vmem:[%s357 + $0x30] sm:$0xff] %v370
                  %v372 = vld [vmem:[%s356 + $0x70] sm:$0xff]
                  %373 = vst [vmem:[%s357 + $0x38] sm:$0xff] %v372
                  %v374 = vld [vmem:[%s356 + $0x80] sm:$0xff]
                  %375 = vst [vmem:[%s357 + $0x40] sm:$0xff] %v374
                  %v376 = vld [vmem:[%s356 + $0x90] sm:$0xff]
                  %377 = vst [vmem:[%s357 + $0x48] sm:$0xff] %v376
                  %v378 = vld [vmem:[%s356 + $0xa0] sm:$0xff]
                  %379 = vst [vmem:[%s357 + $0x50] sm:$0xff] %v378
                  %v380 = vld [vmem:[%s356 + $0xb0] sm:$0xff]
                  %381 = vst [vmem:[%s357 + $0x58] sm:$0xff] %v380
                  %v382 = vld [vmem:[%s356 + $0xc0] sm:$0xff]
                  %383 = vst [vmem:[%s357 + $0x60] sm:$0xff] %v382
                  %v384 = vld [vmem:[%s356 + $0xd0] sm:$0xff]
                  %385 = vst [vmem:[%s357 + $0x68] sm:$0xff] %v384
                  %v386 = vld [vmem:[%s356 + $0xe0] sm:$0xff]
                  %387 = vst [vmem:[%s357 + $0x70] sm:$0xff] %v386
                  %v388 = vld [vmem:[%s356 + $0xf0] sm:$0xff]
                  %389 = vst [vmem:[%s357 + $0x78] sm:$0xff] %v388
                  %v390 = vld [vmem:[%s356 + $0x100] sm:$0xff]
                  %391 = vst [vmem:[%s357 + $0x80] sm:$0xff] %v390
                  %v392 = vld [vmem:[%s356 + $0x110] sm:$0xff]
                  %393 = vst [vmem:[%s357 + $0x88] sm:$0xff] %v392
                  %v394 = vld [vmem:[%s356 + $0x120] sm:$0xff]
                  %395 = vst [vmem:[%s357 + $0x90] sm:$0xff] %v394
                  %v396 = vld [vmem:[%s356 + $0x130] sm:$0xff]
                  %397 = vst [vmem:[%s357 + $0x98] sm:$0xff] %v396
                  %v398 = vld [vmem:[%s356 + $0x140] sm:$0xff]
                  %399 = vst [vmem:[%s357 + $0xa0] sm:$0xff] %v398
                  %v400 = vld [vmem:[%s356 + $0x150] sm:$0xff]
                  %401 = vst [vmem:[%s357 + $0xa8] sm:$0xff] %v400
                  %v402 = vld [vmem:[%s356 + $0x160] sm:$0xff]
                  %403 = vst [vmem:[%s357 + $0xb0] sm:$0xff] %v402
                  %v404 = vld [vmem:[%s356 + $0x170] sm:$0xff]
                  %405 = vst [vmem:[%s357 + $0xb8] sm:$0xff] %v404
                  %v406 = vld [vmem:[%s356 + $0x180] sm:$0xff]
                  %407 = vst [vmem:[%s357 + $0xc0] sm:$0xff] %v406
                  %v408 = vld [vmem:[%s356 + $0x190] sm:$0xff]
                  %409 = vst [vmem:[%s357 + $0xc8] sm:$0xff] %v408
                  %v410 = vld [vmem:[%s356 + $0x1a0] sm:$0xff]
                  %411 = vst [vmem:[%s357 + $0xd0] sm:$0xff] %v410
                  %v412 = vld [vmem:[%s356 + $0x1b0] sm:$0xff]
                  %413 = vst [vmem:[%s357 + $0xd8] sm:$0xff] %v412
                  %v414 = vld [vmem:[%s356 + $0x1c0] sm:$0xff]
                  %415 = vst [vmem:[%s357 + $0xe0] sm:$0xff] %v414
                  %v416 = vld [vmem:[%s356 + $0x1d0] sm:$0xff]
                  %417 = vst [vmem:[%s357 + $0xe8] sm:$0xff] %v416
                  %v418 = vld [vmem:[%s356 + $0x1e0] sm:$0xff]
                  %419 = vst [vmem:[%s357 + $0xf0] sm:$0xff] %v418
                  %v420 = vld [vmem:[%s356 + $0x1f0] sm:$0xff]
                  %421 = vst [vmem:[%s357 + $0xf8] sm:$0xff] %v420
                  %v422 = vld [vmem:[%s356 + $0x200] sm:$0xff]
                  %423 = vst [vmem:[%s357 + $0x100] sm:$0xff] %v422
                  %v424 = vld [vmem:[%s356 + $0x210] sm:$0xff]
                  %425 = vst [vmem:[%s357 + $0x108] sm:$0xff] %v424
                  %v426 = vld [vmem:[%s356 + $0x220] sm:$0xff]
                  %427 = vst [vmem:[%s357 + $0x110] sm:$0xff] %v426
                  %v428 = vld [vmem:[%s356 + $0x230] sm:$0xff]
                  %429 = vst [vmem:[%s357 + $0x118] sm:$0xff] %v428
                  %v430 = vld [vmem:[%s356 + $0x240] sm:$0xff]
                  %431 = vst [vmem:[%s357 + $0x120] sm:$0xff] %v430
                  %v432 = vld [vmem:[%s356 + $0x250] sm:$0xff]
                  %433 = vst [vmem:[%s357 + $0x128] sm:$0xff] %v432
                  %v434 = vld [vmem:[%s356 + $0x260] sm:$0xff]
                  %435 = vst [vmem:[%s357 + $0x130] sm:$0xff] %v434
                  %v436 = vld [vmem:[%s356 + $0x270] sm:$0xff]
                  %437 = vst [vmem:[%s357 + $0x138] sm:$0xff] %v436
                  %v438 = vld [vmem:[%s356 + $0x280] sm:$0xff]
                  %439 = vst [vmem:[%s357 + $0x140] sm:$0xff] %v438
                  %v440 = vld [vmem:[%s356 + $0x290] sm:$0xff]
                  %441 = vst [vmem:[%s357 + $0x148] sm:$0xff] %v440
                  %v442 = vld [vmem:[%s356 + $0x2a0] sm:$0xff]
                  %443 = vst [vmem:[%s357 + $0x150] sm:$0xff] %v442
                  %v444 = vld [vmem:[%s356 + $0x2b0] sm:$0xff]
                  %445 = vst [vmem:[%s357 + $0x158] sm:$0xff] %v444
                  %v446 = vld [vmem:[%s356 + $0x2c0] sm:$0xff]
                  %447 = vst [vmem:[%s357 + $0x160] sm:$0xff] %v446
                  %v448 = vld [vmem:[%s356 + $0x2d0] sm:$0xff]
                  %449 = vst [vmem:[%s357 + $0x168] sm:$0xff] %v448
                  %v450 = vld [vmem:[%s356 + $0x2e0] sm:$0xff]
                  %451 = vst [vmem:[%s357 + $0x170] sm:$0xff] %v450
                  %v452 = vld [vmem:[%s356 + $0x2f0] sm:$0xff]
                  %453 = vst [vmem:[%s357 + $0x178] sm:$0xff] %v452
                $region74: #{wsddn_forward.10} parent=68 // loop_footer
                  %s355 = sadd.s32 1, %s351
                $region75: #{wsddn_forward.10} parent=68 // loop_footer_branch
                  %350 = sbr.rel target = $region71
                $region76: #{wsddn_forward.10} parent=68 // loop_exit
                  _
              $region69: #{wsddn_forward.10} parent=53 // pred_fallthru
                _
              // Predicated region
              $region77: #{wsddn_forward.10} parent=53 // pred_check
                _
              $region78: #{wsddn_forward.10} parent=53 // pred_check_branch
                %455 = sbr.rel target = $region80
              $region79: #{wsddn_forward.10} parent=53 // pred_region
                _
              $region80: #{wsddn_forward.10} parent=53 // pred_fallthru
                _
            $region54: #{wsddn_forward.10} parent=49 // pred_fallthru
              _
            // Predicated region
            $region55: #{wsddn_forward.10} parent=49 // pred_check
              _
            $region56: #{wsddn_forward.10} parent=49 // pred_check_branch
              %241 = sbr.rel target = $region58
            $region57: #{wsddn_forward.10} parent=49 // pred_region
              %s243 = ssub.s32 256, 1
              loop: start=0, step=1, limit=1
              $region59: #{wsddn_forward.10} parent=57 // loop_pre_header
                _
              $region60: #{wsddn_forward.10} parent=57 // loop_header
                %s245 = sphi 0, %s249
                %p246 = scmp.ge.s32.totalorder %s245, 1
                %s250 = sphi %s235, %s235
                %s251 = sphi %s229, %s229
              $region61: #{wsddn_forward.10} parent=57 // loop_header_branch
                %248 = sbr.rel (%p246) target = $region65
              $region62: #{wsddn_forward.10} parent=57 // loop_body
                %v252 = vld [vmem:[%s250] sm:%s243]
                %253 = vst [vmem:[%s251] sm:%s243] %v252
                %v254 = vld [vmem:[%s250 + $0x10] sm:%s243]
                %255 = vst [vmem:[%s251 + $0x8] sm:%s243] %v254
                %v256 = vld [vmem:[%s250 + $0x20] sm:%s243]
                %257 = vst [vmem:[%s251 + $0x10] sm:%s243] %v256
                %v258 = vld [vmem:[%s250 + $0x30] sm:%s243]
                %259 = vst [vmem:[%s251 + $0x18] sm:%s243] %v258
                %v260 = vld [vmem:[%s250 + $0x40] sm:%s243]
                %261 = vst [vmem:[%s251 + $0x20] sm:%s243] %v260
                %v262 = vld [vmem:[%s250 + $0x50] sm:%s243]
                %263 = vst [vmem:[%s251 + $0x28] sm:%s243] %v262
                %v264 = vld [vmem:[%s250 + $0x60] sm:%s243]
                %265 = vst [vmem:[%s251 + $0x30] sm:%s243] %v264
                %v266 = vld [vmem:[%s250 + $0x70] sm:%s243]
                %267 = vst [vmem:[%s251 + $0x38] sm:%s243] %v266
                %v268 = vld [vmem:[%s250 + $0x80] sm:%s243]
                %269 = vst [vmem:[%s251 + $0x40] sm:%s243] %v268
                %v270 = vld [vmem:[%s250 + $0x90] sm:%s243]
                %271 = vst [vmem:[%s251 + $0x48] sm:%s243] %v270
                %v272 = vld [vmem:[%s250 + $0xa0] sm:%s243]
                %273 = vst [vmem:[%s251 + $0x50] sm:%s243] %v272
                %v274 = vld [vmem:[%s250 + $0xb0] sm:%s243]
                %275 = vst [vmem:[%s251 + $0x58] sm:%s243] %v274
                %v276 = vld [vmem:[%s250 + $0xc0] sm:%s243]
                %277 = vst [vmem:[%s251 + $0x60] sm:%s243] %v276
                %v278 = vld [vmem:[%s250 + $0xd0] sm:%s243]
                %279 = vst [vmem:[%s251 + $0x68] sm:%s243] %v278
                %v280 = vld [vmem:[%s250 + $0xe0] sm:%s243]
                %281 = vst [vmem:[%s251 + $0x70] sm:%s243] %v280
                %v282 = vld [vmem:[%s250 + $0xf0] sm:%s243]
                %283 = vst [vmem:[%s251 + $0x78] sm:%s243] %v282
                %v284 = vld [vmem:[%s250 + $0x100] sm:%s243]
                %285 = vst [vmem:[%s251 + $0x80] sm:%s243] %v284
                %v286 = vld [vmem:[%s250 + $0x110] sm:%s243]
                %287 = vst [vmem:[%s251 + $0x88] sm:%s243] %v286
                %v288 = vld [vmem:[%s250 + $0x120] sm:%s243]
                %289 = vst [vmem:[%s251 + $0x90] sm:%s243] %v288
                %v290 = vld [vmem:[%s250 + $0x130] sm:%s243]
                %291 = vst [vmem:[%s251 + $0x98] sm:%s243] %v290
                %v292 = vld [vmem:[%s250 + $0x140] sm:%s243]
                %293 = vst [vmem:[%s251 + $0xa0] sm:%s243] %v292
                %v294 = vld [vmem:[%s250 + $0x150] sm:%s243]
                %295 = vst [vmem:[%s251 + $0xa8] sm:%s243] %v294
                %v296 = vld [vmem:[%s250 + $0x160] sm:%s243]
                %297 = vst [vmem:[%s251 + $0xb0] sm:%s243] %v296
                %v298 = vld [vmem:[%s250 + $0x170] sm:%s243]
                %299 = vst [vmem:[%s251 + $0xb8] sm:%s243] %v298
                %v300 = vld [vmem:[%s250 + $0x180] sm:%s243]
                %301 = vst [vmem:[%s251 + $0xc0] sm:%s243] %v300
                %v302 = vld [vmem:[%s250 + $0x190] sm:%s243]
                %303 = vst [vmem:[%s251 + $0xc8] sm:%s243] %v302
                %v304 = vld [vmem:[%s250 + $0x1a0] sm:%s243]
                %305 = vst [vmem:[%s251 + $0xd0] sm:%s243] %v304
                %v306 = vld [vmem:[%s250 + $0x1b0] sm:%s243]
                %307 = vst [vmem:[%s251 + $0xd8] sm:%s243] %v306
                %v308 = vld [vmem:[%s250 + $0x1c0] sm:%s243]
                %309 = vst [vmem:[%s251 + $0xe0] sm:%s243] %v308
                %v310 = vld [vmem:[%s250 + $0x1d0] sm:%s243]
                %311 = vst [vmem:[%s251 + $0xe8] sm:%s243] %v310
                %v312 = vld [vmem:[%s250 + $0x1e0] sm:%s243]
                %313 = vst [vmem:[%s251 + $0xf0] sm:%s243] %v312
                %v314 = vld [vmem:[%s250 + $0x1f0] sm:%s243]
                %315 = vst [vmem:[%s251 + $0xf8] sm:%s243] %v314
                %v316 = vld [vmem:[%s250 + $0x200] sm:%s243]
                %317 = vst [vmem:[%s251 + $0x100] sm:%s243] %v316
                %v318 = vld [vmem:[%s250 + $0x210] sm:%s243]
                %319 = vst [vmem:[%s251 + $0x108] sm:%s243] %v318
                %v320 = vld [vmem:[%s250 + $0x220] sm:%s243]
                %321 = vst [vmem:[%s251 + $0x110] sm:%s243] %v320
                %v322 = vld [vmem:[%s250 + $0x230] sm:%s243]
                %323 = vst [vmem:[%s251 + $0x118] sm:%s243] %v322
                %v324 = vld [vmem:[%s250 + $0x240] sm:%s243]
                %325 = vst [vmem:[%s251 + $0x120] sm:%s243] %v324
                %v326 = vld [vmem:[%s250 + $0x250] sm:%s243]
                %327 = vst [vmem:[%s251 + $0x128] sm:%s243] %v326
                %v328 = vld [vmem:[%s250 + $0x260] sm:%s243]
                %329 = vst [vmem:[%s251 + $0x130] sm:%s243] %v328
                %v330 = vld [vmem:[%s250 + $0x270] sm:%s243]
                %331 = vst [vmem:[%s251 + $0x138] sm:%s243] %v330
                %v332 = vld [vmem:[%s250 + $0x280] sm:%s243]
                %333 = vst [vmem:[%s251 + $0x140] sm:%s243] %v332
                %v334 = vld [vmem:[%s250 + $0x290] sm:%s243]
                %335 = vst [vmem:[%s251 + $0x148] sm:%s243] %v334
                %v336 = vld [vmem:[%s250 + $0x2a0] sm:%s243]
                %337 = vst [vmem:[%s251 + $0x150] sm:%s243] %v336
                %v338 = vld [vmem:[%s250 + $0x2b0] sm:%s243]
                %339 = vst [vmem:[%s251 + $0x158] sm:%s243] %v338
                %v340 = vld [vmem:[%s250 + $0x2c0] sm:%s243]
                %341 = vst [vmem:[%s251 + $0x160] sm:%s243] %v340
                %v342 = vld [vmem:[%s250 + $0x2d0] sm:%s243]
                %343 = vst [vmem:[%s251 + $0x168] sm:%s243] %v342
                %v344 = vld [vmem:[%s250 + $0x2e0] sm:%s243]
                %345 = vst [vmem:[%s251 + $0x170] sm:%s243] %v344
                %v346 = vld [vmem:[%s250 + $0x2f0] sm:%s243]
                %347 = vst [vmem:[%s251 + $0x178] sm:%s243] %v346
              $region63: #{wsddn_forward.10} parent=57 // loop_footer
                %s249 = sadd.s32 1, %s245
              $region64: #{wsddn_forward.10} parent=57 // loop_footer_branch
                %244 = sbr.rel target = $region60
              $region65: #{wsddn_forward.10} parent=57 // loop_exit
                _
            $region58: #{wsddn_forward.10} parent=49 // pred_fallthru
              _
          $region50: #{wsddn_forward.10} parent=45 // pred_fallthru
            _
          %456 = vnop
        $region46: #{wsddn_forward.10} parent=15 // pred_fallthru
          _
        // Predicated region
        $region81: #{wsddn_forward.10} parent=15 // pred_check
          %p457 = pneg %p104
        $region82: #{wsddn_forward.10} parent=15 // pred_check_branch
          %459 = sbr.rel (%p457) target = $region84
        $region83: #{wsddn_forward.10} parent=15 // pred_region
          %s460 = smul.u32 2, %s17
          %p461 = scmp.lt.s32.totalorder %s460, 3
          %s462 = scalar_select %p461, %s460, 3
          %s463 = scalar_lea.vmem %s2, %s462
          %s464 = smul.u32 2, %s17
        $region84: #{wsddn_forward.10} parent=15 // pred_fallthru
          _
      $region16: #{wsddn_forward.10} parent=5 // pred_fallthru
        _
      %p465 = scmp.le.s32.totalorder 1, %s9
      %p466 = scmp.lt.s32.totalorder %s9, 11
      %p467 = pnand %p465, %p466
      %p468 = pneg %p467
      // Predicated region
      $region85: #{wsddn_forward.10} parent=5 // pred_check
        _
      $region86: #{wsddn_forward.10} parent=5 // pred_check_branch
        %470 = sbr.rel (%p467) target = $region88
      $region87: #{wsddn_forward.10} parent=5 // pred_region
        %s471 = ssub.s32 %s9, 1
        %s472 = sand.u32 %s43, 1
        %s473 = sand.u32 %s43, 1
        %s474 = smul.addr %s473, 84
        %s475 = scalar_lea.vmem [#allocation2], %s474
        // Predicated region
        $region89: #{wsddn_forward.10} parent=87 // pred_check
          %p476 = pneg %p56
        $region90: #{wsddn_forward.10} parent=87 // pred_check_branch
          %478 = sbr.rel (%p476) target = $region92
        $region91: #{wsddn_forward.10} parent=87 // pred_region
          _
        $region92: #{wsddn_forward.10} parent=87 // pred_fallthru
          _
        %s479 = sand.u32 %s71, 1
        %s480 = sand.u32 %s71, 1
        %s481 = smul.addr %s480, 384
        %s482 = scalar_lea.vmem [#allocation3], %s481
        // Predicated region
        $region93: #{wsddn_forward.10} parent=87 // pred_check
          %p483 = pneg %p84
        $region94: #{wsddn_forward.10} parent=87 // pred_check_branch
          %485 = sbr.rel (%p483) target = $region96
        $region95: #{wsddn_forward.10} parent=87 // pred_region
          _
        $region96: #{wsddn_forward.10} parent=87 // pred_fallthru
          _
        %s486 = sand.u32 %s43, 1
        %s487 = sand.u32 %s43, 1
        %s488 = smul.addr %s487, 84
        %s489 = scalar_lea.vmem [#allocation2], %s488
        %p490 = pneg %p56
        %p491 = pneg %p53
        %s492 = sand.u32 %s71, 1
        %s493 = sand.u32 %s71, 1
        %s494 = smul.addr %s493, 384
        %s495 = scalar_lea.vmem [#allocation3], %s494
        %p496 = pneg %p84
        %p497 = pneg %p81
        %s498 = smul.u32 2, %s20
        %p499 = scmp.lt.s32.totalorder %s498, 3
        %s500 = scalar_select %p499, %s498, 3
        %s501 = scalar_lea.vmem %s2, %s500
        %p502 = pneg %p110
        %p503 = pneg %p107
        %p504 = pneg %p138
        %p505 = pneg %p135
        %s506 = sand.u32 %s125, 1
        %s507 = sand.u32 %s125, 1
        %s508 = smul.addr %s507, 112
        %s509 = scalar_lea.vmem [#allocation4], %s508
        %s510 = smul.u32 7, %s19
        %s511 = smul.u32 3, %s21
        %s512 = smul.u32 48, %s21
        %s513 = smul.u32 2, %s20
        %s514 = smul.u32 2, %s20
        %p515 = scmp.lt.s32.totalorder %s514, 3
        %s516 = scalar_select %p515, %s514, 3
        %s517 = scalar_lea.vmem %s2, %s516
        %s518 = smul.u32 2, %s20
        %s519 = smul.u32 7, %s19
        %s520 = smul.u32 2, %s20
        %p521 = scmp.eq.s32.totalorder %s21, 0
        // Predicated region
        $region97: #{wsddn_forward.10} parent=87 // pred_check
          %p522 = pneg %p521
        $region98: #{wsddn_forward.10} parent=87 // pred_check_branch
          %524 = sbr.rel (%p522) target = $region100
        $region99: #{wsddn_forward.10} parent=87 // pred_region
          %525 = vst [vmem:[%s509] sm:$0xff] 0.0
          %526 = vst [vmem:[%s509 + $0x8] sm:$0xff] 0.0
          %527 = vst [vmem:[%s509 + $0x10] sm:$0xff] 0.0
          %528 = vst [vmem:[%s509 + $0x18] sm:$0xff] 0.0
          %529 = vst [vmem:[%s509 + $0x20] sm:$0xff] 0.0
          %530 = vst [vmem:[%s509 + $0x28] sm:$0xff] 0.0
          %531 = vst [vmem:[%s509 + $0x30] sm:$0xff] 0.0
          %532 = vst [vmem:[%s509 + $0x38] sm:$0xff] 0.0
          %533 = vst [vmem:[%s509 + $0x40] sm:$0xff] 0.0
          %534 = vst [vmem:[%s509 + $0x48] sm:$0xff] 0.0
          %535 = vst [vmem:[%s509 + $0x50] sm:$0xff] 0.0
          %536 = vst [vmem:[%s509 + $0x58] sm:$0xff] 0.0
          %537 = vst [vmem:[%s509 + $0x60] sm:$0xff] 0.0
          %538 = vst [vmem:[%s509 + $0x68] sm:$0xff] 0.0
        $region100: #{wsddn_forward.10} parent=87 // pred_fallthru
          _
        %v539 = vld [vmem:[%s509] sm:$0xff]
        %v540 = vld [vmem:[%s509 + $0x8] sm:$0xff]
        %v541 = vld [vmem:[%s509 + $0x10] sm:$0xff]
        %v542 = vld [vmem:[%s509 + $0x18] sm:$0xff]
        %v543 = vld [vmem:[%s509 + $0x20] sm:$0xff]
        %v544 = vld [vmem:[%s509 + $0x28] sm:$0xff]
        %v545 = vld [vmem:[%s509 + $0x30] sm:$0xff]
        %v546 = vld [vmem:[%s509 + $0x38] sm:$0xff]
        %v547 = vld [vmem:[%s509 + $0x40] sm:$0xff]
        %v548 = vld [vmem:[%s509 + $0x48] sm:$0xff]
        %v549 = vld [vmem:[%s509 + $0x50] sm:$0xff]
        %v550 = vld [vmem:[%s509 + $0x58] sm:$0xff]
        %v551 = vld [vmem:[%s509 + $0x60] sm:$0xff]
        %v552 = vld [vmem:[%s509 + $0x68] sm:$0xff]
        %v553 = vld [vmem:[%s475] sm:$0xff]
        %v554 = vld [vmem:[%s475 + $0x8] sm:$0xf]
        %v555 = vld [vmem:[%s475 + $0xc] sm:$0xff]
        %v556 = vld [vmem:[%s475 + $0x14] sm:$0xf]
        %v557 = vld [vmem:[%s475 + $0x18] sm:$0xff]
        %v558 = vld [vmem:[%s475 + $0x20] sm:$0xf]
        %v559 = vld [vmem:[%s475 + $0x24] sm:$0xff]
        %v560 = vld [vmem:[%s475 + $0x2c] sm:$0xf]
        %v561 = vld [vmem:[%s475 + $0x30] sm:$0xff]
        %v562 = vld [vmem:[%s475 + $0x38] sm:$0xf]
        %v563 = vld [vmem:[%s475 + $0x3c] sm:$0xff]
        %v564 = vld [vmem:[%s475 + $0x44] sm:$0xf]
        %v565 = vld [vmem:[%s475 + $0x48] sm:$0xff]
        %v566 = vld [vmem:[%s475 + $0x50] sm:$0xf]
        %v567 = vld [vmem:[%s482] sm:$0xff]
        %v568 = vld [vmem:[%s482 + $0x8] sm:$0xff]
        %v569 = vld [vmem:[%s482 + $0x10] sm:$0xff]
        %v570 = vld [vmem:[%s482 + $0x18] sm:$0xff]
        %v571 = vld [vmem:[%s482 + $0x20] sm:$0xff]
        %v572 = vld [vmem:[%s482 + $0x28] sm:$0xff]
        %v573 = vld [vmem:[%s482 + $0x30] sm:$0xff]
        %v574 = vld [vmem:[%s482 + $0x38] sm:$0xff]
        %v575 = vld [vmem:[%s482 + $0x40] sm:$0xff]
        %v576 = vld [vmem:[%s482 + $0x48] sm:$0xff]
        %v577 = vld [vmem:[%s482 + $0x50] sm:$0xff]
        %v578 = vld [vmem:[%s482 + $0x58] sm:$0xff]
        %v579 = vld [vmem:[%s482 + $0x60] sm:$0xff]
        %v580 = vld [vmem:[%s482 + $0x68] sm:$0xff]
        %v581 = vld [vmem:[%s482 + $0x70] sm:$0xff]
        %v582 = vld [vmem:[%s482 + $0x78] sm:$0xff]
        %v583 = vld [vmem:[%s482 + $0x80] sm:$0xff]
        %v584 = vld [vmem:[%s482 + $0x88] sm:$0xff]
        %v585 = vld [vmem:[%s482 + $0x90] sm:$0xff]
        %v586 = vld [vmem:[%s482 + $0x98] sm:$0xff]
        %v587 = vld [vmem:[%s482 + $0xa0] sm:$0xff]
        %v588 = vld [vmem:[%s482 + $0xa8] sm:$0xff]
        %v589 = vld [vmem:[%s482 + $0xb0] sm:$0xff]
        %v590 = vld [vmem:[%s482 + $0xb8] sm:$0xff]
        %v591 = vld [vmem:[%s482 + $0xc0] sm:$0xff]
        %v592 = vld [vmem:[%s482 + $0xc8] sm:$0xff]
        %v593 = vld [vmem:[%s482 + $0xd0] sm:$0xff]
        %v594 = vld [vmem:[%s482 + $0xd8] sm:$0xff]
        %v595 = vld [vmem:[%s482 + $0xe0] sm:$0xff]
        %v596 = vld [vmem:[%s482 + $0xe8] sm:$0xff]
        %v597 = vld [vmem:[%s482 + $0xf0] sm:$0xff]
        %v598 = vld [vmem:[%s482 + $0xf8] sm:$0xff]
        %v599 = vld [vmem:[%s482 + $0x100] sm:$0xff]
        %v600 = vld [vmem:[%s482 + $0x108] sm:$0xff]
        %v601 = vld [vmem:[%s482 + $0x110] sm:$0xff]
        %v602 = vld [vmem:[%s482 + $0x118] sm:$0xff]
        %v603 = vld [vmem:[%s482 + $0x120] sm:$0xff]
        %v604 = vld [vmem:[%s482 + $0x128] sm:$0xff]
        %v605 = vld [vmem:[%s482 + $0x130] sm:$0xff]
        %v606 = vld [vmem:[%s482 + $0x138] sm:$0xff]
        %v607 = vld [vmem:[%s482 + $0x140] sm:$0xff]
        %v608 = vld [vmem:[%s482 + $0x148] sm:$0xff]
        %v609 = vld [vmem:[%s482 + $0x150] sm:$0xff]
        %v610 = vld [vmem:[%s482 + $0x158] sm:$0xff]
        %v611 = vld [vmem:[%s482 + $0x160] sm:$0xff]
        %v612 = vld [vmem:[%s482 + $0x168] sm:$0xff]
        %v613 = vld [vmem:[%s482 + $0x170] sm:$0xff]
        %v614 = vld [vmem:[%s482 + $0x178] sm:$0xff]
        %v629 = vunpack.c.l.b16 %v553
        %v630 = vunpack.c.h.b16 %v553
        %v631 = vunpack.c.l.b16 %v554
        %v632 = vunpack.c.l.b16 %v555
        %v633 = vunpack.c.h.b16 %v555
        %v634 = vunpack.c.l.b16 %v556
        %v635 = vunpack.c.l.b16 %v557
        %v636 = vunpack.c.h.b16 %v557
        %v637 = vunpack.c.l.b16 %v558
        %v638 = vunpack.c.l.b16 %v559
        %v639 = vunpack.c.h.b16 %v559
        %v640 = vunpack.c.l.b16 %v560
        %v641 = vunpack.c.l.b16 %v561
        %v642 = vunpack.c.h.b16 %v561
        %v643 = vunpack.c.l.b16 %v562
        %v644 = vunpack.c.l.b16 %v563
        %v645 = vunpack.c.h.b16 %v563
        %v646 = vunpack.c.l.b16 %v564
        %v647 = vunpack.c.l.b16 %v565
        %v648 = vunpack.c.h.b16 %v565
        %v649 = vunpack.c.l.b16 %v566
        %v650 = vpack.c.b16 %v632, %v629
        %v651 = vpack.c.b16 %v633, %v630
        %v652 = vpack.c.b16 %v634, %v631
        %v653 = vpack.c.b16 %v638, %v635
        %v654 = vpack.c.b16 %v639, %v636
        %v655 = vpack.c.b16 %v640, %v637
        %v656 = vpack.c.b16 %v644, %v641
        %v657 = vpack.c.b16 %v645, %v642
        %v658 = vpack.c.b16 %v646, %v643
        %v659 = vpack.c.b16 %v647, %v647
        %v660 = vpack.c.b16 %v648, %v648
        %v661 = vpack.c.b16 %v649, %v649
        %v722 = vunpack.c.l.b16 %v567
        %v723 = vunpack.c.h.b16 %v567
        %v724 = vunpack.c.l.b16 %v568
        %v725 = vunpack.c.h.b16 %v568
        %v726 = vunpack.c.l.b16 %v569
        %v727 = vunpack.c.h.b16 %v569
        %v728 = vunpack.c.l.b16 %v570
        %v729 = vunpack.c.h.b16 %v570
        %v730 = vunpack.c.l.b16 %v571
        %v731 = vunpack.c.h.b16 %v571
        %v732 = vunpack.c.l.b16 %v572
        %v733 = vunpack.c.h.b16 %v572
        %v734 = vunpack.c.l.b16 %v573
        %v735 = vunpack.c.h.b16 %v573
        %v736 = vunpack.c.l.b16 %v574
        %v737 = vunpack.c.h.b16 %v574
        %v738 = vunpack.c.l.b16 %v575
        %v739 = vunpack.c.h.b16 %v575
        %v740 = vunpack.c.l.b16 %v576
        %v741 = vunpack.c.h.b16 %v576
        %v742 = vunpack.c.l.b16 %v577
        %v743 = vunpack.c.h.b16 %v577
        %v744 = vunpack.c.l.b16 %v578
        %v745 = vunpack.c.h.b16 %v578
        %v746 = vunpack.c.l.b16 %v579
        %v747 = vunpack.c.h.b16 %v579
        %v748 = vunpack.c.l.b16 %v580
        %v749 = vunpack.c.h.b16 %v580
        %v750 = vunpack.c.l.b16 %v581
        %v751 = vunpack.c.h.b16 %v581
        %v752 = vunpack.c.l.b16 %v582
        %v753 = vunpack.c.h.b16 %v582
        %v754 = vunpack.c.l.b16 %v583
        %v755 = vunpack.c.h.b16 %v583
        %v756 = vunpack.c.l.b16 %v584
        %v757 = vunpack.c.h.b16 %v584
        %v758 = vunpack.c.l.b16 %v585
        %v759 = vunpack.c.h.b16 %v585
        %v760 = vunpack.c.l.b16 %v586
        %v761 = vunpack.c.h.b16 %v586
        %v762 = vunpack.c.l.b16 %v587
        %v763 = vunpack.c.h.b16 %v587
        %v764 = vunpack.c.l.b16 %v588
        %v765 = vunpack.c.h.b16 %v588
        %v766 = vunpack.c.l.b16 %v589
        %v767 = vunpack.c.h.b16 %v589
        %v768 = vunpack.c.l.b16 %v590
        %v769 = vunpack.c.h.b16 %v590
        %v770 = vunpack.c.l.b16 %v591
        %v771 = vunpack.c.h.b16 %v591
        %v772 = vunpack.c.l.b16 %v592
        %v773 = vunpack.c.h.b16 %v592
        %v774 = vunpack.c.l.b16 %v593
        %v775 = vunpack.c.h.b16 %v593
        %v776 = vunpack.c.l.b16 %v594
        %v777 = vunpack.c.h.b16 %v594
        %v778 = vunpack.c.l.b16 %v595
        %v779 = vunpack.c.h.b16 %v595
        %v780 = vunpack.c.l.b16 %v596
        %v781 = vunpack.c.h.b16 %v596
        %v782 = vunpack.c.l.b16 %v597
        %v783 = vunpack.c.h.b16 %v597
        %v784 = vunpack.c.l.b16 %v598
        %v785 = vunpack.c.h.b16 %v598
        %v786 = vunpack.c.l.b16 %v599
        %v787 = vunpack.c.h.b16 %v599
        %v788 = vunpack.c.l.b16 %v600
        %v789 = vunpack.c.h.b16 %v600
        %v790 = vunpack.c.l.b16 %v601
        %v791 = vunpack.c.h.b16 %v601
        %v792 = vunpack.c.l.b16 %v602
        %v793 = vunpack.c.h.b16 %v602
        %v794 = vunpack.c.l.b16 %v603
        %v795 = vunpack.c.h.b16 %v603
        %v796 = vunpack.c.l.b16 %v604
        %v797 = vunpack.c.h.b16 %v604
        %v798 = vunpack.c.l.b16 %v605
        %v799 = vunpack.c.h.b16 %v605
        %v800 = vunpack.c.l.b16 %v606
        %v801 = vunpack.c.h.b16 %v606
        %v802 = vunpack.c.l.b16 %v607
        %v803 = vunpack.c.h.b16 %v607
        %v804 = vunpack.c.l.b16 %v608
        %v805 = vunpack.c.h.b16 %v608
        %v806 = vunpack.c.l.b16 %v609
        %v807 = vunpack.c.h.b16 %v609
        %v808 = vunpack.c.l.b16 %v610
        %v809 = vunpack.c.h.b16 %v610
        %v810 = vunpack.c.l.b16 %v611
        %v811 = vunpack.c.h.b16 %v611
        %v812 = vunpack.c.l.b16 %v612
        %v813 = vunpack.c.h.b16 %v612
        %v814 = vunpack.c.l.b16 %v613
        %v815 = vunpack.c.h.b16 %v613
        %v816 = vunpack.c.l.b16 %v614
        %v817 = vunpack.c.h.b16 %v614
        %v818 = vpack.c.b16 %v724, %v722
        %v819 = vpack.c.b16 %v725, %v723
        %v820 = vpack.c.b16 %v728, %v726
        %v821 = vpack.c.b16 %v729, %v727
        %v822 = vpack.c.b16 %v732, %v730
        %v823 = vpack.c.b16 %v733, %v731
        %v824 = vpack.c.b16 %v736, %v734
        %v825 = vpack.c.b16 %v737, %v735
        %v826 = vpack.c.b16 %v740, %v738
        %v827 = vpack.c.b16 %v741, %v739
        %v828 = vpack.c.b16 %v744, %v742
        %v829 = vpack.c.b16 %v745, %v743
        %v830 = vpack.c.b16 %v748, %v746
        %v831 = vpack.c.b16 %v749, %v747
        %v832 = vpack.c.b16 %v752, %v750
        %v833 = vpack.c.b16 %v753, %v751
        %v834 = vpack.c.b16 %v756, %v754
        %v835 = vpack.c.b16 %v757, %v755
        %v836 = vpack.c.b16 %v760, %v758
        %v837 = vpack.c.b16 %v761, %v759
        %v838 = vpack.c.b16 %v764, %v762
        %v839 = vpack.c.b16 %v765, %v763
        %v840 = vpack.c.b16 %v768, %v766
        %v841 = vpack.c.b16 %v769, %v767
        %v842 = vpack.c.b16 %v772, %v770
        %v843 = vpack.c.b16 %v773, %v771
        %v844 = vpack.c.b16 %v776, %v774
        %v845 = vpack.c.b16 %v777, %v775
        %v846 = vpack.c.b16 %v780, %v778
        %v847 = vpack.c.b16 %v781, %v779
        %v848 = vpack.c.b16 %v784, %v782
        %v849 = vpack.c.b16 %v785, %v783
        %v850 = vpack.c.b16 %v788, %v786
        %v851 = vpack.c.b16 %v789, %v787
        %v852 = vpack.c.b16 %v792, %v790
        %v853 = vpack.c.b16 %v793, %v791
        %v854 = vpack.c.b16 %v796, %v794
        %v855 = vpack.c.b16 %v797, %v795
        %v856 = vpack.c.b16 %v800, %v798
        %v857 = vpack.c.b16 %v801, %v799
        %v858 = vpack.c.b16 %v804, %v802
        %v859 = vpack.c.b16 %v805, %v803
        %v860 = vpack.c.b16 %v808, %v806
        %v861 = vpack.c.b16 %v809, %v807
        %v862 = vpack.c.b16 %v812, %v810
        %v863 = vpack.c.b16 %v813, %v811
        %v864 = vpack.c.b16 %v816, %v814
        %v865 = vpack.c.b16 %v817, %v815
        %914 = vmatpush.bf16.msra.mxu0 %v832
        %915 = vmatpush.bf16.msra.mxu0 %v830
        %916 = vmatpush.bf16.msra.mxu0 %v828
        %917 = vmatpush.bf16.msra.mxu0 %v826
        %918 = vmatpush.bf16.msra.mxu0 %v824
        %919 = vmatpush.bf16.msra.mxu0 %v822
        %920 = vmatpush.bf16.msra.mxu0 %v820
        %921 = vmatpush.bf16.msra.mxu0 %v818
        %922 = vmatmul.bf16.gmra.mxu0 %v650
        %v923 = vpop.f32.mrf.mxu0
        %v924 = vadd.f32 0.0, %v923
        %v925 = vpop.f32.mrf.mxu0
        %v926 = vadd.f32 0.0, %v925
        %927 = vmatmul.bf16.gmra.mxu0 %v653
        %v928 = vpop.f32.mrf.mxu0
        %v929 = vadd.f32 0.0, %v928
        %v930 = vpop.f32.mrf.mxu0
        %v931 = vadd.f32 0.0, %v930
        %932 = vmatmul.bf16.gmra.mxu0 %v656
        %v933 = vpop.f32.mrf.mxu0
        %v934 = vadd.f32 0.0, %v933
        %v935 = vpop.f32.mrf.mxu0
        %v936 = vadd.f32 0.0, %v935
        %937 = vmatmul.bf16.gmra.mxu0 %v659
        %v938 = vpop.f32.mrf.mxu0
        %v939 = vadd.f32 0.0, %v938
        %v940 = vpop.f32.mrf.mxu0
        %941 = vdwg.mxu0
        %942 = vmatpush.bf16.msra.mxu0 %v848
        %943 = vmatpush.bf16.msra.mxu0 %v846
        %944 = vmatpush.bf16.msra.mxu0 %v844
        %945 = vmatpush.bf16.msra.mxu0 %v842
        %946 = vmatpush.bf16.msra.mxu0 %v840
        %947 = vmatpush.bf16.msra.mxu0 %v838
        %948 = vmatpush.bf16.msra.mxu0 %v836
        %949 = vmatpush.bf16.msra.mxu0 %v834
        %950 = vmatmul.bf16.gmra.mxu0 %v651
        %v951 = vpop.f32.mrf.mxu0
        %v952 = vadd.f32 %v924, %v951
        %v953 = vpop.f32.mrf.mxu0
        %v954 = vadd.f32 %v926, %v953
        %955 = vmatmul.bf16.gmra.mxu0 %v654
        %v956 = vpop.f32.mrf.mxu0
        %v957 = vadd.f32 %v929, %v956
        %v958 = vpop.f32.mrf.mxu0
        %v959 = vadd.f32 %v931, %v958
        %960 = vmatmul.bf16.gmra.mxu0 %v657
        %v961 = vpop.f32.mrf.mxu0
        %v962 = vadd.f32 %v934, %v961
        %v963 = vpop.f32.mrf.mxu0
        %v964 = vadd.f32 %v936, %v963
        %965 = vmatmul.bf16.gmra.mxu0 %v660
        %v966 = vpop.f32.mrf.mxu0
        %v967 = vadd.f32 %v939, %v966
        %v968 = vpop.f32.mrf.mxu0
        %969 = vdwg.mxu0
        %970 = vmatpush.bf16.msra.mxu0 %v864
        %971 = vmatpush.bf16.msra.mxu0 %v862
        %972 = vmatpush.bf16.msra.mxu0 %v860
        %973 = vmatpush.bf16.msra.mxu0 %v858
        %974 = vmatpush.bf16.msra.mxu0 %v856
        %975 = vmatpush.bf16.msra.mxu0 %v854
        %976 = vmatpush.bf16.msra.mxu0 %v852
        %977 = vmatpush.bf16.msra.mxu0 %v850
        %978 = vmatmul.bf16.gmra.mxu0 %v652
        %v979 = vpop.f32.mrf.mxu0
        %v980 = vadd.f32 %v952, %v979
        %v981 = vpop.f32.mrf.mxu0
        %v982 = vadd.f32 %v954, %v981
        %983 = vmatmul.bf16.gmra.mxu0 %v655
        %v984 = vpop.f32.mrf.mxu0
        %v985 = vadd.f32 %v957, %v984
        %v986 = vpop.f32.mrf.mxu0
        %v987 = vadd.f32 %v959, %v986
        %988 = vmatmul.bf16.gmra.mxu0 %v658
        %v989 = vpop.f32.mrf.mxu0
        %v990 = vadd.f32 %v962, %v989
        %v991 = vpop.f32.mrf.mxu0
        %v992 = vadd.f32 %v964, %v991
        %993 = vmatmul.bf16.gmra.mxu0 %v661
        %v994 = vpop.f32.mrf.mxu0
        %v995 = vadd.f32 %v967, %v994
        %v996 = vpop.f32.mrf.mxu0
        %997 = vdwg.mxu0
        %998 = vmatpush.bf16.msra.mxu0 %v833
        %999 = vmatpush.bf16.msra.mxu0 %v831
        %1000 = vmatpush.bf16.msra.mxu0 %v829
        %1001 = vmatpush.bf16.msra.mxu0 %v827
        %1002 = vmatpush.bf16.msra.mxu0 %v825
        %1003 = vmatpush.bf16.msra.mxu0 %v823
        %1004 = vmatpush.bf16.msra.mxu0 %v821
        %1005 = vmatpush.bf16.msra.mxu0 %v819
        %1006 = vmatmul.bf16.gmra.mxu0 %v650
        %v1007 = vpop.f32.mrf.mxu0
        %v1008 = vadd.f32 0.0, %v1007
        %v1009 = vpop.f32.mrf.mxu0
        %v1010 = vadd.f32 0.0, %v1009
        %1011 = vmatmul.bf16.gmra.mxu0 %v653
        %v1012 = vpop.f32.mrf.mxu0
        %v1013 = vadd.f32 0.0, %v1012
        %v1014 = vpop.f32.mrf.mxu0
        %v1015 = vadd.f32 0.0, %v1014
        %1016 = vmatmul.bf16.gmra.mxu0 %v656
        %v1017 = vpop.f32.mrf.mxu0
        %v1018 = vadd.f32 0.0, %v1017
        %v1019 = vpop.f32.mrf.mxu0
        %v1020 = vadd.f32 0.0, %v1019
        %1021 = vmatmul.bf16.gmra.mxu0 %v659
        %v1022 = vpop.f32.mrf.mxu0
        %v1023 = vadd.f32 0.0, %v1022
        %v1024 = vpop.f32.mrf.mxu0
        %1025 = vdwg.mxu0
        %1026 = vmatpush.bf16.msra.mxu0 %v849
        %1027 = vmatpush.bf16.msra.mxu0 %v847
        %1028 = vmatpush.bf16.msra.mxu0 %v845
        %1029 = vmatpush.bf16.msra.mxu0 %v843
        %1030 = vmatpush.bf16.msra.mxu0 %v841
        %1031 = vmatpush.bf16.msra.mxu0 %v839
        %1032 = vmatpush.bf16.msra.mxu0 %v837
        %1033 = vmatpush.bf16.msra.mxu0 %v835
        %1034 = vmatmul.bf16.gmra.mxu0 %v651
        %v1035 = vpop.f32.mrf.mxu0
        %v1036 = vadd.f32 %v1008, %v1035
        %v1037 = vpop.f32.mrf.mxu0
        %v1038 = vadd.f32 %v1010, %v1037
        %1039 = vmatmul.bf16.gmra.mxu0 %v654
        %v1040 = vpop.f32.mrf.mxu0
        %v1041 = vadd.f32 %v1013, %v1040
        %v1042 = vpop.f32.mrf.mxu0
        %v1043 = vadd.f32 %v1015, %v1042
        %1044 = vmatmul.bf16.gmra.mxu0 %v657
        %v1045 = vpop.f32.mrf.mxu0
        %v1046 = vadd.f32 %v1018, %v1045
        %v1047 = vpop.f32.mrf.mxu0
        %v1048 = vadd.f32 %v1020, %v1047
        %1049 = vmatmul.bf16.gmra.mxu0 %v660
        %v1050 = vpop.f32.mrf.mxu0
        %v1051 = vadd.f32 %v1023, %v1050
        %v1052 = vpop.f32.mrf.mxu0
        %1053 = vdwg.mxu0
        %1054 = vmatpush.bf16.msra.mxu0 %v865
        %1055 = vmatpush.bf16.msra.mxu0 %v863
        %1056 = vmatpush.bf16.msra.mxu0 %v861
        %1057 = vmatpush.bf16.msra.mxu0 %v859
        %1058 = vmatpush.bf16.msra.mxu0 %v857
        %1059 = vmatpush.bf16.msra.mxu0 %v855
        %1060 = vmatpush.bf16.msra.mxu0 %v853
        %1061 = vmatpush.bf16.msra.mxu0 %v851
        %1062 = vmatmul.bf16.gmra.mxu0 %v652
        %v1063 = vpop.f32.mrf.mxu0
        %v1064 = vadd.f32 %v1036, %v1063
        %v1065 = vpop.f32.mrf.mxu0
        %v1066 = vadd.f32 %v1038, %v1065
        %1067 = vmatmul.bf16.gmra.mxu0 %v655
        %v1068 = vpop.f32.mrf.mxu0
        %v1069 = vadd.f32 %v1041, %v1068
        %v1070 = vpop.f32.mrf.mxu0
        %v1071 = vadd.f32 %v1043, %v1070
        %1072 = vmatmul.bf16.gmra.mxu0 %v658
        %v1073 = vpop.f32.mrf.mxu0
        %v1074 = vadd.f32 %v1046, %v1073
        %v1075 = vpop.f32.mrf.mxu0
        %v1076 = vadd.f32 %v1048, %v1075
        %1077 = vmatmul.bf16.gmra.mxu0 %v661
        %v1078 = vpop.f32.mrf.mxu0
        %v1079 = vadd.f32 %v1051, %v1078
        %v1080 = vpop.f32.mrf.mxu0
        %1081 = vdwg.mxu0
        %v1082 = vadd.f32 %v539, %v980
        %v1083 = vadd.f32 %v540, %v1064
        %v1084 = vadd.f32 %v541, %v982
        %v1085 = vadd.f32 %v542, %v1066
        %v1086 = vadd.f32 %v543, %v985
        %v1087 = vadd.f32 %v544, %v1069
        %v1088 = vadd.f32 %v545, %v987
        %v1089 = vadd.f32 %v546, %v1071
        %v1090 = vadd.f32 %v547, %v990
        %v1091 = vadd.f32 %v548, %v1074
        %v1092 = vadd.f32 %v549, %v992
        %v1093 = vadd.f32 %v550, %v1076
        %v1094 = vadd.f32 %v551, %v995
        %v1095 = vadd.f32 %v552, %v1079
        %1096 = vst [vmem:[%s509] sm:$0xff] %v1082
        %1097 = vst [vmem:[%s509 + $0x8] sm:$0xff] %v1083
        %1098 = vst [vmem:[%s509 + $0x10] sm:$0xff] %v1084
        %1099 = vst [vmem:[%s509 + $0x18] sm:$0xff] %v1085
        %1100 = vst [vmem:[%s509 + $0x20] sm:$0xff] %v1086
        %1101 = vst [vmem:[%s509 + $0x28] sm:$0xff] %v1087
        %1102 = vst [vmem:[%s509 + $0x30] sm:$0xff] %v1088
        %1103 = vst [vmem:[%s509 + $0x38] sm:$0xff] %v1089
        %1104 = vst [vmem:[%s509 + $0x40] sm:$0xff] %v1090
        %1105 = vst [vmem:[%s509 + $0x48] sm:$0xff] %v1091
        %1106 = vst [vmem:[%s509 + $0x50] sm:$0xff] %v1092
        %1107 = vst [vmem:[%s509 + $0x58] sm:$0xff] %v1093
        %1108 = vst [vmem:[%s509 + $0x60] sm:$0xff] %v1094
        %1109 = vst [vmem:[%s509 + $0x68] sm:$0xff] %v1095
        %p1110 = scmp.eq.s32.totalorder %s21, 4
        // Predicated region
        $region101: #{wsddn_forward.10} parent=87 // pred_check
          %p1111 = pneg %p1110
        $region102: #{wsddn_forward.10} parent=87 // pred_check_branch
          %1113 = sbr.rel (%p1111) target = $region104
        $region103: #{wsddn_forward.10} parent=87 // pred_region
          %v1114 = vld [vmem:[%s509] sm:$0xff]
          %v1115 = vld [vmem:[%s509 + $0x8] sm:$0xff]
          %v1116 = vld [vmem:[%s509 + $0x10] sm:$0xff]
          %v1117 = vld [vmem:[%s509 + $0x18] sm:$0xff]
          %v1118 = vld [vmem:[%s509 + $0x20] sm:$0xff]
          %v1119 = vld [vmem:[%s509 + $0x28] sm:$0xff]
          %v1120 = vld [vmem:[%s509 + $0x30] sm:$0xff]
          %v1121 = vld [vmem:[%s509 + $0x38] sm:$0xff]
          %v1122 = vld [vmem:[%s509 + $0x40] sm:$0xff]
          %v1123 = vld [vmem:[%s509 + $0x48] sm:$0xff]
          %v1124 = vld [vmem:[%s509 + $0x50] sm:$0xff]
          %v1125 = vld [vmem:[%s509 + $0x58] sm:$0xff]
          %v1126 = vld [vmem:[%s509 + $0x60] sm:$0xff]
          %v1127 = vld [vmem:[%s509 + $0x68] sm:$0xff]
          %v1128 = vld [vmem:[%s517] sm:$0x3]
          %v1130 = vperm.slane %v1128, 0
          %v1131 = vperm.slane %v1128, 1
          %v1134 = vadd.f32 %v1114, %v1130
          %v1135 = vadd.f32 %v1115, %v1131
          %v1136 = vadd.f32 %v1116, %v1130
          %v1137 = vadd.f32 %v1117, %v1131
          %v1138 = vadd.f32 %v1118, %v1130
          %v1139 = vadd.f32 %v1119, %v1131
          %v1140 = vadd.f32 %v1120, %v1130
          %v1141 = vadd.f32 %v1121, %v1131
          %v1142 = vadd.f32 %v1122, %v1130
          %v1143 = vadd.f32 %v1123, %v1131
          %v1144 = vadd.f32 %v1124, %v1130
          %v1145 = vadd.f32 %v1125, %v1131
          %v1146 = vadd.f32 %v1126, %v1130
          %v1147 = vadd.f32 %v1127, %v1131
          %v1148 = vmax.f32 %v1134, 0.0
          %v1149 = vmax.f32 %v1135, 0.0
          %v1150 = vmax.f32 %v1136, 0.0
          %v1151 = vmax.f32 %v1137, 0.0
          %v1152 = vmax.f32 %v1138, 0.0
          %v1153 = vmax.f32 %v1139, 0.0
          %v1154 = vmax.f32 %v1140, 0.0
          %v1155 = vmax.f32 %v1141, 0.0
          %v1156 = vmax.f32 %v1142, 0.0
          %v1157 = vmax.f32 %v1143, 0.0
          %v1158 = vmax.f32 %v1144, 0.0
          %v1159 = vmax.f32 %v1145, 0.0
          %v1160 = vmax.f32 %v1146, 0.0
          %v1161 = vmax.f32 %v1147, 0.0
          %1162 = vst [vmem:[%s509] sm:$0xff] %v1148
          %1163 = vst [vmem:[%s509 + $0x8] sm:$0xff] %v1149
          %1164 = vst [vmem:[%s509 + $0x10] sm:$0xff] %v1150
          %1165 = vst [vmem:[%s509 + $0x18] sm:$0xff] %v1151
          %1166 = vst [vmem:[%s509 + $0x20] sm:$0xff] %v1152
          %1167 = vst [vmem:[%s509 + $0x28] sm:$0xff] %v1153
          %1168 = vst [vmem:[%s509 + $0x30] sm:$0xff] %v1154
          %1169 = vst [vmem:[%s509 + $0x38] sm:$0xff] %v1155
          %1170 = vst [vmem:[%s509 + $0x40] sm:$0xff] %v1156
          %1171 = vst [vmem:[%s509 + $0x48] sm:$0xff] %v1157
          %1172 = vst [vmem:[%s509 + $0x50] sm:$0xff] %v1158
          %1173 = vst [vmem:[%s509 + $0x58] sm:$0xff] %v1159
          %1174 = vst [vmem:[%s509 + $0x60] sm:$0xff] %v1160
          %1175 = vst [vmem:[%s509 + $0x68] sm:$0xff] %v1161
        $region104: #{wsddn_forward.10} parent=87 // pred_fallthru
          _
        %s1176 = sand.u32 %s125, 1
        %s1177 = sand.u32 %s125, 1
        %s1178 = smul.addr %s1177, 112
        %s1179 = scalar_lea.vmem [#allocation4], %s1178
        // Predicated region
        $region105: #{wsddn_forward.10} parent=87 // pred_check
          %p1180 = pneg %p135
        $region106: #{wsddn_forward.10} parent=87 // pred_check_branch
          %1182 = sbr.rel (%p1180) target = $region108
        $region107: #{wsddn_forward.10} parent=87 // pred_region
          %s1183 = smul.u32 7, %s19
          %s1184 = smul.u32 2, %s20
          %s1185 = smul.addr %s1183, 4
          %s1186 = sadd.s32 %s1184, %s1185
          %s1187 = smul.addr %s1186, 8
          %s1188 = scalar_lea.vmem %s3, %s1187
          // Predicated region
          $region109: #{wsddn_forward.10} parent=107 // pred_check
            _
          $region110: #{wsddn_forward.10} parent=107 // pred_check_branch
            %1190 = sbr.rel (0) target = $region112
          $region111: #{wsddn_forward.10} parent=107 // pred_region
            // Predicated region
            $region113: #{wsddn_forward.10} parent=111 // pred_check
              _
            $region114: #{wsddn_forward.10} parent=111 // pred_check_branch
              %1192 = sbr.rel (0) target = $region116
            $region115: #{wsddn_forward.10} parent=111 // pred_region
              loop: start=0, step=1, limit=1
              $region117: #{wsddn_forward.10} parent=115 // loop_pre_header
                _
              $region118: #{wsddn_forward.10} parent=115 // loop_header
                %s1194 = sphi 0, %s1198
                %p1195 = scmp.ge.s32.totalorder %s1194, 1
                %s1199 = sphi %s1179, %s1179
                %s1200 = sphi %s1188, %s1188
              $region119: #{wsddn_forward.10} parent=115 // loop_header_branch
                %1197 = sbr.rel (%p1195) target = $region123
              $region120: #{wsddn_forward.10} parent=115 // loop_body
                %v1201 = vld [vmem:[%s1199] sm:$0xff]
                %1202 = vst [vmem:[%s1200] sm:$0xff] %v1201
                %v1203 = vld [vmem:[%s1199 + $0x8] sm:$0xff]
                %1204 = vst [vmem:[%s1200 + $0x8] sm:$0xff] %v1203
                %v1205 = vld [vmem:[%s1199 + $0x10] sm:$0xff]
                %1206 = vst [vmem:[%s1200 + $0x20] sm:$0xff] %v1205
                %v1207 = vld [vmem:[%s1199 + $0x18] sm:$0xff]
                %1208 = vst [vmem:[%s1200 + $0x28] sm:$0xff] %v1207
                %v1209 = vld [vmem:[%s1199 + $0x20] sm:$0xff]
                %1210 = vst [vmem:[%s1200 + $0x40] sm:$0xff] %v1209
                %v1211 = vld [vmem:[%s1199 + $0x28] sm:$0xff]
                %1212 = vst [vmem:[%s1200 + $0x48] sm:$0xff] %v1211
                %v1213 = vld [vmem:[%s1199 + $0x30] sm:$0xff]
                %1214 = vst [vmem:[%s1200 + $0x60] sm:$0xff] %v1213
                %v1215 = vld [vmem:[%s1199 + $0x38] sm:$0xff]
                %1216 = vst [vmem:[%s1200 + $0x68] sm:$0xff] %v1215
                %v1217 = vld [vmem:[%s1199 + $0x40] sm:$0xff]
                %1218 = vst [vmem:[%s1200 + $0x80] sm:$0xff] %v1217
                %v1219 = vld [vmem:[%s1199 + $0x48] sm:$0xff]
                %1220 = vst [vmem:[%s1200 + $0x88] sm:$0xff] %v1219
                %v1221 = vld [vmem:[%s1199 + $0x50] sm:$0xff]
                %1222 = vst [vmem:[%s1200 + $0xa0] sm:$0xff] %v1221
                %v1223 = vld [vmem:[%s1199 + $0x58] sm:$0xff]
                %1224 = vst [vmem:[%s1200 + $0xa8] sm:$0xff] %v1223
                %v1225 = vld [vmem:[%s1199 + $0x60] sm:$0xff]
                %1226 = vst [vmem:[%s1200 + $0xc0] sm:$0xff] %v1225
                %v1227 = vld [vmem:[%s1199 + $0x68] sm:$0xff]
                %1228 = vst [vmem:[%s1200 + $0xc8] sm:$0xff] %v1227
              $region121: #{wsddn_forward.10} parent=115 // loop_footer
                %s1198 = sadd.s32 1, %s1194
              $region122: #{wsddn_forward.10} parent=115 // loop_footer_branch
                %1193 = sbr.rel target = $region118
              $region123: #{wsddn_forward.10} parent=115 // loop_exit
                _
            $region116: #{wsddn_forward.10} parent=111 // pred_fallthru
              _
            // Predicated region
            $region124: #{wsddn_forward.10} parent=111 // pred_check
              _
            $region125: #{wsddn_forward.10} parent=111 // pred_check_branch
              %1230 = sbr.rel target = $region127
            $region126: #{wsddn_forward.10} parent=111 // pred_region
              _
            $region127: #{wsddn_forward.10} parent=111 // pred_fallthru
              _
          $region112: #{wsddn_forward.10} parent=107 // pred_fallthru
            _
          %1231 = vnop
        $region108: #{wsddn_forward.10} parent=87 // pred_fallthru
          _
      $region88: #{wsddn_forward.10} parent=5 // pred_fallthru
        _
      %p1232 = scmp.le.s32.totalorder 2, %s9
      // Predicated region
      $region128: #{wsddn_forward.10} parent=5 // pred_check
        %p1233 = pneg %p1232
      $region129: #{wsddn_forward.10} parent=5 // pred_check_branch
        %1235 = sbr.rel (%p1233) target = $region131
      $region130: #{wsddn_forward.10} parent=5 // pred_region
        %s1236 = ssub.s32 %s9, 2
        // Predicated region
        $region132: #{wsddn_forward.10} parent=130 // pred_check
          %p1237 = pneg %p141
        $region133: #{wsddn_forward.10} parent=130 // pred_check_branch
          %1239 = sbr.rel (%p1237) target = $region135
        $region134: #{wsddn_forward.10} parent=130 // pred_region
          %s1240 = sand.u32 %s126, 1
          %s1241 = sand.u32 %s126, 1
          %s1242 = smul.addr %s1241, 112
          %s1243 = scalar_lea.vmem [#allocation4], %s1242
        $region135: #{wsddn_forward.10} parent=130 // pred_fallthru
          _
      $region131: #{wsddn_forward.10} parent=5 // pred_fallthru
        _
    $region6: #{wsddn_forward.10} parent=1 // loop_footer
      %s13 = sadd.s32 1, %s9
    $region7: #{wsddn_forward.10} parent=1 // loop_footer_branch
      %8 = sbr.rel target = $region3
    $region8: #{wsddn_forward.10} parent=1 // loop_exit
      _

// kernel: wsddn_forward.11
$region0: #{wsddn_forward.11}
  #allocation0 [shape = 'u32[]', space=smem, size = 0x4, offset = 0x4, fixed_abs, tag = 'smem constant byte address 0x4 - core index']
  #allocation1 [shape = 'u32[72,128]{1,0:T(1,128)}', space=vmem, size = 0x9000, scoped, tag = 'internal scratch']
  %s0 = inlined_call_operand.vmem [shape: bf16[56,3584], index: 0, kind: input, shape index: {}]
  %s1 = inlined_call_operand.vmem [shape: bf16[3584,256], index: 1, kind: input, shape index: {}]
  %s2 = inlined_call_operand.vmem [shape: f32[1,256], index: 2, kind: input, shape index: {}]
  %s3 = inlined_call_operand.vmem [shape: f32[56,256], index: 3, kind: output, shape index: {}]
  %s4 = sld [smem:[#allocation0]]
  $region76: #{wsddn_forward.11} parent=0
    _
  %s6 = ssub.s32 1, %s4
  %s7 = scalar_select 0, %s6, %s4
  $region1: #{wsddn_forward.11} parent=0
    #allocation2 [shape = 'u8[114688]{0}', space=vmem, size = 0x1c000, scoped, tag = 'input window, operand 0']
    loop: start=0, step=1, limit=9
    $region2: #{wsddn_forward.11} parent=1 // loop_pre_header
      _
    $region3: #{wsddn_forward.11} parent=1 // loop_header
      %s9 = sphi 0, %s13
      %p10 = scmp.ge.s32.totalorder %s9, 9
      %s16 = sphi 0, %s35
      %s17 = sphi 0, %s31
      %s18 = sphi 0, %s27
      %s19 = sphi 0, %s16
      %s20 = sphi 0, %s17
      %s21 = sphi 0, %s18
      %s22 = sphi 0, %s19
      %s23 = sphi 0, %s20
      %s24 = sphi 0, %s21
      %s40 = sphi 0, %s42
      %s43 = sphi 0, %s40
      %s44 = sphi 0, %s43
      %s60 = sphi 0, %s44
      %s68 = sphi 0, %s70
      %s71 = sphi 0, %s68
      %s72 = sphi 0, %s71
      %s88 = sphi 0, %s72
      %s94 = sphi 0, %s96
      %s97 = sphi 0, %s94
      %s98 = sphi 0, %s97
      %s114 = sphi 0, %s98
      %s122 = sphi 0, %s124
      %s125 = sphi 0, %s122
      %s126 = sphi 0, %s125
      %s142 = sphi 0, %s126
    $region4: #{wsddn_forward.11} parent=1 // loop_header_branch
      %12 = sbr.rel (%p10) target = $region8
    $region5: #{wsddn_forward.11} parent=1 // loop_body
      %s14 = ssub.s32 %s9, 1
      %s15 = ssub.s32 %s9, 2
      %s25 = sadd.s32 1, %s18
      %p26 = scmp.ge.s32.totalorder %s25, 7
      %s27 = scalar_select %p26, 0, %s25
      %s28 = sadd.s32 1, %s17
      %s29 = scalar_select %p26, %s28, %s17
      %p30 = scmp.ge.s32.totalorder %s29, 1
      %s31 = scalar_select %p30, 0, %s29
      %s32 = sadd.s32 1, %s16
      %s33 = scalar_select %p30, %s32, %s16
      %p34 = scmp.ge.s32.totalorder %s33, 1
      %s35 = scalar_select %p34, 0, %s33
      %s36 = ssub.s32 %s16, %s35
      %s37 = ssub.s32 %s18, %s27
      %s38 = sor.u32 %s36, %s37
      %p39 = scmp.eq.s32.totalorder %s38, 0
      %s41 = sadd.s32 %s40, 1
      %s42 = scalar_select %p39, %s40, %s41
      %p45 = pneg %p39
      %p46 = scmp.eq.s32.totalorder %s9, 6
      %p47 = por %p45, %p46
      %p48 = scmp.ne.s32.totalorder %s40, %s43
      %p49 = scmp.eq.s32.totalorder %s9, 0
      %p50 = por %p48, %p49
      %p51 = scmp.ne.s32.totalorder %s40, %s43
      %p52 = scmp.eq.s32.totalorder %s14, 6
      %p53 = por %p51, %p52
      %p54 = scmp.ne.s32.totalorder %s43, %s44
      %p55 = scmp.eq.s32.totalorder %s14, 0
      %p56 = por %p54, %p55
      %p57 = scmp.ne.s32.totalorder %s43, %s44
      %p58 = scmp.eq.s32.totalorder %s15, 6
      %p59 = por %p57, %p58
      %p61 = scmp.ne.s32.totalorder %s44, %s60
      %p62 = scmp.eq.s32.totalorder %s15, 0
      %p63 = por %p61, %p62
      %s64 = ssub.s32 %s18, %s27
      %s65 = ssub.s32 %s17, %s31
      %s66 = sor.u32 %s64, %s65
      %p67 = scmp.eq.s32.totalorder %s66, 0
      %s69 = sadd.s32 %s68, 1
      %s70 = scalar_select %p67, %s68, %s69
      %p73 = pneg %p67
      %p74 = scmp.eq.s32.totalorder %s9, 6
      %p75 = por %p73, %p74
      %p76 = scmp.ne.s32.totalorder %s68, %s71
      %p77 = scmp.eq.s32.totalorder %s9, 0
      %p78 = por %p76, %p77
      %p79 = scmp.ne.s32.totalorder %s68, %s71
      %p80 = scmp.eq.s32.totalorder %s14, 6
      %p81 = por %p79, %p80
      %p82 = scmp.ne.s32.totalorder %s71, %s72
      %p83 = scmp.eq.s32.totalorder %s14, 0
      %p84 = por %p82, %p83
      %p85 = scmp.ne.s32.totalorder %s71, %s72
      %p86 = scmp.eq.s32.totalorder %s15, 6
      %p87 = por %p85, %p86
      %p89 = scmp.ne.s32.totalorder %s72, %s88
      %p90 = scmp.eq.s32.totalorder %s15, 0
      %p91 = por %p89, %p90
      %s92 = ssub.s32 %s17, %s31
      %p93 = scmp.eq.s32.totalorder %s92, 0
      %s95 = sadd.s32 %s94, 1
      %s96 = scalar_select %p93, %s94, %s95
      %p99 = pneg %p93
      %p100 = scmp.eq.s32.totalorder %s9, 6
      %p101 = por %p99, %p100
      %p102 = scmp.ne.s32.totalorder %s94, %s97
      %p103 = scmp.eq.s32.totalorder %s9, 0
      %p104 = por %p102, %p103
      %p105 = scmp.ne.s32.totalorder %s94, %s97
      %p106 = scmp.eq.s32.totalorder %s14, 6
      %p107 = por %p105, %p106
      %p108 = scmp.ne.s32.totalorder %s97, %s98
      %p109 = scmp.eq.s32.totalorder %s14, 0
      %p110 = por %p108, %p109
      %p111 = scmp.ne.s32.totalorder %s97, %s98
      %p112 = scmp.eq.s32.totalorder %s15, 6
      %p113 = por %p111, %p112
      %p115 = scmp.ne.s32.totalorder %s98, %s114
      %p116 = scmp.eq.s32.totalorder %s15, 0
      %p117 = por %p115, %p116
      %s118 = ssub.s32 %s16, %s35
      %s119 = ssub.s32 %s17, %s31
      %s120 = sor.u32 %s118, %s119
      %p121 = scmp.eq.s32.totalorder %s120, 0
      %s123 = sadd.s32 %s122, 1
      %s124 = scalar_select %p121, %s122, %s123
      %p127 = pneg %p121
      %p128 = scmp.eq.s32.totalorder %s9, 6
      %p129 = por %p127, %p128
      %p130 = scmp.ne.s32.totalorder %s122, %s125
      %p131 = scmp.eq.s32.totalorder %s9, 0
      %p132 = por %p130, %p131
      %p133 = scmp.ne.s32.totalorder %s122, %s125
      %p134 = scmp.eq.s32.totalorder %s14, 6
      %p135 = por %p133, %p134
      %p136 = scmp.ne.s32.totalorder %s125, %s126
      %p137 = scmp.eq.s32.totalorder %s14, 0
      %p138 = por %p136, %p137
      %p139 = scmp.ne.s32.totalorder %s125, %s126
      %p140 = scmp.eq.s32.totalorder %s15, 6
      %p141 = por %p139, %p140
      %p143 = scmp.ne.s32.totalorder %s126, %s142
      %p144 = scmp.eq.s32.totalorder %s15, 0
      %p145 = por %p143, %p144
      %p146 = scmp.le.s32.totalorder 1, %s9
      %p147 = scmp.lt.s32.totalorder %s9, 8
      %p148 = pnand %p146, %p147
      %p149 = pneg %p148
      // Predicated region
      $region9: #{wsddn_forward.11} parent=5 // pred_check
        _
      $region10: #{wsddn_forward.11} parent=5 // pred_check_branch
        %151 = sbr.rel (%p148) target = $region12
      $region11: #{wsddn_forward.11} parent=5 // pred_region
        %s152 = ssub.s32 %s9, 1
        // Predicated region
        $region13: #{wsddn_forward.11} parent=11 // pred_check
          %p153 = pneg %p110
        $region14: #{wsddn_forward.11} parent=11 // pred_check_branch
          %155 = sbr.rel (%p153) target = $region16
        $region15: #{wsddn_forward.11} parent=11 // pred_region
          %s156 = smul.u32 2, %s20
          %p157 = scmp.lt.s32.totalorder %s156, 1
          %s158 = scalar_select %p157, %s156, 1
          %s159 = scalar_lea.vmem %s2, %s158
          %s160 = smul.u32 2, %s20
        $region16: #{wsddn_forward.11} parent=11 // pred_fallthru
          _
      $region12: #{wsddn_forward.11} parent=5 // pred_fallthru
        _
      %p161 = scmp.lt.s32.totalorder %s9, 7
      // Predicated region
      $region17: #{wsddn_forward.11} parent=5 // pred_check
        %p162 = pneg %p161
      $region18: #{wsddn_forward.11} parent=5 // pred_check_branch
        %164 = sbr.rel (%p162) target = $region20
      $region19: #{wsddn_forward.11} parent=5 // pred_region
        // Predicated region
        $region21: #{wsddn_forward.11} parent=19 // pred_check
          %p165 = pneg %p50
        $region22: #{wsddn_forward.11} parent=19 // pred_check_branch
          %167 = sbr.rel (%p165) target = $region24
        $region23: #{wsddn_forward.11} parent=19 // pred_region
          %s168 = sand.u32 %s40, 1
          %s169 = sand.u32 %s40, 1
          %s170 = smul.addr %s169, 112
          %s171 = scalar_lea.vmem [#allocation2], %s170
          %s172 = smul.u32 7, %s16
          %s173 = smul.u32 4, %s18
          %s174 = smul.addr %s172, 28
          %s175 = sadd.s32 %s173, %s174
          %s176 = smul.addr %s175, 4
          %s177 = scalar_lea.vmem %s0, %s176
          // Predicated region
          $region25: #{wsddn_forward.11} parent=23 // pred_check
            _
          $region26: #{wsddn_forward.11} parent=23 // pred_check_branch
            %179 = sbr.rel (0) target = $region28
          $region27: #{wsddn_forward.11} parent=23 // pred_region
            // Predicated region
            $region29: #{wsddn_forward.11} parent=27 // pred_check
              _
            $region30: #{wsddn_forward.11} parent=27 // pred_check_branch
              %181 = sbr.rel (0) target = $region32
            $region31: #{wsddn_forward.11} parent=27 // pred_region
              loop: start=0, step=1, limit=1
              $region33: #{wsddn_forward.11} parent=31 // loop_pre_header
                _
              $region34: #{wsddn_forward.11} parent=31 // loop_header
                %s183 = sphi 0, %s187
                %p184 = scmp.ge.s32.totalorder %s183, 1
                %s188 = sphi %s177, %s177
                %s189 = sphi %s171, %s171
              $region35: #{wsddn_forward.11} parent=31 // loop_header_branch
                %186 = sbr.rel (%p184) target = $region39
              $region36: #{wsddn_forward.11} parent=31 // loop_body
                %v190 = vld [vmem:[%s188] sm:$0xff]
                %191 = vst [vmem:[%s189] sm:$0xff] %v190
                %v192 = vld [vmem:[%s188 + $0x8] sm:$0xff]
                %193 = vst [vmem:[%s189 + $0x8] sm:$0xff] %v192
                %v194 = vld [vmem:[%s188 + $0x70] sm:$0xff]
                %195 = vst [vmem:[%s189 + $0x10] sm:$0xff] %v194
                %v196 = vld [vmem:[%s188 + $0x78] sm:$0xff]
                %197 = vst [vmem:[%s189 + $0x18] sm:$0xff] %v196
                %v198 = vld [vmem:[%s188 + $0xe0] sm:$0xff]
                %199 = vst [vmem:[%s189 + $0x20] sm:$0xff] %v198
                %v200 = vld [vmem:[%s188 + $0xe8] sm:$0xff]
                %201 = vst [vmem:[%s189 + $0x28] sm:$0xff] %v200
                %v202 = vld [vmem:[%s188 + $0x150] sm:$0xff]
                %203 = vst [vmem:[%s189 + $0x30] sm:$0xff] %v202
                %v204 = vld [vmem:[%s188 + $0x158] sm:$0xff]
                %205 = vst [vmem:[%s189 + $0x38] sm:$0xff] %v204
                %v206 = vld [vmem:[%s188 + $0x1c0] sm:$0xff]
                %207 = vst [vmem:[%s189 + $0x40] sm:$0xff] %v206
                %v208 = vld [vmem:[%s188 + $0x1c8] sm:$0xff]
                %209 = vst [vmem:[%s189 + $0x48] sm:$0xff] %v208
                %v210 = vld [vmem:[%s188 + $0x230] sm:$0xff]
                %211 = vst [vmem:[%s189 + $0x50] sm:$0xff] %v210
                %v212 = vld [vmem:[%s188 + $0x238] sm:$0xff]
                %213 = vst [vmem:[%s189 + $0x58] sm:$0xff] %v212
                %v214 = vld [vmem:[%s188 + $0x2a0] sm:$0xff]
                %215 = vst [vmem:[%s189 + $0x60] sm:$0xff] %v214
                %v216 = vld [vmem:[%s188 + $0x2a8] sm:$0xff]
                %217 = vst [vmem:[%s189 + $0x68] sm:$0xff] %v216
              $region37: #{wsddn_forward.11} parent=31 // loop_footer
                %s187 = sadd.s32 1, %s183
              $region38: #{wsddn_forward.11} parent=31 // loop_footer_branch
                %182 = sbr.rel target = $region34
              $region39: #{wsddn_forward.11} parent=31 // loop_exit
                _
            $region32: #{wsddn_forward.11} parent=27 // pred_fallthru
              _
            // Predicated region
            $region40: #{wsddn_forward.11} parent=27 // pred_check
              _
            $region41: #{wsddn_forward.11} parent=27 // pred_check_branch
              %219 = sbr.rel target = $region43
            $region42: #{wsddn_forward.11} parent=27 // pred_region
              _
            $region43: #{wsddn_forward.11} parent=27 // pred_fallthru
              _
          $region28: #{wsddn_forward.11} parent=23 // pred_fallthru
            _
          %220 = vnop
        $region24: #{wsddn_forward.11} parent=19 // pred_fallthru
          _
        // Predicated region
        $region44: #{wsddn_forward.11} parent=19 // pred_check
          %p221 = pneg %p78
        $region45: #{wsddn_forward.11} parent=19 // pred_check_branch
          %223 = sbr.rel (%p221) target = $region47
        $region46: #{wsddn_forward.11} parent=19 // pred_region
          %s224 = smul.u32 64, %s18
          %s225 = smul.u32 2, %s17
          %p226 = scmp.lt.s32.totalorder %s224, 447
          %s227 = scalar_select %p226, %s224, 447
          %p228 = scmp.lt.s32.totalorder %s225, 1
          %s229 = scalar_select %p228, %s225, 1
          %s230 = smul.addr %s227, 2
          %s231 = sadd.s32 %s229, %s230
          %s232 = smul.addr %s231, 4
          %s233 = scalar_lea.vmem %s1, %s232
          %s234 = smul.u32 64, %s18
          %s235 = smul.u32 2, %s17
        $region47: #{wsddn_forward.11} parent=19 // pred_fallthru
          _
      $region20: #{wsddn_forward.11} parent=5 // pred_fallthru
        _
      %p236 = scmp.le.s32.totalorder 1, %s9
      %p237 = scmp.lt.s32.totalorder %s9, 8
      %p238 = pnand %p236, %p237
      %p239 = pneg %p238
      // Predicated region
      $region48: #{wsddn_forward.11} parent=5 // pred_check
        _
      $region49: #{wsddn_forward.11} parent=5 // pred_check_branch
        %241 = sbr.rel (%p238) target = $region51
      $region50: #{wsddn_forward.11} parent=5 // pred_region
        %s242 = ssub.s32 %s9, 1
        %s243 = sand.u32 %s43, 1
        %s244 = sand.u32 %s43, 1
        %s245 = smul.addr %s244, 112
        %s246 = scalar_lea.vmem [#allocation2], %s245
        // Predicated region
        $region52: #{wsddn_forward.11} parent=50 // pred_check
          %p247 = pneg %p56
        $region53: #{wsddn_forward.11} parent=50 // pred_check_branch
          %249 = sbr.rel (%p247) target = $region55
        $region54: #{wsddn_forward.11} parent=50 // pred_region
          _
        $region55: #{wsddn_forward.11} parent=50 // pred_fallthru
          _
        %s250 = sand.u32 %s43, 1
        %s251 = sand.u32 %s43, 1
        %s252 = smul.addr %s251, 112
        %s253 = scalar_lea.vmem [#allocation2], %s252
        %p254 = pneg %p56
        %p255 = pneg %p53
        %s256 = smul.u32 64, %s21
        %s257 = smul.u32 2, %s20
        %p258 = scmp.lt.s32.totalorder %s256, 447
        %s259 = scalar_select %p258, %s256, 447
        %p260 = scmp.lt.s32.totalorder %s257, 1
        %s261 = scalar_select %p260, %s257, 1
        %s262 = smul.addr %s259, 2
        %s263 = sadd.s32 %s261, %s262
        %s264 = smul.addr %s263, 4
        %s265 = scalar_lea.vmem %s1, %s264
        %p266 = pneg %p84
        %p267 = pneg %p81
        %s268 = smul.u32 2, %s20
        %p269 = scmp.lt.s32.totalorder %s268, 1
        %s270 = scalar_select %p269, %s268, 1
        %s271 = scalar_lea.vmem %s2, %s270
        %p272 = pneg %p110
        %p273 = pneg %p107
        %p274 = pneg %p138
        %p275 = pneg %p135
        %s276 = smul.u32 7, %s19
        %s277 = smul.u32 2, %s20
        %p278 = scmp.lt.s32.totalorder %s276, 6
        %s279 = scalar_select %p278, %s276, 6
        %p280 = scmp.lt.s32.totalorder %s277, 1
        %s281 = scalar_select %p280, %s277, 1
        %s282 = smul.addr %s279, 2
        %s283 = sadd.s32 %s281, %s282
        %s284 = smul.addr %s283, 8
        %s285 = scalar_lea.vmem %s3, %s284
        %s286 = smul.u32 7, %s19
        %s287 = smul.u32 4, %s21
        %s288 = smul.u32 64, %s21
        %s289 = smul.u32 2, %s20
        %p290 = scmp.lt.s32.totalorder %s288, 447
        %s291 = scalar_select %p290, %s288, 447
        %p292 = scmp.lt.s32.totalorder %s289, 1
        %s293 = scalar_select %p292, %s289, 1
        %s294 = smul.addr %s291, 2
        %s295 = sadd.s32 %s293, %s294
        %s296 = smul.addr %s295, 4
        %s297 = scalar_lea.vmem %s1, %s296
        %s298 = smul.u32 64, %s21
        %s299 = smul.u32 2, %s20
        %s300 = smul.u32 2, %s20
        %p301 = scmp.lt.s32.totalorder %s300, 1
        %s302 = scalar_select %p301, %s300, 1
        %s303 = scalar_lea.vmem %s2, %s302
        %s304 = smul.u32 2, %s20
        %s305 = smul.u32 7, %s19
        %s306 = smul.u32 2, %s20
        %p307 = scmp.lt.s32.totalorder %s305, 6
        %s308 = scalar_select %p307, %s305, 6
        %p309 = scmp.lt.s32.totalorder %s306, 1
        %s310 = scalar_select %p309, %s306, 1
        %s311 = smul.addr %s308, 2
        %s312 = sadd.s32 %s310, %s311
        %s313 = smul.addr %s312, 8
        %s314 = scalar_lea.vmem %s3, %s313
        %s315 = smul.u32 7, %s19
        %s316 = smul.u32 2, %s20
        %p317 = scmp.eq.s32.totalorder %s21, 0
        // Predicated region
        $region56: #{wsddn_forward.11} parent=50 // pred_check
          %p318 = pneg %p317
        $region57: #{wsddn_forward.11} parent=50 // pred_check_branch
          %320 = sbr.rel (%p318) target = $region59
        $region58: #{wsddn_forward.11} parent=50 // pred_region
          %321 = vst [vmem:[%s314] sm:$0xff] 0.0
          %322 = vst [vmem:[%s314 + $0x8] sm:$0xff] 0.0
          %323 = vst [vmem:[%s314 + $0x10] sm:$0xff] 0.0
          %324 = vst [vmem:[%s314 + $0x18] sm:$0xff] 0.0
          %325 = vst [vmem:[%s314 + $0x20] sm:$0xff] 0.0
          %326 = vst [vmem:[%s314 + $0x28] sm:$0xff] 0.0
          %327 = vst [vmem:[%s314 + $0x30] sm:$0xff] 0.0
          %328 = vst [vmem:[%s314 + $0x38] sm:$0xff] 0.0
          %329 = vst [vmem:[%s314 + $0x40] sm:$0xff] 0.0
          %330 = vst [vmem:[%s314 + $0x48] sm:$0xff] 0.0
          %331 = vst [vmem:[%s314 + $0x50] sm:$0xff] 0.0
          %332 = vst [vmem:[%s314 + $0x58] sm:$0xff] 0.0
          %333 = vst [vmem:[%s314 + $0x60] sm:$0xff] 0.0
          %334 = vst [vmem:[%s314 + $0x68] sm:$0xff] 0.0
        $region59: #{wsddn_forward.11} parent=50 // pred_fallthru
          _
        %v335 = vld [vmem:[%s314] sm:$0xff]
        %v336 = vld [vmem:[%s314 + $0x8] sm:$0xff]
        %v337 = vld [vmem:[%s314 + $0x10] sm:$0xff]
        %v338 = vld [vmem:[%s314 + $0x18] sm:$0xff]
        %v339 = vld [vmem:[%s314 + $0x20] sm:$0xff]
        %v340 = vld [vmem:[%s314 + $0x28] sm:$0xff]
        %v341 = vld [vmem:[%s314 + $0x30] sm:$0xff]
        %v342 = vld [vmem:[%s314 + $0x38] sm:$0xff]
        %v343 = vld [vmem:[%s314 + $0x40] sm:$0xff]
        %v344 = vld [vmem:[%s314 + $0x48] sm:$0xff]
        %v345 = vld [vmem:[%s314 + $0x50] sm:$0xff]
        %v346 = vld [vmem:[%s314 + $0x58] sm:$0xff]
        %v347 = vld [vmem:[%s314 + $0x60] sm:$0xff]
        %v348 = vld [vmem:[%s314 + $0x68] sm:$0xff]
        %v349 = vld [vmem:[%s246] sm:$0xff]
        %v350 = vld [vmem:[%s246 + $0x8] sm:$0xff]
        %v351 = vld [vmem:[%s246 + $0x10] sm:$0xff]
        %v352 = vld [vmem:[%s246 + $0x18] sm:$0xff]
        %v353 = vld [vmem:[%s246 + $0x20] sm:$0xff]
        %v354 = vld [vmem:[%s246 + $0x28] sm:$0xff]
        %v355 = vld [vmem:[%s246 + $0x30] sm:$0xff]
        %v356 = vld [vmem:[%s246 + $0x38] sm:$0xff]
        %v357 = vld [vmem:[%s246 + $0x40] sm:$0xff]
        %v358 = vld [vmem:[%s246 + $0x48] sm:$0xff]
        %v359 = vld [vmem:[%s246 + $0x50] sm:$0xff]
        %v360 = vld [vmem:[%s246 + $0x58] sm:$0xff]
        %v361 = vld [vmem:[%s246 + $0x60] sm:$0xff]
        %v362 = vld [vmem:[%s246 + $0x68] sm:$0xff]
        %v363 = vld [vmem:[%s297] sm:$0xff]
        %v364 = vld [vmem:[%s297 + $0x8] sm:$0xff]
        %v365 = vld [vmem:[%s297 + $0x10] sm:$0xff]
        %v366 = vld [vmem:[%s297 + $0x18] sm:$0xff]
        %v367 = vld [vmem:[%s297 + $0x20] sm:$0xff]
        %v368 = vld [vmem:[%s297 + $0x28] sm:$0xff]
        %v369 = vld [vmem:[%s297 + $0x30] sm:$0xff]
        %v370 = vld [vmem:[%s297 + $0x38] sm:$0xff]
        %v371 = vld [vmem:[%s297 + $0x40] sm:$0xff]
        %v372 = vld [vmem:[%s297 + $0x48] sm:$0xff]
        %v373 = vld [vmem:[%s297 + $0x50] sm:$0xff]
        %v374 = vld [vmem:[%s297 + $0x58] sm:$0xff]
        %v375 = vld [vmem:[%s297 + $0x60] sm:$0xff]
        %v376 = vld [vmem:[%s297 + $0x68] sm:$0xff]
        %v377 = vld [vmem:[%s297 + $0x70] sm:$0xff]
        %v378 = vld [vmem:[%s297 + $0x78] sm:$0xff]
        %v379 = vld [vmem:[%s297 + $0x80] sm:$0xff]
        %v380 = vld [vmem:[%s297 + $0x88] sm:$0xff]
        %v381 = vld [vmem:[%s297 + $0x90] sm:$0xff]
        %v382 = vld [vmem:[%s297 + $0x98] sm:$0xff]
        %v383 = vld [vmem:[%s297 + $0xa0] sm:$0xff]
        %v384 = vld [vmem:[%s297 + $0xa8] sm:$0xff]
        %v385 = vld [vmem:[%s297 + $0xb0] sm:$0xff]
        %v386 = vld [vmem:[%s297 + $0xb8] sm:$0xff]
        %v387 = vld [vmem:[%s297 + $0xc0] sm:$0xff]
        %v388 = vld [vmem:[%s297 + $0xc8] sm:$0xff]
        %v389 = vld [vmem:[%s297 + $0xd0] sm:$0xff]
        %v390 = vld [vmem:[%s297 + $0xd8] sm:$0xff]
        %v391 = vld [vmem:[%s297 + $0xe0] sm:$0xff]
        %v392 = vld [vmem:[%s297 + $0xe8] sm:$0xff]
        %v393 = vld [vmem:[%s297 + $0xf0] sm:$0xff]
        %v394 = vld [vmem:[%s297 + $0xf8] sm:$0xff]
        %v395 = vld [vmem:[%s297 + $0x100] sm:$0xff]
        %v396 = vld [vmem:[%s297 + $0x108] sm:$0xff]
        %v397 = vld [vmem:[%s297 + $0x110] sm:$0xff]
        %v398 = vld [vmem:[%s297 + $0x118] sm:$0xff]
        %v399 = vld [vmem:[%s297 + $0x120] sm:$0xff]
        %v400 = vld [vmem:[%s297 + $0x128] sm:$0xff]
        %v401 = vld [vmem:[%s297 + $0x130] sm:$0xff]
        %v402 = vld [vmem:[%s297 + $0x138] sm:$0xff]
        %v403 = vld [vmem:[%s297 + $0x140] sm:$0xff]
        %v404 = vld [vmem:[%s297 + $0x148] sm:$0xff]
        %v405 = vld [vmem:[%s297 + $0x150] sm:$0xff]
        %v406 = vld [vmem:[%s297 + $0x158] sm:$0xff]
        %v407 = vld [vmem:[%s297 + $0x160] sm:$0xff]
        %v408 = vld [vmem:[%s297 + $0x168] sm:$0xff]
        %v409 = vld [vmem:[%s297 + $0x170] sm:$0xff]
        %v410 = vld [vmem:[%s297 + $0x178] sm:$0xff]
        %v411 = vld [vmem:[%s297 + $0x180] sm:$0xff]
        %v412 = vld [vmem:[%s297 + $0x188] sm:$0xff]
        %v413 = vld [vmem:[%s297 + $0x190] sm:$0xff]
        %v414 = vld [vmem:[%s297 + $0x198] sm:$0xff]
        %v415 = vld [vmem:[%s297 + $0x1a0] sm:$0xff]
        %v416 = vld [vmem:[%s297 + $0x1a8] sm:$0xff]
        %v417 = vld [vmem:[%s297 + $0x1b0] sm:$0xff]
        %v418 = vld [vmem:[%s297 + $0x1b8] sm:$0xff]
        %v419 = vld [vmem:[%s297 + $0x1c0] sm:$0xff]
        %v420 = vld [vmem:[%s297 + $0x1c8] sm:$0xff]
        %v421 = vld [vmem:[%s297 + $0x1d0] sm:$0xff]
        %v422 = vld [vmem:[%s297 + $0x1d8] sm:$0xff]
        %v423 = vld [vmem:[%s297 + $0x1e0] sm:$0xff]
        %v424 = vld [vmem:[%s297 + $0x1e8] sm:$0xff]
        %v425 = vld [vmem:[%s297 + $0x1f0] sm:$0xff]
        %v426 = vld [vmem:[%s297 + $0x1f8] sm:$0xff]
        %v441 = vunpack.c.l.b16 %v349
        %v442 = vunpack.c.h.b16 %v349
        %v443 = vunpack.c.l.b16 %v350
        %v444 = vunpack.c.h.b16 %v350
        %v445 = vunpack.c.l.b16 %v351
        %v446 = vunpack.c.h.b16 %v351
        %v447 = vunpack.c.l.b16 %v352
        %v448 = vunpack.c.h.b16 %v352
        %v449 = vunpack.c.l.b16 %v353
        %v450 = vunpack.c.h.b16 %v353
        %v451 = vunpack.c.l.b16 %v354
        %v452 = vunpack.c.h.b16 %v354
        %v453 = vunpack.c.l.b16 %v355
        %v454 = vunpack.c.h.b16 %v355
        %v455 = vunpack.c.l.b16 %v356
        %v456 = vunpack.c.h.b16 %v356
        %v457 = vunpack.c.l.b16 %v357
        %v458 = vunpack.c.h.b16 %v357
        %v459 = vunpack.c.l.b16 %v358
        %v460 = vunpack.c.h.b16 %v358
        %v461 = vunpack.c.l.b16 %v359
        %v462 = vunpack.c.h.b16 %v359
        %v463 = vunpack.c.l.b16 %v360
        %v464 = vunpack.c.h.b16 %v360
        %v465 = vunpack.c.l.b16 %v361
        %v466 = vunpack.c.h.b16 %v361
        %v467 = vunpack.c.l.b16 %v362
        %v468 = vunpack.c.h.b16 %v362
        %v469 = vpack.c.b16 %v445, %v441
        %v470 = vpack.c.b16 %v446, %v442
        %v471 = vpack.c.b16 %v447, %v443
        %v472 = vpack.c.b16 %v448, %v444
        %v473 = vpack.c.b16 %v453, %v449
        %v474 = vpack.c.b16 %v454, %v450
        %v475 = vpack.c.b16 %v455, %v451
        %v476 = vpack.c.b16 %v456, %v452
        %v477 = vpack.c.b16 %v461, %v457
        %v478 = vpack.c.b16 %v462, %v458
        %v479 = vpack.c.b16 %v463, %v459
        %v480 = vpack.c.b16 %v464, %v460
        %v481 = vpack.c.b16 %v465, %v465
        %v482 = vpack.c.b16 %v466, %v466
        %v483 = vpack.c.b16 %v467, %v467
        %v484 = vpack.c.b16 %v468, %v468
        %v565 = vunpack.c.l.b16 %v363
        %v566 = vunpack.c.h.b16 %v363
        %v567 = vunpack.c.l.b16 %v364
        %v568 = vunpack.c.h.b16 %v364
        %v569 = vunpack.c.l.b16 %v365
        %v570 = vunpack.c.h.b16 %v365
        %v571 = vunpack.c.l.b16 %v366
        %v572 = vunpack.c.h.b16 %v366
        %v573 = vunpack.c.l.b16 %v367
        %v574 = vunpack.c.h.b16 %v367
        %v575 = vunpack.c.l.b16 %v368
        %v576 = vunpack.c.h.b16 %v368
        %v577 = vunpack.c.l.b16 %v369
        %v578 = vunpack.c.h.b16 %v369
        %v579 = vunpack.c.l.b16 %v370
        %v580 = vunpack.c.h.b16 %v370
        %v581 = vunpack.c.l.b16 %v371
        %v582 = vunpack.c.h.b16 %v371
        %v583 = vunpack.c.l.b16 %v372
        %v584 = vunpack.c.h.b16 %v372
        %v585 = vunpack.c.l.b16 %v373
        %v586 = vunpack.c.h.b16 %v373
        %v587 = vunpack.c.l.b16 %v374
        %v588 = vunpack.c.h.b16 %v374
        %v589 = vunpack.c.l.b16 %v375
        %v590 = vunpack.c.h.b16 %v375
        %v591 = vunpack.c.l.b16 %v376
        %v592 = vunpack.c.h.b16 %v376
        %v593 = vunpack.c.l.b16 %v377
        %v594 = vunpack.c.h.b16 %v377
        %v595 = vunpack.c.l.b16 %v378
        %v596 = vunpack.c.h.b16 %v378
        %v597 = vunpack.c.l.b16 %v379
        %v598 = vunpack.c.h.b16 %v379
        %v599 = vunpack.c.l.b16 %v380
        %v600 = vunpack.c.h.b16 %v380
        %v601 = vunpack.c.l.b16 %v381
        %v602 = vunpack.c.h.b16 %v381
        %v603 = vunpack.c.l.b16 %v382
        %v604 = vunpack.c.h.b16 %v382
        %v605 = vunpack.c.l.b16 %v383
        %v606 = vunpack.c.h.b16 %v383
        %v607 = vunpack.c.l.b16 %v384
        %v608 = vunpack.c.h.b16 %v384
        %v609 = vunpack.c.l.b16 %v385
        %v610 = vunpack.c.h.b16 %v385
        %v611 = vunpack.c.l.b16 %v386
        %v612 = vunpack.c.h.b16 %v386
        %v613 = vunpack.c.l.b16 %v387
        %v614 = vunpack.c.h.b16 %v387
        %v615 = vunpack.c.l.b16 %v388
        %v616 = vunpack.c.h.b16 %v388
        %v617 = vunpack.c.l.b16 %v389
        %v618 = vunpack.c.h.b16 %v389
        %v619 = vunpack.c.l.b16 %v390
        %v620 = vunpack.c.h.b16 %v390
        %v621 = vunpack.c.l.b16 %v391
        %v622 = vunpack.c.h.b16 %v391
        %v623 = vunpack.c.l.b16 %v392
        %v624 = vunpack.c.h.b16 %v392
        %v625 = vunpack.c.l.b16 %v393
        %v626 = vunpack.c.h.b16 %v393
        %v627 = vunpack.c.l.b16 %v394
        %v628 = vunpack.c.h.b16 %v394
        %v629 = vunpack.c.l.b16 %v395
        %v630 = vunpack.c.h.b16 %v395
        %v631 = vunpack.c.l.b16 %v396
        %v632 = vunpack.c.h.b16 %v396
        %v633 = vunpack.c.l.b16 %v397
        %v634 = vunpack.c.h.b16 %v397
        %v635 = vunpack.c.l.b16 %v398
        %v636 = vunpack.c.h.b16 %v398
        %v637 = vunpack.c.l.b16 %v399
        %v638 = vunpack.c.h.b16 %v399
        %v639 = vunpack.c.l.b16 %v400
        %v640 = vunpack.c.h.b16 %v400
        %v641 = vunpack.c.l.b16 %v401
        %v642 = vunpack.c.h.b16 %v401
        %v643 = vunpack.c.l.b16 %v402
        %v644 = vunpack.c.h.b16 %v402
        %v645 = vunpack.c.l.b16 %v403
        %v646 = vunpack.c.h.b16 %v403
        %v647 = vunpack.c.l.b16 %v404
        %v648 = vunpack.c.h.b16 %v404
        %v649 = vunpack.c.l.b16 %v405
        %v650 = vunpack.c.h.b16 %v405
        %v651 = vunpack.c.l.b16 %v406
        %v652 = vunpack.c.h.b16 %v406
        %v653 = vunpack.c.l.b16 %v407
        %v654 = vunpack.c.h.b16 %v407
        %v655 = vunpack.c.l.b16 %v408
        %v656 = vunpack.c.h.b16 %v408
        %v657 = vunpack.c.l.b16 %v409
        %v658 = vunpack.c.h.b16 %v409
        %v659 = vunpack.c.l.b16 %v410
        %v660 = vunpack.c.h.b16 %v410
        %v661 = vunpack.c.l.b16 %v411
        %v662 = vunpack.c.h.b16 %v411
        %v663 = vunpack.c.l.b16 %v412
        %v664 = vunpack.c.h.b16 %v412
        %v665 = vunpack.c.l.b16 %v413
        %v666 = vunpack.c.h.b16 %v413
        %v667 = vunpack.c.l.b16 %v414
        %v668 = vunpack.c.h.b16 %v414
        %v669 = vunpack.c.l.b16 %v415
        %v670 = vunpack.c.h.b16 %v415
        %v671 = vunpack.c.l.b16 %v416
        %v672 = vunpack.c.h.b16 %v416
        %v673 = vunpack.c.l.b16 %v417
        %v674 = vunpack.c.h.b16 %v417
        %v675 = vunpack.c.l.b16 %v418
        %v676 = vunpack.c.h.b16 %v418
        %v677 = vunpack.c.l.b16 %v419
        %v678 = vunpack.c.h.b16 %v419
        %v679 = vunpack.c.l.b16 %v420
        %v680 = vunpack.c.h.b16 %v420
        %v681 = vunpack.c.l.b16 %v421
        %v682 = vunpack.c.h.b16 %v421
        %v683 = vunpack.c.l.b16 %v422
        %v684 = vunpack.c.h.b16 %v422
        %v685 = vunpack.c.l.b16 %v423
        %v686 = vunpack.c.h.b16 %v423
        %v687 = vunpack.c.l.b16 %v424
        %v688 = vunpack.c.h.b16 %v424
        %v689 = vunpack.c.l.b16 %v425
        %v690 = vunpack.c.h.b16 %v425
        %v691 = vunpack.c.l.b16 %v426
        %v692 = vunpack.c.h.b16 %v426
        %v693 = vpack.c.b16 %v567, %v565
        %v694 = vpack.c.b16 %v568, %v566
        %v695 = vpack.c.b16 %v571, %v569
        %v696 = vpack.c.b16 %v572, %v570
        %v697 = vpack.c.b16 %v575, %v573
        %v698 = vpack.c.b16 %v576, %v574
        %v699 = vpack.c.b16 %v579, %v577
        %v700 = vpack.c.b16 %v580, %v578
        %v701 = vpack.c.b16 %v583, %v581
        %v702 = vpack.c.b16 %v584, %v582
        %v703 = vpack.c.b16 %v587, %v585
        %v704 = vpack.c.b16 %v588, %v586
        %v705 = vpack.c.b16 %v591, %v589
        %v706 = vpack.c.b16 %v592, %v590
        %v707 = vpack.c.b16 %v595, %v593
        %v708 = vpack.c.b16 %v596, %v594
        %v709 = vpack.c.b16 %v599, %v597
        %v710 = vpack.c.b16 %v600, %v598
        %v711 = vpack.c.b16 %v603, %v601
        %v712 = vpack.c.b16 %v604, %v602
        %v713 = vpack.c.b16 %v607, %v605
        %v714 = vpack.c.b16 %v608, %v606
        %v715 = vpack.c.b16 %v611, %v609
        %v716 = vpack.c.b16 %v612, %v610
        %v717 = vpack.c.b16 %v615, %v613
        %v718 = vpack.c.b16 %v616, %v614
        %v719 = vpack.c.b16 %v619, %v617
        %v720 = vpack.c.b16 %v620, %v618
        %v721 = vpack.c.b16 %v623, %v621
        %v722 = vpack.c.b16 %v624, %v622
        %v723 = vpack.c.b16 %v627, %v625
        %v724 = vpack.c.b16 %v628, %v626
        %v725 = vpack.c.b16 %v631, %v629
        %v726 = vpack.c.b16 %v632, %v630
        %v727 = vpack.c.b16 %v635, %v633
        %v728 = vpack.c.b16 %v636, %v634
        %v729 = vpack.c.b16 %v639, %v637
        %v730 = vpack.c.b16 %v640, %v638
        %v731 = vpack.c.b16 %v643, %v641
        %v732 = vpack.c.b16 %v644, %v642
        %v733 = vpack.c.b16 %v647, %v645
        %v734 = vpack.c.b16 %v648, %v646
        %v735 = vpack.c.b16 %v651, %v649
        %v736 = vpack.c.b16 %v652, %v650
        %v737 = vpack.c.b16 %v655, %v653
        %v738 = vpack.c.b16 %v656, %v654
        %v739 = vpack.c.b16 %v659, %v657
        %v740 = vpack.c.b16 %v660, %v658
        %v741 = vpack.c.b16 %v663, %v661
        %v742 = vpack.c.b16 %v664, %v662
        %v743 = vpack.c.b16 %v667, %v665
        %v744 = vpack.c.b16 %v668, %v666
        %v745 = vpack.c.b16 %v671, %v669
        %v746 = vpack.c.b16 %v672, %v670
        %v747 = vpack.c.b16 %v675, %v673
        %v748 = vpack.c.b16 %v676, %v674
        %v749 = vpack.c.b16 %v679, %v677
        %v750 = vpack.c.b16 %v680, %v678
        %v751 = vpack.c.b16 %v683, %v681
        %v752 = vpack.c.b16 %v684, %v682
        %v753 = vpack.c.b16 %v687, %v685
        %v754 = vpack.c.b16 %v688, %v686
        %v755 = vpack.c.b16 %v691, %v689
        %v756 = vpack.c.b16 %v692, %v690
        %821 = vmatpush.bf16.msra.mxu0 %v707
        %822 = vmatpush.bf16.msra.mxu0 %v705
        %823 = vmatpush.bf16.msra.mxu0 %v703
        %824 = vmatpush.bf16.msra.mxu0 %v701
        %825 = vmatpush.bf16.msra.mxu0 %v699
        %826 = vmatpush.bf16.msra.mxu0 %v697
        %827 = vmatpush.bf16.msra.mxu0 %v695
        %828 = vmatpush.bf16.msra.mxu0 %v693
        %829 = vmatmul.bf16.gmra.mxu0 %v469
        %v830 = vpop.f32.mrf.mxu0
        %v831 = vadd.f32 0.0, %v830
        %v832 = vpop.f32.mrf.mxu0
        %v833 = vadd.f32 0.0, %v832
        %834 = vmatmul.bf16.gmra.mxu0 %v473
        %v835 = vpop.f32.mrf.mxu0
        %v836 = vadd.f32 0.0, %v835
        %v837 = vpop.f32.mrf.mxu0
        %v838 = vadd.f32 0.0, %v837
        %839 = vmatmul.bf16.gmra.mxu0 %v477
        %v840 = vpop.f32.mrf.mxu0
        %v841 = vadd.f32 0.0, %v840
        %v842 = vpop.f32.mrf.mxu0
        %v843 = vadd.f32 0.0, %v842
        %844 = vmatmul.bf16.gmra.mxu0 %v481
        %v845 = vpop.f32.mrf.mxu0
        %v846 = vadd.f32 0.0, %v845
        %v847 = vpop.f32.mrf.mxu0
        %848 = vdwg.mxu0
        %849 = vmatpush.bf16.msra.mxu0 %v723
        %850 = vmatpush.bf16.msra.mxu0 %v721
        %851 = vmatpush.bf16.msra.mxu0 %v719
        %852 = vmatpush.bf16.msra.mxu0 %v717
        %853 = vmatpush.bf16.msra.mxu0 %v715
        %854 = vmatpush.bf16.msra.mxu0 %v713
        %855 = vmatpush.bf16.msra.mxu0 %v711
        %856 = vmatpush.bf16.msra.mxu0 %v709
        %857 = vmatmul.bf16.gmra.mxu0 %v470
        %v858 = vpop.f32.mrf.mxu0
        %v859 = vadd.f32 %v831, %v858
        %v860 = vpop.f32.mrf.mxu0
        %v861 = vadd.f32 %v833, %v860
        %862 = vmatmul.bf16.gmra.mxu0 %v474
        %v863 = vpop.f32.mrf.mxu0
        %v864 = vadd.f32 %v836, %v863
        %v865 = vpop.f32.mrf.mxu0
        %v866 = vadd.f32 %v838, %v865
        %867 = vmatmul.bf16.gmra.mxu0 %v478
        %v868 = vpop.f32.mrf.mxu0
        %v869 = vadd.f32 %v841, %v868
        %v870 = vpop.f32.mrf.mxu0
        %v871 = vadd.f32 %v843, %v870
        %872 = vmatmul.bf16.gmra.mxu0 %v482
        %v873 = vpop.f32.mrf.mxu0
        %v874 = vadd.f32 %v846, %v873
        %v875 = vpop.f32.mrf.mxu0
        %876 = vdwg.mxu0
        %877 = vmatpush.bf16.msra.mxu0 %v739
        %878 = vmatpush.bf16.msra.mxu0 %v737
        %879 = vmatpush.bf16.msra.mxu0 %v735
        %880 = vmatpush.bf16.msra.mxu0 %v733
        %881 = vmatpush.bf16.msra.mxu0 %v731
        %882 = vmatpush.bf16.msra.mxu0 %v729
        %883 = vmatpush.bf16.msra.mxu0 %v727
        %884 = vmatpush.bf16.msra.mxu0 %v725
        %885 = vmatmul.bf16.gmra.mxu0 %v471
        %v886 = vpop.f32.mrf.mxu0
        %v887 = vadd.f32 %v859, %v886
        %v888 = vpop.f32.mrf.mxu0
        %v889 = vadd.f32 %v861, %v888
        %890 = vmatmul.bf16.gmra.mxu0 %v475
        %v891 = vpop.f32.mrf.mxu0
        %v892 = vadd.f32 %v864, %v891
        %v893 = vpop.f32.mrf.mxu0
        %v894 = vadd.f32 %v866, %v893
        %895 = vmatmul.bf16.gmra.mxu0 %v479
        %v896 = vpop.f32.mrf.mxu0
        %v897 = vadd.f32 %v869, %v896
        %v898 = vpop.f32.mrf.mxu0
        %v899 = vadd.f32 %v871, %v898
        %900 = vmatmul.bf16.gmra.mxu0 %v483
        %v901 = vpop.f32.mrf.mxu0
        %v902 = vadd.f32 %v874, %v901
        %v903 = vpop.f32.mrf.mxu0
        %904 = vdwg.mxu0
        %905 = vmatpush.bf16.msra.mxu0 %v755
        %906 = vmatpush.bf16.msra.mxu0 %v753
        %907 = vmatpush.bf16.msra.mxu0 %v751
        %908 = vmatpush.bf16.msra.mxu0 %v749
        %909 = vmatpush.bf16.msra.mxu0 %v747
        %910 = vmatpush.bf16.msra.mxu0 %v745
        %911 = vmatpush.bf16.msra.mxu0 %v743
        %912 = vmatpush.bf16.msra.mxu0 %v741
        %913 = vmatmul.bf16.gmra.mxu0 %v472
        %v914 = vpop.f32.mrf.mxu0
        %v915 = vadd.f32 %v887, %v914
        %v916 = vpop.f32.mrf.mxu0
        %v917 = vadd.f32 %v889, %v916
        %918 = vmatmul.bf16.gmra.mxu0 %v476
        %v919 = vpop.f32.mrf.mxu0
        %v920 = vadd.f32 %v892, %v919
        %v921 = vpop.f32.mrf.mxu0
        %v922 = vadd.f32 %v894, %v921
        %923 = vmatmul.bf16.gmra.mxu0 %v480
        %v924 = vpop.f32.mrf.mxu0
        %v925 = vadd.f32 %v897, %v924
        %v926 = vpop.f32.mrf.mxu0
        %v927 = vadd.f32 %v899, %v926
        %928 = vmatmul.bf16.gmra.mxu0 %v484
        %v929 = vpop.f32.mrf.mxu0
        %v930 = vadd.f32 %v902, %v929
        %v931 = vpop.f32.mrf.mxu0
        %932 = vdwg.mxu0
        %933 = vmatpush.bf16.msra.mxu0 %v708
        %934 = vmatpush.bf16.msra.mxu0 %v706
        %935 = vmatpush.bf16.msra.mxu0 %v704
        %936 = vmatpush.bf16.msra.mxu0 %v702
        %937 = vmatpush.bf16.msra.mxu0 %v700
        %938 = vmatpush.bf16.msra.mxu0 %v698
        %939 = vmatpush.bf16.msra.mxu0 %v696
        %940 = vmatpush.bf16.msra.mxu0 %v694
        %941 = vmatmul.bf16.gmra.mxu0 %v469
        %v942 = vpop.f32.mrf.mxu0
        %v943 = vadd.f32 0.0, %v942
        %v944 = vpop.f32.mrf.mxu0
        %v945 = vadd.f32 0.0, %v944
        %946 = vmatmul.bf16.gmra.mxu0 %v473
        %v947 = vpop.f32.mrf.mxu0
        %v948 = vadd.f32 0.0, %v947
        %v949 = vpop.f32.mrf.mxu0
        %v950 = vadd.f32 0.0, %v949
        %951 = vmatmul.bf16.gmra.mxu0 %v477
        %v952 = vpop.f32.mrf.mxu0
        %v953 = vadd.f32 0.0, %v952
        %v954 = vpop.f32.mrf.mxu0
        %v955 = vadd.f32 0.0, %v954
        %956 = vmatmul.bf16.gmra.mxu0 %v481
        %v957 = vpop.f32.mrf.mxu0
        %v958 = vadd.f32 0.0, %v957
        %v959 = vpop.f32.mrf.mxu0
        %960 = vdwg.mxu0
        %961 = vmatpush.bf16.msra.mxu0 %v724
        %962 = vmatpush.bf16.msra.mxu0 %v722
        %963 = vmatpush.bf16.msra.mxu0 %v720
        %964 = vmatpush.bf16.msra.mxu0 %v718
        %965 = vmatpush.bf16.msra.mxu0 %v716
        %966 = vmatpush.bf16.msra.mxu0 %v714
        %967 = vmatpush.bf16.msra.mxu0 %v712
        %968 = vmatpush.bf16.msra.mxu0 %v710
        %969 = vmatmul.bf16.gmra.mxu0 %v470
        %v970 = vpop.f32.mrf.mxu0
        %v971 = vadd.f32 %v943, %v970
        %v972 = vpop.f32.mrf.mxu0
        %v973 = vadd.f32 %v945, %v972
        %974 = vmatmul.bf16.gmra.mxu0 %v474
        %v975 = vpop.f32.mrf.mxu0
        %v976 = vadd.f32 %v948, %v975
        %v977 = vpop.f32.mrf.mxu0
        %v978 = vadd.f32 %v950, %v977
        %979 = vmatmul.bf16.gmra.mxu0 %v478
        %v980 = vpop.f32.mrf.mxu0
        %v981 = vadd.f32 %v953, %v980
        %v982 = vpop.f32.mrf.mxu0
        %v983 = vadd.f32 %v955, %v982
        %984 = vmatmul.bf16.gmra.mxu0 %v482
        %v985 = vpop.f32.mrf.mxu0
        %v986 = vadd.f32 %v958, %v985
        %v987 = vpop.f32.mrf.mxu0
        %988 = vdwg.mxu0
        %989 = vmatpush.bf16.msra.mxu0 %v740
        %990 = vmatpush.bf16.msra.mxu0 %v738
        %991 = vmatpush.bf16.msra.mxu0 %v736
        %992 = vmatpush.bf16.msra.mxu0 %v734
        %993 = vmatpush.bf16.msra.mxu0 %v732
        %994 = vmatpush.bf16.msra.mxu0 %v730
        %995 = vmatpush.bf16.msra.mxu0 %v728
        %996 = vmatpush.bf16.msra.mxu0 %v726
        %997 = vmatmul.bf16.gmra.mxu0 %v471
        %v998 = vpop.f32.mrf.mxu0
        %v999 = vadd.f32 %v971, %v998
        %v1000 = vpop.f32.mrf.mxu0
        %v1001 = vadd.f32 %v973, %v1000
        %1002 = vmatmul.bf16.gmra.mxu0 %v475
        %v1003 = vpop.f32.mrf.mxu0
        %v1004 = vadd.f32 %v976, %v1003
        %v1005 = vpop.f32.mrf.mxu0
        %v1006 = vadd.f32 %v978, %v1005
        %1007 = vmatmul.bf16.gmra.mxu0 %v479
        %v1008 = vpop.f32.mrf.mxu0
        %v1009 = vadd.f32 %v981, %v1008
        %v1010 = vpop.f32.mrf.mxu0
        %v1011 = vadd.f32 %v983, %v1010
        %1012 = vmatmul.bf16.gmra.mxu0 %v483
        %v1013 = vpop.f32.mrf.mxu0
        %v1014 = vadd.f32 %v986, %v1013
        %v1015 = vpop.f32.mrf.mxu0
        %1016 = vdwg.mxu0
        %1017 = vmatpush.bf16.msra.mxu0 %v756
        %1018 = vmatpush.bf16.msra.mxu0 %v754
        %1019 = vmatpush.bf16.msra.mxu0 %v752
        %1020 = vmatpush.bf16.msra.mxu0 %v750
        %1021 = vmatpush.bf16.msra.mxu0 %v748
        %1022 = vmatpush.bf16.msra.mxu0 %v746
        %1023 = vmatpush.bf16.msra.mxu0 %v744
        %1024 = vmatpush.bf16.msra.mxu0 %v742
        %1025 = vmatmul.bf16.gmra.mxu0 %v472
        %v1026 = vpop.f32.mrf.mxu0
        %v1027 = vadd.f32 %v999, %v1026
        %v1028 = vpop.f32.mrf.mxu0
        %v1029 = vadd.f32 %v1001, %v1028
        %1030 = vmatmul.bf16.gmra.mxu0 %v476
        %v1031 = vpop.f32.mrf.mxu0
        %v1032 = vadd.f32 %v1004, %v1031
        %v1033 = vpop.f32.mrf.mxu0
        %v1034 = vadd.f32 %v1006, %v1033
        %1035 = vmatmul.bf16.gmra.mxu0 %v480
        %v1036 = vpop.f32.mrf.mxu0
        %v1037 = vadd.f32 %v1009, %v1036
        %v1038 = vpop.f32.mrf.mxu0
        %v1039 = vadd.f32 %v1011, %v1038
        %1040 = vmatmul.bf16.gmra.mxu0 %v484
        %v1041 = vpop.f32.mrf.mxu0
        %v1042 = vadd.f32 %v1014, %v1041
        %v1043 = vpop.f32.mrf.mxu0
        %1044 = vdwg.mxu0
        %v1045 = vadd.f32 %v335, %v915
        %v1046 = vadd.f32 %v336, %v1027
        %v1047 = vadd.f32 %v337, %v917
        %v1048 = vadd.f32 %v338, %v1029
        %v1049 = vadd.f32 %v339, %v920
        %v1050 = vadd.f32 %v340, %v1032
        %v1051 = vadd.f32 %v341, %v922
        %v1052 = vadd.f32 %v342, %v1034
        %v1053 = vadd.f32 %v343, %v925
        %v1054 = vadd.f32 %v344, %v1037
        %v1055 = vadd.f32 %v345, %v927
        %v1056 = vadd.f32 %v346, %v1039
        %v1057 = vadd.f32 %v347, %v930
        %v1058 = vadd.f32 %v348, %v1042
        %1059 = vst [vmem:[%s314] sm:$0xff] %v1045
        %1060 = vst [vmem:[%s314 + $0x8] sm:$0xff] %v1046
        %1061 = vst [vmem:[%s314 + $0x10] sm:$0xff] %v1047
        %1062 = vst [vmem:[%s314 + $0x18] sm:$0xff] %v1048
        %1063 = vst [vmem:[%s314 + $0x20] sm:$0xff] %v1049
        %1064 = vst [vmem:[%s314 + $0x28] sm:$0xff] %v1050
        %1065 = vst [vmem:[%s314 + $0x30] sm:$0xff] %v1051
        %1066 = vst [vmem:[%s314 + $0x38] sm:$0xff] %v1052
        %1067 = vst [vmem:[%s314 + $0x40] sm:$0xff] %v1053
        %1068 = vst [vmem:[%s314 + $0x48] sm:$0xff] %v1054
        %1069 = vst [vmem:[%s314 + $0x50] sm:$0xff] %v1055
        %1070 = vst [vmem:[%s314 + $0x58] sm:$0xff] %v1056
        %1071 = vst [vmem:[%s314 + $0x60] sm:$0xff] %v1057
        %1072 = vst [vmem:[%s314 + $0x68] sm:$0xff] %v1058
        %p1073 = scmp.eq.s32.totalorder %s21, 6
        // Predicated region
        $region60: #{wsddn_forward.11} parent=50 // pred_check
          %p1074 = pneg %p1073
        $region61: #{wsddn_forward.11} parent=50 // pred_check_branch
          %1076 = sbr.rel (%p1074) target = $region63
        $region62: #{wsddn_forward.11} parent=50 // pred_region
          %v1077 = vld [vmem:[%s314] sm:$0xff]
          %v1078 = vld [vmem:[%s314 + $0x8] sm:$0xff]
          %v1079 = vld [vmem:[%s314 + $0x10] sm:$0xff]
          %v1080 = vld [vmem:[%s314 + $0x18] sm:$0xff]
          %v1081 = vld [vmem:[%s314 + $0x20] sm:$0xff]
          %v1082 = vld [vmem:[%s314 + $0x28] sm:$0xff]
          %v1083 = vld [vmem:[%s314 + $0x30] sm:$0xff]
          %v1084 = vld [vmem:[%s314 + $0x38] sm:$0xff]
          %v1085 = vld [vmem:[%s314 + $0x40] sm:$0xff]
          %v1086 = vld [vmem:[%s314 + $0x48] sm:$0xff]
          %v1087 = vld [vmem:[%s314 + $0x50] sm:$0xff]
          %v1088 = vld [vmem:[%s314 + $0x58] sm:$0xff]
          %v1089 = vld [vmem:[%s314 + $0x60] sm:$0xff]
          %v1090 = vld [vmem:[%s314 + $0x68] sm:$0xff]
          %v1091 = vld [vmem:[%s303] sm:$0x3]
          %v1093 = vperm.slane %v1091, 0
          %v1094 = vperm.slane %v1091, 1
          %v1097 = vadd.f32 %v1077, %v1093
          %v1098 = vadd.f32 %v1078, %v1094
          %v1099 = vadd.f32 %v1079, %v1093
          %v1100 = vadd.f32 %v1080, %v1094
          %v1101 = vadd.f32 %v1081, %v1093
          %v1102 = vadd.f32 %v1082, %v1094
          %v1103 = vadd.f32 %v1083, %v1093
          %v1104 = vadd.f32 %v1084, %v1094
          %v1105 = vadd.f32 %v1085, %v1093
          %v1106 = vadd.f32 %v1086, %v1094
          %v1107 = vadd.f32 %v1087, %v1093
          %v1108 = vadd.f32 %v1088, %v1094
          %v1109 = vadd.f32 %v1089, %v1093
          %v1110 = vadd.f32 %v1090, %v1094
          %v1111 = vmax.f32 %v1097, 0.0
          %v1112 = vmax.f32 %v1098, 0.0
          %v1113 = vmax.f32 %v1099, 0.0
          %v1114 = vmax.f32 %v1100, 0.0
          %v1115 = vmax.f32 %v1101, 0.0
          %v1116 = vmax.f32 %v1102, 0.0
          %v1117 = vmax.f32 %v1103, 0.0
          %v1118 = vmax.f32 %v1104, 0.0
          %v1119 = vmax.f32 %v1105, 0.0
          %v1120 = vmax.f32 %v1106, 0.0
          %v1121 = vmax.f32 %v1107, 0.0
          %v1122 = vmax.f32 %v1108, 0.0
          %v1123 = vmax.f32 %v1109, 0.0
          %v1124 = vmax.f32 %v1110, 0.0
          %1125 = vst [vmem:[%s314] sm:$0xff] %v1111
          %1126 = vst [vmem:[%s314 + $0x8] sm:$0xff] %v1112
          %1127 = vst [vmem:[%s314 + $0x10] sm:$0xff] %v1113
          %1128 = vst [vmem:[%s314 + $0x18] sm:$0xff] %v1114
          %1129 = vst [vmem:[%s314 + $0x20] sm:$0xff] %v1115
          %1130 = vst [vmem:[%s314 + $0x28] sm:$0xff] %v1116
          %1131 = vst [vmem:[%s314 + $0x30] sm:$0xff] %v1117
          %1132 = vst [vmem:[%s314 + $0x38] sm:$0xff] %v1118
          %1133 = vst [vmem:[%s314 + $0x40] sm:$0xff] %v1119
          %1134 = vst [vmem:[%s314 + $0x48] sm:$0xff] %v1120
          %1135 = vst [vmem:[%s314 + $0x50] sm:$0xff] %v1121
          %1136 = vst [vmem:[%s314 + $0x58] sm:$0xff] %v1122
          %1137 = vst [vmem:[%s314 + $0x60] sm:$0xff] %v1123
          %1138 = vst [vmem:[%s314 + $0x68] sm:$0xff] %v1124
        $region63: #{wsddn_forward.11} parent=50 // pred_fallthru
          _
        %s1139 = smul.u32 7, %s19
        %s1140 = smul.u32 2, %s20
        %p1141 = scmp.lt.s32.totalorder %s1139, 6
        %s1142 = scalar_select %p1141, %s1139, 6
        %p1143 = scmp.lt.s32.totalorder %s1140, 1
        %s1144 = scalar_select %p1143, %s1140, 1
        %s1145 = smul.addr %s1142, 2
        %s1146 = sadd.s32 %s1144, %s1145
        %s1147 = smul.addr %s1146, 8
        %s1148 = scalar_lea.vmem %s3, %s1147
        // Predicated region
        $region64: #{wsddn_forward.11} parent=50 // pred_check
          %p1149 = pneg %p135
        $region65: #{wsddn_forward.11} parent=50 // pred_check_branch
          %1151 = sbr.rel (%p1149) target = $region67
        $region66: #{wsddn_forward.11} parent=50 // pred_region
          %s1152 = smul.u32 7, %s19
          %s1153 = smul.u32 2, %s20
        $region67: #{wsddn_forward.11} parent=50 // pred_fallthru
          _
        // Predicated region
        $region68: #{wsddn_forward.11} parent=50 // pred_check
          %p1154 = pneg %p135
        $region69: #{wsddn_forward.11} parent=50 // pred_check_branch
          %1156 = sbr.rel (%p1154) target = $region71
        $region70: #{wsddn_forward.11} parent=50 // pred_region
          %s1157 = smul.u32 7, %s19
          %s1158 = smul.u32 2, %s20
          %p1159 = scmp.lt.s32.totalorder %s1157, 6
          %s1160 = scalar_select %p1159, %s1157, 6
          %p1161 = scmp.lt.s32.totalorder %s1158, 1
          %s1162 = scalar_select %p1161, %s1158, 1
          %s1163 = smul.addr %s1160, 2
          %s1164 = sadd.s32 %s1162, %s1163
          %s1165 = smul.addr %s1164, 8
          %s1166 = scalar_lea.vmem %s3, %s1165
        $region71: #{wsddn_forward.11} parent=50 // pred_fallthru
          _
      $region51: #{wsddn_forward.11} parent=5 // pred_fallthru
        _
      %p1167 = scmp.le.s32.totalorder 2, %s9
      // Predicated region
      $region72: #{wsddn_forward.11} parent=5 // pred_check
        %p1168 = pneg %p1167
      $region73: #{wsddn_forward.11} parent=5 // pred_check_branch
        %1170 = sbr.rel (%p1168) target = $region75
      $region74: #{wsddn_forward.11} parent=5 // pred_region
        %s1171 = ssub.s32 %s9, 2
      $region75: #{wsddn_forward.11} parent=5 // pred_fallthru
        _
    $region6: #{wsddn_forward.11} parent=1 // loop_footer
      %s13 = sadd.s32 1, %s9
    $region7: #{wsddn_forward.11} parent=1 // loop_footer_branch
      %8 = sbr.rel target = $region3
    $region8: #{wsddn_forward.11} parent=1 // loop_exit
      _

// kernel: wsddn_forward.12
$region0: #{wsddn_forward.12}
  #allocation0 [shape = 'u32[]', space=smem, size = 0x4, offset = 0x4, fixed_abs, tag = 'smem constant byte address 0x4 - core index']
  #allocation1 [shape = 'u32[72,128]{1,0:T(1,128)}', space=vmem, size = 0x9000, scoped, tag = 'internal scratch']
  %s0 = inlined_call_operand.vmem [shape: bf16[56,2304], index: 0, kind: input, shape index: {}]
  %s1 = inlined_call_operand.vmem [shape: bf16[2304,256], index: 1, kind: input, shape index: {}]
  %s2 = inlined_call_operand.vmem [shape: f32[1,256], index: 2, kind: input, shape index: {}]
  %s3 = inlined_call_operand.vmem [shape: f32[56,256], index: 3, kind: output, shape index: {}]
  %s4 = sld [smem:[#allocation0]]
  $region79: #{wsddn_forward.12} parent=0
    _
  %s6 = ssub.s32 1, %s4
  %s7 = scalar_select 0, %s6, %s4
  $region1: #{wsddn_forward.12} parent=0
    #allocation2 [shape = 'u8[86016]{0}', space=vmem, size = 0x15000, scoped, tag = 'input window, operand 0']
    loop: start=0, step=1, limit=8
    $region2: #{wsddn_forward.12} parent=1 // loop_pre_header
      _
    $region3: #{wsddn_forward.12} parent=1 // loop_header
      %s9 = sphi 0, %s13
      %p10 = scmp.ge.s32.totalorder %s9, 8
      %s16 = sphi 0, %s35
      %s17 = sphi 0, %s31
      %s18 = sphi 0, %s27
      %s19 = sphi 0, %s16
      %s20 = sphi 0, %s17
      %s21 = sphi 0, %s18
      %s22 = sphi 0, %s19
      %s23 = sphi 0, %s20
      %s24 = sphi 0, %s21
      %s40 = sphi 0, %s42
      %s43 = sphi 0, %s40
      %s44 = sphi 0, %s43
      %s60 = sphi 0, %s44
      %s68 = sphi 0, %s70
      %s71 = sphi 0, %s68
      %s72 = sphi 0, %s71
      %s88 = sphi 0, %s72
      %s94 = sphi 0, %s96
      %s97 = sphi 0, %s94
      %s98 = sphi 0, %s97
      %s114 = sphi 0, %s98
      %s122 = sphi 0, %s124
      %s125 = sphi 0, %s122
      %s126 = sphi 0, %s125
      %s142 = sphi 0, %s126
    $region4: #{wsddn_forward.12} parent=1 // loop_header_branch
      %12 = sbr.rel (%p10) target = $region8
    $region5: #{wsddn_forward.12} parent=1 // loop_body
      %s14 = ssub.s32 %s9, 1
      %s15 = ssub.s32 %s9, 2
      %s25 = sadd.s32 1, %s18
      %p26 = scmp.ge.s32.totalorder %s25, 6
      %s27 = scalar_select %p26, 0, %s25
      %s28 = sadd.s32 1, %s17
      %s29 = scalar_select %p26, %s28, %s17
      %p30 = scmp.ge.s32.totalorder %s29, 1
      %s31 = scalar_select %p30, 0, %s29
      %s32 = sadd.s32 1, %s16
      %s33 = scalar_select %p30, %s32, %s16
      %p34 = scmp.ge.s32.totalorder %s33, 1
      %s35 = scalar_select %p34, 0, %s33
      %s36 = ssub.s32 %s16, %s35
      %s37 = ssub.s32 %s18, %s27
      %s38 = sor.u32 %s36, %s37
      %p39 = scmp.eq.s32.totalorder %s38, 0
      %s41 = sadd.s32 %s40, 1
      %s42 = scalar_select %p39, %s40, %s41
      %p45 = pneg %p39
      %p46 = scmp.eq.s32.totalorder %s9, 5
      %p47 = por %p45, %p46
      %p48 = scmp.ne.s32.totalorder %s40, %s43
      %p49 = scmp.eq.s32.totalorder %s9, 0
      %p50 = por %p48, %p49
      %p51 = scmp.ne.s32.totalorder %s40, %s43
      %p52 = scmp.eq.s32.totalorder %s14, 5
      %p53 = por %p51, %p52
      %p54 = scmp.ne.s32.totalorder %s43, %s44
      %p55 = scmp.eq.s32.totalorder %s14, 0
      %p56 = por %p54, %p55
      %p57 = scmp.ne.s32.totalorder %s43, %s44
      %p58 = scmp.eq.s32.totalorder %s15, 5
      %p59 = por %p57, %p58
      %p61 = scmp.ne.s32.totalorder %s44, %s60
      %p62 = scmp.eq.s32.totalorder %s15, 0
      %p63 = por %p61, %p62
      %s64 = ssub.s32 %s18, %s27
      %s65 = ssub.s32 %s17, %s31
      %s66 = sor.u32 %s64, %s65
      %p67 = scmp.eq.s32.totalorder %s66, 0
      %s69 = sadd.s32 %s68, 1
      %s70 = scalar_select %p67, %s68, %s69
      %p73 = pneg %p67
      %p74 = scmp.eq.s32.totalorder %s9, 5
      %p75 = por %p73, %p74
      %p76 = scmp.ne.s32.totalorder %s68, %s71
      %p77 = scmp.eq.s32.totalorder %s9, 0
      %p78 = por %p76, %p77
      %p79 = scmp.ne.s32.totalorder %s68, %s71
      %p80 = scmp.eq.s32.totalorder %s14, 5
      %p81 = por %p79, %p80
      %p82 = scmp.ne.s32.totalorder %s71, %s72
      %p83 = scmp.eq.s32.totalorder %s14, 0
      %p84 = por %p82, %p83
      %p85 = scmp.ne.s32.totalorder %s71, %s72
      %p86 = scmp.eq.s32.totalorder %s15, 5
      %p87 = por %p85, %p86
      %p89 = scmp.ne.s32.totalorder %s72, %s88
      %p90 = scmp.eq.s32.totalorder %s15, 0
      %p91 = por %p89, %p90
      %s92 = ssub.s32 %s17, %s31
      %p93 = scmp.eq.s32.totalorder %s92, 0
      %s95 = sadd.s32 %s94, 1
      %s96 = scalar_select %p93, %s94, %s95
      %p99 = pneg %p93
      %p100 = scmp.eq.s32.totalorder %s9, 5
      %p101 = por %p99, %p100
      %p102 = scmp.ne.s32.totalorder %s94, %s97
      %p103 = scmp.eq.s32.totalorder %s9, 0
      %p104 = por %p102, %p103
      %p105 = scmp.ne.s32.totalorder %s94, %s97
      %p106 = scmp.eq.s32.totalorder %s14, 5
      %p107 = por %p105, %p106
      %p108 = scmp.ne.s32.totalorder %s97, %s98
      %p109 = scmp.eq.s32.totalorder %s14, 0
      %p110 = por %p108, %p109
      %p111 = scmp.ne.s32.totalorder %s97, %s98
      %p112 = scmp.eq.s32.totalorder %s15, 5
      %p113 = por %p111, %p112
      %p115 = scmp.ne.s32.totalorder %s98, %s114
      %p116 = scmp.eq.s32.totalorder %s15, 0
      %p117 = por %p115, %p116
      %s118 = ssub.s32 %s16, %s35
      %s119 = ssub.s32 %s17, %s31
      %s120 = sor.u32 %s118, %s119
      %p121 = scmp.eq.s32.totalorder %s120, 0
      %s123 = sadd.s32 %s122, 1
      %s124 = scalar_select %p121, %s122, %s123
      %p127 = pneg %p121
      %p128 = scmp.eq.s32.totalorder %s9, 5
      %p129 = por %p127, %p128
      %p130 = scmp.ne.s32.totalorder %s122, %s125
      %p131 = scmp.eq.s32.totalorder %s9, 0
      %p132 = por %p130, %p131
      %p133 = scmp.ne.s32.totalorder %s122, %s125
      %p134 = scmp.eq.s32.totalorder %s14, 5
      %p135 = por %p133, %p134
      %p136 = scmp.ne.s32.totalorder %s125, %s126
      %p137 = scmp.eq.s32.totalorder %s14, 0
      %p138 = por %p136, %p137
      %p139 = scmp.ne.s32.totalorder %s125, %s126
      %p140 = scmp.eq.s32.totalorder %s15, 5
      %p141 = por %p139, %p140
      %p143 = scmp.ne.s32.totalorder %s126, %s142
      %p144 = scmp.eq.s32.totalorder %s15, 0
      %p145 = por %p143, %p144
      %p146 = scmp.le.s32.totalorder 1, %s9
      %p147 = scmp.lt.s32.totalorder %s9, 7
      %p148 = pnand %p146, %p147
      %p149 = pneg %p148
      // Predicated region
      $region9: #{wsddn_forward.12} parent=5 // pred_check
        _
      $region10: #{wsddn_forward.12} parent=5 // pred_check_branch
        %151 = sbr.rel (%p148) target = $region12
      $region11: #{wsddn_forward.12} parent=5 // pred_region
        %s152 = ssub.s32 %s9, 1
        // Predicated region
        $region13: #{wsddn_forward.12} parent=11 // pred_check
          %p153 = pneg %p110
        $region14: #{wsddn_forward.12} parent=11 // pred_check_branch
          %155 = sbr.rel (%p153) target = $region16
        $region15: #{wsddn_forward.12} parent=11 // pred_region
          %s156 = smul.u32 2, %s20
          %p157 = scmp.lt.s32.totalorder %s156, 1
          %s158 = scalar_select %p157, %s156, 1
          %s159 = scalar_lea.vmem %s2, %s158
          %s160 = smul.u32 2, %s20
        $region16: #{wsddn_forward.12} parent=11 // pred_fallthru
          _
      $region12: #{wsddn_forward.12} parent=5 // pred_fallthru
        _
      %p161 = scmp.lt.s32.totalorder %s9, 6
      // Predicated region
      $region17: #{wsddn_forward.12} parent=5 // pred_check
        %p162 = pneg %p161
      $region18: #{wsddn_forward.12} parent=5 // pred_check_branch
        %164 = sbr.rel (%p162) target = $region20
      $region19: #{wsddn_forward.12} parent=5 // pred_region
        // Predicated region
        $region21: #{wsddn_forward.12} parent=19 // pred_check
          %p165 = pneg %p50
        $region22: #{wsddn_forward.12} parent=19 // pred_check_branch
          %167 = sbr.rel (%p165) target = $region24
        $region23: #{wsddn_forward.12} parent=19 // pred_region
          %s168 = sand.u32 %s40, 1
          %s169 = sand.u32 %s40, 1
          %s170 = smul.addr %s169, 84
          %s171 = scalar_lea.vmem [#allocation2], %s170
          %s172 = smul.u32 7, %s16
          %s173 = smul.u32 3, %s18
          %s174 = smul.addr %s172, 18
          %s175 = sadd.s32 %s173, %s174
          %s176 = smul.addr %s175, 4
          %s177 = scalar_lea.vmem %s0, %s176
          // Predicated region
          $region25: #{wsddn_forward.12} parent=23 // pred_check
            _
          $region26: #{wsddn_forward.12} parent=23 // pred_check_branch
            %179 = sbr.rel (0) target = $region28
          $region27: #{wsddn_forward.12} parent=23 // pred_region
            // Predicated region
            $region29: #{wsddn_forward.12} parent=27 // pred_check
              _
            $region30: #{wsddn_forward.12} parent=27 // pred_check_branch
              %181 = sbr.rel (0) target = $region32
            $region31: #{wsddn_forward.12} parent=27 // pred_region
              %s182 = scalar_lea.vmem %s177, 8
              %s183 = scalar_lea.vmem %s171, 8 [#allocation2]
              loop: start=0, step=1, limit=1
              $region33: #{wsddn_forward.12} parent=31 // loop_pre_header
                _
              $region34: #{wsddn_forward.12} parent=31 // loop_header
                %s185 = sphi 0, %s189
                %p186 = scmp.ge.s32.totalorder %s185, 1
                %s190 = sphi %s177, %s177
                %s191 = sphi %s171, %s171
              $region35: #{wsddn_forward.12} parent=31 // loop_header_branch
                %188 = sbr.rel (%p186) target = $region39
              $region36: #{wsddn_forward.12} parent=31 // loop_body
                %v192 = vld [vmem:[%s190] sm:$0xff]
                %193 = vst [vmem:[%s191] sm:$0xff] %v192
                %v194 = vld [vmem:[%s190 + $0x48] sm:$0xff]
                %195 = vst [vmem:[%s191 + $0xc] sm:$0xff] %v194
                %v196 = vld [vmem:[%s190 + $0x90] sm:$0xff]
                %197 = vst [vmem:[%s191 + $0x18] sm:$0xff] %v196
                %v198 = vld [vmem:[%s190 + $0xd8] sm:$0xff]
                %199 = vst [vmem:[%s191 + $0x24] sm:$0xff] %v198
                %v200 = vld [vmem:[%s190 + $0x120] sm:$0xff]
                %201 = vst [vmem:[%s191 + $0x30] sm:$0xff] %v200
                %v202 = vld [vmem:[%s190 + $0x168] sm:$0xff]
                %203 = vst [vmem:[%s191 + $0x3c] sm:$0xff] %v202
                %v204 = vld [vmem:[%s190 + $0x1b0] sm:$0xff]
                %205 = vst [vmem:[%s191 + $0x48] sm:$0xff] %v204
              $region37: #{wsddn_forward.12} parent=31 // loop_footer
                %s189 = sadd.s32 1, %s185
              $region38: #{wsddn_forward.12} parent=31 // loop_footer_branch
                %184 = sbr.rel target = $region34
              $region39: #{wsddn_forward.12} parent=31 // loop_exit
                _
              %s207 = ssub.s32 16, 1
              loop: start=0, step=1, limit=1
              $region40: #{wsddn_forward.12} parent=31 // loop_pre_header
                _
              $region41: #{wsddn_forward.12} parent=31 // loop_header
                %s209 = sphi 0, %s213
                %p210 = scmp.ge.s32.totalorder %s209, 1
                %s214 = sphi %s182, %s182
                %s215 = sphi %s183, %s183
              $region42: #{wsddn_forward.12} parent=31 // loop_header_branch
                %212 = sbr.rel (%p210) target = $region46
              $region43: #{wsddn_forward.12} parent=31 // loop_body
                %v216 = vld [vmem:[%s214] sm:%s207]
                %217 = vst [vmem:[%s215] sm:%s207] %v216
                %v218 = vld [vmem:[%s214 + $0x48] sm:%s207]
                %219 = vst [vmem:[%s215 + $0xc] sm:%s207] %v218
                %v220 = vld [vmem:[%s214 + $0x90] sm:%s207]
                %221 = vst [vmem:[%s215 + $0x18] sm:%s207] %v220
                %v222 = vld [vmem:[%s214 + $0xd8] sm:%s207]
                %223 = vst [vmem:[%s215 + $0x24] sm:%s207] %v222
                %v224 = vld [vmem:[%s214 + $0x120] sm:%s207]
                %225 = vst [vmem:[%s215 + $0x30] sm:%s207] %v224
                %v226 = vld [vmem:[%s214 + $0x168] sm:%s207]
                %227 = vst [vmem:[%s215 + $0x3c] sm:%s207] %v226
                %v228 = vld [vmem:[%s214 + $0x1b0] sm:%s207]
                %229 = vst [vmem:[%s215 + $0x48] sm:%s207] %v228
              $region44: #{wsddn_forward.12} parent=31 // loop_footer
                %s213 = sadd.s32 1, %s209
              $region45: #{wsddn_forward.12} parent=31 // loop_footer_branch
                %208 = sbr.rel target = $region41
              $region46: #{wsddn_forward.12} parent=31 // loop_exit
                _
            $region32: #{wsddn_forward.12} parent=27 // pred_fallthru
              _
          $region28: #{wsddn_forward.12} parent=23 // pred_fallthru
            _
          %230 = vnop
        $region24: #{wsddn_forward.12} parent=19 // pred_fallthru
          _
        // Predicated region
        $region47: #{wsddn_forward.12} parent=19 // pred_check
          %p231 = pneg %p78
        $region48: #{wsddn_forward.12} parent=19 // pred_check_branch
          %233 = sbr.rel (%p231) target = $region50
        $region49: #{wsddn_forward.12} parent=19 // pred_region
          %s234 = smul.u32 48, %s18
          %s235 = smul.u32 2, %s17
          %p236 = scmp.lt.s32.totalorder %s234, 287
          %s237 = scalar_select %p236, %s234, 287
          %p238 = scmp.lt.s32.totalorder %s235, 1
          %s239 = scalar_select %p238, %s235, 1
          %s240 = smul.addr %s237, 2
          %s241 = sadd.s32 %s239, %s240
          %s242 = smul.addr %s241, 4
          %s243 = scalar_lea.vmem %s1, %s242
          %s244 = smul.u32 48, %s18
          %s245 = smul.u32 2, %s17
        $region50: #{wsddn_forward.12} parent=19 // pred_fallthru
          _
      $region20: #{wsddn_forward.12} parent=5 // pred_fallthru
        _
      %p246 = scmp.le.s32.totalorder 1, %s9
      %p247 = scmp.lt.s32.totalorder %s9, 7
      %p248 = pnand %p246, %p247
      %p249 = pneg %p248
      // Predicated region
      $region51: #{wsddn_forward.12} parent=5 // pred_check
        _
      $region52: #{wsddn_forward.12} parent=5 // pred_check_branch
        %251 = sbr.rel (%p248) target = $region54
      $region53: #{wsddn_forward.12} parent=5 // pred_region
        %s252 = ssub.s32 %s9, 1
        %s253 = sand.u32 %s43, 1
        %s254 = sand.u32 %s43, 1
        %s255 = smul.addr %s254, 84
        %s256 = scalar_lea.vmem [#allocation2], %s255
        // Predicated region
        $region55: #{wsddn_forward.12} parent=53 // pred_check
          %p257 = pneg %p56
        $region56: #{wsddn_forward.12} parent=53 // pred_check_branch
          %259 = sbr.rel (%p257) target = $region58
        $region57: #{wsddn_forward.12} parent=53 // pred_region
          _
        $region58: #{wsddn_forward.12} parent=53 // pred_fallthru
          _
        %s260 = sand.u32 %s43, 1
        %s261 = sand.u32 %s43, 1
        %s262 = smul.addr %s261, 84
        %s263 = scalar_lea.vmem [#allocation2], %s262
        %p264 = pneg %p56
        %p265 = pneg %p53
        %s266 = smul.u32 48, %s21
        %s267 = smul.u32 2, %s20
        %p268 = scmp.lt.s32.totalorder %s266, 287
        %s269 = scalar_select %p268, %s266, 287
        %p270 = scmp.lt.s32.totalorder %s267, 1
        %s271 = scalar_select %p270, %s267, 1
        %s272 = smul.addr %s269, 2
        %s273 = sadd.s32 %s271, %s272
        %s274 = smul.addr %s273, 4
        %s275 = scalar_lea.vmem %s1, %s274
        %p276 = pneg %p84
        %p277 = pneg %p81
        %s278 = smul.u32 2, %s20
        %p279 = scmp.lt.s32.totalorder %s278, 1
        %s280 = scalar_select %p279, %s278, 1
        %s281 = scalar_lea.vmem %s2, %s280
        %p282 = pneg %p110
        %p283 = pneg %p107
        %p284 = pneg %p138
        %p285 = pneg %p135
        %s286 = smul.u32 7, %s19
        %s287 = smul.u32 2, %s20
        %p288 = scmp.lt.s32.totalorder %s286, 6
        %s289 = scalar_select %p288, %s286, 6
        %p290 = scmp.lt.s32.totalorder %s287, 1
        %s291 = scalar_select %p290, %s287, 1
        %s292 = smul.addr %s289, 2
        %s293 = sadd.s32 %s291, %s292
        %s294 = smul.addr %s293, 8
        %s295 = scalar_lea.vmem %s3, %s294
        %s296 = smul.u32 7, %s19
        %s297 = smul.u32 3, %s21
        %s298 = smul.u32 48, %s21
        %s299 = smul.u32 2, %s20
        %p300 = scmp.lt.s32.totalorder %s298, 287
        %s301 = scalar_select %p300, %s298, 287
        %p302 = scmp.lt.s32.totalorder %s299, 1
        %s303 = scalar_select %p302, %s299, 1
        %s304 = smul.addr %s301, 2
        %s305 = sadd.s32 %s303, %s304
        %s306 = smul.addr %s305, 4
        %s307 = scalar_lea.vmem %s1, %s306
        %s308 = smul.u32 48, %s21
        %s309 = smul.u32 2, %s20
        %s310 = smul.u32 2, %s20
        %p311 = scmp.lt.s32.totalorder %s310, 1
        %s312 = scalar_select %p311, %s310, 1
        %s313 = scalar_lea.vmem %s2, %s312
        %s314 = smul.u32 2, %s20
        %s315 = smul.u32 7, %s19
        %s316 = smul.u32 2, %s20
        %p317 = scmp.lt.s32.totalorder %s315, 6
        %s318 = scalar_select %p317, %s315, 6
        %p319 = scmp.lt.s32.totalorder %s316, 1
        %s320 = scalar_select %p319, %s316, 1
        %s321 = smul.addr %s318, 2
        %s322 = sadd.s32 %s320, %s321
        %s323 = smul.addr %s322, 8
        %s324 = scalar_lea.vmem %s3, %s323
        %s325 = smul.u32 7, %s19
        %s326 = smul.u32 2, %s20
        %p327 = scmp.eq.s32.totalorder %s21, 0
        // Predicated region
        $region59: #{wsddn_forward.12} parent=53 // pred_check
          %p328 = pneg %p327
        $region60: #{wsddn_forward.12} parent=53 // pred_check_branch
          %330 = sbr.rel (%p328) target = $region62
        $region61: #{wsddn_forward.12} parent=53 // pred_region
          %331 = vst [vmem:[%s324] sm:$0xff] 0.0
          %332 = vst [vmem:[%s324 + $0x8] sm:$0xff] 0.0
          %333 = vst [vmem:[%s324 + $0x10] sm:$0xff] 0.0
          %334 = vst [vmem:[%s324 + $0x18] sm:$0xff] 0.0
          %335 = vst [vmem:[%s324 + $0x20] sm:$0xff] 0.0
          %336 = vst [vmem:[%s324 + $0x28] sm:$0xff] 0.0
          %337 = vst [vmem:[%s324 + $0x30] sm:$0xff] 0.0
          %338 = vst [vmem:[%s324 + $0x38] sm:$0xff] 0.0
          %339 = vst [vmem:[%s324 + $0x40] sm:$0xff] 0.0
          %340 = vst [vmem:[%s324 + $0x48] sm:$0xff] 0.0
          %341 = vst [vmem:[%s324 + $0x50] sm:$0xff] 0.0
          %342 = vst [vmem:[%s324 + $0x58] sm:$0xff] 0.0
          %343 = vst [vmem:[%s324 + $0x60] sm:$0xff] 0.0
          %344 = vst [vmem:[%s324 + $0x68] sm:$0xff] 0.0
        $region62: #{wsddn_forward.12} parent=53 // pred_fallthru
          _
        %v345 = vld [vmem:[%s324] sm:$0xff]
        %v346 = vld [vmem:[%s324 + $0x8] sm:$0xff]
        %v347 = vld [vmem:[%s324 + $0x10] sm:$0xff]
        %v348 = vld [vmem:[%s324 + $0x18] sm:$0xff]
        %v349 = vld [vmem:[%s324 + $0x20] sm:$0xff]
        %v350 = vld [vmem:[%s324 + $0x28] sm:$0xff]
        %v351 = vld [vmem:[%s324 + $0x30] sm:$0xff]
        %v352 = vld [vmem:[%s324 + $0x38] sm:$0xff]
        %v353 = vld [vmem:[%s324 + $0x40] sm:$0xff]
        %v354 = vld [vmem:[%s324 + $0x48] sm:$0xff]
        %v355 = vld [vmem:[%s324 + $0x50] sm:$0xff]
        %v356 = vld [vmem:[%s324 + $0x58] sm:$0xff]
        %v357 = vld [vmem:[%s324 + $0x60] sm:$0xff]
        %v358 = vld [vmem:[%s324 + $0x68] sm:$0xff]
        %v359 = vld [vmem:[%s256] sm:$0xff]
        %v360 = vld [vmem:[%s256 + $0x8] sm:$0xf]
        %v361 = vld [vmem:[%s256 + $0xc] sm:$0xff]
        %v362 = vld [vmem:[%s256 + $0x14] sm:$0xf]
        %v363 = vld [vmem:[%s256 + $0x18] sm:$0xff]
        %v364 = vld [vmem:[%s256 + $0x20] sm:$0xf]
        %v365 = vld [vmem:[%s256 + $0x24] sm:$0xff]
        %v366 = vld [vmem:[%s256 + $0x2c] sm:$0xf]
        %v367 = vld [vmem:[%s256 + $0x30] sm:$0xff]
        %v368 = vld [vmem:[%s256 + $0x38] sm:$0xf]
        %v369 = vld [vmem:[%s256 + $0x3c] sm:$0xff]
        %v370 = vld [vmem:[%s256 + $0x44] sm:$0xf]
        %v371 = vld [vmem:[%s256 + $0x48] sm:$0xff]
        %v372 = vld [vmem:[%s256 + $0x50] sm:$0xf]
        %v373 = vld [vmem:[%s307] sm:$0xff]
        %v374 = vld [vmem:[%s307 + $0x8] sm:$0xff]
        %v375 = vld [vmem:[%s307 + $0x10] sm:$0xff]
        %v376 = vld [vmem:[%s307 + $0x18] sm:$0xff]
        %v377 = vld [vmem:[%s307 + $0x20] sm:$0xff]
        %v378 = vld [vmem:[%s307 + $0x28] sm:$0xff]
        %v379 = vld [vmem:[%s307 + $0x30] sm:$0xff]
        %v380 = vld [vmem:[%s307 + $0x38] sm:$0xff]
        %v381 = vld [vmem:[%s307 + $0x40] sm:$0xff]
        %v382 = vld [vmem:[%s307 + $0x48] sm:$0xff]
        %v383 = vld [vmem:[%s307 + $0x50] sm:$0xff]
        %v384 = vld [vmem:[%s307 + $0x58] sm:$0xff]
        %v385 = vld [vmem:[%s307 + $0x60] sm:$0xff]
        %v386 = vld [vmem:[%s307 + $0x68] sm:$0xff]
        %v387 = vld [vmem:[%s307 + $0x70] sm:$0xff]
        %v388 = vld [vmem:[%s307 + $0x78] sm:$0xff]
        %v389 = vld [vmem:[%s307 + $0x80] sm:$0xff]
        %v390 = vld [vmem:[%s307 + $0x88] sm:$0xff]
        %v391 = vld [vmem:[%s307 + $0x90] sm:$0xff]
        %v392 = vld [vmem:[%s307 + $0x98] sm:$0xff]
        %v393 = vld [vmem:[%s307 + $0xa0] sm:$0xff]
        %v394 = vld [vmem:[%s307 + $0xa8] sm:$0xff]
        %v395 = vld [vmem:[%s307 + $0xb0] sm:$0xff]
        %v396 = vld [vmem:[%s307 + $0xb8] sm:$0xff]
        %v397 = vld [vmem:[%s307 + $0xc0] sm:$0xff]
        %v398 = vld [vmem:[%s307 + $0xc8] sm:$0xff]
        %v399 = vld [vmem:[%s307 + $0xd0] sm:$0xff]
        %v400 = vld [vmem:[%s307 + $0xd8] sm:$0xff]
        %v401 = vld [vmem:[%s307 + $0xe0] sm:$0xff]
        %v402 = vld [vmem:[%s307 + $0xe8] sm:$0xff]
        %v403 = vld [vmem:[%s307 + $0xf0] sm:$0xff]
        %v404 = vld [vmem:[%s307 + $0xf8] sm:$0xff]
        %v405 = vld [vmem:[%s307 + $0x100] sm:$0xff]
        %v406 = vld [vmem:[%s307 + $0x108] sm:$0xff]
        %v407 = vld [vmem:[%s307 + $0x110] sm:$0xff]
        %v408 = vld [vmem:[%s307 + $0x118] sm:$0xff]
        %v409 = vld [vmem:[%s307 + $0x120] sm:$0xff]
        %v410 = vld [vmem:[%s307 + $0x128] sm:$0xff]
        %v411 = vld [vmem:[%s307 + $0x130] sm:$0xff]
        %v412 = vld [vmem:[%s307 + $0x138] sm:$0xff]
        %v413 = vld [vmem:[%s307 + $0x140] sm:$0xff]
        %v414 = vld [vmem:[%s307 + $0x148] sm:$0xff]
        %v415 = vld [vmem:[%s307 + $0x150] sm:$0xff]
        %v416 = vld [vmem:[%s307 + $0x158] sm:$0xff]
        %v417 = vld [vmem:[%s307 + $0x160] sm:$0xff]
        %v418 = vld [vmem:[%s307 + $0x168] sm:$0xff]
        %v419 = vld [vmem:[%s307 + $0x170] sm:$0xff]
        %v420 = vld [vmem:[%s307 + $0x178] sm:$0xff]
        %v435 = vunpack.c.l.b16 %v359
        %v436 = vunpack.c.h.b16 %v359
        %v437 = vunpack.c.l.b16 %v360
        %v438 = vunpack.c.l.b16 %v361
        %v439 = vunpack.c.h.b16 %v361
        %v440 = vunpack.c.l.b16 %v362
        %v441 = vunpack.c.l.b16 %v363
        %v442 = vunpack.c.h.b16 %v363
        %v443 = vunpack.c.l.b16 %v364
        %v444 = vunpack.c.l.b16 %v365
        %v445 = vunpack.c.h.b16 %v365
        %v446 = vunpack.c.l.b16 %v366
        %v447 = vunpack.c.l.b16 %v367
        %v448 = vunpack.c.h.b16 %v367
        %v449 = vunpack.c.l.b16 %v368
        %v450 = vunpack.c.l.b16 %v369
        %v451 = vunpack.c.h.b16 %v369
        %v452 = vunpack.c.l.b16 %v370
        %v453 = vunpack.c.l.b16 %v371
        %v454 = vunpack.c.h.b16 %v371
        %v455 = vunpack.c.l.b16 %v372
        %v456 = vpack.c.b16 %v438, %v435
        %v457 = vpack.c.b16 %v439, %v436
        %v458 = vpack.c.b16 %v440, %v437
        %v459 = vpack.c.b16 %v444, %v441
        %v460 = vpack.c.b16 %v445, %v442
        %v461 = vpack.c.b16 %v446, %v443
        %v462 = vpack.c.b16 %v450, %v447
        %v463 = vpack.c.b16 %v451, %v448
        %v464 = vpack.c.b16 %v452, %v449
        %v465 = vpack.c.b16 %v453, %v453
        %v466 = vpack.c.b16 %v454, %v454
        %v467 = vpack.c.b16 %v455, %v455
        %v528 = vunpack.c.l.b16 %v373
        %v529 = vunpack.c.h.b16 %v373
        %v530 = vunpack.c.l.b16 %v374
        %v531 = vunpack.c.h.b16 %v374
        %v532 = vunpack.c.l.b16 %v375
        %v533 = vunpack.c.h.b16 %v375
        %v534 = vunpack.c.l.b16 %v376
        %v535 = vunpack.c.h.b16 %v376
        %v536 = vunpack.c.l.b16 %v377
        %v537 = vunpack.c.h.b16 %v377
        %v538 = vunpack.c.l.b16 %v378
        %v539 = vunpack.c.h.b16 %v378
        %v540 = vunpack.c.l.b16 %v379
        %v541 = vunpack.c.h.b16 %v379
        %v542 = vunpack.c.l.b16 %v380
        %v543 = vunpack.c.h.b16 %v380
        %v544 = vunpack.c.l.b16 %v381
        %v545 = vunpack.c.h.b16 %v381
        %v546 = vunpack.c.l.b16 %v382
        %v547 = vunpack.c.h.b16 %v382
        %v548 = vunpack.c.l.b16 %v383
        %v549 = vunpack.c.h.b16 %v383
        %v550 = vunpack.c.l.b16 %v384
        %v551 = vunpack.c.h.b16 %v384
        %v552 = vunpack.c.l.b16 %v385
        %v553 = vunpack.c.h.b16 %v385
        %v554 = vunpack.c.l.b16 %v386
        %v555 = vunpack.c.h.b16 %v386
        %v556 = vunpack.c.l.b16 %v387
        %v557 = vunpack.c.h.b16 %v387
        %v558 = vunpack.c.l.b16 %v388
        %v559 = vunpack.c.h.b16 %v388
        %v560 = vunpack.c.l.b16 %v389
        %v561 = vunpack.c.h.b16 %v389
        %v562 = vunpack.c.l.b16 %v390
        %v563 = vunpack.c.h.b16 %v390
        %v564 = vunpack.c.l.b16 %v391
        %v565 = vunpack.c.h.b16 %v391
        %v566 = vunpack.c.l.b16 %v392
        %v567 = vunpack.c.h.b16 %v392
        %v568 = vunpack.c.l.b16 %v393
        %v569 = vunpack.c.h.b16 %v393
        %v570 = vunpack.c.l.b16 %v394
        %v571 = vunpack.c.h.b16 %v394
        %v572 = vunpack.c.l.b16 %v395
        %v573 = vunpack.c.h.b16 %v395
        %v574 = vunpack.c.l.b16 %v396
        %v575 = vunpack.c.h.b16 %v396
        %v576 = vunpack.c.l.b16 %v397
        %v577 = vunpack.c.h.b16 %v397
        %v578 = vunpack.c.l.b16 %v398
        %v579 = vunpack.c.h.b16 %v398
        %v580 = vunpack.c.l.b16 %v399
        %v581 = vunpack.c.h.b16 %v399
        %v582 = vunpack.c.l.b16 %v400
        %v583 = vunpack.c.h.b16 %v400
        %v584 = vunpack.c.l.b16 %v401
        %v585 = vunpack.c.h.b16 %v401
        %v586 = vunpack.c.l.b16 %v402
        %v587 = vunpack.c.h.b16 %v402
        %v588 = vunpack.c.l.b16 %v403
        %v589 = vunpack.c.h.b16 %v403
        %v590 = vunpack.c.l.b16 %v404
        %v591 = vunpack.c.h.b16 %v404
        %v592 = vunpack.c.l.b16 %v405
        %v593 = vunpack.c.h.b16 %v405
        %v594 = vunpack.c.l.b16 %v406
        %v595 = vunpack.c.h.b16 %v406
        %v596 = vunpack.c.l.b16 %v407
        %v597 = vunpack.c.h.b16 %v407
        %v598 = vunpack.c.l.b16 %v408
        %v599 = vunpack.c.h.b16 %v408
        %v600 = vunpack.c.l.b16 %v409
        %v601 = vunpack.c.h.b16 %v409
        %v602 = vunpack.c.l.b16 %v410
        %v603 = vunpack.c.h.b16 %v410
        %v604 = vunpack.c.l.b16 %v411
        %v605 = vunpack.c.h.b16 %v411
        %v606 = vunpack.c.l.b16 %v412
        %v607 = vunpack.c.h.b16 %v412
        %v608 = vunpack.c.l.b16 %v413
        %v609 = vunpack.c.h.b16 %v413
        %v610 = vunpack.c.l.b16 %v414
        %v611 = vunpack.c.h.b16 %v414
        %v612 = vunpack.c.l.b16 %v415
        %v613 = vunpack.c.h.b16 %v415
        %v614 = vunpack.c.l.b16 %v416
        %v615 = vunpack.c.h.b16 %v416
        %v616 = vunpack.c.l.b16 %v417
        %v617 = vunpack.c.h.b16 %v417
        %v618 = vunpack.c.l.b16 %v418
        %v619 = vunpack.c.h.b16 %v418
        %v620 = vunpack.c.l.b16 %v419
        %v621 = vunpack.c.h.b16 %v419
        %v622 = vunpack.c.l.b16 %v420
        %v623 = vunpack.c.h.b16 %v420
        %v624 = vpack.c.b16 %v530, %v528
        %v625 = vpack.c.b16 %v531, %v529
        %v626 = vpack.c.b16 %v534, %v532
        %v627 = vpack.c.b16 %v535, %v533
        %v628 = vpack.c.b16 %v538, %v536
        %v629 = vpack.c.b16 %v539, %v537
        %v630 = vpack.c.b16 %v542, %v540
        %v631 = vpack.c.b16 %v543, %v541
        %v632 = vpack.c.b16 %v546, %v544
        %v633 = vpack.c.b16 %v547, %v545
        %v634 = vpack.c.b16 %v550, %v548
        %v635 = vpack.c.b16 %v551, %v549
        %v636 = vpack.c.b16 %v554, %v552
        %v637 = vpack.c.b16 %v555, %v553
        %v638 = vpack.c.b16 %v558, %v556
        %v639 = vpack.c.b16 %v559, %v557
        %v640 = vpack.c.b16 %v562, %v560
        %v641 = vpack.c.b16 %v563, %v561
        %v642 = vpack.c.b16 %v566, %v564
        %v643 = vpack.c.b16 %v567, %v565
        %v644 = vpack.c.b16 %v570, %v568
        %v645 = vpack.c.b16 %v571, %v569
        %v646 = vpack.c.b16 %v574, %v572
        %v647 = vpack.c.b16 %v575, %v573
        %v648 = vpack.c.b16 %v578, %v576
        %v649 = vpack.c.b16 %v579, %v577
        %v650 = vpack.c.b16 %v582, %v580
        %v651 = vpack.c.b16 %v583, %v581
        %v652 = vpack.c.b16 %v586, %v584
        %v653 = vpack.c.b16 %v587, %v585
        %v654 = vpack.c.b16 %v590, %v588
        %v655 = vpack.c.b16 %v591, %v589
        %v656 = vpack.c.b16 %v594, %v592
        %v657 = vpack.c.b16 %v595, %v593
        %v658 = vpack.c.b16 %v598, %v596
        %v659 = vpack.c.b16 %v599, %v597
        %v660 = vpack.c.b16 %v602, %v600
        %v661 = vpack.c.b16 %v603, %v601
        %v662 = vpack.c.b16 %v606, %v604
        %v663 = vpack.c.b16 %v607, %v605
        %v664 = vpack.c.b16 %v610, %v608
        %v665 = vpack.c.b16 %v611, %v609
        %v666 = vpack.c.b16 %v614, %v612
        %v667 = vpack.c.b16 %v615, %v613
        %v668 = vpack.c.b16 %v618, %v616
        %v669 = vpack.c.b16 %v619, %v617
        %v670 = vpack.c.b16 %v622, %v620
        %v671 = vpack.c.b16 %v623, %v621
        %720 = vmatpush.bf16.msra.mxu0 %v638
        %721 = vmatpush.bf16.msra.mxu0 %v636
        %722 = vmatpush.bf16.msra.mxu0 %v634
        %723 = vmatpush.bf16.msra.mxu0 %v632
        %724 = vmatpush.bf16.msra.mxu0 %v630
        %725 = vmatpush.bf16.msra.mxu0 %v628
        %726 = vmatpush.bf16.msra.mxu0 %v626
        %727 = vmatpush.bf16.msra.mxu0 %v624
        %728 = vmatmul.bf16.gmra.mxu0 %v456
        %v729 = vpop.f32.mrf.mxu0
        %v730 = vadd.f32 0.0, %v729
        %v731 = vpop.f32.mrf.mxu0
        %v732 = vadd.f32 0.0, %v731
        %733 = vmatmul.bf16.gmra.mxu0 %v459
        %v734 = vpop.f32.mrf.mxu0
        %v735 = vadd.f32 0.0, %v734
        %v736 = vpop.f32.mrf.mxu0
        %v737 = vadd.f32 0.0, %v736
        %738 = vmatmul.bf16.gmra.mxu0 %v462
        %v739 = vpop.f32.mrf.mxu0
        %v740 = vadd.f32 0.0, %v739
        %v741 = vpop.f32.mrf.mxu0
        %v742 = vadd.f32 0.0, %v741
        %743 = vmatmul.bf16.gmra.mxu0 %v465
        %v744 = vpop.f32.mrf.mxu0
        %v745 = vadd.f32 0.0, %v744
        %v746 = vpop.f32.mrf.mxu0
        %747 = vdwg.mxu0
        %748 = vmatpush.bf16.msra.mxu0 %v654
        %749 = vmatpush.bf16.msra.mxu0 %v652
        %750 = vmatpush.bf16.msra.mxu0 %v650
        %751 = vmatpush.bf16.msra.mxu0 %v648
        %752 = vmatpush.bf16.msra.mxu0 %v646
        %753 = vmatpush.bf16.msra.mxu0 %v644
        %754 = vmatpush.bf16.msra.mxu0 %v642
        %755 = vmatpush.bf16.msra.mxu0 %v640
        %756 = vmatmul.bf16.gmra.mxu0 %v457
        %v757 = vpop.f32.mrf.mxu0
        %v758 = vadd.f32 %v730, %v757
        %v759 = vpop.f32.mrf.mxu0
        %v760 = vadd.f32 %v732, %v759
        %761 = vmatmul.bf16.gmra.mxu0 %v460
        %v762 = vpop.f32.mrf.mxu0
        %v763 = vadd.f32 %v735, %v762
        %v764 = vpop.f32.mrf.mxu0
        %v765 = vadd.f32 %v737, %v764
        %766 = vmatmul.bf16.gmra.mxu0 %v463
        %v767 = vpop.f32.mrf.mxu0
        %v768 = vadd.f32 %v740, %v767
        %v769 = vpop.f32.mrf.mxu0
        %v770 = vadd.f32 %v742, %v769
        %771 = vmatmul.bf16.gmra.mxu0 %v466
        %v772 = vpop.f32.mrf.mxu0
        %v773 = vadd.f32 %v745, %v772
        %v774 = vpop.f32.mrf.mxu0
        %775 = vdwg.mxu0
        %776 = vmatpush.bf16.msra.mxu0 %v670
        %777 = vmatpush.bf16.msra.mxu0 %v668
        %778 = vmatpush.bf16.msra.mxu0 %v666
        %779 = vmatpush.bf16.msra.mxu0 %v664
        %780 = vmatpush.bf16.msra.mxu0 %v662
        %781 = vmatpush.bf16.msra.mxu0 %v660
        %782 = vmatpush.bf16.msra.mxu0 %v658
        %783 = vmatpush.bf16.msra.mxu0 %v656
        %784 = vmatmul.bf16.gmra.mxu0 %v458
        %v785 = vpop.f32.mrf.mxu0
        %v786 = vadd.f32 %v758, %v785
        %v787 = vpop.f32.mrf.mxu0
        %v788 = vadd.f32 %v760, %v787
        %789 = vmatmul.bf16.gmra.mxu0 %v461
        %v790 = vpop.f32.mrf.mxu0
        %v791 = vadd.f32 %v763, %v790
        %v792 = vpop.f32.mrf.mxu0
        %v793 = vadd.f32 %v765, %v792
        %794 = vmatmul.bf16.gmra.mxu0 %v464
        %v795 = vpop.f32.mrf.mxu0
        %v796 = vadd.f32 %v768, %v795
        %v797 = vpop.f32.mrf.mxu0
        %v798 = vadd.f32 %v770, %v797
        %799 = vmatmul.bf16.gmra.mxu0 %v467
        %v800 = vpop.f32.mrf.mxu0
        %v801 = vadd.f32 %v773, %v800
        %v802 = vpop.f32.mrf.mxu0
        %803 = vdwg.mxu0
        %804 = vmatpush.bf16.msra.mxu0 %v639
        %805 = vmatpush.bf16.msra.mxu0 %v637
        %806 = vmatpush.bf16.msra.mxu0 %v635
        %807 = vmatpush.bf16.msra.mxu0 %v633
        %808 = vmatpush.bf16.msra.mxu0 %v631
        %809 = vmatpush.bf16.msra.mxu0 %v629
        %810 = vmatpush.bf16.msra.mxu0 %v627
        %811 = vmatpush.bf16.msra.mxu0 %v625
        %812 = vmatmul.bf16.gmra.mxu0 %v456
        %v813 = vpop.f32.mrf.mxu0
        %v814 = vadd.f32 0.0, %v813
        %v815 = vpop.f32.mrf.mxu0
        %v816 = vadd.f32 0.0, %v815
        %817 = vmatmul.bf16.gmra.mxu0 %v459
        %v818 = vpop.f32.mrf.mxu0
        %v819 = vadd.f32 0.0, %v818
        %v820 = vpop.f32.mrf.mxu0
        %v821 = vadd.f32 0.0, %v820
        %822 = vmatmul.bf16.gmra.mxu0 %v462
        %v823 = vpop.f32.mrf.mxu0
        %v824 = vadd.f32 0.0, %v823
        %v825 = vpop.f32.mrf.mxu0
        %v826 = vadd.f32 0.0, %v825
        %827 = vmatmul.bf16.gmra.mxu0 %v465
        %v828 = vpop.f32.mrf.mxu0
        %v829 = vadd.f32 0.0, %v828
        %v830 = vpop.f32.mrf.mxu0
        %831 = vdwg.mxu0
        %832 = vmatpush.bf16.msra.mxu0 %v655
        %833 = vmatpush.bf16.msra.mxu0 %v653
        %834 = vmatpush.bf16.msra.mxu0 %v651
        %835 = vmatpush.bf16.msra.mxu0 %v649
        %836 = vmatpush.bf16.msra.mxu0 %v647
        %837 = vmatpush.bf16.msra.mxu0 %v645
        %838 = vmatpush.bf16.msra.mxu0 %v643
        %839 = vmatpush.bf16.msra.mxu0 %v641
        %840 = vmatmul.bf16.gmra.mxu0 %v457
        %v841 = vpop.f32.mrf.mxu0
        %v842 = vadd.f32 %v814, %v841
        %v843 = vpop.f32.mrf.mxu0
        %v844 = vadd.f32 %v816, %v843
        %845 = vmatmul.bf16.gmra.mxu0 %v460
        %v846 = vpop.f32.mrf.mxu0
        %v847 = vadd.f32 %v819, %v846
        %v848 = vpop.f32.mrf.mxu0
        %v849 = vadd.f32 %v821, %v848
        %850 = vmatmul.bf16.gmra.mxu0 %v463
        %v851 = vpop.f32.mrf.mxu0
        %v852 = vadd.f32 %v824, %v851
        %v853 = vpop.f32.mrf.mxu0
        %v854 = vadd.f32 %v826, %v853
        %855 = vmatmul.bf16.gmra.mxu0 %v466
        %v856 = vpop.f32.mrf.mxu0
        %v857 = vadd.f32 %v829, %v856
        %v858 = vpop.f32.mrf.mxu0
        %859 = vdwg.mxu0
        %860 = vmatpush.bf16.msra.mxu0 %v671
        %861 = vmatpush.bf16.msra.mxu0 %v669
        %862 = vmatpush.bf16.msra.mxu0 %v667
        %863 = vmatpush.bf16.msra.mxu0 %v665
        %864 = vmatpush.bf16.msra.mxu0 %v663
        %865 = vmatpush.bf16.msra.mxu0 %v661
        %866 = vmatpush.bf16.msra.mxu0 %v659
        %867 = vmatpush.bf16.msra.mxu0 %v657
        %868 = vmatmul.bf16.gmra.mxu0 %v458
        %v869 = vpop.f32.mrf.mxu0
        %v870 = vadd.f32 %v842, %v869
        %v871 = vpop.f32.mrf.mxu0
        %v872 = vadd.f32 %v844, %v871
        %873 = vmatmul.bf16.gmra.mxu0 %v461
        %v874 = vpop.f32.mrf.mxu0
        %v875 = vadd.f32 %v847, %v874
        %v876 = vpop.f32.mrf.mxu0
        %v877 = vadd.f32 %v849, %v876
        %878 = vmatmul.bf16.gmra.mxu0 %v464
        %v879 = vpop.f32.mrf.mxu0
        %v880 = vadd.f32 %v852, %v879
        %v881 = vpop.f32.mrf.mxu0
        %v882 = vadd.f32 %v854, %v881
        %883 = vmatmul.bf16.gmra.mxu0 %v467
        %v884 = vpop.f32.mrf.mxu0
        %v885 = vadd.f32 %v857, %v884
        %v886 = vpop.f32.mrf.mxu0
        %887 = vdwg.mxu0
        %v888 = vadd.f32 %v345, %v786
        %v889 = vadd.f32 %v346, %v870
        %v890 = vadd.f32 %v347, %v788
        %v891 = vadd.f32 %v348, %v872
        %v892 = vadd.f32 %v349, %v791
        %v893 = vadd.f32 %v350, %v875
        %v894 = vadd.f32 %v351, %v793
        %v895 = vadd.f32 %v352, %v877
        %v896 = vadd.f32 %v353, %v796
        %v897 = vadd.f32 %v354, %v880
        %v898 = vadd.f32 %v355, %v798
        %v899 = vadd.f32 %v356, %v882
        %v900 = vadd.f32 %v357, %v801
        %v901 = vadd.f32 %v358, %v885
        %902 = vst [vmem:[%s324] sm:$0xff] %v888
        %903 = vst [vmem:[%s324 + $0x8] sm:$0xff] %v889
        %904 = vst [vmem:[%s324 + $0x10] sm:$0xff] %v890
        %905 = vst [vmem:[%s324 + $0x18] sm:$0xff] %v891
        %906 = vst [vmem:[%s324 + $0x20] sm:$0xff] %v892
        %907 = vst [vmem:[%s324 + $0x28] sm:$0xff] %v893
        %908 = vst [vmem:[%s324 + $0x30] sm:$0xff] %v894
        %909 = vst [vmem:[%s324 + $0x38] sm:$0xff] %v895
        %910 = vst [vmem:[%s324 + $0x40] sm:$0xff] %v896
        %911 = vst [vmem:[%s324 + $0x48] sm:$0xff] %v897
        %912 = vst [vmem:[%s324 + $0x50] sm:$0xff] %v898
        %913 = vst [vmem:[%s324 + $0x58] sm:$0xff] %v899
        %914 = vst [vmem:[%s324 + $0x60] sm:$0xff] %v900
        %915 = vst [vmem:[%s324 + $0x68] sm:$0xff] %v901
        %p916 = scmp.eq.s32.totalorder %s21, 5
        // Predicated region
        $region63: #{wsddn_forward.12} parent=53 // pred_check
          %p917 = pneg %p916
        $region64: #{wsddn_forward.12} parent=53 // pred_check_branch
          %919 = sbr.rel (%p917) target = $region66
        $region65: #{wsddn_forward.12} parent=53 // pred_region
          %v920 = vld [vmem:[%s324] sm:$0xff]
          %v921 = vld [vmem:[%s324 + $0x8] sm:$0xff]
          %v922 = vld [vmem:[%s324 + $0x10] sm:$0xff]
          %v923 = vld [vmem:[%s324 + $0x18] sm:$0xff]
          %v924 = vld [vmem:[%s324 + $0x20] sm:$0xff]
          %v925 = vld [vmem:[%s324 + $0x28] sm:$0xff]
          %v926 = vld [vmem:[%s324 + $0x30] sm:$0xff]
          %v927 = vld [vmem:[%s324 + $0x38] sm:$0xff]
          %v928 = vld [vmem:[%s324 + $0x40] sm:$0xff]
          %v929 = vld [vmem:[%s324 + $0x48] sm:$0xff]
          %v930 = vld [vmem:[%s324 + $0x50] sm:$0xff]
          %v931 = vld [vmem:[%s324 + $0x58] sm:$0xff]
          %v932 = vld [vmem:[%s324 + $0x60] sm:$0xff]
          %v933 = vld [vmem:[%s324 + $0x68] sm:$0xff]
          %v934 = vld [vmem:[%s313] sm:$0x3]
          %v936 = vperm.slane %v934, 0
          %v937 = vperm.slane %v934, 1
          %v940 = vadd.f32 %v920, %v936
          %v941 = vadd.f32 %v921, %v937
          %v942 = vadd.f32 %v922, %v936
          %v943 = vadd.f32 %v923, %v937
          %v944 = vadd.f32 %v924, %v936
          %v945 = vadd.f32 %v925, %v937
          %v946 = vadd.f32 %v926, %v936
          %v947 = vadd.f32 %v927, %v937
          %v948 = vadd.f32 %v928, %v936
          %v949 = vadd.f32 %v929, %v937
          %v950 = vadd.f32 %v930, %v936
          %v951 = vadd.f32 %v931, %v937
          %v952 = vadd.f32 %v932, %v936
          %v953 = vadd.f32 %v933, %v937
          %v954 = vmax.f32 %v940, 0.0
          %v955 = vmax.f32 %v941, 0.0
          %v956 = vmax.f32 %v942, 0.0
          %v957 = vmax.f32 %v943, 0.0
          %v958 = vmax.f32 %v944, 0.0
          %v959 = vmax.f32 %v945, 0.0
          %v960 = vmax.f32 %v946, 0.0
          %v961 = vmax.f32 %v947, 0.0
          %v962 = vmax.f32 %v948, 0.0
          %v963 = vmax.f32 %v949, 0.0
          %v964 = vmax.f32 %v950, 0.0
          %v965 = vmax.f32 %v951, 0.0
          %v966 = vmax.f32 %v952, 0.0
          %v967 = vmax.f32 %v953, 0.0
          %968 = vst [vmem:[%s324] sm:$0xff] %v954
          %969 = vst [vmem:[%s324 + $0x8] sm:$0xff] %v955
          %970 = vst [vmem:[%s324 + $0x10] sm:$0xff] %v956
          %971 = vst [vmem:[%s324 + $0x18] sm:$0xff] %v957
          %972 = vst [vmem:[%s324 + $0x20] sm:$0xff] %v958
          %973 = vst [vmem:[%s324 + $0x28] sm:$0xff] %v959
          %974 = vst [vmem:[%s324 + $0x30] sm:$0xff] %v960
          %975 = vst [vmem:[%s324 + $0x38] sm:$0xff] %v961
          %976 = vst [vmem:[%s324 + $0x40] sm:$0xff] %v962
          %977 = vst [vmem:[%s324 + $0x48] sm:$0xff] %v963
          %978 = vst [vmem:[%s324 + $0x50] sm:$0xff] %v964
          %979 = vst [vmem:[%s324 + $0x58] sm:$0xff] %v965
          %980 = vst [vmem:[%s324 + $0x60] sm:$0xff] %v966
          %981 = vst [vmem:[%s324 + $0x68] sm:$0xff] %v967
        $region66: #{wsddn_forward.12} parent=53 // pred_fallthru
          _
        %s982 = smul.u32 7, %s19
        %s983 = smul.u32 2, %s20
        %p984 = scmp.lt.s32.totalorder %s982, 6
        %s985 = scalar_select %p984, %s982, 6
        %p986 = scmp.lt.s32.totalorder %s983, 1
        %s987 = scalar_select %p986, %s983, 1
        %s988 = smul.addr %s985, 2
        %s989 = sadd.s32 %s987, %s988
        %s990 = smul.addr %s989, 8
        %s991 = scalar_lea.vmem %s3, %s990
        // Predicated region
        $region67: #{wsddn_forward.12} parent=53 // pred_check
          %p992 = pneg %p135
        $region68: #{wsddn_forward.12} parent=53 // pred_check_branch
          %994 = sbr.rel (%p992) target = $region70
        $region69: #{wsddn_forward.12} parent=53 // pred_region
          %s995 = smul.u32 7, %s19
          %s996 = smul.u32 2, %s20
        $region70: #{wsddn_forward.12} parent=53 // pred_fallthru
          _
        // Predicated region
        $region71: #{wsddn_forward.12} parent=53 // pred_check
          %p997 = pneg %p135
        $region72: #{wsddn_forward.12} parent=53 // pred_check_branch
          %999 = sbr.rel (%p997) target = $region74
        $region73: #{wsddn_forward.12} parent=53 // pred_region
          %s1000 = smul.u32 7, %s19
          %s1001 = smul.u32 2, %s20
          %p1002 = scmp.lt.s32.totalorder %s1000, 6
          %s1003 = scalar_select %p1002, %s1000, 6
          %p1004 = scmp.lt.s32.totalorder %s1001, 1
          %s1005 = scalar_select %p1004, %s1001, 1
          %s1006 = smul.addr %s1003, 2
          %s1007 = sadd.s32 %s1005, %s1006
          %s1008 = smul.addr %s1007, 8
          %s1009 = scalar_lea.vmem %s3, %s1008
        $region74: #{wsddn_forward.12} parent=53 // pred_fallthru
          _
      $region54: #{wsddn_forward.12} parent=5 // pred_fallthru
        _
      %p1010 = scmp.le.s32.totalorder 2, %s9
      // Predicated region
      $region75: #{wsddn_forward.12} parent=5 // pred_check
        %p1011 = pneg %p1010
      $region76: #{wsddn_forward.12} parent=5 // pred_check_branch
        %1013 = sbr.rel (%p1011) target = $region78
      $region77: #{wsddn_forward.12} parent=5 // pred_region
        %s1014 = ssub.s32 %s9, 2
      $region78: #{wsddn_forward.12} parent=5 // pred_fallthru
        _
    $region6: #{wsddn_forward.12} parent=1 // loop_footer
      %s13 = sadd.s32 1, %s9
    $region7: #{wsddn_forward.12} parent=1 // loop_footer_branch
      %8 = sbr.rel target = $region3
    $region8: #{wsddn_forward.12} parent=1 // loop_exit
      _

// kernel: wsddn_forward.13
$region0: #{wsddn_forward.13}
  #allocation0 [shape = 'u32[]', space=smem, size = 0x4, offset = 0x4, fixed_abs, tag = 'smem constant byte address 0x4 - core index']
  #allocation1 [shape = 'u32[72,128]{1,0:T(1,128)}', space=vmem, size = 0x9000, scoped, tag = 'internal scratch']
  %s0 = inlined_call_operand.vmem [shape: bf16[8,57600], index: 0, kind: input, shape index: {}]
  %s1 = inlined_call_operand.vmem [shape: bf16[57600,512], index: 1, kind: input, shape index: {}]
  %s2 = inlined_call_operand.vmem [shape: f32[1,512], index: 2, kind: input, shape index: {}]
  %s3 = inlined_call_operand.vmem [shape: f32[8,512], index: 3, kind: output, shape index: {}]
  %s4 = sld [smem:[#allocation0]]
  $region91: #{wsddn_forward.13} parent=0
    _
  %s6 = ssub.s32 1, %s4
  %s7 = scalar_select 0, %s6, %s4
  $region1: #{wsddn_forward.13} parent=0
    #allocation2 [shape = 'u8[393216]{0}', space=vmem, size = 0x60000, scoped, tag = 'input window, operand 1']
    loop: start=0, step=1, limit=302
    $region2: #{wsddn_forward.13} parent=1 // loop_pre_header
      _
    $region3: #{wsddn_forward.13} parent=1 // loop_header
      %s9 = sphi 0, %s13
      %p10 = scmp.ge.s32.totalorder %s9, 302
      %s16 = sphi 0, %s35
      %s17 = sphi 0, %s31
      %s18 = sphi 0, %s27
      %s19 = sphi 0, %s16
      %s20 = sphi 0, %s17
      %s21 = sphi 0, %s18
      %s22 = sphi 0, %s19
      %s23 = sphi 0, %s20
      %s24 = sphi 0, %s21
      %s40 = sphi 0, %s42
      %s43 = sphi 0, %s40
      %s44 = sphi 0, %s43
      %s60 = sphi 0, %s44
      %s68 = sphi 0, %s70
      %s71 = sphi 0, %s68
      %s72 = sphi 0, %s71
      %s88 = sphi 0, %s72
      %s94 = sphi 0, %s96
      %s97 = sphi 0, %s94
      %s98 = sphi 0, %s97
      %s114 = sphi 0, %s98
      %s122 = sphi 0, %s124
      %s125 = sphi 0, %s122
      %s126 = sphi 0, %s125
      %s142 = sphi 0, %s126
    $region4: #{wsddn_forward.13} parent=1 // loop_header_branch
      %12 = sbr.rel (%p10) target = $region8
    $region5: #{wsddn_forward.13} parent=1 // loop_body
      %s14 = ssub.s32 %s9, 1
      %s15 = ssub.s32 %s9, 2
      %s25 = sadd.s32 1, %s18
      %p26 = scmp.ge.s32.totalorder %s25, 150
      %s27 = scalar_select %p26, 0, %s25
      %s28 = sadd.s32 1, %s17
      %s29 = scalar_select %p26, %s28, %s17
      %p30 = scmp.ge.s32.totalorder %s29, 2
      %s31 = scalar_select %p30, 0, %s29
      %s32 = sadd.s32 1, %s16
      %s33 = scalar_select %p30, %s32, %s16
      %p34 = scmp.ge.s32.totalorder %s33, 1
      %s35 = scalar_select %p34, 0, %s33
      %s36 = ssub.s32 %s16, %s35
      %s37 = ssub.s32 %s18, %s27
      %s38 = sor.u32 %s36, %s37
      %p39 = scmp.eq.s32.totalorder %s38, 0
      %s41 = sadd.s32 %s40, 1
      %s42 = scalar_select %p39, %s40, %s41
      %p45 = pneg %p39
      %p46 = scmp.eq.s32.totalorder %s9, 299
      %p47 = por %p45, %p46
      %p48 = scmp.ne.s32.totalorder %s40, %s43
      %p49 = scmp.eq.s32.totalorder %s9, 0
      %p50 = por %p48, %p49
      %p51 = scmp.ne.s32.totalorder %s40, %s43
      %p52 = scmp.eq.s32.totalorder %s14, 299
      %p53 = por %p51, %p52
      %p54 = scmp.ne.s32.totalorder %s43, %s44
      %p55 = scmp.eq.s32.totalorder %s14, 0
      %p56 = por %p54, %p55
      %p57 = scmp.ne.s32.totalorder %s43, %s44
      %p58 = scmp.eq.s32.totalorder %s15, 299
      %p59 = por %p57, %p58
      %p61 = scmp.ne.s32.totalorder %s44, %s60
      %p62 = scmp.eq.s32.totalorder %s15, 0
      %p63 = por %p61, %p62
      %s64 = ssub.s32 %s18, %s27
      %s65 = ssub.s32 %s17, %s31
      %s66 = sor.u32 %s64, %s65
      %p67 = scmp.eq.s32.totalorder %s66, 0
      %s69 = sadd.s32 %s68, 1
      %s70 = scalar_select %p67, %s68, %s69
      %p73 = pneg %p67
      %p74 = scmp.eq.s32.totalorder %s9, 299
      %p75 = por %p73, %p74
      %p76 = scmp.ne.s32.totalorder %s68, %s71
      %p77 = scmp.eq.s32.totalorder %s9, 0
      %p78 = por %p76, %p77
      %p79 = scmp.ne.s32.totalorder %s68, %s71
      %p80 = scmp.eq.s32.totalorder %s14, 299
      %p81 = por %p79, %p80
      %p82 = scmp.ne.s32.totalorder %s71, %s72
      %p83 = scmp.eq.s32.totalorder %s14, 0
      %p84 = por %p82, %p83
      %p85 = scmp.ne.s32.totalorder %s71, %s72
      %p86 = scmp.eq.s32.totalorder %s15, 299
      %p87 = por %p85, %p86
      %p89 = scmp.ne.s32.totalorder %s72, %s88
      %p90 = scmp.eq.s32.totalorder %s15, 0
      %p91 = por %p89, %p90
      %s92 = ssub.s32 %s17, %s31
      %p93 = scmp.eq.s32.totalorder %s92, 0
      %s95 = sadd.s32 %s94, 1
      %s96 = scalar_select %p93, %s94, %s95
      %p99 = pneg %p93
      %p100 = scmp.eq.s32.totalorder %s9, 299
      %p101 = por %p99, %p100
      %p102 = scmp.ne.s32.totalorder %s94, %s97
      %p103 = scmp.eq.s32.totalorder %s9, 0
      %p104 = por %p102, %p103
      %p105 = scmp.ne.s32.totalorder %s94, %s97
      %p106 = scmp.eq.s32.totalorder %s14, 299
      %p107 = por %p105, %p106
      %p108 = scmp.ne.s32.totalorder %s97, %s98
      %p109 = scmp.eq.s32.totalorder %s14, 0
      %p110 = por %p108, %p109
      %p111 = scmp.ne.s32.totalorder %s97, %s98
      %p112 = scmp.eq.s32.totalorder %s15, 299
      %p113 = por %p111, %p112
      %p115 = scmp.ne.s32.totalorder %s98, %s114
      %p116 = scmp.eq.s32.totalorder %s15, 0
      %p117 = por %p115, %p116
      %s118 = ssub.s32 %s16, %s35
      %s119 = ssub.s32 %s17, %s31
      %s120 = sor.u32 %s118, %s119
      %p121 = scmp.eq.s32.totalorder %s120, 0
      %s123 = sadd.s32 %s122, 1
      %s124 = scalar_select %p121, %s122, %s123
      %p127 = pneg %p121
      %p128 = scmp.eq.s32.totalorder %s9, 299
      %p129 = por %p127, %p128
      %p130 = scmp.ne.s32.totalorder %s122, %s125
      %p131 = scmp.eq.s32.totalorder %s9, 0
      %p132 = por %p130, %p131
      %p133 = scmp.ne.s32.totalorder %s122, %s125
      %p134 = scmp.eq.s32.totalorder %s14, 299
      %p135 = por %p133, %p134
      %p136 = scmp.ne.s32.totalorder %s125, %s126
      %p137 = scmp.eq.s32.totalorder %s14, 0
      %p138 = por %p136, %p137
      %p139 = scmp.ne.s32.totalorder %s125, %s126
      %p140 = scmp.eq.s32.totalorder %s15, 299
      %p141 = por %p139, %p140
      %p143 = scmp.ne.s32.totalorder %s126, %s142
      %p144 = scmp.eq.s32.totalorder %s15, 0
      %p145 = por %p143, %p144
      %p146 = scmp.le.s32.totalorder 1, %s9
      %p147 = scmp.lt.s32.totalorder %s9, 301
      %p148 = pnand %p146, %p147
      %p149 = pneg %p148
      // Predicated region
      $region9: #{wsddn_forward.13} parent=5 // pred_check
        _
      $region10: #{wsddn_forward.13} parent=5 // pred_check_branch
        %151 = sbr.rel (%p148) target = $region12
      $region11: #{wsddn_forward.13} parent=5 // pred_region
        %s152 = ssub.s32 %s9, 1
      $region12: #{wsddn_forward.13} parent=5 // pred_fallthru
        _
      %p153 = scmp.lt.s32.totalorder %s9, 300
      // Predicated region
      $region13: #{wsddn_forward.13} parent=5 // pred_check
        %p154 = pneg %p153
      $region14: #{wsddn_forward.13} parent=5 // pred_check_branch
        %156 = sbr.rel (%p154) target = $region16
      $region15: #{wsddn_forward.13} parent=5 // pred_region
        // Predicated region
        $region17: #{wsddn_forward.13} parent=15 // pred_check
          %p157 = pneg %p50
        $region18: #{wsddn_forward.13} parent=15 // pred_check_branch
          %159 = sbr.rel (%p157) target = $region20
        $region19: #{wsddn_forward.13} parent=15 // pred_region
          %s160 = smul.u32 3, %s18
          %p161 = scmp.lt.s32.totalorder %s16, 0
          %s162 = scalar_select %p161, %s16, 0
          %p163 = scmp.lt.s32.totalorder %s160, 449
          %s164 = scalar_select %p163, %s160, 449
          %s165 = smul.addr %s162, 450
          %s166 = sadd.s32 %s164, %s165
          %s167 = smul.addr %s166, 4
          %s168 = scalar_lea.vmem %s0, %s167
          %s169 = smul.u32 3, %s18
        $region20: #{wsddn_forward.13} parent=15 // pred_fallthru
          _
        // Predicated region
        $region21: #{wsddn_forward.13} parent=15 // pred_check
          %p170 = pneg %p78
        $region22: #{wsddn_forward.13} parent=15 // pred_check_branch
          %172 = sbr.rel (%p170) target = $region24
        $region23: #{wsddn_forward.13} parent=15 // pred_region
          %s173 = sand.u32 %s68, 1
          %s174 = sand.u32 %s68, 1
          %s175 = smul.addr %s174, 384
          %s176 = scalar_lea.vmem [#allocation2], %s175
          %s177 = smul.u32 48, %s18
          %s178 = smul.u32 2, %s17
          %s179 = smul.addr %s177, 4
          %s180 = sadd.s32 %s178, %s179
          %s181 = smul.addr %s180, 4
          %s182 = scalar_lea.vmem %s1, %s181
          // Predicated region
          $region25: #{wsddn_forward.13} parent=23 // pred_check
            _
          $region26: #{wsddn_forward.13} parent=23 // pred_check_branch
            %184 = sbr.rel (0) target = $region28
          $region27: #{wsddn_forward.13} parent=23 // pred_region
            // Predicated region
            $region29: #{wsddn_forward.13} parent=27 // pred_check
              _
            $region30: #{wsddn_forward.13} parent=27 // pred_check_branch
              %186 = sbr.rel (0) target = $region32
            $region31: #{wsddn_forward.13} parent=27 // pred_region
              // Predicated region
              $region44: #{wsddn_forward.13} parent=31 // pred_check
                _
              $region45: #{wsddn_forward.13} parent=31 // pred_check_branch
                %296 = sbr.rel (0) target = $region47
              $region46: #{wsddn_forward.13} parent=31 // pred_region
                loop: start=0, step=1, limit=1
                $region48: #{wsddn_forward.13} parent=46 // loop_pre_header
                  _
                $region49: #{wsddn_forward.13} parent=46 // loop_header
                  %s298 = sphi 0, %s302
                  %p299 = scmp.ge.s32.totalorder %s298, 1
                  %s303 = sphi %s182, %s182
                  %s304 = sphi %s176, %s176
                $region50: #{wsddn_forward.13} parent=46 // loop_header_branch
                  %301 = sbr.rel (%p299) target = $region54
                $region51: #{wsddn_forward.13} parent=46 // loop_body
                  %v305 = vld [vmem:[%s303] sm:$0xff]
                  %306 = vst [vmem:[%s304] sm:$0xff] %v305
                  %v307 = vld [vmem:[%s303 + $0x10] sm:$0xff]
                  %308 = vst [vmem:[%s304 + $0x8] sm:$0xff] %v307
                  %v309 = vld [vmem:[%s303 + $0x20] sm:$0xff]
                  %310 = vst [vmem:[%s304 + $0x10] sm:$0xff] %v309
                  %v311 = vld [vmem:[%s303 + $0x30] sm:$0xff]
                  %312 = vst [vmem:[%s304 + $0x18] sm:$0xff] %v311
                  %v313 = vld [vmem:[%s303 + $0x40] sm:$0xff]
                  %314 = vst [vmem:[%s304 + $0x20] sm:$0xff] %v313
                  %v315 = vld [vmem:[%s303 + $0x50] sm:$0xff]
                  %316 = vst [vmem:[%s304 + $0x28] sm:$0xff] %v315
                  %v317 = vld [vmem:[%s303 + $0x60] sm:$0xff]
                  %318 = vst [vmem:[%s304 + $0x30] sm:$0xff] %v317
                  %v319 = vld [vmem:[%s303 + $0x70] sm:$0xff]
                  %320 = vst [vmem:[%s304 + $0x38] sm:$0xff] %v319
                  %v321 = vld [vmem:[%s303 + $0x80] sm:$0xff]
                  %322 = vst [vmem:[%s304 + $0x40] sm:$0xff] %v321
                  %v323 = vld [vmem:[%s303 + $0x90] sm:$0xff]
                  %324 = vst [vmem:[%s304 + $0x48] sm:$0xff] %v323
                  %v325 = vld [vmem:[%s303 + $0xa0] sm:$0xff]
                  %326 = vst [vmem:[%s304 + $0x50] sm:$0xff] %v325
                  %v327 = vld [vmem:[%s303 + $0xb0] sm:$0xff]
                  %328 = vst [vmem:[%s304 + $0x58] sm:$0xff] %v327
                  %v329 = vld [vmem:[%s303 + $0xc0] sm:$0xff]
                  %330 = vst [vmem:[%s304 + $0x60] sm:$0xff] %v329
                  %v331 = vld [vmem:[%s303 + $0xd0] sm:$0xff]
                  %332 = vst [vmem:[%s304 + $0x68] sm:$0xff] %v331
                  %v333 = vld [vmem:[%s303 + $0xe0] sm:$0xff]
                  %334 = vst [vmem:[%s304 + $0x70] sm:$0xff] %v333
                  %v335 = vld [vmem:[%s303 + $0xf0] sm:$0xff]
                  %336 = vst [vmem:[%s304 + $0x78] sm:$0xff] %v335
                  %v337 = vld [vmem:[%s303 + $0x100] sm:$0xff]
                  %338 = vst [vmem:[%s304 + $0x80] sm:$0xff] %v337
                  %v339 = vld [vmem:[%s303 + $0x110] sm:$0xff]
                  %340 = vst [vmem:[%s304 + $0x88] sm:$0xff] %v339
                  %v341 = vld [vmem:[%s303 + $0x120] sm:$0xff]
                  %342 = vst [vmem:[%s304 + $0x90] sm:$0xff] %v341
                  %v343 = vld [vmem:[%s303 + $0x130] sm:$0xff]
                  %344 = vst [vmem:[%s304 + $0x98] sm:$0xff] %v343
                  %v345 = vld [vmem:[%s303 + $0x140] sm:$0xff]
                  %346 = vst [vmem:[%s304 + $0xa0] sm:$0xff] %v345
                  %v347 = vld [vmem:[%s303 + $0x150] sm:$0xff]
                  %348 = vst [vmem:[%s304 + $0xa8] sm:$0xff] %v347
                  %v349 = vld [vmem:[%s303 + $0x160] sm:$0xff]
                  %350 = vst [vmem:[%s304 + $0xb0] sm:$0xff] %v349
                  %v351 = vld [vmem:[%s303 + $0x170] sm:$0xff]
                  %352 = vst [vmem:[%s304 + $0xb8] sm:$0xff] %v351
                  %v353 = vld [vmem:[%s303 + $0x180] sm:$0xff]
                  %354 = vst [vmem:[%s304 + $0xc0] sm:$0xff] %v353
                  %v355 = vld [vmem:[%s303 + $0x190] sm:$0xff]
                  %356 = vst [vmem:[%s304 + $0xc8] sm:$0xff] %v355
                  %v357 = vld [vmem:[%s303 + $0x1a0] sm:$0xff]
                  %358 = vst [vmem:[%s304 + $0xd0] sm:$0xff] %v357
                  %v359 = vld [vmem:[%s303 + $0x1b0] sm:$0xff]
                  %360 = vst [vmem:[%s304 + $0xd8] sm:$0xff] %v359
                  %v361 = vld [vmem:[%s303 + $0x1c0] sm:$0xff]
                  %362 = vst [vmem:[%s304 + $0xe0] sm:$0xff] %v361
                  %v363 = vld [vmem:[%s303 + $0x1d0] sm:$0xff]
                  %364 = vst [vmem:[%s304 + $0xe8] sm:$0xff] %v363
                  %v365 = vld [vmem:[%s303 + $0x1e0] sm:$0xff]
                  %366 = vst [vmem:[%s304 + $0xf0] sm:$0xff] %v365
                  %v367 = vld [vmem:[%s303 + $0x1f0] sm:$0xff]
                  %368 = vst [vmem:[%s304 + $0xf8] sm:$0xff] %v367
                  %v369 = vld [vmem:[%s303 + $0x200] sm:$0xff]
                  %370 = vst [vmem:[%s304 + $0x100] sm:$0xff] %v369
                  %v371 = vld [vmem:[%s303 + $0x210] sm:$0xff]
                  %372 = vst [vmem:[%s304 + $0x108] sm:$0xff] %v371
                  %v373 = vld [vmem:[%s303 + $0x220] sm:$0xff]
                  %374 = vst [vmem:[%s304 + $0x110] sm:$0xff] %v373
                  %v375 = vld [vmem:[%s303 + $0x230] sm:$0xff]
                  %376 = vst [vmem:[%s304 + $0x118] sm:$0xff] %v375
                  %v377 = vld [vmem:[%s303 + $0x240] sm:$0xff]
                  %378 = vst [vmem:[%s304 + $0x120] sm:$0xff] %v377
                  %v379 = vld [vmem:[%s303 + $0x250] sm:$0xff]
                  %380 = vst [vmem:[%s304 + $0x128] sm:$0xff] %v379
                  %v381 = vld [vmem:[%s303 + $0x260] sm:$0xff]
                  %382 = vst [vmem:[%s304 + $0x130] sm:$0xff] %v381
                  %v383 = vld [vmem:[%s303 + $0x270] sm:$0xff]
                  %384 = vst [vmem:[%s304 + $0x138] sm:$0xff] %v383
                  %v385 = vld [vmem:[%s303 + $0x280] sm:$0xff]
                  %386 = vst [vmem:[%s304 + $0x140] sm:$0xff] %v385
                  %v387 = vld [vmem:[%s303 + $0x290] sm:$0xff]
                  %388 = vst [vmem:[%s304 + $0x148] sm:$0xff] %v387
                  %v389 = vld [vmem:[%s303 + $0x2a0] sm:$0xff]
                  %390 = vst [vmem:[%s304 + $0x150] sm:$0xff] %v389
                  %v391 = vld [vmem:[%s303 + $0x2b0] sm:$0xff]
                  %392 = vst [vmem:[%s304 + $0x158] sm:$0xff] %v391
                  %v393 = vld [vmem:[%s303 + $0x2c0] sm:$0xff]
                  %394 = vst [vmem:[%s304 + $0x160] sm:$0xff] %v393
                  %v395 = vld [vmem:[%s303 + $0x2d0] sm:$0xff]
                  %396 = vst [vmem:[%s304 + $0x168] sm:$0xff] %v395
                  %v397 = vld [vmem:[%s303 + $0x2e0] sm:$0xff]
                  %398 = vst [vmem:[%s304 + $0x170] sm:$0xff] %v397
                  %v399 = vld [vmem:[%s303 + $0x2f0] sm:$0xff]
                  %400 = vst [vmem:[%s304 + $0x178] sm:$0xff] %v399
                $region52: #{wsddn_forward.13} parent=46 // loop_footer
                  %s302 = sadd.s32 1, %s298
                $region53: #{wsddn_forward.13} parent=46 // loop_footer_branch
                  %297 = sbr.rel target = $region49
                $region54: #{wsddn_forward.13} parent=46 // loop_exit
                  _
              $region47: #{wsddn_forward.13} parent=31 // pred_fallthru
                _
              // Predicated region
              $region55: #{wsddn_forward.13} parent=31 // pred_check
                _
              $region56: #{wsddn_forward.13} parent=31 // pred_check_branch
                %402 = sbr.rel target = $region58
              $region57: #{wsddn_forward.13} parent=31 // pred_region
                _
              $region58: #{wsddn_forward.13} parent=31 // pred_fallthru
                _
            $region32: #{wsddn_forward.13} parent=27 // pred_fallthru
              _
            // Predicated region
            $region33: #{wsddn_forward.13} parent=27 // pred_check
              _
            $region34: #{wsddn_forward.13} parent=27 // pred_check_branch
              %188 = sbr.rel target = $region36
            $region35: #{wsddn_forward.13} parent=27 // pred_region
              %s190 = ssub.s32 256, 1
              loop: start=0, step=1, limit=1
              $region37: #{wsddn_forward.13} parent=35 // loop_pre_header
                _
              $region38: #{wsddn_forward.13} parent=35 // loop_header
                %s192 = sphi 0, %s196
                %p193 = scmp.ge.s32.totalorder %s192, 1
                %s197 = sphi %s182, %s182
                %s198 = sphi %s176, %s176
              $region39: #{wsddn_forward.13} parent=35 // loop_header_branch
                %195 = sbr.rel (%p193) target = $region43
              $region40: #{wsddn_forward.13} parent=35 // loop_body
                %v199 = vld [vmem:[%s197] sm:%s190]
                %200 = vst [vmem:[%s198] sm:%s190] %v199
                %v201 = vld [vmem:[%s197 + $0x10] sm:%s190]
                %202 = vst [vmem:[%s198 + $0x8] sm:%s190] %v201
                %v203 = vld [vmem:[%s197 + $0x20] sm:%s190]
                %204 = vst [vmem:[%s198 + $0x10] sm:%s190] %v203
                %v205 = vld [vmem:[%s197 + $0x30] sm:%s190]
                %206 = vst [vmem:[%s198 + $0x18] sm:%s190] %v205
                %v207 = vld [vmem:[%s197 + $0x40] sm:%s190]
                %208 = vst [vmem:[%s198 + $0x20] sm:%s190] %v207
                %v209 = vld [vmem:[%s197 + $0x50] sm:%s190]
                %210 = vst [vmem:[%s198 + $0x28] sm:%s190] %v209
                %v211 = vld [vmem:[%s197 + $0x60] sm:%s190]
                %212 = vst [vmem:[%s198 + $0x30] sm:%s190] %v211
                %v213 = vld [vmem:[%s197 + $0x70] sm:%s190]
                %214 = vst [vmem:[%s198 + $0x38] sm:%s190] %v213
                %v215 = vld [vmem:[%s197 + $0x80] sm:%s190]
                %216 = vst [vmem:[%s198 + $0x40] sm:%s190] %v215
                %v217 = vld [vmem:[%s197 + $0x90] sm:%s190]
                %218 = vst [vmem:[%s198 + $0x48] sm:%s190] %v217
                %v219 = vld [vmem:[%s197 + $0xa0] sm:%s190]
                %220 = vst [vmem:[%s198 + $0x50] sm:%s190] %v219
                %v221 = vld [vmem:[%s197 + $0xb0] sm:%s190]
                %222 = vst [vmem:[%s198 + $0x58] sm:%s190] %v221
                %v223 = vld [vmem:[%s197 + $0xc0] sm:%s190]
                %224 = vst [vmem:[%s198 + $0x60] sm:%s190] %v223
                %v225 = vld [vmem:[%s197 + $0xd0] sm:%s190]
                %226 = vst [vmem:[%s198 + $0x68] sm:%s190] %v225
                %v227 = vld [vmem:[%s197 + $0xe0] sm:%s190]
                %228 = vst [vmem:[%s198 + $0x70] sm:%s190] %v227
                %v229 = vld [vmem:[%s197 + $0xf0] sm:%s190]
                %230 = vst [vmem:[%s198 + $0x78] sm:%s190] %v229
                %v231 = vld [vmem:[%s197 + $0x100] sm:%s190]
                %232 = vst [vmem:[%s198 + $0x80] sm:%s190] %v231
                %v233 = vld [vmem:[%s197 + $0x110] sm:%s190]
                %234 = vst [vmem:[%s198 + $0x88] sm:%s190] %v233
                %v235 = vld [vmem:[%s197 + $0x120] sm:%s190]
                %236 = vst [vmem:[%s198 + $0x90] sm:%s190] %v235
                %v237 = vld [vmem:[%s197 + $0x130] sm:%s190]
                %238 = vst [vmem:[%s198 + $0x98] sm:%s190] %v237
                %v239 = vld [vmem:[%s197 + $0x140] sm:%s190]
                %240 = vst [vmem:[%s198 + $0xa0] sm:%s190] %v239
                %v241 = vld [vmem:[%s197 + $0x150] sm:%s190]
                %242 = vst [vmem:[%s198 + $0xa8] sm:%s190] %v241
                %v243 = vld [vmem:[%s197 + $0x160] sm:%s190]
                %244 = vst [vmem:[%s198 + $0xb0] sm:%s190] %v243
                %v245 = vld [vmem:[%s197 + $0x170] sm:%s190]
                %246 = vst [vmem:[%s198 + $0xb8] sm:%s190] %v245
                %v247 = vld [vmem:[%s197 + $0x180] sm:%s190]
                %248 = vst [vmem:[%s198 + $0xc0] sm:%s190] %v247
                %v249 = vld [vmem:[%s197 + $0x190] sm:%s190]
                %250 = vst [vmem:[%s198 + $0xc8] sm:%s190] %v249
                %v251 = vld [vmem:[%s197 + $0x1a0] sm:%s190]
                %252 = vst [vmem:[%s198 + $0xd0] sm:%s190] %v251
                %v253 = vld [vmem:[%s197 + $0x1b0] sm:%s190]
                %254 = vst [vmem:[%s198 + $0xd8] sm:%s190] %v253
                %v255 = vld [vmem:[%s197 + $0x1c0] sm:%s190]
                %256 = vst [vmem:[%s198 + $0xe0] sm:%s190] %v255
                %v257 = vld [vmem:[%s197 + $0x1d0] sm:%s190]
                %258 = vst [vmem:[%s198 + $0xe8] sm:%s190] %v257
                %v259 = vld [vmem:[%s197 + $0x1e0] sm:%s190]
                %260 = vst [vmem:[%s198 + $0xf0] sm:%s190] %v259
                %v261 = vld [vmem:[%s197 + $0x1f0] sm:%s190]
                %262 = vst [vmem:[%s198 + $0xf8] sm:%s190] %v261
                %v263 = vld [vmem:[%s197 + $0x200] sm:%s190]
                %264 = vst [vmem:[%s198 + $0x100] sm:%s190] %v263
                %v265 = vld [vmem:[%s197 + $0x210] sm:%s190]
                %266 = vst [vmem:[%s198 + $0x108] sm:%s190] %v265
                %v267 = vld [vmem:[%s197 + $0x220] sm:%s190]
                %268 = vst [vmem:[%s198 + $0x110] sm:%s190] %v267
                %v269 = vld [vmem:[%s197 + $0x230] sm:%s190]
                %270 = vst [vmem:[%s198 + $0x118] sm:%s190] %v269
                %v271 = vld [vmem:[%s197 + $0x240] sm:%s190]
                %272 = vst [vmem:[%s198 + $0x120] sm:%s190] %v271
                %v273 = vld [vmem:[%s197 + $0x250] sm:%s190]
                %274 = vst [vmem:[%s198 + $0x128] sm:%s190] %v273
                %v275 = vld [vmem:[%s197 + $0x260] sm:%s190]
                %276 = vst [vmem:[%s198 + $0x130] sm:%s190] %v275
                %v277 = vld [vmem:[%s197 + $0x270] sm:%s190]
                %278 = vst [vmem:[%s198 + $0x138] sm:%s190] %v277
                %v279 = vld [vmem:[%s197 + $0x280] sm:%s190]
                %280 = vst [vmem:[%s198 + $0x140] sm:%s190] %v279
                %v281 = vld [vmem:[%s197 + $0x290] sm:%s190]
                %282 = vst [vmem:[%s198 + $0x148] sm:%s190] %v281
                %v283 = vld [vmem:[%s197 + $0x2a0] sm:%s190]
                %284 = vst [vmem:[%s198 + $0x150] sm:%s190] %v283
                %v285 = vld [vmem:[%s197 + $0x2b0] sm:%s190]
                %286 = vst [vmem:[%s198 + $0x158] sm:%s190] %v285
                %v287 = vld [vmem:[%s197 + $0x2c0] sm:%s190]
                %288 = vst [vmem:[%s198 + $0x160] sm:%s190] %v287
                %v289 = vld [vmem:[%s197 + $0x2d0] sm:%s190]
                %290 = vst [vmem:[%s198 + $0x168] sm:%s190] %v289
                %v291 = vld [vmem:[%s197 + $0x2e0] sm:%s190]
                %292 = vst [vmem:[%s198 + $0x170] sm:%s190] %v291
                %v293 = vld [vmem:[%s197 + $0x2f0] sm:%s190]
                %294 = vst [vmem:[%s198 + $0x178] sm:%s190] %v293
              $region41: #{wsddn_forward.13} parent=35 // loop_footer
                %s196 = sadd.s32 1, %s192
              $region42: #{wsddn_forward.13} parent=35 // loop_footer_branch
                %191 = sbr.rel target = $region38
              $region43: #{wsddn_forward.13} parent=35 // loop_exit
                _
            $region36: #{wsddn_forward.13} parent=27 // pred_fallthru
              _
          $region28: #{wsddn_forward.13} parent=23 // pred_fallthru
            _
          %403 = vnop
        $region24: #{wsddn_forward.13} parent=15 // pred_fallthru
          _
        // Predicated region
        $region59: #{wsddn_forward.13} parent=15 // pred_check
          %p404 = pneg %p104
        $region60: #{wsddn_forward.13} parent=15 // pred_check_branch
          %406 = sbr.rel (%p404) target = $region62
        $region61: #{wsddn_forward.13} parent=15 // pred_region
          %s407 = smul.u32 2, %s17
          %p408 = scmp.lt.s32.totalorder %s407, 3
          %s409 = scalar_select %p408, %s407, 3
          %s410 = scalar_lea.vmem %s2, %s409
          %s411 = smul.u32 2, %s17
        $region62: #{wsddn_forward.13} parent=15 // pred_fallthru
          _
      $region16: #{wsddn_forward.13} parent=5 // pred_fallthru
        _
      %p412 = scmp.le.s32.totalorder 1, %s9
      %p413 = scmp.lt.s32.totalorder %s9, 301
      %p414 = pnand %p412, %p413
      %p415 = pneg %p414
      // Predicated region
      $region63: #{wsddn_forward.13} parent=5 // pred_check
        _
      $region64: #{wsddn_forward.13} parent=5 // pred_check_branch
        %417 = sbr.rel (%p414) target = $region66
      $region65: #{wsddn_forward.13} parent=5 // pred_region
        %s418 = ssub.s32 %s9, 1
        %s419 = sand.u32 %s71, 1
        %s420 = sand.u32 %s71, 1
        %s421 = smul.addr %s420, 384
        %s422 = scalar_lea.vmem [#allocation2], %s421
        // Predicated region
        $region67: #{wsddn_forward.13} parent=65 // pred_check
          %p423 = pneg %p84
        $region68: #{wsddn_forward.13} parent=65 // pred_check_branch
          %425 = sbr.rel (%p423) target = $region70
        $region69: #{wsddn_forward.13} parent=65 // pred_region
          _
        $region70: #{wsddn_forward.13} parent=65 // pred_fallthru
          _
        %s426 = smul.u32 3, %s21
        %p427 = scmp.lt.s32.totalorder %s19, 0
        %s428 = scalar_select %p427, %s19, 0
        %p429 = scmp.lt.s32.totalorder %s426, 449
        %s430 = scalar_select %p429, %s426, 449
        %s431 = smul.addr %s428, 450
        %s432 = sadd.s32 %s430, %s431
        %s433 = smul.addr %s432, 4
        %s434 = scalar_lea.vmem %s0, %s433
        %p435 = pneg %p56
        %p436 = pneg %p53
        %s437 = sand.u32 %s71, 1
        %s438 = sand.u32 %s71, 1
        %s439 = smul.addr %s438, 384
        %s440 = scalar_lea.vmem [#allocation2], %s439
        %p441 = pneg %p84
        %p442 = pneg %p81
        %s443 = smul.u32 2, %s20
        %p444 = scmp.lt.s32.totalorder %s443, 3
        %s445 = scalar_select %p444, %s443, 3
        %s446 = scalar_lea.vmem %s2, %s445
        %p447 = pneg %p110
        %p448 = pneg %p107
        %p449 = pneg %p138
        %p450 = pneg %p135
        %s451 = smul.u32 2, %s20
        %p452 = scmp.lt.s32.totalorder %s19, 0
        %s453 = scalar_select %p452, %s19, 0
        %p454 = scmp.lt.s32.totalorder %s451, 3
        %s455 = scalar_select %p454, %s451, 3
        %s456 = smul.addr %s453, 4
        %s457 = sadd.s32 %s455, %s456
        %s458 = smul.addr %s457, 8
        %s459 = scalar_lea.vmem %s3, %s458
        %s460 = smul.u32 3, %s21
        %p461 = scmp.lt.s32.totalorder %s19, 0
        %s462 = scalar_select %p461, %s19, 0
        %p463 = scmp.lt.s32.totalorder %s460, 449
        %s464 = scalar_select %p463, %s460, 449
        %s465 = smul.addr %s462, 450
        %s466 = sadd.s32 %s464, %s465
        %s467 = smul.addr %s466, 4
        %s468 = scalar_lea.vmem %s0, %s467
        %s469 = smul.u32 3, %s21
        %s470 = smul.u32 48, %s21
        %s471 = smul.u32 2, %s20
        %s472 = smul.u32 2, %s20
        %p473 = scmp.lt.s32.totalorder %s472, 3
        %s474 = scalar_select %p473, %s472, 3
        %s475 = scalar_lea.vmem %s2, %s474
        %s476 = smul.u32 2, %s20
        %s477 = smul.u32 2, %s20
        %p478 = scmp.lt.s32.totalorder %s19, 0
        %s479 = scalar_select %p478, %s19, 0
        %p480 = scmp.lt.s32.totalorder %s477, 3
        %s481 = scalar_select %p480, %s477, 3
        %s482 = smul.addr %s479, 4
        %s483 = sadd.s32 %s481, %s482
        %s484 = smul.addr %s483, 8
        %s485 = scalar_lea.vmem %s3, %s484
        %s486 = smul.u32 2, %s20
        %p487 = scmp.eq.s32.totalorder %s21, 0
        // Predicated region
        $region71: #{wsddn_forward.13} parent=65 // pred_check
          %p488 = pneg %p487
        $region72: #{wsddn_forward.13} parent=65 // pred_check_branch
          %490 = sbr.rel (%p488) target = $region74
        $region73: #{wsddn_forward.13} parent=65 // pred_region
          %491 = vst [vmem:[%s485] sm:$0xff] 0.0
          %492 = vst [vmem:[%s485 + $0x8] sm:$0xff] 0.0
        $region74: #{wsddn_forward.13} parent=65 // pred_fallthru
          _
        %v493 = vld [vmem:[%s485] sm:$0xff]
        %v494 = vld [vmem:[%s485 + $0x8] sm:$0xff]
        %v495 = vld [vmem:[%s468] sm:$0xff]
        %v496 = vld [vmem:[%s468 + $0x8] sm:$0xf]
        %v497 = vld [vmem:[%s422] sm:$0xff]
        %v498 = vld [vmem:[%s422 + $0x8] sm:$0xff]
        %v499 = vld [vmem:[%s422 + $0x10] sm:$0xff]
        %v500 = vld [vmem:[%s422 + $0x18] sm:$0xff]
        %v501 = vld [vmem:[%s422 + $0x20] sm:$0xff]
        %v502 = vld [vmem:[%s422 + $0x28] sm:$0xff]
        %v503 = vld [vmem:[%s422 + $0x30] sm:$0xff]
        %v504 = vld [vmem:[%s422 + $0x38] sm:$0xff]
        %v505 = vld [vmem:[%s422 + $0x40] sm:$0xff]
        %v506 = vld [vmem:[%s422 + $0x48] sm:$0xff]
        %v507 = vld [vmem:[%s422 + $0x50] sm:$0xff]
        %v508 = vld [vmem:[%s422 + $0x58] sm:$0xff]
        %v509 = vld [vmem:[%s422 + $0x60] sm:$0xff]
        %v510 = vld [vmem:[%s422 + $0x68] sm:$0xff]
        %v511 = vld [vmem:[%s422 + $0x70] sm:$0xff]
        %v512 = vld [vmem:[%s422 + $0x78] sm:$0xff]
        %v513 = vld [vmem:[%s422 + $0x80] sm:$0xff]
        %v514 = vld [vmem:[%s422 + $0x88] sm:$0xff]
        %v515 = vld [vmem:[%s422 + $0x90] sm:$0xff]
        %v516 = vld [vmem:[%s422 + $0x98] sm:$0xff]
        %v517 = vld [vmem:[%s422 + $0xa0] sm:$0xff]
        %v518 = vld [vmem:[%s422 + $0xa8] sm:$0xff]
        %v519 = vld [vmem:[%s422 + $0xb0] sm:$0xff]
        %v520 = vld [vmem:[%s422 + $0xb8] sm:$0xff]
        %v521 = vld [vmem:[%s422 + $0xc0] sm:$0xff]
        %v522 = vld [vmem:[%s422 + $0xc8] sm:$0xff]
        %v523 = vld [vmem:[%s422 + $0xd0] sm:$0xff]
        %v524 = vld [vmem:[%s422 + $0xd8] sm:$0xff]
        %v525 = vld [vmem:[%s422 + $0xe0] sm:$0xff]
        %v526 = vld [vmem:[%s422 + $0xe8] sm:$0xff]
        %v527 = vld [vmem:[%s422 + $0xf0] sm:$0xff]
        %v528 = vld [vmem:[%s422 + $0xf8] sm:$0xff]
        %v529 = vld [vmem:[%s422 + $0x100] sm:$0xff]
        %v530 = vld [vmem:[%s422 + $0x108] sm:$0xff]
        %v531 = vld [vmem:[%s422 + $0x110] sm:$0xff]
        %v532 = vld [vmem:[%s422 + $0x118] sm:$0xff]
        %v533 = vld [vmem:[%s422 + $0x120] sm:$0xff]
        %v534 = vld [vmem:[%s422 + $0x128] sm:$0xff]
        %v535 = vld [vmem:[%s422 + $0x130] sm:$0xff]
        %v536 = vld [vmem:[%s422 + $0x138] sm:$0xff]
        %v537 = vld [vmem:[%s422 + $0x140] sm:$0xff]
        %v538 = vld [vmem:[%s422 + $0x148] sm:$0xff]
        %v539 = vld [vmem:[%s422 + $0x150] sm:$0xff]
        %v540 = vld [vmem:[%s422 + $0x158] sm:$0xff]
        %v541 = vld [vmem:[%s422 + $0x160] sm:$0xff]
        %v542 = vld [vmem:[%s422 + $0x168] sm:$0xff]
        %v543 = vld [vmem:[%s422 + $0x170] sm:$0xff]
        %v544 = vld [vmem:[%s422 + $0x178] sm:$0xff]
        %v547 = vunpack.c.l.b16 %v495
        %v548 = vunpack.c.h.b16 %v495
        %v549 = vunpack.c.l.b16 %v496
        %v550 = vpack.c.b16 %v547, %v547
        %v551 = vpack.c.b16 %v548, %v548
        %v552 = vpack.c.b16 %v549, %v549
        %v604 = vunpack.c.l.b16 %v497
        %v605 = vunpack.c.h.b16 %v497
        %v606 = vunpack.c.l.b16 %v498
        %v607 = vunpack.c.h.b16 %v498
        %v608 = vunpack.c.l.b16 %v499
        %v609 = vunpack.c.h.b16 %v499
        %v610 = vunpack.c.l.b16 %v500
        %v611 = vunpack.c.h.b16 %v500
        %v612 = vunpack.c.l.b16 %v501
        %v613 = vunpack.c.h.b16 %v501
        %v614 = vunpack.c.l.b16 %v502
        %v615 = vunpack.c.h.b16 %v502
        %v616 = vunpack.c.l.b16 %v503
        %v617 = vunpack.c.h.b16 %v503
        %v618 = vunpack.c.l.b16 %v504
        %v619 = vunpack.c.h.b16 %v504
        %v620 = vunpack.c.l.b16 %v505
        %v621 = vunpack.c.h.b16 %v505
        %v622 = vunpack.c.l.b16 %v506
        %v623 = vunpack.c.h.b16 %v506
        %v624 = vunpack.c.l.b16 %v507
        %v625 = vunpack.c.h.b16 %v507
        %v626 = vunpack.c.l.b16 %v508
        %v627 = vunpack.c.h.b16 %v508
        %v628 = vunpack.c.l.b16 %v509
        %v629 = vunpack.c.h.b16 %v509
        %v630 = vunpack.c.l.b16 %v510
        %v631 = vunpack.c.h.b16 %v510
        %v632 = vunpack.c.l.b16 %v511
        %v633 = vunpack.c.h.b16 %v511
        %v634 = vunpack.c.l.b16 %v512
        %v635 = vunpack.c.h.b16 %v512
        %v636 = vunpack.c.l.b16 %v513
        %v637 = vunpack.c.h.b16 %v513
        %v638 = vunpack.c.l.b16 %v514
        %v639 = vunpack.c.h.b16 %v514
        %v640 = vunpack.c.l.b16 %v515
        %v641 = vunpack.c.h.b16 %v515
        %v642 = vunpack.c.l.b16 %v516
        %v643 = vunpack.c.h.b16 %v516
        %v644 = vunpack.c.l.b16 %v517
        %v645 = vunpack.c.h.b16 %v517
        %v646 = vunpack.c.l.b16 %v518
        %v647 = vunpack.c.h.b16 %v518
        %v648 = vunpack.c.l.b16 %v519
        %v649 = vunpack.c.h.b16 %v519
        %v650 = vunpack.c.l.b16 %v520
        %v651 = vunpack.c.h.b16 %v520
        %v652 = vunpack.c.l.b16 %v521
        %v653 = vunpack.c.h.b16 %v521
        %v654 = vunpack.c.l.b16 %v522
        %v655 = vunpack.c.h.b16 %v522
        %v656 = vunpack.c.l.b16 %v523
        %v657 = vunpack.c.h.b16 %v523
        %v658 = vunpack.c.l.b16 %v524
        %v659 = vunpack.c.h.b16 %v524
        %v660 = vunpack.c.l.b16 %v525
        %v661 = vunpack.c.h.b16 %v525
        %v662 = vunpack.c.l.b16 %v526
        %v663 = vunpack.c.h.b16 %v526
        %v664 = vunpack.c.l.b16 %v527
        %v665 = vunpack.c.h.b16 %v527
        %v666 = vunpack.c.l.b16 %v528
        %v667 = vunpack.c.h.b16 %v528
        %v668 = vunpack.c.l.b16 %v529
        %v669 = vunpack.c.h.b16 %v529
        %v670 = vunpack.c.l.b16 %v530
        %v671 = vunpack.c.h.b16 %v530
        %v672 = vunpack.c.l.b16 %v531
        %v673 = vunpack.c.h.b16 %v531
        %v674 = vunpack.c.l.b16 %v532
        %v675 = vunpack.c.h.b16 %v532
        %v676 = vunpack.c.l.b16 %v533
        %v677 = vunpack.c.h.b16 %v533
        %v678 = vunpack.c.l.b16 %v534
        %v679 = vunpack.c.h.b16 %v534
        %v680 = vunpack.c.l.b16 %v535
        %v681 = vunpack.c.h.b16 %v535
        %v682 = vunpack.c.l.b16 %v536
        %v683 = vunpack.c.h.b16 %v536
        %v684 = vunpack.c.l.b16 %v537
        %v685 = vunpack.c.h.b16 %v537
        %v686 = vunpack.c.l.b16 %v538
        %v687 = vunpack.c.h.b16 %v538
        %v688 = vunpack.c.l.b16 %v539
        %v689 = vunpack.c.h.b16 %v539
        %v690 = vunpack.c.l.b16 %v540
        %v691 = vunpack.c.h.b16 %v540
        %v692 = vunpack.c.l.b16 %v541
        %v693 = vunpack.c.h.b16 %v541
        %v694 = vunpack.c.l.b16 %v542
        %v695 = vunpack.c.h.b16 %v542
        %v696 = vunpack.c.l.b16 %v543
        %v697 = vunpack.c.h.b16 %v543
        %v698 = vunpack.c.l.b16 %v544
        %v699 = vunpack.c.h.b16 %v544
        %v700 = vpack.c.b16 %v606, %v604
        %v701 = vpack.c.b16 %v607, %v605
        %v702 = vpack.c.b16 %v610, %v608
        %v703 = vpack.c.b16 %v611, %v609
        %v704 = vpack.c.b16 %v614, %v612
        %v705 = vpack.c.b16 %v615, %v613
        %v706 = vpack.c.b16 %v618, %v616
        %v707 = vpack.c.b16 %v619, %v617
        %v708 = vpack.c.b16 %v622, %v620
        %v709 = vpack.c.b16 %v623, %v621
        %v710 = vpack.c.b16 %v626, %v624
        %v711 = vpack.c.b16 %v627, %v625
        %v712 = vpack.c.b16 %v630, %v628
        %v713 = vpack.c.b16 %v631, %v629
        %v714 = vpack.c.b16 %v634, %v632
        %v715 = vpack.c.b16 %v635, %v633
        %v716 = vpack.c.b16 %v638, %v636
        %v717 = vpack.c.b16 %v639, %v637
        %v718 = vpack.c.b16 %v642, %v640
        %v719 = vpack.c.b16 %v643, %v641
        %v720 = vpack.c.b16 %v646, %v644
        %v721 = vpack.c.b16 %v647, %v645
        %v722 = vpack.c.b16 %v650, %v648
        %v723 = vpack.c.b16 %v651, %v649
        %v724 = vpack.c.b16 %v654, %v652
        %v725 = vpack.c.b16 %v655, %v653
        %v726 = vpack.c.b16 %v658, %v656
        %v727 = vpack.c.b16 %v659, %v657
        %v728 = vpack.c.b16 %v662, %v660
        %v729 = vpack.c.b16 %v663, %v661
        %v730 = vpack.c.b16 %v666, %v664
        %v731 = vpack.c.b16 %v667, %v665
        %v732 = vpack.c.b16 %v670, %v668
        %v733 = vpack.c.b16 %v671, %v669
        %v734 = vpack.c.b16 %v674, %v672
        %v735 = vpack.c.b16 %v675, %v673
        %v736 = vpack.c.b16 %v678, %v676
        %v737 = vpack.c.b16 %v679, %v677
        %v738 = vpack.c.b16 %v682, %v680
        %v739 = vpack.c.b16 %v683, %v681
        %v740 = vpack.c.b16 %v686, %v684
        %v741 = vpack.c.b16 %v687, %v685
        %v742 = vpack.c.b16 %v690, %v688
        %v743 = vpack.c.b16 %v691, %v689
        %v744 = vpack.c.b16 %v694, %v692
        %v745 = vpack.c.b16 %v695, %v693
        %v746 = vpack.c.b16 %v698, %v696
        %v747 = vpack.c.b16 %v699, %v697
        %796 = vmatpush.bf16.msra.mxu0 %v714
        %797 = vmatpush.bf16.msra.mxu0 %v712
        %798 = vmatpush.bf16.msra.mxu0 %v710
        %799 = vmatpush.bf16.msra.mxu0 %v708
        %800 = vmatpush.bf16.msra.mxu0 %v706
        %801 = vmatpush.bf16.msra.mxu0 %v704
        %802 = vmatpush.bf16.msra.mxu0 %v702
        %803 = vmatpush.bf16.msra.mxu0 %v700
        %804 = vmatmul.bf16.gmra.mxu0 %v550
        %v805 = vpop.f32.mrf.mxu0
        %v806 = vadd.f32 0.0, %v805
        %v807 = vpop.f32.mrf.mxu0
        %808 = vdwg.mxu0
        %809 = vmatpush.bf16.msra.mxu0 %v730
        %810 = vmatpush.bf16.msra.mxu0 %v728
        %811 = vmatpush.bf16.msra.mxu0 %v726
        %812 = vmatpush.bf16.msra.mxu0 %v724
        %813 = vmatpush.bf16.msra.mxu0 %v722
        %814 = vmatpush.bf16.msra.mxu0 %v720
        %815 = vmatpush.bf16.msra.mxu0 %v718
        %816 = vmatpush.bf16.msra.mxu0 %v716
        %817 = vmatmul.bf16.gmra.mxu0 %v551
        %v818 = vpop.f32.mrf.mxu0
        %v819 = vadd.f32 %v806, %v818
        %v820 = vpop.f32.mrf.mxu0
        %821 = vdwg.mxu0
        %822 = vmatpush.bf16.msra.mxu0 %v746
        %823 = vmatpush.bf16.msra.mxu0 %v744
        %824 = vmatpush.bf16.msra.mxu0 %v742
        %825 = vmatpush.bf16.msra.mxu0 %v740
        %826 = vmatpush.bf16.msra.mxu0 %v738
        %827 = vmatpush.bf16.msra.mxu0 %v736
        %828 = vmatpush.bf16.msra.mxu0 %v734
        %829 = vmatpush.bf16.msra.mxu0 %v732
        %830 = vmatmul.bf16.gmra.mxu0 %v552
        %v831 = vpop.f32.mrf.mxu0
        %v832 = vadd.f32 %v819, %v831
        %v833 = vpop.f32.mrf.mxu0
        %834 = vdwg.mxu0
        %835 = vmatpush.bf16.msra.mxu0 %v715
        %836 = vmatpush.bf16.msra.mxu0 %v713
        %837 = vmatpush.bf16.msra.mxu0 %v711
        %838 = vmatpush.bf16.msra.mxu0 %v709
        %839 = vmatpush.bf16.msra.mxu0 %v707
        %840 = vmatpush.bf16.msra.mxu0 %v705
        %841 = vmatpush.bf16.msra.mxu0 %v703
        %842 = vmatpush.bf16.msra.mxu0 %v701
        %843 = vmatmul.bf16.gmra.mxu0 %v550
        %v844 = vpop.f32.mrf.mxu0
        %v845 = vadd.f32 0.0, %v844
        %v846 = vpop.f32.mrf.mxu0
        %847 = vdwg.mxu0
        %848 = vmatpush.bf16.msra.mxu0 %v731
        %849 = vmatpush.bf16.msra.mxu0 %v729
        %850 = vmatpush.bf16.msra.mxu0 %v727
        %851 = vmatpush.bf16.msra.mxu0 %v725
        %852 = vmatpush.bf16.msra.mxu0 %v723
        %853 = vmatpush.bf16.msra.mxu0 %v721
        %854 = vmatpush.bf16.msra.mxu0 %v719
        %855 = vmatpush.bf16.msra.mxu0 %v717
        %856 = vmatmul.bf16.gmra.mxu0 %v551
        %v857 = vpop.f32.mrf.mxu0
        %v858 = vadd.f32 %v845, %v857
        %v859 = vpop.f32.mrf.mxu0
        %860 = vdwg.mxu0
        %861 = vmatpush.bf16.msra.mxu0 %v747
        %862 = vmatpush.bf16.msra.mxu0 %v745
        %863 = vmatpush.bf16.msra.mxu0 %v743
        %864 = vmatpush.bf16.msra.mxu0 %v741
        %865 = vmatpush.bf16.msra.mxu0 %v739
        %866 = vmatpush.bf16.msra.mxu0 %v737
        %867 = vmatpush.bf16.msra.mxu0 %v735
        %868 = vmatpush.bf16.msra.mxu0 %v733
        %869 = vmatmul.bf16.gmra.mxu0 %v552
        %v870 = vpop.f32.mrf.mxu0
        %v871 = vadd.f32 %v858, %v870
        %v872 = vpop.f32.mrf.mxu0
        %873 = vdwg.mxu0
        %v874 = vadd.f32 %v493, %v832
        %v875 = vadd.f32 %v494, %v871
        %876 = vst [vmem:[%s485] sm:$0xff] %v874
        %877 = vst [vmem:[%s485 + $0x8] sm:$0xff] %v875
        %p878 = scmp.eq.s32.totalorder %s21, 149
        // Predicated region
        $region75: #{wsddn_forward.13} parent=65 // pred_check
          %p879 = pneg %p878
        $region76: #{wsddn_forward.13} parent=65 // pred_check_branch
          %881 = sbr.rel (%p879) target = $region78
        $region77: #{wsddn_forward.13} parent=65 // pred_region
          %v882 = vld [vmem:[%s485] sm:$0xff]
          %v883 = vld [vmem:[%s485 + $0x8] sm:$0xff]
          %v884 = vld [vmem:[%s475] sm:$0x3]
          %v886 = vperm.slane %v884, 0
          %v887 = vperm.slane %v884, 1
          %v890 = vadd.f32 %v882, %v886
          %v891 = vadd.f32 %v883, %v887
          %v892 = vmax.f32 %v890, 0.0
          %v893 = vmax.f32 %v891, 0.0
          %894 = vst [vmem:[%s485] sm:$0xff] %v892
          %895 = vst [vmem:[%s485 + $0x8] sm:$0xff] %v893
        $region78: #{wsddn_forward.13} parent=65 // pred_fallthru
          _
        %s896 = smul.u32 2, %s20
        %p897 = scmp.lt.s32.totalorder %s19, 0
        %s898 = scalar_select %p897, %s19, 0
        %p899 = scmp.lt.s32.totalorder %s896, 3
        %s900 = scalar_select %p899, %s896, 3
        %s901 = smul.addr %s898, 4
        %s902 = sadd.s32 %s900, %s901
        %s903 = smul.addr %s902, 8
        %s904 = scalar_lea.vmem %s3, %s903
        // Predicated region
        $region79: #{wsddn_forward.13} parent=65 // pred_check
          %p905 = pneg %p135
        $region80: #{wsddn_forward.13} parent=65 // pred_check_branch
          %907 = sbr.rel (%p905) target = $region82
        $region81: #{wsddn_forward.13} parent=65 // pred_region
          %s908 = smul.u32 2, %s20
        $region82: #{wsddn_forward.13} parent=65 // pred_fallthru
          _
      $region66: #{wsddn_forward.13} parent=5 // pred_fallthru
        _
      %p909 = scmp.le.s32.totalorder 2, %s9
      // Predicated region
      $region83: #{wsddn_forward.13} parent=5 // pred_check
        %p910 = pneg %p909
      $region84: #{wsddn_forward.13} parent=5 // pred_check_branch
        %912 = sbr.rel (%p910) target = $region86
      $region85: #{wsddn_forward.13} parent=5 // pred_region
        %s913 = ssub.s32 %s9, 2
        // Predicated region
        $region87: #{wsddn_forward.13} parent=85 // pred_check
          %p914 = pneg %p141
        $region88: #{wsddn_forward.13} parent=85 // pred_check_branch
          %916 = sbr.rel (%p914) target = $region90
        $region89: #{wsddn_forward.13} parent=85 // pred_region
          %s917 = smul.u32 2, %s23
          %p918 = scmp.lt.s32.totalorder %s22, 0
          %s919 = scalar_select %p918, %s22, 0
          %p920 = scmp.lt.s32.totalorder %s917, 3
          %s921 = scalar_select %p920, %s917, 3
          %s922 = smul.addr %s919, 4
          %s923 = sadd.s32 %s921, %s922
          %s924 = smul.addr %s923, 8
          %s925 = scalar_lea.vmem %s3, %s924
        $region90: #{wsddn_forward.13} parent=85 // pred_fallthru
          _
      $region86: #{wsddn_forward.13} parent=5 // pred_fallthru
        _
    $region6: #{wsddn_forward.13} parent=1 // loop_footer
      %s13 = sadd.s32 1, %s9
    $region7: #{wsddn_forward.13} parent=1 // loop_footer_branch
      %8 = sbr.rel target = $region3
    $region8: #{wsddn_forward.13} parent=1 // loop_exit
      _

// kernel: wsddn_forward.14
$region0: #{wsddn_forward.14}
  #allocation0 [shape = 'u32[]', space=smem, size = 0x4, offset = 0x4, fixed_abs, tag = 'smem constant byte address 0x4 - core index']
  #allocation1 [shape = 'u32[72,128]{1,0:T(1,128)}', space=vmem, size = 0x9000, scoped, tag = 'internal scratch']
  %s0 = inlined_call_operand.vmem [shape: bf16[8,512], index: 0, kind: input, shape index: {}]
  %s1 = inlined_call_operand.vmem [shape: bf16[512,512], index: 1, kind: input, shape index: {}]
  %s2 = inlined_call_operand.vmem [shape: f32[1,512], index: 2, kind: input, shape index: {}]
  %s3 = inlined_call_operand.vmem [shape: f32[8,512], index: 3, kind: output, shape index: {}]
  %s4 = sld [smem:[#allocation0]]
  $region91: #{wsddn_forward.14} parent=0
    _
  %s6 = ssub.s32 1, %s4
  %s7 = scalar_select 0, %s6, %s4
  $region1: #{wsddn_forward.14} parent=0
    #allocation2 [shape = 'u8[524288]{0}', space=vmem, size = 0x80000, scoped, tag = 'input window, operand 1']
    loop: start=0, step=1, limit=4
    $region2: #{wsddn_forward.14} parent=1 // loop_pre_header
      _
    $region3: #{wsddn_forward.14} parent=1 // loop_header
      %s9 = sphi 0, %s13
      %p10 = scmp.ge.s32.totalorder %s9, 4
      %s16 = sphi 0, %s35
      %s17 = sphi 0, %s31
      %s18 = sphi 0, %s27
      %s19 = sphi 0, %s16
      %s20 = sphi 0, %s17
      %s21 = sphi 0, %s18
      %s22 = sphi 0, %s19
      %s23 = sphi 0, %s20
      %s24 = sphi 0, %s21
      %s40 = sphi 0, %s42
      %s43 = sphi 0, %s40
      %s44 = sphi 0, %s43
      %s60 = sphi 0, %s44
      %s68 = sphi 0, %s70
      %s71 = sphi 0, %s68
      %s72 = sphi 0, %s71
      %s88 = sphi 0, %s72
      %s94 = sphi 0, %s96
      %s97 = sphi 0, %s94
      %s98 = sphi 0, %s97
      %s114 = sphi 0, %s98
      %s122 = sphi 0, %s124
      %s125 = sphi 0, %s122
      %s126 = sphi 0, %s125
      %s142 = sphi 0, %s126
    $region4: #{wsddn_forward.14} parent=1 // loop_header_branch
      %12 = sbr.rel (%p10) target = $region8
    $region5: #{wsddn_forward.14} parent=1 // loop_body
      %s14 = ssub.s32 %s9, 1
      %s15 = ssub.s32 %s9, 2
      %s25 = sadd.s32 1, %s18
      %p26 = scmp.ge.s32.totalorder %s25, 1
      %s27 = scalar_select %p26, 0, %s25
      %s28 = sadd.s32 1, %s17
      %s29 = scalar_select %p26, %s28, %s17
      %p30 = scmp.ge.s32.totalorder %s29, 2
      %s31 = scalar_select %p30, 0, %s29
      %s32 = sadd.s32 1, %s16
      %s33 = scalar_select %p30, %s32, %s16
      %p34 = scmp.ge.s32.totalorder %s33, 1
      %s35 = scalar_select %p34, 0, %s33
      %s36 = ssub.s32 %s16, %s35
      %s37 = ssub.s32 %s18, %s27
      %s38 = sor.u32 %s36, %s37
      %p39 = scmp.eq.s32.totalorder %s38, 0
      %s41 = sadd.s32 %s40, 1
      %s42 = scalar_select %p39, %s40, %s41
      %p45 = pneg %p39
      %p46 = scmp.eq.s32.totalorder %s9, 1
      %p47 = por %p45, %p46
      %p48 = scmp.ne.s32.totalorder %s40, %s43
      %p49 = scmp.eq.s32.totalorder %s9, 0
      %p50 = por %p48, %p49
      %p51 = scmp.ne.s32.totalorder %s40, %s43
      %p52 = scmp.eq.s32.totalorder %s14, 1
      %p53 = por %p51, %p52
      %p54 = scmp.ne.s32.totalorder %s43, %s44
      %p55 = scmp.eq.s32.totalorder %s14, 0
      %p56 = por %p54, %p55
      %p57 = scmp.ne.s32.totalorder %s43, %s44
      %p58 = scmp.eq.s32.totalorder %s15, 1
      %p59 = por %p57, %p58
      %p61 = scmp.ne.s32.totalorder %s44, %s60
      %p62 = scmp.eq.s32.totalorder %s15, 0
      %p63 = por %p61, %p62
      %s64 = ssub.s32 %s18, %s27
      %s65 = ssub.s32 %s17, %s31
      %s66 = sor.u32 %s64, %s65
      %p67 = scmp.eq.s32.totalorder %s66, 0
      %s69 = sadd.s32 %s68, 1
      %s70 = scalar_select %p67, %s68, %s69
      %p73 = pneg %p67
      %p74 = scmp.eq.s32.totalorder %s9, 1
      %p75 = por %p73, %p74
      %p76 = scmp.ne.s32.totalorder %s68, %s71
      %p77 = scmp.eq.s32.totalorder %s9, 0
      %p78 = por %p76, %p77
      %p79 = scmp.ne.s32.totalorder %s68, %s71
      %p80 = scmp.eq.s32.totalorder %s14, 1
      %p81 = por %p79, %p80
      %p82 = scmp.ne.s32.totalorder %s71, %s72
      %p83 = scmp.eq.s32.totalorder %s14, 0
      %p84 = por %p82, %p83
      %p85 = scmp.ne.s32.totalorder %s71, %s72
      %p86 = scmp.eq.s32.totalorder %s15, 1
      %p87 = por %p85, %p86
      %p89 = scmp.ne.s32.totalorder %s72, %s88
      %p90 = scmp.eq.s32.totalorder %s15, 0
      %p91 = por %p89, %p90
      %s92 = ssub.s32 %s17, %s31
      %p93 = scmp.eq.s32.totalorder %s92, 0
      %s95 = sadd.s32 %s94, 1
      %s96 = scalar_select %p93, %s94, %s95
      %p99 = pneg %p93
      %p100 = scmp.eq.s32.totalorder %s9, 1
      %p101 = por %p99, %p100
      %p102 = scmp.ne.s32.totalorder %s94, %s97
      %p103 = scmp.eq.s32.totalorder %s9, 0
      %p104 = por %p102, %p103
      %p105 = scmp.ne.s32.totalorder %s94, %s97
      %p106 = scmp.eq.s32.totalorder %s14, 1
      %p107 = por %p105, %p106
      %p108 = scmp.ne.s32.totalorder %s97, %s98
      %p109 = scmp.eq.s32.totalorder %s14, 0
      %p110 = por %p108, %p109
      %p111 = scmp.ne.s32.totalorder %s97, %s98
      %p112 = scmp.eq.s32.totalorder %s15, 1
      %p113 = por %p111, %p112
      %p115 = scmp.ne.s32.totalorder %s98, %s114
      %p116 = scmp.eq.s32.totalorder %s15, 0
      %p117 = por %p115, %p116
      %s118 = ssub.s32 %s16, %s35
      %s119 = ssub.s32 %s17, %s31
      %s120 = sor.u32 %s118, %s119
      %p121 = scmp.eq.s32.totalorder %s120, 0
      %s123 = sadd.s32 %s122, 1
      %s124 = scalar_select %p121, %s122, %s123
      %p127 = pneg %p121
      %p128 = scmp.eq.s32.totalorder %s9, 1
      %p129 = por %p127, %p128
      %p130 = scmp.ne.s32.totalorder %s122, %s125
      %p131 = scmp.eq.s32.totalorder %s9, 0
      %p132 = por %p130, %p131
      %p133 = scmp.ne.s32.totalorder %s122, %s125
      %p134 = scmp.eq.s32.totalorder %s14, 1
      %p135 = por %p133, %p134
      %p136 = scmp.ne.s32.totalorder %s125, %s126
      %p137 = scmp.eq.s32.totalorder %s14, 0
      %p138 = por %p136, %p137
      %p139 = scmp.ne.s32.totalorder %s125, %s126
      %p140 = scmp.eq.s32.totalorder %s15, 1
      %p141 = por %p139, %p140
      %p143 = scmp.ne.s32.totalorder %s126, %s142
      %p144 = scmp.eq.s32.totalorder %s15, 0
      %p145 = por %p143, %p144
      %p146 = scmp.le.s32.totalorder 1, %s9
      %p147 = scmp.lt.s32.totalorder %s9, 3
      %p148 = pnand %p146, %p147
      %p149 = pneg %p148
      // Predicated region
      $region9: #{wsddn_forward.14} parent=5 // pred_check
        _
      $region10: #{wsddn_forward.14} parent=5 // pred_check_branch
        %151 = sbr.rel (%p148) target = $region12
      $region11: #{wsddn_forward.14} parent=5 // pred_region
        %s152 = ssub.s32 %s9, 1
        // Predicated region
        $region13: #{wsddn_forward.14} parent=11 // pred_check
          %p153 = pneg %p56
        $region14: #{wsddn_forward.14} parent=11 // pred_check_branch
          %155 = sbr.rel (%p153) target = $region16
        $region15: #{wsddn_forward.14} parent=11 // pred_region
          %s156 = smul.u32 4, %s21
          %p157 = scmp.lt.s32.totalorder %s19, 0
          %s158 = scalar_select %p157, %s19, 0
          %p159 = scmp.lt.s32.totalorder %s156, 3
          %s160 = scalar_select %p159, %s156, 3
          %s161 = smul.addr %s158, 4
          %s162 = sadd.s32 %s160, %s161
          %s163 = smul.addr %s162, 4
          %s164 = scalar_lea.vmem %s0, %s163
          %s165 = smul.u32 4, %s21
        $region16: #{wsddn_forward.14} parent=11 // pred_fallthru
          _
      $region12: #{wsddn_forward.14} parent=5 // pred_fallthru
        _
      %p166 = scmp.lt.s32.totalorder %s9, 2
      // Predicated region
      $region17: #{wsddn_forward.14} parent=5 // pred_check
        %p167 = pneg %p166
      $region18: #{wsddn_forward.14} parent=5 // pred_check_branch
        %169 = sbr.rel (%p167) target = $region20
      $region19: #{wsddn_forward.14} parent=5 // pred_region
        // Predicated region
        $region21: #{wsddn_forward.14} parent=19 // pred_check
          %p170 = pneg %p78
        $region22: #{wsddn_forward.14} parent=19 // pred_check_branch
          %172 = sbr.rel (%p170) target = $region24
        $region23: #{wsddn_forward.14} parent=19 // pred_region
          %s173 = sand.u32 %s68, 1
          %s174 = sand.u32 %s68, 1
          %s175 = smul.addr %s174, 512
          %s176 = scalar_lea.vmem [#allocation2], %s175
          %s177 = smul.u32 64, %s18
          %s178 = smul.u32 2, %s17
          %s179 = smul.addr %s177, 4
          %s180 = sadd.s32 %s178, %s179
          %s181 = smul.addr %s180, 4
          %s182 = scalar_lea.vmem %s1, %s181
          // Predicated region
          $region25: #{wsddn_forward.14} parent=23 // pred_check
            _
          $region26: #{wsddn_forward.14} parent=23 // pred_check_branch
            %184 = sbr.rel (0) target = $region28
          $region27: #{wsddn_forward.14} parent=23 // pred_region
            // Predicated region
            $region29: #{wsddn_forward.14} parent=27 // pred_check
              _
            $region30: #{wsddn_forward.14} parent=27 // pred_check_branch
              %186 = sbr.rel (0) target = $region32
            $region31: #{wsddn_forward.14} parent=27 // pred_region
              // Predicated region
              $region44: #{wsddn_forward.14} parent=31 // pred_check
                _
              $region45: #{wsddn_forward.14} parent=31 // pred_check_branch
                %328 = sbr.rel (0) target = $region47
              $region46: #{wsddn_forward.14} parent=31 // pred_region
                loop: start=0, step=1, limit=1
                $region48: #{wsddn_forward.14} parent=46 // loop_pre_header
                  _
                $region49: #{wsddn_forward.14} parent=46 // loop_header
                  %s330 = sphi 0, %s334
                  %p331 = scmp.ge.s32.totalorder %s330, 1
                  %s335 = sphi %s182, %s182
                  %s336 = sphi %s176, %s176
                $region50: #{wsddn_forward.14} parent=46 // loop_header_branch
                  %333 = sbr.rel (%p331) target = $region54
                $region51: #{wsddn_forward.14} parent=46 // loop_body
                  %v337 = vld [vmem:[%s335] sm:$0xff]
                  %338 = vst [vmem:[%s336] sm:$0xff] %v337
                  %v339 = vld [vmem:[%s335 + $0x10] sm:$0xff]
                  %340 = vst [vmem:[%s336 + $0x8] sm:$0xff] %v339
                  %v341 = vld [vmem:[%s335 + $0x20] sm:$0xff]
                  %342 = vst [vmem:[%s336 + $0x10] sm:$0xff] %v341
                  %v343 = vld [vmem:[%s335 + $0x30] sm:$0xff]
                  %344 = vst [vmem:[%s336 + $0x18] sm:$0xff] %v343
                  %v345 = vld [vmem:[%s335 + $0x40] sm:$0xff]
                  %346 = vst [vmem:[%s336 + $0x20] sm:$0xff] %v345
                  %v347 = vld [vmem:[%s335 + $0x50] sm:$0xff]
                  %348 = vst [vmem:[%s336 + $0x28] sm:$0xff] %v347
                  %v349 = vld [vmem:[%s335 + $0x60] sm:$0xff]
                  %350 = vst [vmem:[%s336 + $0x30] sm:$0xff] %v349
                  %v351 = vld [vmem:[%s335 + $0x70] sm:$0xff]
                  %352 = vst [vmem:[%s336 + $0x38] sm:$0xff] %v351
                  %v353 = vld [vmem:[%s335 + $0x80] sm:$0xff]
                  %354 = vst [vmem:[%s336 + $0x40] sm:$0xff] %v353
                  %v355 = vld [vmem:[%s335 + $0x90] sm:$0xff]
                  %356 = vst [vmem:[%s336 + $0x48] sm:$0xff] %v355
                  %v357 = vld [vmem:[%s335 + $0xa0] sm:$0xff]
                  %358 = vst [vmem:[%s336 + $0x50] sm:$0xff] %v357
                  %v359 = vld [vmem:[%s335 + $0xb0] sm:$0xff]
                  %360 = vst [vmem:[%s336 + $0x58] sm:$0xff] %v359
                  %v361 = vld [vmem:[%s335 + $0xc0] sm:$0xff]
                  %362 = vst [vmem:[%s336 + $0x60] sm:$0xff] %v361
                  %v363 = vld [vmem:[%s335 + $0xd0] sm:$0xff]
                  %364 = vst [vmem:[%s336 + $0x68] sm:$0xff] %v363
                  %v365 = vld [vmem:[%s335 + $0xe0] sm:$0xff]
                  %366 = vst [vmem:[%s336 + $0x70] sm:$0xff] %v365
                  %v367 = vld [vmem:[%s335 + $0xf0] sm:$0xff]
                  %368 = vst [vmem:[%s336 + $0x78] sm:$0xff] %v367
                  %v369 = vld [vmem:[%s335 + $0x100] sm:$0xff]
                  %370 = vst [vmem:[%s336 + $0x80] sm:$0xff] %v369
                  %v371 = vld [vmem:[%s335 + $0x110] sm:$0xff]
                  %372 = vst [vmem:[%s336 + $0x88] sm:$0xff] %v371
                  %v373 = vld [vmem:[%s335 + $0x120] sm:$0xff]
                  %374 = vst [vmem:[%s336 + $0x90] sm:$0xff] %v373
                  %v375 = vld [vmem:[%s335 + $0x130] sm:$0xff]
                  %376 = vst [vmem:[%s336 + $0x98] sm:$0xff] %v375
                  %v377 = vld [vmem:[%s335 + $0x140] sm:$0xff]
                  %378 = vst [vmem:[%s336 + $0xa0] sm:$0xff] %v377
                  %v379 = vld [vmem:[%s335 + $0x150] sm:$0xff]
                  %380 = vst [vmem:[%s336 + $0xa8] sm:$0xff] %v379
                  %v381 = vld [vmem:[%s335 + $0x160] sm:$0xff]
                  %382 = vst [vmem:[%s336 + $0xb0] sm:$0xff] %v381
                  %v383 = vld [vmem:[%s335 + $0x170] sm:$0xff]
                  %384 = vst [vmem:[%s336 + $0xb8] sm:$0xff] %v383
                  %v385 = vld [vmem:[%s335 + $0x180] sm:$0xff]
                  %386 = vst [vmem:[%s336 + $0xc0] sm:$0xff] %v385
                  %v387 = vld [vmem:[%s335 + $0x190] sm:$0xff]
                  %388 = vst [vmem:[%s336 + $0xc8] sm:$0xff] %v387
                  %v389 = vld [vmem:[%s335 + $0x1a0] sm:$0xff]
                  %390 = vst [vmem:[%s336 + $0xd0] sm:$0xff] %v389
                  %v391 = vld [vmem:[%s335 + $0x1b0] sm:$0xff]
                  %392 = vst [vmem:[%s336 + $0xd8] sm:$0xff] %v391
                  %v393 = vld [vmem:[%s335 + $0x1c0] sm:$0xff]
                  %394 = vst [vmem:[%s336 + $0xe0] sm:$0xff] %v393
                  %v395 = vld [vmem:[%s335 + $0x1d0] sm:$0xff]
                  %396 = vst [vmem:[%s336 + $0xe8] sm:$0xff] %v395
                  %v397 = vld [vmem:[%s335 + $0x1e0] sm:$0xff]
                  %398 = vst [vmem:[%s336 + $0xf0] sm:$0xff] %v397
                  %v399 = vld [vmem:[%s335 + $0x1f0] sm:$0xff]
                  %400 = vst [vmem:[%s336 + $0xf8] sm:$0xff] %v399
                  %v401 = vld [vmem:[%s335 + $0x200] sm:$0xff]
                  %402 = vst [vmem:[%s336 + $0x100] sm:$0xff] %v401
                  %v403 = vld [vmem:[%s335 + $0x210] sm:$0xff]
                  %404 = vst [vmem:[%s336 + $0x108] sm:$0xff] %v403
                  %v405 = vld [vmem:[%s335 + $0x220] sm:$0xff]
                  %406 = vst [vmem:[%s336 + $0x110] sm:$0xff] %v405
                  %v407 = vld [vmem:[%s335 + $0x230] sm:$0xff]
                  %408 = vst [vmem:[%s336 + $0x118] sm:$0xff] %v407
                  %v409 = vld [vmem:[%s335 + $0x240] sm:$0xff]
                  %410 = vst [vmem:[%s336 + $0x120] sm:$0xff] %v409
                  %v411 = vld [vmem:[%s335 + $0x250] sm:$0xff]
                  %412 = vst [vmem:[%s336 + $0x128] sm:$0xff] %v411
                  %v413 = vld [vmem:[%s335 + $0x260] sm:$0xff]
                  %414 = vst [vmem:[%s336 + $0x130] sm:$0xff] %v413
                  %v415 = vld [vmem:[%s335 + $0x270] sm:$0xff]
                  %416 = vst [vmem:[%s336 + $0x138] sm:$0xff] %v415
                  %v417 = vld [vmem:[%s335 + $0x280] sm:$0xff]
                  %418 = vst [vmem:[%s336 + $0x140] sm:$0xff] %v417
                  %v419 = vld [vmem:[%s335 + $0x290] sm:$0xff]
                  %420 = vst [vmem:[%s336 + $0x148] sm:$0xff] %v419
                  %v421 = vld [vmem:[%s335 + $0x2a0] sm:$0xff]
                  %422 = vst [vmem:[%s336 + $0x150] sm:$0xff] %v421
                  %v423 = vld [vmem:[%s335 + $0x2b0] sm:$0xff]
                  %424 = vst [vmem:[%s336 + $0x158] sm:$0xff] %v423
                  %v425 = vld [vmem:[%s335 + $0x2c0] sm:$0xff]
                  %426 = vst [vmem:[%s336 + $0x160] sm:$0xff] %v425
                  %v427 = vld [vmem:[%s335 + $0x2d0] sm:$0xff]
                  %428 = vst [vmem:[%s336 + $0x168] sm:$0xff] %v427
                  %v429 = vld [vmem:[%s335 + $0x2e0] sm:$0xff]
                  %430 = vst [vmem:[%s336 + $0x170] sm:$0xff] %v429
                  %v431 = vld [vmem:[%s335 + $0x2f0] sm:$0xff]
                  %432 = vst [vmem:[%s336 + $0x178] sm:$0xff] %v431
                  %v433 = vld [vmem:[%s335 + $0x300] sm:$0xff]
                  %434 = vst [vmem:[%s336 + $0x180] sm:$0xff] %v433
                  %v435 = vld [vmem:[%s335 + $0x310] sm:$0xff]
                  %436 = vst [vmem:[%s336 + $0x188] sm:$0xff] %v435
                  %v437 = vld [vmem:[%s335 + $0x320] sm:$0xff]
                  %438 = vst [vmem:[%s336 + $0x190] sm:$0xff] %v437
                  %v439 = vld [vmem:[%s335 + $0x330] sm:$0xff]
                  %440 = vst [vmem:[%s336 + $0x198] sm:$0xff] %v439
                  %v441 = vld [vmem:[%s335 + $0x340] sm:$0xff]
                  %442 = vst [vmem:[%s336 + $0x1a0] sm:$0xff] %v441
                  %v443 = vld [vmem:[%s335 + $0x350] sm:$0xff]
                  %444 = vst [vmem:[%s336 + $0x1a8] sm:$0xff] %v443
                  %v445 = vld [vmem:[%s335 + $0x360] sm:$0xff]
                  %446 = vst [vmem:[%s336 + $0x1b0] sm:$0xff] %v445
                  %v447 = vld [vmem:[%s335 + $0x370] sm:$0xff]
                  %448 = vst [vmem:[%s336 + $0x1b8] sm:$0xff] %v447
                  %v449 = vld [vmem:[%s335 + $0x380] sm:$0xff]
                  %450 = vst [vmem:[%s336 + $0x1c0] sm:$0xff] %v449
                  %v451 = vld [vmem:[%s335 + $0x390] sm:$0xff]
                  %452 = vst [vmem:[%s336 + $0x1c8] sm:$0xff] %v451
                  %v453 = vld [vmem:[%s335 + $0x3a0] sm:$0xff]
                  %454 = vst [vmem:[%s336 + $0x1d0] sm:$0xff] %v453
                  %v455 = vld [vmem:[%s335 + $0x3b0] sm:$0xff]
                  %456 = vst [vmem:[%s336 + $0x1d8] sm:$0xff] %v455
                  %v457 = vld [vmem:[%s335 + $0x3c0] sm:$0xff]
                  %458 = vst [vmem:[%s336 + $0x1e0] sm:$0xff] %v457
                  %v459 = vld [vmem:[%s335 + $0x3d0] sm:$0xff]
                  %460 = vst [vmem:[%s336 + $0x1e8] sm:$0xff] %v459
                  %v461 = vld [vmem:[%s335 + $0x3e0] sm:$0xff]
                  %462 = vst [vmem:[%s336 + $0x1f0] sm:$0xff] %v461
                  %v463 = vld [vmem:[%s335 + $0x3f0] sm:$0xff]
                  %464 = vst [vmem:[%s336 + $0x1f8] sm:$0xff] %v463
                $region52: #{wsddn_forward.14} parent=46 // loop_footer
                  %s334 = sadd.s32 1, %s330
                $region53: #{wsddn_forward.14} parent=46 // loop_footer_branch
                  %329 = sbr.rel target = $region49
                $region54: #{wsddn_forward.14} parent=46 // loop_exit
                  _
              $region47: #{wsddn_forward.14} parent=31 // pred_fallthru
                _
              // Predicated region
              $region55: #{wsddn_forward.14} parent=31 // pred_check
                _
              $region56: #{wsddn_forward.14} parent=31 // pred_check_branch
                %466 = sbr.rel target = $region58
              $region57: #{wsddn_forward.14} parent=31 // pred_region
                _
              $region58: #{wsddn_forward.14} parent=31 // pred_fallthru
                _
            $region32: #{wsddn_forward.14} parent=27 // pred_fallthru
              _
            // Predicated region
            $region33: #{wsddn_forward.14} parent=27 // pred_check
              _
            $region34: #{wsddn_forward.14} parent=27 // pred_check_branch
              %188 = sbr.rel target = $region36
            $region35: #{wsddn_forward.14} parent=27 // pred_region
              %s190 = ssub.s32 256, 1
              loop: start=0, step=1, limit=1
              $region37: #{wsddn_forward.14} parent=35 // loop_pre_header
                _
              $region38: #{wsddn_forward.14} parent=35 // loop_header
                %s192 = sphi 0, %s196
                %p193 = scmp.ge.s32.totalorder %s192, 1
                %s197 = sphi %s182, %s182
                %s198 = sphi %s176, %s176
              $region39: #{wsddn_forward.14} parent=35 // loop_header_branch
                %195 = sbr.rel (%p193) target = $region43
              $region40: #{wsddn_forward.14} parent=35 // loop_body
                %v199 = vld [vmem:[%s197] sm:%s190]
                %200 = vst [vmem:[%s198] sm:%s190] %v199
                %v201 = vld [vmem:[%s197 + $0x10] sm:%s190]
                %202 = vst [vmem:[%s198 + $0x8] sm:%s190] %v201
                %v203 = vld [vmem:[%s197 + $0x20] sm:%s190]
                %204 = vst [vmem:[%s198 + $0x10] sm:%s190] %v203
                %v205 = vld [vmem:[%s197 + $0x30] sm:%s190]
                %206 = vst [vmem:[%s198 + $0x18] sm:%s190] %v205
                %v207 = vld [vmem:[%s197 + $0x40] sm:%s190]
                %208 = vst [vmem:[%s198 + $0x20] sm:%s190] %v207
                %v209 = vld [vmem:[%s197 + $0x50] sm:%s190]
                %210 = vst [vmem:[%s198 + $0x28] sm:%s190] %v209
                %v211 = vld [vmem:[%s197 + $0x60] sm:%s190]
                %212 = vst [vmem:[%s198 + $0x30] sm:%s190] %v211
                %v213 = vld [vmem:[%s197 + $0x70] sm:%s190]
                %214 = vst [vmem:[%s198 + $0x38] sm:%s190] %v213
                %v215 = vld [vmem:[%s197 + $0x80] sm:%s190]
                %216 = vst [vmem:[%s198 + $0x40] sm:%s190] %v215
                %v217 = vld [vmem:[%s197 + $0x90] sm:%s190]
                %218 = vst [vmem:[%s198 + $0x48] sm:%s190] %v217
                %v219 = vld [vmem:[%s197 + $0xa0] sm:%s190]
                %220 = vst [vmem:[%s198 + $0x50] sm:%s190] %v219
                %v221 = vld [vmem:[%s197 + $0xb0] sm:%s190]
                %222 = vst [vmem:[%s198 + $0x58] sm:%s190] %v221
                %v223 = vld [vmem:[%s197 + $0xc0] sm:%s190]
                %224 = vst [vmem:[%s198 + $0x60] sm:%s190] %v223
                %v225 = vld [vmem:[%s197 + $0xd0] sm:%s190]
                %226 = vst [vmem:[%s198 + $0x68] sm:%s190] %v225
                %v227 = vld [vmem:[%s197 + $0xe0] sm:%s190]
                %228 = vst [vmem:[%s198 + $0x70] sm:%s190] %v227
                %v229 = vld [vmem:[%s197 + $0xf0] sm:%s190]
                %230 = vst [vmem:[%s198 + $0x78] sm:%s190] %v229
                %v231 = vld [vmem:[%s197 + $0x100] sm:%s190]
                %232 = vst [vmem:[%s198 + $0x80] sm:%s190] %v231
                %v233 = vld [vmem:[%s197 + $0x110] sm:%s190]
                %234 = vst [vmem:[%s198 + $0x88] sm:%s190] %v233
                %v235 = vld [vmem:[%s197 + $0x120] sm:%s190]
                %236 = vst [vmem:[%s198 + $0x90] sm:%s190] %v235
                %v237 = vld [vmem:[%s197 + $0x130] sm:%s190]
                %238 = vst [vmem:[%s198 + $0x98] sm:%s190] %v237
                %v239 = vld [vmem:[%s197 + $0x140] sm:%s190]
                %240 = vst [vmem:[%s198 + $0xa0] sm:%s190] %v239
                %v241 = vld [vmem:[%s197 + $0x150] sm:%s190]
                %242 = vst [vmem:[%s198 + $0xa8] sm:%s190] %v241
                %v243 = vld [vmem:[%s197 + $0x160] sm:%s190]
                %244 = vst [vmem:[%s198 + $0xb0] sm:%s190] %v243
                %v245 = vld [vmem:[%s197 + $0x170] sm:%s190]
                %246 = vst [vmem:[%s198 + $0xb8] sm:%s190] %v245
                %v247 = vld [vmem:[%s197 + $0x180] sm:%s190]
                %248 = vst [vmem:[%s198 + $0xc0] sm:%s190] %v247
                %v249 = vld [vmem:[%s197 + $0x190] sm:%s190]
                %250 = vst [vmem:[%s198 + $0xc8] sm:%s190] %v249
                %v251 = vld [vmem:[%s197 + $0x1a0] sm:%s190]
                %252 = vst [vmem:[%s198 + $0xd0] sm:%s190] %v251
                %v253 = vld [vmem:[%s197 + $0x1b0] sm:%s190]
                %254 = vst [vmem:[%s198 + $0xd8] sm:%s190] %v253
                %v255 = vld [vmem:[%s197 + $0x1c0] sm:%s190]
                %256 = vst [vmem:[%s198 + $0xe0] sm:%s190] %v255
                %v257 = vld [vmem:[%s197 + $0x1d0] sm:%s190]
                %258 = vst [vmem:[%s198 + $0xe8] sm:%s190] %v257
                %v259 = vld [vmem:[%s197 + $0x1e0] sm:%s190]
                %260 = vst [vmem:[%s198 + $0xf0] sm:%s190] %v259
                %v261 = vld [vmem:[%s197 + $0x1f0] sm:%s190]
                %262 = vst [vmem:[%s198 + $0xf8] sm:%s190] %v261
                %v263 = vld [vmem:[%s197 + $0x200] sm:%s190]
                %264 = vst [vmem:[%s198 + $0x100] sm:%s190] %v263
                %v265 = vld [vmem:[%s197 + $0x210] sm:%s190]
                %266 = vst [vmem:[%s198 + $0x108] sm:%s190] %v265
                %v267 = vld [vmem:[%s197 + $0x220] sm:%s190]
                %268 = vst [vmem:[%s198 + $0x110] sm:%s190] %v267
                %v269 = vld [vmem:[%s197 + $0x230] sm:%s190]
                %270 = vst [vmem:[%s198 + $0x118] sm:%s190] %v269
                %v271 = vld [vmem:[%s197 + $0x240] sm:%s190]
                %272 = vst [vmem:[%s198 + $0x120] sm:%s190] %v271
                %v273 = vld [vmem:[%s197 + $0x250] sm:%s190]
                %274 = vst [vmem:[%s198 + $0x128] sm:%s190] %v273
                %v275 = vld [vmem:[%s197 + $0x260] sm:%s190]
                %276 = vst [vmem:[%s198 + $0x130] sm:%s190] %v275
                %v277 = vld [vmem:[%s197 + $0x270] sm:%s190]
                %278 = vst [vmem:[%s198 + $0x138] sm:%s190] %v277
                %v279 = vld [vmem:[%s197 + $0x280] sm:%s190]
                %280 = vst [vmem:[%s198 + $0x140] sm:%s190] %v279
                %v281 = vld [vmem:[%s197 + $0x290] sm:%s190]
                %282 = vst [vmem:[%s198 + $0x148] sm:%s190] %v281
                %v283 = vld [vmem:[%s197 + $0x2a0] sm:%s190]
                %284 = vst [vmem:[%s198 + $0x150] sm:%s190] %v283
                %v285 = vld [vmem:[%s197 + $0x2b0] sm:%s190]
                %286 = vst [vmem:[%s198 + $0x158] sm:%s190] %v285
                %v287 = vld [vmem:[%s197 + $0x2c0] sm:%s190]
                %288 = vst [vmem:[%s198 + $0x160] sm:%s190] %v287
                %v289 = vld [vmem:[%s197 + $0x2d0] sm:%s190]
                %290 = vst [vmem:[%s198 + $0x168] sm:%s190] %v289
                %v291 = vld [vmem:[%s197 + $0x2e0] sm:%s190]
                %292 = vst [vmem:[%s198 + $0x170] sm:%s190] %v291
                %v293 = vld [vmem:[%s197 + $0x2f0] sm:%s190]
                %294 = vst [vmem:[%s198 + $0x178] sm:%s190] %v293
                %v295 = vld [vmem:[%s197 + $0x300] sm:%s190]
                %296 = vst [vmem:[%s198 + $0x180] sm:%s190] %v295
                %v297 = vld [vmem:[%s197 + $0x310] sm:%s190]
                %298 = vst [vmem:[%s198 + $0x188] sm:%s190] %v297
                %v299 = vld [vmem:[%s197 + $0x320] sm:%s190]
                %300 = vst [vmem:[%s198 + $0x190] sm:%s190] %v299
                %v301 = vld [vmem:[%s197 + $0x330] sm:%s190]
                %302 = vst [vmem:[%s198 + $0x198] sm:%s190] %v301
                %v303 = vld [vmem:[%s197 + $0x340] sm:%s190]
                %304 = vst [vmem:[%s198 + $0x1a0] sm:%s190] %v303
                %v305 = vld [vmem:[%s197 + $0x350] sm:%s190]
                %306 = vst [vmem:[%s198 + $0x1a8] sm:%s190] %v305
                %v307 = vld [vmem:[%s197 + $0x360] sm:%s190]
                %308 = vst [vmem:[%s198 + $0x1b0] sm:%s190] %v307
                %v309 = vld [vmem:[%s197 + $0x370] sm:%s190]
                %310 = vst [vmem:[%s198 + $0x1b8] sm:%s190] %v309
                %v311 = vld [vmem:[%s197 + $0x380] sm:%s190]
                %312 = vst [vmem:[%s198 + $0x1c0] sm:%s190] %v311
                %v313 = vld [vmem:[%s197 + $0x390] sm:%s190]
                %314 = vst [vmem:[%s198 + $0x1c8] sm:%s190] %v313
                %v315 = vld [vmem:[%s197 + $0x3a0] sm:%s190]
                %316 = vst [vmem:[%s198 + $0x1d0] sm:%s190] %v315
                %v317 = vld [vmem:[%s197 + $0x3b0] sm:%s190]
                %318 = vst [vmem:[%s198 + $0x1d8] sm:%s190] %v317
                %v319 = vld [vmem:[%s197 + $0x3c0] sm:%s190]
                %320 = vst [vmem:[%s198 + $0x1e0] sm:%s190] %v319
                %v321 = vld [vmem:[%s197 + $0x3d0] sm:%s190]
                %322 = vst [vmem:[%s198 + $0x1e8] sm:%s190] %v321
                %v323 = vld [vmem:[%s197 + $0x3e0] sm:%s190]
                %324 = vst [vmem:[%s198 + $0x1f0] sm:%s190] %v323
                %v325 = vld [vmem:[%s197 + $0x3f0] sm:%s190]
                %326 = vst [vmem:[%s198 + $0x1f8] sm:%s190] %v325
              $region41: #{wsddn_forward.14} parent=35 // loop_footer
                %s196 = sadd.s32 1, %s192
              $region42: #{wsddn_forward.14} parent=35 // loop_footer_branch
                %191 = sbr.rel target = $region38
              $region43: #{wsddn_forward.14} parent=35 // loop_exit
                _
            $region36: #{wsddn_forward.14} parent=27 // pred_fallthru
              _
          $region28: #{wsddn_forward.14} parent=23 // pred_fallthru
            _
          %467 = vnop
        $region24: #{wsddn_forward.14} parent=19 // pred_fallthru
          _
        // Predicated region
        $region59: #{wsddn_forward.14} parent=19 // pred_check
          %p468 = pneg %p104
        $region60: #{wsddn_forward.14} parent=19 // pred_check_branch
          %470 = sbr.rel (%p468) target = $region62
        $region61: #{wsddn_forward.14} parent=19 // pred_region
          %s471 = smul.u32 2, %s17
          %p472 = scmp.lt.s32.totalorder %s471, 3
          %s473 = scalar_select %p472, %s471, 3
          %s474 = scalar_lea.vmem %s2, %s473
          %s475 = smul.u32 2, %s17
        $region62: #{wsddn_forward.14} parent=19 // pred_fallthru
          _
      $region20: #{wsddn_forward.14} parent=5 // pred_fallthru
        _
      %p476 = scmp.le.s32.totalorder 1, %s9
      %p477 = scmp.lt.s32.totalorder %s9, 3
      %p478 = pnand %p476, %p477
      %p479 = pneg %p478
      // Predicated region
      $region63: #{wsddn_forward.14} parent=5 // pred_check
        _
      $region64: #{wsddn_forward.14} parent=5 // pred_check_branch
        %481 = sbr.rel (%p478) target = $region66
      $region65: #{wsddn_forward.14} parent=5 // pred_region
        %s482 = ssub.s32 %s9, 1
        %s483 = sand.u32 %s71, 1
        %s484 = sand.u32 %s71, 1
        %s485 = smul.addr %s484, 512
        %s486 = scalar_lea.vmem [#allocation2], %s485
        // Predicated region
        $region67: #{wsddn_forward.14} parent=65 // pred_check
          %p487 = pneg %p84
        $region68: #{wsddn_forward.14} parent=65 // pred_check_branch
          %489 = sbr.rel (%p487) target = $region70
        $region69: #{wsddn_forward.14} parent=65 // pred_region
          _
        $region70: #{wsddn_forward.14} parent=65 // pred_fallthru
          _
        %s490 = smul.u32 4, %s21
        %p491 = scmp.lt.s32.totalorder %s19, 0
        %s492 = scalar_select %p491, %s19, 0
        %p493 = scmp.lt.s32.totalorder %s490, 3
        %s494 = scalar_select %p493, %s490, 3
        %s495 = smul.addr %s492, 4
        %s496 = sadd.s32 %s494, %s495
        %s497 = smul.addr %s496, 4
        %s498 = scalar_lea.vmem %s0, %s497
        %p499 = pneg %p56
        %p500 = pneg %p53
        %s501 = sand.u32 %s71, 1
        %s502 = sand.u32 %s71, 1
        %s503 = smul.addr %s502, 512
        %s504 = scalar_lea.vmem [#allocation2], %s503
        %p505 = pneg %p84
        %p506 = pneg %p81
        %s507 = smul.u32 2, %s20
        %p508 = scmp.lt.s32.totalorder %s507, 3
        %s509 = scalar_select %p508, %s507, 3
        %s510 = scalar_lea.vmem %s2, %s509
        %p511 = pneg %p110
        %p512 = pneg %p107
        %p513 = pneg %p138
        %p514 = pneg %p135
        %s515 = smul.u32 2, %s20
        %p516 = scmp.lt.s32.totalorder %s19, 0
        %s517 = scalar_select %p516, %s19, 0
        %p518 = scmp.lt.s32.totalorder %s515, 3
        %s519 = scalar_select %p518, %s515, 3
        %s520 = smul.addr %s517, 4
        %s521 = sadd.s32 %s519, %s520
        %s522 = smul.addr %s521, 8
        %s523 = scalar_lea.vmem %s3, %s522
        %s524 = smul.u32 4, %s21
        %p525 = scmp.lt.s32.totalorder %s19, 0
        %s526 = scalar_select %p525, %s19, 0
        %p527 = scmp.lt.s32.totalorder %s524, 3
        %s528 = scalar_select %p527, %s524, 3
        %s529 = smul.addr %s526, 4
        %s530 = sadd.s32 %s528, %s529
        %s531 = smul.addr %s530, 4
        %s532 = scalar_lea.vmem %s0, %s531
        %s533 = smul.u32 4, %s21
        %s534 = smul.u32 64, %s21
        %s535 = smul.u32 2, %s20
        %s536 = smul.u32 2, %s20
        %p537 = scmp.lt.s32.totalorder %s536, 3
        %s538 = scalar_select %p537, %s536, 3
        %s539 = scalar_lea.vmem %s2, %s538
        %s540 = smul.u32 2, %s20
        %s541 = smul.u32 2, %s20
        %p542 = scmp.lt.s32.totalorder %s19, 0
        %s543 = scalar_select %p542, %s19, 0
        %p544 = scmp.lt.s32.totalorder %s541, 3
        %s545 = scalar_select %p544, %s541, 3
        %s546 = smul.addr %s543, 4
        %s547 = sadd.s32 %s545, %s546
        %s548 = smul.addr %s547, 8
        %s549 = scalar_lea.vmem %s3, %s548
        %s550 = smul.u32 2, %s20
        %p551 = scmp.eq.s32.totalorder %s21, 0
        // Predicated region
        $region71: #{wsddn_forward.14} parent=65 // pred_check
          %p552 = pneg %p551
        $region72: #{wsddn_forward.14} parent=65 // pred_check_branch
          %554 = sbr.rel (%p552) target = $region74
        $region73: #{wsddn_forward.14} parent=65 // pred_region
          %555 = vst [vmem:[%s549] sm:$0xff] 0.0
          %556 = vst [vmem:[%s549 + $0x8] sm:$0xff] 0.0
        $region74: #{wsddn_forward.14} parent=65 // pred_fallthru
          _
        %v557 = vld [vmem:[%s549] sm:$0xff]
        %v558 = vld [vmem:[%s549 + $0x8] sm:$0xff]
        %v559 = vld [vmem:[%s532] sm:$0xff]
        %v560 = vld [vmem:[%s532 + $0x8] sm:$0xff]
        %v561 = vld [vmem:[%s486] sm:$0xff]
        %v562 = vld [vmem:[%s486 + $0x8] sm:$0xff]
        %v563 = vld [vmem:[%s486 + $0x10] sm:$0xff]
        %v564 = vld [vmem:[%s486 + $0x18] sm:$0xff]
        %v565 = vld [vmem:[%s486 + $0x20] sm:$0xff]
        %v566 = vld [vmem:[%s486 + $0x28] sm:$0xff]
        %v567 = vld [vmem:[%s486 + $0x30] sm:$0xff]
        %v568 = vld [vmem:[%s486 + $0x38] sm:$0xff]
        %v569 = vld [vmem:[%s486 + $0x40] sm:$0xff]
        %v570 = vld [vmem:[%s486 + $0x48] sm:$0xff]
        %v571 = vld [vmem:[%s486 + $0x50] sm:$0xff]
        %v572 = vld [vmem:[%s486 + $0x58] sm:$0xff]
        %v573 = vld [vmem:[%s486 + $0x60] sm:$0xff]
        %v574 = vld [vmem:[%s486 + $0x68] sm:$0xff]
        %v575 = vld [vmem:[%s486 + $0x70] sm:$0xff]
        %v576 = vld [vmem:[%s486 + $0x78] sm:$0xff]
        %v577 = vld [vmem:[%s486 + $0x80] sm:$0xff]
        %v578 = vld [vmem:[%s486 + $0x88] sm:$0xff]
        %v579 = vld [vmem:[%s486 + $0x90] sm:$0xff]
        %v580 = vld [vmem:[%s486 + $0x98] sm:$0xff]
        %v581 = vld [vmem:[%s486 + $0xa0] sm:$0xff]
        %v582 = vld [vmem:[%s486 + $0xa8] sm:$0xff]
        %v583 = vld [vmem:[%s486 + $0xb0] sm:$0xff]
        %v584 = vld [vmem:[%s486 + $0xb8] sm:$0xff]
        %v585 = vld [vmem:[%s486 + $0xc0] sm:$0xff]
        %v586 = vld [vmem:[%s486 + $0xc8] sm:$0xff]
        %v587 = vld [vmem:[%s486 + $0xd0] sm:$0xff]
        %v588 = vld [vmem:[%s486 + $0xd8] sm:$0xff]
        %v589 = vld [vmem:[%s486 + $0xe0] sm:$0xff]
        %v590 = vld [vmem:[%s486 + $0xe8] sm:$0xff]
        %v591 = vld [vmem:[%s486 + $0xf0] sm:$0xff]
        %v592 = vld [vmem:[%s486 + $0xf8] sm:$0xff]
        %v593 = vld [vmem:[%s486 + $0x100] sm:$0xff]
        %v594 = vld [vmem:[%s486 + $0x108] sm:$0xff]
        %v595 = vld [vmem:[%s486 + $0x110] sm:$0xff]
        %v596 = vld [vmem:[%s486 + $0x118] sm:$0xff]
        %v597 = vld [vmem:[%s486 + $0x120] sm:$0xff]
        %v598 = vld [vmem:[%s486 + $0x128] sm:$0xff]
        %v599 = vld [vmem:[%s486 + $0x130] sm:$0xff]
        %v600 = vld [vmem:[%s486 + $0x138] sm:$0xff]
        %v601 = vld [vmem:[%s486 + $0x140] sm:$0xff]
        %v602 = vld [vmem:[%s486 + $0x148] sm:$0xff]
        %v603 = vld [vmem:[%s486 + $0x150] sm:$0xff]
        %v604 = vld [vmem:[%s486 + $0x158] sm:$0xff]
        %v605 = vld [vmem:[%s486 + $0x160] sm:$0xff]
        %v606 = vld [vmem:[%s486 + $0x168] sm:$0xff]
        %v607 = vld [vmem:[%s486 + $0x170] sm:$0xff]
        %v608 = vld [vmem:[%s486 + $0x178] sm:$0xff]
        %v609 = vld [vmem:[%s486 + $0x180] sm:$0xff]
        %v610 = vld [vmem:[%s486 + $0x188] sm:$0xff]
        %v611 = vld [vmem:[%s486 + $0x190] sm:$0xff]
        %v612 = vld [vmem:[%s486 + $0x198] sm:$0xff]
        %v613 = vld [vmem:[%s486 + $0x1a0] sm:$0xff]
        %v614 = vld [vmem:[%s486 + $0x1a8] sm:$0xff]
        %v615 = vld [vmem:[%s486 + $0x1b0] sm:$0xff]
        %v616 = vld [vmem:[%s486 + $0x1b8] sm:$0xff]
        %v617 = vld [vmem:[%s486 + $0x1c0] sm:$0xff]
        %v618 = vld [vmem:[%s486 + $0x1c8] sm:$0xff]
        %v619 = vld [vmem:[%s486 + $0x1d0] sm:$0xff]
        %v620 = vld [vmem:[%s486 + $0x1d8] sm:$0xff]
        %v621 = vld [vmem:[%s486 + $0x1e0] sm:$0xff]
        %v622 = vld [vmem:[%s486 + $0x1e8] sm:$0xff]
        %v623 = vld [vmem:[%s486 + $0x1f0] sm:$0xff]
        %v624 = vld [vmem:[%s486 + $0x1f8] sm:$0xff]
        %v627 = vunpack.c.l.b16 %v559
        %v628 = vunpack.c.h.b16 %v559
        %v629 = vunpack.c.l.b16 %v560
        %v630 = vunpack.c.h.b16 %v560
        %v631 = vpack.c.b16 %v627, %v627
        %v632 = vpack.c.b16 %v628, %v628
        %v633 = vpack.c.b16 %v629, %v629
        %v634 = vpack.c.b16 %v630, %v630
        %v703 = vunpack.c.l.b16 %v561
        %v704 = vunpack.c.h.b16 %v561
        %v705 = vunpack.c.l.b16 %v562
        %v706 = vunpack.c.h.b16 %v562
        %v707 = vunpack.c.l.b16 %v563
        %v708 = vunpack.c.h.b16 %v563
        %v709 = vunpack.c.l.b16 %v564
        %v710 = vunpack.c.h.b16 %v564
        %v711 = vunpack.c.l.b16 %v565
        %v712 = vunpack.c.h.b16 %v565
        %v713 = vunpack.c.l.b16 %v566
        %v714 = vunpack.c.h.b16 %v566
        %v715 = vunpack.c.l.b16 %v567
        %v716 = vunpack.c.h.b16 %v567
        %v717 = vunpack.c.l.b16 %v568
        %v718 = vunpack.c.h.b16 %v568
        %v719 = vunpack.c.l.b16 %v569
        %v720 = vunpack.c.h.b16 %v569
        %v721 = vunpack.c.l.b16 %v570
        %v722 = vunpack.c.h.b16 %v570
        %v723 = vunpack.c.l.b16 %v571
        %v724 = vunpack.c.h.b16 %v571
        %v725 = vunpack.c.l.b16 %v572
        %v726 = vunpack.c.h.b16 %v572
        %v727 = vunpack.c.l.b16 %v573
        %v728 = vunpack.c.h.b16 %v573
        %v729 = vunpack.c.l.b16 %v574
        %v730 = vunpack.c.h.b16 %v574
        %v731 = vunpack.c.l.b16 %v575
        %v732 = vunpack.c.h.b16 %v575
        %v733 = vunpack.c.l.b16 %v576
        %v734 = vunpack.c.h.b16 %v576
        %v735 = vunpack.c.l.b16 %v577
        %v736 = vunpack.c.h.b16 %v577
        %v737 = vunpack.c.l.b16 %v578
        %v738 = vunpack.c.h.b16 %v578
        %v739 = vunpack.c.l.b16 %v579
        %v740 = vunpack.c.h.b16 %v579
        %v741 = vunpack.c.l.b16 %v580
        %v742 = vunpack.c.h.b16 %v580
        %v743 = vunpack.c.l.b16 %v581
        %v744 = vunpack.c.h.b16 %v581
        %v745 = vunpack.c.l.b16 %v582
        %v746 = vunpack.c.h.b16 %v582
        %v747 = vunpack.c.l.b16 %v583
        %v748 = vunpack.c.h.b16 %v583
        %v749 = vunpack.c.l.b16 %v584
        %v750 = vunpack.c.h.b16 %v584
        %v751 = vunpack.c.l.b16 %v585
        %v752 = vunpack.c.h.b16 %v585
        %v753 = vunpack.c.l.b16 %v586
        %v754 = vunpack.c.h.b16 %v586
        %v755 = vunpack.c.l.b16 %v587
        %v756 = vunpack.c.h.b16 %v587
        %v757 = vunpack.c.l.b16 %v588
        %v758 = vunpack.c.h.b16 %v588
        %v759 = vunpack.c.l.b16 %v589
        %v760 = vunpack.c.h.b16 %v589
        %v761 = vunpack.c.l.b16 %v590
        %v762 = vunpack.c.h.b16 %v590
        %v763 = vunpack.c.l.b16 %v591
        %v764 = vunpack.c.h.b16 %v591
        %v765 = vunpack.c.l.b16 %v592
        %v766 = vunpack.c.h.b16 %v592
        %v767 = vunpack.c.l.b16 %v593
        %v768 = vunpack.c.h.b16 %v593
        %v769 = vunpack.c.l.b16 %v594
        %v770 = vunpack.c.h.b16 %v594
        %v771 = vunpack.c.l.b16 %v595
        %v772 = vunpack.c.h.b16 %v595
        %v773 = vunpack.c.l.b16 %v596
        %v774 = vunpack.c.h.b16 %v596
        %v775 = vunpack.c.l.b16 %v597
        %v776 = vunpack.c.h.b16 %v597
        %v777 = vunpack.c.l.b16 %v598
        %v778 = vunpack.c.h.b16 %v598
        %v779 = vunpack.c.l.b16 %v599
        %v780 = vunpack.c.h.b16 %v599
        %v781 = vunpack.c.l.b16 %v600
        %v782 = vunpack.c.h.b16 %v600
        %v783 = vunpack.c.l.b16 %v601
        %v784 = vunpack.c.h.b16 %v601
        %v785 = vunpack.c.l.b16 %v602
        %v786 = vunpack.c.h.b16 %v602
        %v787 = vunpack.c.l.b16 %v603
        %v788 = vunpack.c.h.b16 %v603
        %v789 = vunpack.c.l.b16 %v604
        %v790 = vunpack.c.h.b16 %v604
        %v791 = vunpack.c.l.b16 %v605
        %v792 = vunpack.c.h.b16 %v605
        %v793 = vunpack.c.l.b16 %v606
        %v794 = vunpack.c.h.b16 %v606
        %v795 = vunpack.c.l.b16 %v607
        %v796 = vunpack.c.h.b16 %v607
        %v797 = vunpack.c.l.b16 %v608
        %v798 = vunpack.c.h.b16 %v608
        %v799 = vunpack.c.l.b16 %v609
        %v800 = vunpack.c.h.b16 %v609
        %v801 = vunpack.c.l.b16 %v610
        %v802 = vunpack.c.h.b16 %v610
        %v803 = vunpack.c.l.b16 %v611
        %v804 = vunpack.c.h.b16 %v611
        %v805 = vunpack.c.l.b16 %v612
        %v806 = vunpack.c.h.b16 %v612
        %v807 = vunpack.c.l.b16 %v613
        %v808 = vunpack.c.h.b16 %v613
        %v809 = vunpack.c.l.b16 %v614
        %v810 = vunpack.c.h.b16 %v614
        %v811 = vunpack.c.l.b16 %v615
        %v812 = vunpack.c.h.b16 %v615
        %v813 = vunpack.c.l.b16 %v616
        %v814 = vunpack.c.h.b16 %v616
        %v815 = vunpack.c.l.b16 %v617
        %v816 = vunpack.c.h.b16 %v617
        %v817 = vunpack.c.l.b16 %v618
        %v818 = vunpack.c.h.b16 %v618
        %v819 = vunpack.c.l.b16 %v619
        %v820 = vunpack.c.h.b16 %v619
        %v821 = vunpack.c.l.b16 %v620
        %v822 = vunpack.c.h.b16 %v620
        %v823 = vunpack.c.l.b16 %v621
        %v824 = vunpack.c.h.b16 %v621
        %v825 = vunpack.c.l.b16 %v622
        %v826 = vunpack.c.h.b16 %v622
        %v827 = vunpack.c.l.b16 %v623
        %v828 = vunpack.c.h.b16 %v623
        %v829 = vunpack.c.l.b16 %v624
        %v830 = vunpack.c.h.b16 %v624
        %v831 = vpack.c.b16 %v705, %v703
        %v832 = vpack.c.b16 %v706, %v704
        %v833 = vpack.c.b16 %v709, %v707
        %v834 = vpack.c.b16 %v710, %v708
        %v835 = vpack.c.b16 %v713, %v711
        %v836 = vpack.c.b16 %v714, %v712
        %v837 = vpack.c.b16 %v717, %v715
        %v838 = vpack.c.b16 %v718, %v716
        %v839 = vpack.c.b16 %v721, %v719
        %v840 = vpack.c.b16 %v722, %v720
        %v841 = vpack.c.b16 %v725, %v723
        %v842 = vpack.c.b16 %v726, %v724
        %v843 = vpack.c.b16 %v729, %v727
        %v844 = vpack.c.b16 %v730, %v728
        %v845 = vpack.c.b16 %v733, %v731
        %v846 = vpack.c.b16 %v734, %v732
        %v847 = vpack.c.b16 %v737, %v735
        %v848 = vpack.c.b16 %v738, %v736
        %v849 = vpack.c.b16 %v741, %v739
        %v850 = vpack.c.b16 %v742, %v740
        %v851 = vpack.c.b16 %v745, %v743
        %v852 = vpack.c.b16 %v746, %v744
        %v853 = vpack.c.b16 %v749, %v747
        %v854 = vpack.c.b16 %v750, %v748
        %v855 = vpack.c.b16 %v753, %v751
        %v856 = vpack.c.b16 %v754, %v752
        %v857 = vpack.c.b16 %v757, %v755
        %v858 = vpack.c.b16 %v758, %v756
        %v859 = vpack.c.b16 %v761, %v759
        %v860 = vpack.c.b16 %v762, %v760
        %v861 = vpack.c.b16 %v765, %v763
        %v862 = vpack.c.b16 %v766, %v764
        %v863 = vpack.c.b16 %v769, %v767
        %v864 = vpack.c.b16 %v770, %v768
        %v865 = vpack.c.b16 %v773, %v771
        %v866 = vpack.c.b16 %v774, %v772
        %v867 = vpack.c.b16 %v777, %v775
        %v868 = vpack.c.b16 %v778, %v776
        %v869 = vpack.c.b16 %v781, %v779
        %v870 = vpack.c.b16 %v782, %v780
        %v871 = vpack.c.b16 %v785, %v783
        %v872 = vpack.c.b16 %v786, %v784
        %v873 = vpack.c.b16 %v789, %v787
        %v874 = vpack.c.b16 %v790, %v788
        %v875 = vpack.c.b16 %v793, %v791
        %v876 = vpack.c.b16 %v794, %v792
        %v877 = vpack.c.b16 %v797, %v795
        %v878 = vpack.c.b16 %v798, %v796
        %v879 = vpack.c.b16 %v801, %v799
        %v880 = vpack.c.b16 %v802, %v800
        %v881 = vpack.c.b16 %v805, %v803
        %v882 = vpack.c.b16 %v806, %v804
        %v883 = vpack.c.b16 %v809, %v807
        %v884 = vpack.c.b16 %v810, %v808
        %v885 = vpack.c.b16 %v813, %v811
        %v886 = vpack.c.b16 %v814, %v812
        %v887 = vpack.c.b16 %v817, %v815
        %v888 = vpack.c.b16 %v818, %v816
        %v889 = vpack.c.b16 %v821, %v819
        %v890 = vpack.c.b16 %v822, %v820
        %v891 = vpack.c.b16 %v825, %v823
        %v892 = vpack.c.b16 %v826, %v824
        %v893 = vpack.c.b16 %v829, %v827
        %v894 = vpack.c.b16 %v830, %v828
        %959 = vmatpush.bf16.msra.mxu0 %v845
        %960 = vmatpush.bf16.msra.mxu0 %v843
        %961 = vmatpush.bf16.msra.mxu0 %v841
        %962 = vmatpush.bf16.msra.mxu0 %v839
        %963 = vmatpush.bf16.msra.mxu0 %v837
        %964 = vmatpush.bf16.msra.mxu0 %v835
        %965 = vmatpush.bf16.msra.mxu0 %v833
        %966 = vmatpush.bf16.msra.mxu0 %v831
        %967 = vmatmul.bf16.gmra.mxu0 %v631
        %v968 = vpop.f32.mrf.mxu0
        %v969 = vadd.f32 0.0, %v968
        %v970 = vpop.f32.mrf.mxu0
        %971 = vdwg.mxu0
        %972 = vmatpush.bf16.msra.mxu0 %v861
        %973 = vmatpush.bf16.msra.mxu0 %v859
        %974 = vmatpush.bf16.msra.mxu0 %v857
        %975 = vmatpush.bf16.msra.mxu0 %v855
        %976 = vmatpush.bf16.msra.mxu0 %v853
        %977 = vmatpush.bf16.msra.mxu0 %v851
        %978 = vmatpush.bf16.msra.mxu0 %v849
        %979 = vmatpush.bf16.msra.mxu0 %v847
        %980 = vmatmul.bf16.gmra.mxu0 %v632
        %v981 = vpop.f32.mrf.mxu0
        %v982 = vadd.f32 %v969, %v981
        %v983 = vpop.f32.mrf.mxu0
        %984 = vdwg.mxu0
        %985 = vmatpush.bf16.msra.mxu0 %v877
        %986 = vmatpush.bf16.msra.mxu0 %v875
        %987 = vmatpush.bf16.msra.mxu0 %v873
        %988 = vmatpush.bf16.msra.mxu0 %v871
        %989 = vmatpush.bf16.msra.mxu0 %v869
        %990 = vmatpush.bf16.msra.mxu0 %v867
        %991 = vmatpush.bf16.msra.mxu0 %v865
        %992 = vmatpush.bf16.msra.mxu0 %v863
        %993 = vmatmul.bf16.gmra.mxu0 %v633
        %v994 = vpop.f32.mrf.mxu0
        %v995 = vadd.f32 %v982, %v994
        %v996 = vpop.f32.mrf.mxu0
        %997 = vdwg.mxu0
        %998 = vmatpush.bf16.msra.mxu0 %v893
        %999 = vmatpush.bf16.msra.mxu0 %v891
        %1000 = vmatpush.bf16.msra.mxu0 %v889
        %1001 = vmatpush.bf16.msra.mxu0 %v887
        %1002 = vmatpush.bf16.msra.mxu0 %v885
        %1003 = vmatpush.bf16.msra.mxu0 %v883
        %1004 = vmatpush.bf16.msra.mxu0 %v881
        %1005 = vmatpush.bf16.msra.mxu0 %v879
        %1006 = vmatmul.bf16.gmra.mxu0 %v634
        %v1007 = vpop.f32.mrf.mxu0
        %v1008 = vadd.f32 %v995, %v1007
        %v1009 = vpop.f32.mrf.mxu0
        %1010 = vdwg.mxu0
        %1011 = vmatpush.bf16.msra.mxu0 %v846
        %1012 = vmatpush.bf16.msra.mxu0 %v844
        %1013 = vmatpush.bf16.msra.mxu0 %v842
        %1014 = vmatpush.bf16.msra.mxu0 %v840
        %1015 = vmatpush.bf16.msra.mxu0 %v838
        %1016 = vmatpush.bf16.msra.mxu0 %v836
        %1017 = vmatpush.bf16.msra.mxu0 %v834
        %1018 = vmatpush.bf16.msra.mxu0 %v832
        %1019 = vmatmul.bf16.gmra.mxu0 %v631
        %v1020 = vpop.f32.mrf.mxu0
        %v1021 = vadd.f32 0.0, %v1020
        %v1022 = vpop.f32.mrf.mxu0
        %1023 = vdwg.mxu0
        %1024 = vmatpush.bf16.msra.mxu0 %v862
        %1025 = vmatpush.bf16.msra.mxu0 %v860
        %1026 = vmatpush.bf16.msra.mxu0 %v858
        %1027 = vmatpush.bf16.msra.mxu0 %v856
        %1028 = vmatpush.bf16.msra.mxu0 %v854
        %1029 = vmatpush.bf16.msra.mxu0 %v852
        %1030 = vmatpush.bf16.msra.mxu0 %v850
        %1031 = vmatpush.bf16.msra.mxu0 %v848
        %1032 = vmatmul.bf16.gmra.mxu0 %v632
        %v1033 = vpop.f32.mrf.mxu0
        %v1034 = vadd.f32 %v1021, %v1033
        %v1035 = vpop.f32.mrf.mxu0
        %1036 = vdwg.mxu0
        %1037 = vmatpush.bf16.msra.mxu0 %v878
        %1038 = vmatpush.bf16.msra.mxu0 %v876
        %1039 = vmatpush.bf16.msra.mxu0 %v874
        %1040 = vmatpush.bf16.msra.mxu0 %v872
        %1041 = vmatpush.bf16.msra.mxu0 %v870
        %1042 = vmatpush.bf16.msra.mxu0 %v868
        %1043 = vmatpush.bf16.msra.mxu0 %v866
        %1044 = vmatpush.bf16.msra.mxu0 %v864
        %1045 = vmatmul.bf16.gmra.mxu0 %v633
        %v1046 = vpop.f32.mrf.mxu0
        %v1047 = vadd.f32 %v1034, %v1046
        %v1048 = vpop.f32.mrf.mxu0
        %1049 = vdwg.mxu0
        %1050 = vmatpush.bf16.msra.mxu0 %v894
        %1051 = vmatpush.bf16.msra.mxu0 %v892
        %1052 = vmatpush.bf16.msra.mxu0 %v890
        %1053 = vmatpush.bf16.msra.mxu0 %v888
        %1054 = vmatpush.bf16.msra.mxu0 %v886
        %1055 = vmatpush.bf16.msra.mxu0 %v884
        %1056 = vmatpush.bf16.msra.mxu0 %v882
        %1057 = vmatpush.bf16.msra.mxu0 %v880
        %1058 = vmatmul.bf16.gmra.mxu0 %v634
        %v1059 = vpop.f32.mrf.mxu0
        %v1060 = vadd.f32 %v1047, %v1059
        %v1061 = vpop.f32.mrf.mxu0
        %1062 = vdwg.mxu0
        %v1063 = vadd.f32 %v557, %v1008
        %v1064 = vadd.f32 %v558, %v1060
        %1065 = vst [vmem:[%s549] sm:$0xff] %v1063
        %1066 = vst [vmem:[%s549 + $0x8] sm:$0xff] %v1064
        // Predicated region
        $region75: #{wsddn_forward.14} parent=65 // pred_check
          %p1067 = pneg %p551
        $region76: #{wsddn_forward.14} parent=65 // pred_check_branch
          %1069 = sbr.rel (%p1067) target = $region78
        $region77: #{wsddn_forward.14} parent=65 // pred_region
          %v1070 = vld [vmem:[%s549] sm:$0xff]
          %v1071 = vld [vmem:[%s549 + $0x8] sm:$0xff]
          %v1072 = vld [vmem:[%s539] sm:$0x3]
          %v1074 = vperm.slane %v1072, 0
          %v1075 = vperm.slane %v1072, 1
          %v1078 = vadd.f32 %v1070, %v1074
          %v1079 = vadd.f32 %v1071, %v1075
          %v1080 = vmax.f32 %v1078, 0.0
          %v1081 = vmax.f32 %v1079, 0.0
          %1082 = vst [vmem:[%s549] sm:$0xff] %v1080
          %1083 = vst [vmem:[%s549 + $0x8] sm:$0xff] %v1081
        $region78: #{wsddn_forward.14} parent=65 // pred_fallthru
          _
        %s1084 = smul.u32 2, %s20
        %p1085 = scmp.lt.s32.totalorder %s19, 0
        %s1086 = scalar_select %p1085, %s19, 0
        %p1087 = scmp.lt.s32.totalorder %s1084, 3
        %s1088 = scalar_select %p1087, %s1084, 3
        %s1089 = smul.addr %s1086, 4
        %s1090 = sadd.s32 %s1088, %s1089
        %s1091 = smul.addr %s1090, 8
        %s1092 = scalar_lea.vmem %s3, %s1091
        // Predicated region
        $region79: #{wsddn_forward.14} parent=65 // pred_check
          %p1093 = pneg %p135
        $region80: #{wsddn_forward.14} parent=65 // pred_check_branch
          %1095 = sbr.rel (%p1093) target = $region82
        $region81: #{wsddn_forward.14} parent=65 // pred_region
          %s1096 = smul.u32 2, %s20
        $region82: #{wsddn_forward.14} parent=65 // pred_fallthru
          _
      $region66: #{wsddn_forward.14} parent=5 // pred_fallthru
        _
      %p1097 = scmp.le.s32.totalorder 2, %s9
      // Predicated region
      $region83: #{wsddn_forward.14} parent=5 // pred_check
        %p1098 = pneg %p1097
      $region84: #{wsddn_forward.14} parent=5 // pred_check_branch
        %1100 = sbr.rel (%p1098) target = $region86
      $region85: #{wsddn_forward.14} parent=5 // pred_region
        %s1101 = ssub.s32 %s9, 2
        // Predicated region
        $region87: #{wsddn_forward.14} parent=85 // pred_check
          %p1102 = pneg %p141
        $region88: #{wsddn_forward.14} parent=85 // pred_check_branch
          %1104 = sbr.rel (%p1102) target = $region90
        $region89: #{wsddn_forward.14} parent=85 // pred_region
          %s1105 = smul.u32 2, %s23
          %p1106 = scmp.lt.s32.totalorder %s22, 0
          %s1107 = scalar_select %p1106, %s22, 0
          %p1108 = scmp.lt.s32.totalorder %s1105, 3
          %s1109 = scalar_select %p1108, %s1105, 3
          %s1110 = smul.addr %s1107, 4
          %s1111 = sadd.s32 %s1109, %s1110
          %s1112 = smul.addr %s1111, 8
          %s1113 = scalar_lea.vmem %s3, %s1112
        $region90: #{wsddn_forward.14} parent=85 // pred_fallthru
          _
      $region86: #{wsddn_forward.14} parent=5 // pred_fallthru
        _
    $region6: #{wsddn_forward.14} parent=1 // loop_footer
      %s13 = sadd.s32 1, %s9
    $region7: #{wsddn_forward.14} parent=1 // loop_footer_branch
      %8 = sbr.rel target = $region3
    $region8: #{wsddn_forward.14} parent=1 // loop_exit
      _

// kernel: wsddn_forward.15
$region0: #{wsddn_forward.15}
  #allocation0 [shape = 'u32[]', space=smem, size = 0x4, offset = 0x4, fixed_abs, tag = 'smem constant byte address 0x4 - core index']
  #allocation1 [shape = 'u32[72,128]{1,0:T(1,128)}', space=vmem, size = 0x9000, scoped, tag = 'internal scratch']
  %s0 = inlined_call_operand.vmem [shape: f32[8,512], index: 0, kind: input, shape index: {}]
  %s1 = inlined_call_operand.vmem [shape: f32[512,20], index: 1, kind: input, shape index: {}]
  %s2 = inlined_call_operand.vmem [shape: f32[1,20], index: 2, kind: input, shape index: {}]
  %s3 = inlined_call_operand.vmem [shape: f32[512,20], index: 3, kind: input, shape index: {}]
  %s4 = inlined_call_operand.vmem [shape: f32[1,20], index: 4, kind: input, shape index: {}]
  %s5 = inlined_call_operand.hbm [shape: f32[8,20], index: 5, kind: output, shape index: {}]
  %s6 = sld [smem:[#allocation0]]
  $region30: #{wsddn_forward.15} parent=0
    _
  %s8 = ssub.s32 1, %s6
  %s9 = scalar_select 0, %s8, %s6
  $region1: #{wsddn_forward.15} parent=0
    #allocation2 [shape = 'u8[4096]{0}', space=vmem, size = 0x1000, scoped, tag = 'output window, operand 0, single buffered']
    #allocation3 [shape = 's32[1]{0}', space=sflag, size = 0x4, scoped, tag = 'scoped memory for wsddn_forward.15']
    %10 = vsyncpa [#allocation3], 0
    // Predicated region
    $region2: #{wsddn_forward.15} parent=1 // pred_check
      _
    $region3: #{wsddn_forward.15} parent=1 // pred_check_branch
      %12 = sbr.rel (0) target = $region5
    $region4: #{wsddn_forward.15} parent=1 // pred_region
      _
    $region5: #{wsddn_forward.15} parent=1 // pred_fallthru
      _
    // Predicated region
    $region6: #{wsddn_forward.15} parent=1 // pred_check
      _
    $region7: #{wsddn_forward.15} parent=1 // pred_check_branch
      %14 = sbr.rel (0) target = $region9
    $region8: #{wsddn_forward.15} parent=1 // pred_region
      _
    $region9: #{wsddn_forward.15} parent=1 // pred_fallthru
      _
    // Predicated region
    $region10: #{wsddn_forward.15} parent=1 // pred_check
      _
    $region11: #{wsddn_forward.15} parent=1 // pred_check_branch
      %16 = sbr.rel (0) target = $region13
    $region12: #{wsddn_forward.15} parent=1 // pred_region
      _
    $region13: #{wsddn_forward.15} parent=1 // pred_fallthru
      _
    // Predicated region
    $region14: #{wsddn_forward.15} parent=1 // pred_check
      _
    $region15: #{wsddn_forward.15} parent=1 // pred_check_branch
      %18 = sbr.rel (0) target = $region17
    $region16: #{wsddn_forward.15} parent=1 // pred_region
      _
    $region17: #{wsddn_forward.15} parent=1 // pred_fallthru
      _
    // Predicated region
    $region18: #{wsddn_forward.15} parent=1 // pred_check
      _
    $region19: #{wsddn_forward.15} parent=1 // pred_check_branch
      %20 = sbr.rel (0) target = $region21
    $region20: #{wsddn_forward.15} parent=1 // pred_region
      _
    $region21: #{wsddn_forward.15} parent=1 // pred_fallthru
      _
    %v21 = vld [vmem:[%s0] sm:$0xff]
    %v22 = vld [vmem:[%s0 + $0x8] sm:$0xff]
    %v23 = vld [vmem:[%s0 + $0x10] sm:$0xff]
    %v24 = vld [vmem:[%s0 + $0x18] sm:$0xff]
    %v25 = vld [vmem:[%s1] sm:$0xff]
    %v26 = vld [vmem:[%s1 + $0x8] sm:$0xff]
    %v27 = vld [vmem:[%s1 + $0x10] sm:$0xff]
    %v28 = vld [vmem:[%s1 + $0x18] sm:$0xff]
    %v29 = vld [vmem:[%s1 + $0x20] sm:$0xff]
    %v30 = vld [vmem:[%s1 + $0x28] sm:$0xff]
    %v31 = vld [vmem:[%s1 + $0x30] sm:$0xff]
    %v32 = vld [vmem:[%s1 + $0x38] sm:$0xff]
    %v33 = vld [vmem:[%s1 + $0x40] sm:$0xff]
    %v34 = vld [vmem:[%s1 + $0x48] sm:$0xff]
    %v35 = vld [vmem:[%s1 + $0x50] sm:$0xff]
    %v36 = vld [vmem:[%s1 + $0x58] sm:$0xff]
    %v37 = vld [vmem:[%s1 + $0x60] sm:$0xff]
    %v38 = vld [vmem:[%s1 + $0x68] sm:$0xff]
    %v39 = vld [vmem:[%s1 + $0x70] sm:$0xff]
    %v40 = vld [vmem:[%s1 + $0x78] sm:$0xff]
    %v41 = vld [vmem:[%s1 + $0x80] sm:$0xff]
    %v42 = vld [vmem:[%s1 + $0x88] sm:$0xff]
    %v43 = vld [vmem:[%s1 + $0x90] sm:$0xff]
    %v44 = vld [vmem:[%s1 + $0x98] sm:$0xff]
    %v45 = vld [vmem:[%s1 + $0xa0] sm:$0xff]
    %v46 = vld [vmem:[%s1 + $0xa8] sm:$0xff]
    %v47 = vld [vmem:[%s1 + $0xb0] sm:$0xff]
    %v48 = vld [vmem:[%s1 + $0xb8] sm:$0xff]
    %v49 = vld [vmem:[%s1 + $0xc0] sm:$0xff]
    %v50 = vld [vmem:[%s1 + $0xc8] sm:$0xff]
    %v51 = vld [vmem:[%s1 + $0xd0] sm:$0xff]
    %v52 = vld [vmem:[%s1 + $0xd8] sm:$0xff]
    %v53 = vld [vmem:[%s1 + $0xe0] sm:$0xff]
    %v54 = vld [vmem:[%s1 + $0xe8] sm:$0xff]
    %v55 = vld [vmem:[%s1 + $0xf0] sm:$0xff]
    %v56 = vld [vmem:[%s1 + $0xf8] sm:$0xff]
    %v57 = vld [vmem:[%s1 + $0x100] sm:$0xff]
    %v58 = vld [vmem:[%s1 + $0x108] sm:$0xff]
    %v59 = vld [vmem:[%s1 + $0x110] sm:$0xff]
    %v60 = vld [vmem:[%s1 + $0x118] sm:$0xff]
    %v61 = vld [vmem:[%s1 + $0x120] sm:$0xff]
    %v62 = vld [vmem:[%s1 + $0x128] sm:$0xff]
    %v63 = vld [vmem:[%s1 + $0x130] sm:$0xff]
    %v64 = vld [vmem:[%s1 + $0x138] sm:$0xff]
    %v65 = vld [vmem:[%s1 + $0x140] sm:$0xff]
    %v66 = vld [vmem:[%s1 + $0x148] sm:$0xff]
    %v67 = vld [vmem:[%s1 + $0x150] sm:$0xff]
    %v68 = vld [vmem:[%s1 + $0x158] sm:$0xff]
    %v69 = vld [vmem:[%s1 + $0x160] sm:$0xff]
    %v70 = vld [vmem:[%s1 + $0x168] sm:$0xff]
    %v71 = vld [vmem:[%s1 + $0x170] sm:$0xff]
    %v72 = vld [vmem:[%s1 + $0x178] sm:$0xff]
    %v73 = vld [vmem:[%s1 + $0x180] sm:$0xff]
    %v74 = vld [vmem:[%s1 + $0x188] sm:$0xff]
    %v75 = vld [vmem:[%s1 + $0x190] sm:$0xff]
    %v76 = vld [vmem:[%s1 + $0x198] sm:$0xff]
    %v77 = vld [vmem:[%s1 + $0x1a0] sm:$0xff]
    %v78 = vld [vmem:[%s1 + $0x1a8] sm:$0xff]
    %v79 = vld [vmem:[%s1 + $0x1b0] sm:$0xff]
    %v80 = vld [vmem:[%s1 + $0x1b8] sm:$0xff]
    %v81 = vld [vmem:[%s1 + $0x1c0] sm:$0xff]
    %v82 = vld [vmem:[%s1 + $0x1c8] sm:$0xff]
    %v83 = vld [vmem:[%s1 + $0x1d0] sm:$0xff]
    %v84 = vld [vmem:[%s1 + $0x1d8] sm:$0xff]
    %v85 = vld [vmem:[%s1 + $0x1e0] sm:$0xff]
    %v86 = vld [vmem:[%s1 + $0x1e8] sm:$0xff]
    %v87 = vld [vmem:[%s1 + $0x1f0] sm:$0xff]
    %v88 = vld [vmem:[%s1 + $0x1f8] sm:$0xff]
    %v89 = vld [vmem:[%s2] sm:$0x1]
    %v91 = vperm.slane %v89, 0
    %93 = vmatpush.msra.mxu0 %v40
    %94 = vmatpush.msra.mxu0 %v39
    %95 = vmatpush.msra.mxu0 %v38
    %96 = vmatpush.msra.mxu0 %v37
    %97 = vmatpush.msra.mxu0 %v36
    %98 = vmatpush.msra.mxu0 %v35
    %99 = vmatpush.msra.mxu0 %v34
    %100 = vmatpush.msra.mxu0 %v33
    %101 = vmatpush.msra.mxu0 %v32
    %102 = vmatpush.msra.mxu0 %v31
    %103 = vmatpush.msra.mxu0 %v30
    %104 = vmatpush.msra.mxu0 %v29
    %105 = vmatpush.msra.mxu0 %v28
    %106 = vmatpush.msra.mxu0 %v27
    %107 = vmatpush.msra.mxu0 %v26
    %108 = vmatpush.msra.mxu0 %v25
    %109 = vmatmul.f32.gmra.mxu0 %v21
    %v110 = vpop.f32.mrf.mxu0
    %v111 = vadd.f32 %v91, %v110
    %112 = vdwg.mxu0
    %113 = vmatpush.msra.mxu0 %v56
    %114 = vmatpush.msra.mxu0 %v55
    %115 = vmatpush.msra.mxu0 %v54
    %116 = vmatpush.msra.mxu0 %v53
    %117 = vmatpush.msra.mxu0 %v52
    %118 = vmatpush.msra.mxu0 %v51
    %119 = vmatpush.msra.mxu0 %v50
    %120 = vmatpush.msra.mxu0 %v49
    %121 = vmatpush.msra.mxu0 %v48
    %122 = vmatpush.msra.mxu0 %v47
    %123 = vmatpush.msra.mxu0 %v46
    %124 = vmatpush.msra.mxu0 %v45
    %125 = vmatpush.msra.mxu0 %v44
    %126 = vmatpush.msra.mxu0 %v43
    %127 = vmatpush.msra.mxu0 %v42
    %128 = vmatpush.msra.mxu0 %v41
    %129 = vmatmul.f32.gmra.mxu0 %v22
    %v130 = vpop.f32.mrf.mxu0
    %v131 = vadd.f32 %v111, %v130
    %132 = vdwg.mxu0
    %133 = vmatpush.msra.mxu0 %v72
    %134 = vmatpush.msra.mxu0 %v71
    %135 = vmatpush.msra.mxu0 %v70
    %136 = vmatpush.msra.mxu0 %v69
    %137 = vmatpush.msra.mxu0 %v68
    %138 = vmatpush.msra.mxu0 %v67
    %139 = vmatpush.msra.mxu0 %v66
    %140 = vmatpush.msra.mxu0 %v65
    %141 = vmatpush.msra.mxu0 %v64
    %142 = vmatpush.msra.mxu0 %v63
    %143 = vmatpush.msra.mxu0 %v62
    %144 = vmatpush.msra.mxu0 %v61
    %145 = vmatpush.msra.mxu0 %v60
    %146 = vmatpush.msra.mxu0 %v59
    %147 = vmatpush.msra.mxu0 %v58
    %148 = vmatpush.msra.mxu0 %v57
    %149 = vmatmul.f32.gmra.mxu0 %v23
    %v150 = vpop.f32.mrf.mxu0
    %v151 = vadd.f32 %v131, %v150
    %152 = vdwg.mxu0
    %153 = vmatpush.msra.mxu0 %v88
    %154 = vmatpush.msra.mxu0 %v87
    %155 = vmatpush.msra.mxu0 %v86
    %156 = vmatpush.msra.mxu0 %v85
    %157 = vmatpush.msra.mxu0 %v84
    %158 = vmatpush.msra.mxu0 %v83
    %159 = vmatpush.msra.mxu0 %v82
    %160 = vmatpush.msra.mxu0 %v81
    %161 = vmatpush.msra.mxu0 %v80
    %162 = vmatpush.msra.mxu0 %v79
    %163 = vmatpush.msra.mxu0 %v78
    %164 = vmatpush.msra.mxu0 %v77
    %165 = vmatpush.msra.mxu0 %v76
    %166 = vmatpush.msra.mxu0 %v75
    %167 = vmatpush.msra.mxu0 %v74
    %168 = vmatpush.msra.mxu0 %v73
    %169 = vmatmul.f32.gmra.mxu0 %v24
    %v170 = vpop.f32.mrf.mxu0
    %v171 = vadd.f32 %v151, %v170
    %172 = vdwg.mxu0
    %vm173 = vcmask 162816
    %v174 = vsel %vm173, %v171, -inf
    %175 = vmax.xlane.f32.xlu0 %v174
    %v176 = vpop.xlane.xlu0 %175
    %v177 = vsub.f32 %v171, %v176
    %v178 = vmul.f32 %v177, 1.442695
    %v179 = vpow.pop %v178
    %v180 = vsel %vm173, %v179, 0.0
    %181 = vadd.xlane.f32.xlu0 %v180
    %v182 = vpop.xlane.xlu0 %181
    %v183 = vrcp.pop %v182
    %v184 = vmul.f32 %v182, %v183
    %v185 = vsub.f32 1.0, %v184
    %v186 = vmul.f32 %v183, %v185
    %v187 = vadd.f32 %v183, %v186
    %vm188 = vweird.f32 %v182
    %vm189 = vweird.f32 %v183
    %vm190 = vmor %vm188, %vm189
    %v191 = vsel %vm190, %v183, %v187
    %v192 = vand.u32 2147483647, %v182
    %vm193 = vcmp.eq.f32.partialorder %v192, 8.507059e+37
    %v194 = vand.u32 %v182, 2147483648
    %v195 = vor.u32 1.1754944e-38, %v194
    %v196 = vsel %vm193, %v195, %v191
    %v197 = vmul.f32 %v179, %v196
    %v198 = vld [vmem:[%s3] sm:$0xff]
    %v199 = vld [vmem:[%s3 + $0x8] sm:$0xff]
    %v200 = vld [vmem:[%s3 + $0x10] sm:$0xff]
    %v201 = vld [vmem:[%s3 + $0x18] sm:$0xff]
    %v202 = vld [vmem:[%s3 + $0x20] sm:$0xff]
    %v203 = vld [vmem:[%s3 + $0x28] sm:$0xff]
    %v204 = vld [vmem:[%s3 + $0x30] sm:$0xff]
    %v205 = vld [vmem:[%s3 + $0x38] sm:$0xff]
    %v206 = vld [vmem:[%s3 + $0x40] sm:$0xff]
    %v207 = vld [vmem:[%s3 + $0x48] sm:$0xff]
    %v208 = vld [vmem:[%s3 + $0x50] sm:$0xff]
    %v209 = vld [vmem:[%s3 + $0x58] sm:$0xff]
    %v210 = vld [vmem:[%s3 + $0x60] sm:$0xff]
    %v211 = vld [vmem:[%s3 + $0x68] sm:$0xff]
    %v212 = vld [vmem:[%s3 + $0x70] sm:$0xff]
    %v213 = vld [vmem:[%s3 + $0x78] sm:$0xff]
    %v214 = vld [vmem:[%s3 + $0x80] sm:$0xff]
    %v215 = vld [vmem:[%s3 + $0x88] sm:$0xff]
    %v216 = vld [vmem:[%s3 + $0x90] sm:$0xff]
    %v217 = vld [vmem:[%s3 + $0x98] sm:$0xff]
    %v218 = vld [vmem:[%s3 + $0xa0] sm:$0xff]
    %v219 = vld [vmem:[%s3 + $0xa8] sm:$0xff]
    %v220 = vld [vmem:[%s3 + $0xb0] sm:$0xff]
    %v221 = vld [vmem:[%s3 + $0xb8] sm:$0xff]
    %v222 = vld [vmem:[%s3 + $0xc0] sm:$0xff]
    %v223 = vld [vmem:[%s3 + $0xc8] sm:$0xff]
    %v224 = vld [vmem:[%s3 + $0xd0] sm:$0xff]
    %v225 = vld [vmem:[%s3 + $0xd8] sm:$0xff]
    %v226 = vld [vmem:[%s3 + $0xe0] sm:$0xff]
    %v227 = vld [vmem:[%s3 + $0xe8] sm:$0xff]
    %v228 = vld [vmem:[%s3 + $0xf0] sm:$0xff]
    %v229 = vld [vmem:[%s3 + $0xf8] sm:$0xff]
    %v230 = vld [vmem:[%s3 + $0x100] sm:$0xff]
    %v231 = vld [vmem:[%s3 + $0x108] sm:$0xff]
    %v232 = vld [vmem:[%s3 + $0x110] sm:$0xff]
    %v233 = vld [vmem:[%s3 + $0x118] sm:$0xff]
    %v234 = vld [vmem:[%s3 + $0x120] sm:$0xff]
    %v235 = vld [vmem:[%s3 + $0x128] sm:$0xff]
    %v236 = vld [vmem:[%s3 + $0x130] sm:$0xff]
    %v237 = vld [vmem:[%s3 + $0x138] sm:$0xff]
    %v238 = vld [vmem:[%s3 + $0x140] sm:$0xff]
    %v239 = vld [vmem:[%s3 + $0x148] sm:$0xff]
    %v240 = vld [vmem:[%s3 + $0x150] sm:$0xff]
    %v241 = vld [vmem:[%s3 + $0x158] sm:$0xff]
    %v242 = vld [vmem:[%s3 + $0x160] sm:$0xff]
    %v243 = vld [vmem:[%s3 + $0x168] sm:$0xff]
    %v244 = vld [vmem:[%s3 + $0x170] sm:$0xff]
    %v245 = vld [vmem:[%s3 + $0x178] sm:$0xff]
    %v246 = vld [vmem:[%s3 + $0x180] sm:$0xff]
    %v247 = vld [vmem:[%s3 + $0x188] sm:$0xff]
    %v248 = vld [vmem:[%s3 + $0x190] sm:$0xff]
    %v249 = vld [vmem:[%s3 + $0x198] sm:$0xff]
    %v250 = vld [vmem:[%s3 + $0x1a0] sm:$0xff]
    %v251 = vld [vmem:[%s3 + $0x1a8] sm:$0xff]
    %v252 = vld [vmem:[%s3 + $0x1b0] sm:$0xff]
    %v253 = vld [vmem:[%s3 + $0x1b8] sm:$0xff]
    %v254 = vld [vmem:[%s3 + $0x1c0] sm:$0xff]
    %v255 = vld [vmem:[%s3 + $0x1c8] sm:$0xff]
    %v256 = vld [vmem:[%s3 + $0x1d0] sm:$0xff]
    %v257 = vld [vmem:[%s3 + $0x1d8] sm:$0xff]
    %v258 = vld [vmem:[%s3 + $0x1e0] sm:$0xff]
    %v259 = vld [vmem:[%s3 + $0x1e8] sm:$0xff]
    %v260 = vld [vmem:[%s3 + $0x1f0] sm:$0xff]
    %v261 = vld [vmem:[%s3 + $0x1f8] sm:$0xff]
    %v262 = vld [vmem:[%s4] sm:$0x1]
    %v264 = vperm.slane %v262, 0
    %266 = vmatpush.msra.mxu0 %v213
    %267 = vmatpush.msra.mxu0 %v212
    %268 = vmatpush.msra.mxu0 %v211
    %269 = vmatpush.msra.mxu0 %v210
    %270 = vmatpush.msra.mxu0 %v209
    %271 = vmatpush.msra.mxu0 %v208
    %272 = vmatpush.msra.mxu0 %v207
    %273 = vmatpush.msra.mxu0 %v206
    %274 = vmatpush.msra.mxu0 %v205
    %275 = vmatpush.msra.mxu0 %v204
    %276 = vmatpush.msra.mxu0 %v203
    %277 = vmatpush.msra.mxu0 %v202
    %278 = vmatpush.msra.mxu0 %v201
    %279 = vmatpush.msra.mxu0 %v200
    %280 = vmatpush.msra.mxu0 %v199
    %281 = vmatpush.msra.mxu0 %v198
    %282 = vmatmul.f32.gmra.mxu0 %v21
    %v283 = vpop.f32.mrf.mxu0
    %v284 = vadd.f32 %v264, %v283
    %285 = vdwg.mxu0
    %286 = vmatpush.msra.mxu0 %v229
    %287 = vmatpush.msra.mxu0 %v228
    %288 = vmatpush.msra.mxu0 %v227
    %289 = vmatpush.msra.mxu0 %v226
    %290 = vmatpush.msra.mxu0 %v225
    %291 = vmatpush.msra.mxu0 %v224
    %292 = vmatpush.msra.mxu0 %v223
    %293 = vmatpush.msra.mxu0 %v222
    %294 = vmatpush.msra.mxu0 %v221
    %295 = vmatpush.msra.mxu0 %v220
    %296 = vmatpush.msra.mxu0 %v219
    %297 = vmatpush.msra.mxu0 %v218
    %298 = vmatpush.msra.mxu0 %v217
    %299 = vmatpush.msra.mxu0 %v216
    %300 = vmatpush.msra.mxu0 %v215
    %301 = vmatpush.msra.mxu0 %v214
    %302 = vmatmul.f32.gmra.mxu0 %v22
    %v303 = vpop.f32.mrf.mxu0
    %v304 = vadd.f32 %v284, %v303
    %305 = vdwg.mxu0
    %306 = vmatpush.msra.mxu0 %v245
    %307 = vmatpush.msra.mxu0 %v244
    %308 = vmatpush.msra.mxu0 %v243
    %309 = vmatpush.msra.mxu0 %v242
    %310 = vmatpush.msra.mxu0 %v241
    %311 = vmatpush.msra.mxu0 %v240
    %312 = vmatpush.msra.mxu0 %v239
    %313 = vmatpush.msra.mxu0 %v238
    %314 = vmatpush.msra.mxu0 %v237
    %315 = vmatpush.msra.mxu0 %v236
    %316 = vmatpush.msra.mxu0 %v235
    %317 = vmatpush.msra.mxu0 %v234
    %318 = vmatpush.msra.mxu0 %v233
    %319 = vmatpush.msra.mxu0 %v232
    %320 = vmatpush.msra.mxu0 %v231
    %321 = vmatpush.msra.mxu0 %v230
    %322 = vmatmul.f32.gmra.mxu0 %v23
    %v323 = vpop.f32.mrf.mxu0
    %v324 = vadd.f32 %v304, %v323
    %325 = vdwg.mxu0
    %326 = vmatpush.msra.mxu0 %v261
    %327 = vmatpush.msra.mxu0 %v260
    %328 = vmatpush.msra.mxu0 %v259
    %329 = vmatpush.msra.mxu0 %v258
    %330 = vmatpush.msra.mxu0 %v257
    %331 = vmatpush.msra.mxu0 %v256
    %332 = vmatpush.msra.mxu0 %v255
    %333 = vmatpush.msra.mxu0 %v254
    %334 = vmatpush.msra.mxu0 %v253
    %335 = vmatpush.msra.mxu0 %v252
    %336 = vmatpush.msra.mxu0 %v251
    %337 = vmatpush.msra.mxu0 %v250
    %338 = vmatpush.msra.mxu0 %v249
    %339 = vmatpush.msra.mxu0 %v248
    %340 = vmatpush.msra.mxu0 %v247
    %341 = vmatpush.msra.mxu0 %v246
    %342 = vmatmul.f32.gmra.mxu0 %v24
    %v343 = vpop.f32.mrf.mxu0
    %v344 = vadd.f32 %v324, %v343
    %345 = vdwg.mxu0
    %v346 = vsel %vm173, %v344, -inf
    %v347 = vrot.slane %v346, 4
    %v348 = vmax.f32 %v346, %v347
    %v349 = vrot.slane %v348, 2
    %v350 = vmax.f32 %v348, %v349
    %v351 = vrot.slane %v350, 1
    %v352 = vmax.f32 %v350, %v351
    %v353 = vsub.f32 %v344, %v352
    %v354 = vmul.f32 %v353, 1.442695
    %v355 = vpow.pop %v354
    %v356 = vsel %vm173, %v355, 0.0
    %v357 = vrot.slane %v356, 4
    %v358 = vadd.f32 %v356, %v357
    %v359 = vrot.slane %v358, 2
    %v360 = vadd.f32 %v358, %v359
    %v361 = vrot.slane %v360, 1
    %v362 = vadd.f32 %v360, %v361
    %v363 = vrcp.pop %v362
    %v364 = vmul.f32 %v362, %v363
    %v365 = vsub.f32 1.0, %v364
    %v366 = vmul.f32 %v363, %v365
    %v367 = vadd.f32 %v363, %v366
    %vm368 = vweird.f32 %v362
    %vm369 = vweird.f32 %v363
    %vm370 = vmor %vm368, %vm369
    %v371 = vsel %vm370, %v363, %v367
    %v372 = vand.u32 2147483647, %v362
    %vm373 = vcmp.eq.f32.partialorder %v372, 8.507059e+37
    %v374 = vand.u32 %v362, 2147483648
    %v375 = vor.u32 1.1754944e-38, %v374
    %v376 = vsel %vm373, %v375, %v371
    %v377 = vmul.f32 %v355, %v376
    %v378 = vmul.f32 %v197, %v377
    %379 = vst.msk [vmem:[#allocation2] sm:$0xff] %vm173, %v378
    // Predicated region
    $region22: #{wsddn_forward.15} parent=1 // pred_check
      _
    $region23: #{wsddn_forward.15} parent=1 // pred_check_branch
      %381 = sbr.rel (0) target = $region25
    $region24: #{wsddn_forward.15} parent=1 // pred_region
      %383 = vsyncadd [#allocation3], 0
      %s385 = sshll.u32 [#allocation2], 4
      %s386 = int_to_ptr.vmem [resolvable:$true] %s385
      %s387 = sshll.u32 %s5, 4
      %s388 = int_to_ptr.hbm [resolvable:$true] %s387
      %390 = dma.vmem_to_hbm [thread:$0]  %s386, 128, %s388, [#allocation3]
    $region25: #{wsddn_forward.15} parent=1 // pred_fallthru
      _
    // Predicated region
    $region26: #{wsddn_forward.15} parent=1 // pred_check
      _
    $region27: #{wsddn_forward.15} parent=1 // pred_check_branch
      %392 = sbr.rel (0) target = $region29
    $region28: #{wsddn_forward.15} parent=1 // pred_region
      %394 = dma.done [#allocation3], 128
    $region29: #{wsddn_forward.15} parent=1 // pred_fallthru
      _
    %395 = vsyncpa [#allocation3], 1

</llo_original>
